<compile_context>
chip_gen: v7x
topology: tpu7x:2x2x1
jax: 0.10.0
libtpu: 0.0.40
codegen_flags: <defaults>
</compile_context>

<pallas_src>
import jax
import jax.numpy as jnp
from jax.experimental import pallas as pl
from jax.experimental.pallas import tpu as pltpu

INPUT_DIM = 2
HIDDEN = 64
NUM_CLASSES = 10
NUM_HEADS = 4
NUM_LAYERS = 2
FF = HIDDEN * 4
HEAD_DIM = HIDDEN // NUM_HEADS
LN_EPS = 1e-5
NCLS_PAD = 128  # lane-dense padded class dimension


def _layernorm(x, gamma, beta):
    mu = jnp.mean(x, axis=-1, keepdims=True)
    xc = x - mu
    var = jnp.mean(xc * xc, axis=-1, keepdims=True)
    inv = jax.lax.rsqrt(var + LN_EPS)
    return xc * inv * gamma + beta


def _make_kernel(TB, S):
    R = TB * S  # rows per grid step

    def kernel(
        x_ref, wp_ref, bp_ref,
        wqkv_ref, bqkv_ref, wo_ref, bo_ref,
        ln1g_ref, ln1b_ref,
        w1_ref, b1_ref, w2_ref, b2_ref,
        ln2g_ref, ln2b_ref,
        wf1_ref, bf1_ref, wf2_ref, bf2_ref,
        out_ref,
    ):
        x = x_ref[0].reshape(R, INPUT_DIM)  # (R, 2)

        # ---- input_proj + relu: K=2 contraction done on the VPU ----
        wp = wp_ref[...]                    # (2, HIDDEN)
        h = x[:, 0:1] * wp[0:1, :] + x[:, 1:2] * wp[1:2, :] + bp_ref[...]
        h = jnp.maximum(h, 0.0)             # (R, HIDDEN)

        scale = 1.0 / (HEAD_DIM ** 0.5)
        for l in range(NUM_LAYERS):
            # ---- multi-head self attention (post-norm, dropout = identity) ----
            # Per-head weights are indexed on the leading dim (free); the head
            # outputs are folded into the output projection by accumulation,
            # so there is no lane slicing and no concatenation.
            attn = jnp.zeros((R, HIDDEN), jnp.float32)
            for hd in range(NUM_HEADS):
                qi = (l * 3 + 0) * NUM_HEADS + hd
                ki = (l * 3 + 1) * NUM_HEADS + hd
                vi = (l * 3 + 2) * NUM_HEADS + hd
                q = jnp.dot(h, wqkv_ref[qi], preferred_element_type=jnp.float32) + bqkv_ref[qi]
                k = jnp.dot(h, wqkv_ref[ki], preferred_element_type=jnp.float32) + bqkv_ref[ki]
                v = jnp.dot(h, wqkv_ref[vi], preferred_element_type=jnp.float32) + bqkv_ref[vi]
                q3 = q.reshape(TB, S, HEAD_DIM)
                k3 = k.reshape(TB, S, HEAD_DIM)
                v3 = v.reshape(TB, S, HEAD_DIM)
                s = jnp.einsum('bqd,bkd->bqk', q3, k3,
                               preferred_element_type=jnp.float32) * scale
                s = s - jnp.max(s, axis=-1, keepdims=True)
                e = jnp.exp(s)
                a = e / jnp.sum(e, axis=-1, keepdims=True)
                ctx = jnp.einsum('bqk,bkd->bqd', a, v3,
                                 preferred_element_type=jnp.float32)
                attn = attn + jnp.dot(ctx.reshape(R, HEAD_DIM),
                                      wo_ref[l * NUM_HEADS + hd],
                                      preferred_element_type=jnp.float32)
            attn = attn + bo_ref[l]
            h = _layernorm(h + attn, ln1g_ref[l], ln1b_ref[l])

            # ---- feed-forward block ----
            ff = jnp.dot(h, w1_ref[l], preferred_element_type=jnp.float32) + b1_ref[l]
            ff = jnp.maximum(ff, 0.0)
            ff = jnp.dot(ff, w2_ref[l], preferred_element_type=jnp.float32) + b2_ref[l]
            h = _layernorm(h + ff, ln2g_ref[l], ln2b_ref[l])

        # ---- mean pool over the sequence dimension ----
        pooled = jnp.mean(h.reshape(TB, S, HIDDEN), axis=1)  # (TB, HIDDEN)

        # ---- classifier head (dropout is identity at inference) ----
        z = jnp.dot(pooled, wf1_ref[...], preferred_element_type=jnp.float32) + bf1_ref[...]
        z = jnp.maximum(z, 0.0)
        logits = jnp.dot(z, wf2_ref[...], preferred_element_type=jnp.float32) + bf2_ref[...]
        out_ref[0] = logits  # (TB, NCLS_PAD) lane-dense store

    return kernel


def _choose_tb(B):
    # Target ~16 sequences (128 rows with S=8) per grid step, but keep at
    # least two grid steps whenever B >= 2 so both v7x TensorCores get work.
    if B >= 32:
        return 16
    return max(1, (B + 1) // 2)


def transformer_classifier(x, params):
    B, S, Din = x.shape
    assert Din == INPUT_DIM
    TB = _choose_tb(B)
    num_steps = -(-B // TB)
    pad_B = num_steps * TB
    if pad_B != B:
        x = jnp.concatenate(
            [x, jnp.zeros((pad_B - B, S, Din), x.dtype)], axis=0)
    x_g = x.reshape(num_steps, TB, S, Din)

    # Flatten per-(layer, qkv, head) weights onto a leading index so the
    # kernel never slices the lane axis.
    wqkv = params["wqkv"].reshape(NUM_LAYERS * 3 * NUM_HEADS, HIDDEN, HEAD_DIM)
    bqkv = params["bqkv"].reshape(NUM_LAYERS * 3 * NUM_HEADS, 1, HEAD_DIM)
    wo = params["wo"].reshape(NUM_LAYERS * NUM_HEADS, HEAD_DIM, HIDDEN)
    # Pad the classifier output to 128 lanes (lane-dense stores).
    wf2p = jnp.zeros((HIDDEN // 2, NCLS_PAD), jnp.float32).at[:, :NUM_CLASSES].set(params["wf2"])
    bf2p = jnp.zeros((1, NCLS_PAD), jnp.float32).at[:, :NUM_CLASSES].set(params["bf2"])

    weights = [
        params["wp"], params["bp"],
        wqkv, bqkv, wo, params["bo"],
        params["ln1g"], params["ln1b"],
        params["w1"], params["b1"], params["w2"], params["b2"],
        params["ln2g"], params["ln2b"],
        params["wf1"], params["bf1"], wf2p, bf2p,
    ]

    in_specs = [pl.BlockSpec((1, TB, S, Din), lambda g: (g, 0, 0, 0))]
    for w in weights:
        # Grid-invariant, full-shape blocks (~0.7 MiB total) stay VMEM-resident.
        nd = w.ndim
        in_specs.append(pl.BlockSpec(w.shape, (lambda n: (lambda g: (0,) * n))(nd)))

    out = pl.pallas_call(
        _make_kernel(TB, S),
        out_shape=jax.ShapeDtypeStruct((num_steps, TB, NCLS_PAD), jnp.float32),
        grid_spec=pltpu.PrefetchScalarGridSpec(
            num_scalar_prefetch=0,
            grid=(num_steps,),
            in_specs=in_specs,
            out_specs=pl.BlockSpec((1, TB, NCLS_PAD), lambda g: (g, 0, 0)),
        ),
        compiler_params=pltpu.CompilerParams(dimension_semantics=("parallel",)),
    )(x_g, *weights)

    return out.reshape(pad_B, NCLS_PAD)[:B, :NUM_CLASSES]


def init_params(key):
    ks = iter(jax.random.split(key, 32))

    def w(shape, fan_in):
        return jax.random.normal(next(ks), shape, dtype=jnp.float32) / jnp.sqrt(float(fan_in))

    return {
        "wp":   w((INPUT_DIM, HIDDEN), INPUT_DIM),
        "bp":   jnp.zeros((1, HIDDEN), jnp.float32),
        # (layer, q/k/v, head, in, head_dim): equivalent to PyTorch in_proj^T split per head.
        "wqkv": w((NUM_LAYERS, 3, NUM_HEADS, HIDDEN, HEAD_DIM), HIDDEN),
        "bqkv": jnp.zeros((NUM_LAYERS, 3, NUM_HEADS, 1, HEAD_DIM), jnp.float32),
        # (layer, head, head_dim, out): per-head slab of out_proj^T.
        "wo":   w((NUM_LAYERS, NUM_HEADS, HEAD_DIM, HIDDEN), HIDDEN),
        "bo":   jnp.zeros((NUM_LAYERS, 1, HIDDEN), jnp.float32),
        "ln1g": jnp.ones((NUM_LAYERS, 1, HIDDEN), jnp.float32),
        "ln1b": jnp.zeros((NUM_LAYERS, 1, HIDDEN), jnp.float32),
        "w1":   w((NUM_LAYERS, HIDDEN, FF), HIDDEN),
        "b1":   jnp.zeros((NUM_LAYERS, 1, FF), jnp.float32),
        "w2":   w((NUM_LAYERS, FF, HIDDEN), FF),
        "b2":   jnp.zeros((NUM_LAYERS, 1, HIDDEN), jnp.float32),
        "ln2g": jnp.ones((NUM_LAYERS, 1, HIDDEN), jnp.float32),
        "ln2b": jnp.zeros((NUM_LAYERS, 1, HIDDEN), jnp.float32),
        "wf1":  w((HIDDEN, HIDDEN // 2), HIDDEN),
        "bf1":  jnp.zeros((1, HIDDEN // 2), jnp.float32),
        "wf2":  w((HIDDEN // 2, NUM_CLASSES), HIDDEN // 2),
        "bf2":  jnp.zeros((1, NUM_CLASSES), jnp.float32),
    }


if __name__ == "__main__":
    key = jax.random.PRNGKey(0)
    kx, kp = jax.random.split(key)
    B, S = 2, 8
    x = jax.random.normal(kx, (B, S, INPUT_DIM), dtype=jnp.float32)
    params = init_params(kp)

    out = transformer_classifier(x, params)
    out = jax.block_until_ready(out)
    assert out.shape == (B, NUM_CLASSES), out.shape
    assert bool(jnp.all(jnp.isfinite(out)))
    print("KERNEL_OK")
</pallas_src>

<mosaic_0001>
module attributes {stable_mosaic.version = 11 : i64} {
  func.func @kernel(%arg0: i32, %arg1: memref<1x1x8x2xf32, #tpu.memory_space<vmem>>, %arg2: memref<2x64xf32, #tpu.memory_space<vmem>>, %arg3: memref<1x64xf32, #tpu.memory_space<vmem>>, %arg4: memref<24x64x16xf32, #tpu.memory_space<vmem>>, %arg5: memref<24x1x16xf32, #tpu.memory_space<vmem>>, %arg6: memref<8x16x64xf32, #tpu.memory_space<vmem>>, %arg7: memref<2x1x64xf32, #tpu.memory_space<vmem>>, %arg8: memref<2x1x64xf32, #tpu.memory_space<vmem>>, %arg9: memref<2x1x64xf32, #tpu.memory_space<vmem>>, %arg10: memref<2x64x256xf32, #tpu.memory_space<vmem>>, %arg11: memref<2x1x256xf32, #tpu.memory_space<vmem>>, %arg12: memref<2x256x64xf32, #tpu.memory_space<vmem>>, %arg13: memref<2x1x64xf32, #tpu.memory_space<vmem>>, %arg14: memref<2x1x64xf32, #tpu.memory_space<vmem>>, %arg15: memref<2x1x64xf32, #tpu.memory_space<vmem>>, %arg16: memref<64x32xf32, #tpu.memory_space<vmem>>, %arg17: memref<1x32xf32, #tpu.memory_space<vmem>>, %arg18: memref<32x128xf32, #tpu.memory_space<vmem>>, %arg19: memref<1x128xf32, #tpu.memory_space<vmem>>, %arg20: memref<1x1x128xf32, #tpu.memory_space<vmem>>) attributes {dimension_semantics = [#tpu.dimension_semantics<parallel>], iteration_bounds = array<i64: 2>, scalar_prefetch = 0 : i64, scratch_operands = 0 : i64, tpu.core_type = #tpu.core_type<tc>, window_params = [{transform_indices = @transform_0, window_bounds = array<i64: 1, 1, 8, 2>}, {pipeline_mode = #tpu.pipeline_mode<synchronous>, transform_indices = @transform_1, window_bounds = array<i64: 2, 64>}, {pipeline_mode = #tpu.pipeline_mode<synchronous>, transform_indices = @transform_2, window_bounds = array<i64: 1, 64>}, {pipeline_mode = #tpu.pipeline_mode<synchronous>, transform_indices = @transform_3, window_bounds = array<i64: 24, 64, 16>}, {pipeline_mode = #tpu.pipeline_mode<synchronous>, transform_indices = @transform_4, window_bounds = array<i64: 24, 1, 16>}, {pipeline_mode = #tpu.pipeline_mode<synchronous>, transform_indices = @transform_5, window_bounds = array<i64: 8, 16, 64>}, {pipeline_mode = #tpu.pipeline_mode<synchronous>, transform_indices = @transform_6, window_bounds = array<i64: 2, 1, 64>}, {pipeline_mode = #tpu.pipeline_mode<synchronous>, transform_indices = @transform_7, window_bounds = array<i64: 2, 1, 64>}, {pipeline_mode = #tpu.pipeline_mode<synchronous>, transform_indices = @transform_8, window_bounds = array<i64: 2, 1, 64>}, {pipeline_mode = #tpu.pipeline_mode<synchronous>, transform_indices = @transform_9, window_bounds = array<i64: 2, 64, 256>}, {pipeline_mode = #tpu.pipeline_mode<synchronous>, transform_indices = @transform_10, window_bounds = array<i64: 2, 1, 256>}, {pipeline_mode = #tpu.pipeline_mode<synchronous>, transform_indices = @transform_11, window_bounds = array<i64: 2, 256, 64>}, {pipeline_mode = #tpu.pipeline_mode<synchronous>, transform_indices = @transform_12, window_bounds = array<i64: 2, 1, 64>}, {pipeline_mode = #tpu.pipeline_mode<synchronous>, transform_indices = @transform_13, window_bounds = array<i64: 2, 1, 64>}, {pipeline_mode = #tpu.pipeline_mode<synchronous>, transform_indices = @transform_14, window_bounds = array<i64: 2, 1, 64>}, {pipeline_mode = #tpu.pipeline_mode<synchronous>, transform_indices = @transform_15, window_bounds = array<i64: 64, 32>}, {pipeline_mode = #tpu.pipeline_mode<synchronous>, transform_indices = @transform_16, window_bounds = array<i64: 1, 32>}, {pipeline_mode = #tpu.pipeline_mode<synchronous>, transform_indices = @transform_17, window_bounds = array<i64: 32, 128>}, {pipeline_mode = #tpu.pipeline_mode<synchronous>, transform_indices = @transform_18, window_bounds = array<i64: 1, 128>}, {transform_indices = @transform_19, window_bounds = array<i64: 1, 1, 128>}]} {
    %c0 = arith.constant 0 : index
    %c0_0 = arith.constant 0 : index
    %c0_1 = arith.constant 0 : index
    %c0_2 = arith.constant 0 : index
    %0 = vector.load %arg1[%c0, %c0_0, %c0_1, %c0_2] : memref<1x1x8x2xf32, #tpu.memory_space<vmem>>, vector<1x1x8x2xf32>
    %1 = vector.shape_cast %0 : vector<1x1x8x2xf32> to vector<1x8x2xf32>
    %2 = vector.shape_cast %1 : vector<1x8x2xf32> to vector<8x2xf32>
    %c0_3 = arith.constant 0 : index
    %c0_4 = arith.constant 0 : index
    %3 = vector.load %arg2[%c0_3, %c0_4] : memref<2x64xf32, #tpu.memory_space<vmem>>, vector<2x64xf32>
    %4 = vector.extract_strided_slice %2 {offsets = [0, 0], sizes = [8, 1], strides = [1, 1]} : vector<8x2xf32> to vector<8x1xf32>
    %5 = vector.extract_strided_slice %3 {offsets = [0, 0], sizes = [1, 64], strides = [1, 1]} : vector<2x64xf32> to vector<1x64xf32>
    %6 = vector.broadcast %4 : vector<8x1xf32> to vector<8x64xf32>
    %7 = vector.broadcast %5 : vector<1x64xf32> to vector<8x64xf32>
    %8 = arith.mulf %6, %7 : vector<8x64xf32>
    %9 = vector.extract_strided_slice %2 {offsets = [0, 1], sizes = [8, 1], strides = [1, 1]} : vector<8x2xf32> to vector<8x1xf32>
    %10 = vector.extract_strided_slice %3 {offsets = [1, 0], sizes = [1, 64], strides = [1, 1]} : vector<2x64xf32> to vector<1x64xf32>
    %11 = vector.broadcast %9 : vector<8x1xf32> to vector<8x64xf32>
    %12 = vector.broadcast %10 : vector<1x64xf32> to vector<8x64xf32>
    %13 = arith.mulf %11, %12 : vector<8x64xf32>
    %14 = arith.addf %8, %13 : vector<8x64xf32>
    %c0_5 = arith.constant 0 : index
    %c0_6 = arith.constant 0 : index
    %15 = vector.load %arg3[%c0_5, %c0_6] : memref<1x64xf32, #tpu.memory_space<vmem>>, vector<1x64xf32>
    %16 = vector.broadcast %15 : vector<1x64xf32> to vector<8x64xf32>
    %17 = arith.addf %14, %16 : vector<8x64xf32>
    %cst = arith.constant 0.000000e+00 : f32
    %18 = vector.broadcast %cst : f32 to vector<8x64xf32>
    %19 = arith.maximumf %17, %18 : vector<8x64xf32>
    %cst_7 = arith.constant 0.000000e+00 : f32
    %20 = vector.broadcast %cst_7 : f32 to vector<8x64xf32>
    %c0_8 = arith.constant 0 : index
    %c0_9 = arith.constant 0 : index
    %c0_10 = arith.constant 0 : index
    %21 = vector.load %arg4[%c0_8, %c0_9, %c0_10] : memref<24x64x16xf32, #tpu.memory_space<vmem>>, vector<1x64x16xf32>
    %22 = vector.shape_cast %21 : vector<1x64x16xf32> to vector<64x16xf32>
    %cst_11 = arith.constant dense<0.000000e+00> : vector<8x16xf32>
    %23 = tpu.matmul %19, %22, %cst_11 {dimension_numbers = #tpu.dot_dimension_numbers<[1], [0], [0], [1], [0, 0, 1, 1], [], []>} : vector<8x64xf32>, vector<64x16xf32>, vector<8x16xf32> -> vector<8x16xf32>
    %c0_12 = arith.constant 0 : index
    %c0_13 = arith.constant 0 : index
    %c0_14 = arith.constant 0 : index
    %24 = vector.load %arg5[%c0_12, %c0_13, %c0_14] : memref<24x1x16xf32, #tpu.memory_space<vmem>>, vector<1x1x16xf32>
    %25 = vector.shape_cast %24 : vector<1x1x16xf32> to vector<1x16xf32>
    %26 = vector.broadcast %25 : vector<1x16xf32> to vector<8x16xf32>
    %27 = arith.addf %23, %26 : vector<8x16xf32>
    %c4 = arith.constant 4 : index
    %c0_15 = arith.constant 0 : index
    %c0_16 = arith.constant 0 : index
    %28 = vector.load %arg4[%c4, %c0_15, %c0_16] : memref<24x64x16xf32, #tpu.memory_space<vmem>>, vector<1x64x16xf32>
    %29 = vector.shape_cast %28 : vector<1x64x16xf32> to vector<64x16xf32>
    %cst_17 = arith.constant dense<0.000000e+00> : vector<8x16xf32>
    %30 = tpu.matmul %19, %29, %cst_17 {dimension_numbers = #tpu.dot_dimension_numbers<[1], [0], [0], [1], [0, 0, 1, 1], [], []>} : vector<8x64xf32>, vector<64x16xf32>, vector<8x16xf32> -> vector<8x16xf32>
    %c4_18 = arith.constant 4 : index
    %c0_19 = arith.constant 0 : index
    %c0_20 = arith.constant 0 : index
    %31 = vector.load %arg5[%c4_18, %c0_19, %c0_20] : memref<24x1x16xf32, #tpu.memory_space<vmem>>, vector<1x1x16xf32>
    %32 = vector.shape_cast %31 : vector<1x1x16xf32> to vector<1x16xf32>
    %33 = vector.broadcast %32 : vector<1x16xf32> to vector<8x16xf32>
    %34 = arith.addf %30, %33 : vector<8x16xf32>
    %c8 = arith.constant 8 : index
    %c0_21 = arith.constant 0 : index
    %c0_22 = arith.constant 0 : index
    %35 = vector.load %arg4[%c8, %c0_21, %c0_22] : memref<24x64x16xf32, #tpu.memory_space<vmem>>, vector<1x64x16xf32>
    %36 = vector.shape_cast %35 : vector<1x64x16xf32> to vector<64x16xf32>
    %cst_23 = arith.constant dense<0.000000e+00> : vector<8x16xf32>
    %37 = tpu.matmul %19, %36, %cst_23 {dimension_numbers = #tpu.dot_dimension_numbers<[1], [0], [0], [1], [0, 0, 1, 1], [], []>} : vector<8x64xf32>, vector<64x16xf32>, vector<8x16xf32> -> vector<8x16xf32>
    %c8_24 = arith.constant 8 : index
    %c0_25 = arith.constant 0 : index
    %c0_26 = arith.constant 0 : index
    %38 = vector.load %arg5[%c8_24, %c0_25, %c0_26] : memref<24x1x16xf32, #tpu.memory_space<vmem>>, vector<1x1x16xf32>
    %39 = vector.shape_cast %38 : vector<1x1x16xf32> to vector<1x16xf32>
    %40 = vector.broadcast %39 : vector<1x16xf32> to vector<8x16xf32>
    %41 = arith.addf %37, %40 : vector<8x16xf32>
    %42 = vector.shape_cast %27 : vector<8x16xf32> to vector<1x8x16xf32>
    %43 = vector.shape_cast %34 : vector<8x16xf32> to vector<1x8x16xf32>
    %44 = vector.shape_cast %41 : vector<8x16xf32> to vector<1x8x16xf32>
    "tpu.trace_start"() <{level = 10 : i32, message = "bqd,bkd->bqk"}> : () -> ()
    %cst_27 = arith.constant dense<0.000000e+00> : vector<1x8x8xf32>
    %45 = tpu.matmul %42, %43, %cst_27 {dimension_numbers = #tpu.dot_dimension_numbers<[2], [2], [1], [1], [0, 0, 0, 1, 1, 1], [0], [0]>} : vector<1x8x16xf32>, vector<1x8x16xf32>, vector<1x8x8xf32> -> vector<1x8x8xf32>
    "tpu.trace_stop"() : () -> ()
    %cst_28 = arith.constant 2.500000e-01 : f32
    %46 = vector.broadcast %cst_28 : f32 to vector<1x8x8xf32>
    %47 = arith.mulf %45, %46 : vector<1x8x8xf32>
    %cst_29 = arith.constant dense<0xFF800000> : vector<1x8xf32>
    %48 = vector.multi_reduction <maximumf>, %47, %cst_29 [2] : vector<1x8x8xf32> to vector<1x8xf32>
    %49 = vector.shape_cast %48 : vector<1x8xf32> to vector<1x8x1xf32>
    %50 = vector.broadcast %49 : vector<1x8x1xf32> to vector<1x8x8xf32>
    %51 = arith.subf %47, %50 : vector<1x8x8xf32>
    %52 = math.exp %51 : vector<1x8x8xf32>
    %cst_30 = arith.constant dense<0.000000e+00> : vector<1x8xf32>
    %53 = vector.multi_reduction <add>, %52, %cst_30 [2] : vector<1x8x8xf32> to vector<1x8xf32>
    %54 = vector.shape_cast %53 : vector<1x8xf32> to vector<1x8x1xf32>
    %55 = vector.broadcast %54 : vector<1x8x1xf32> to vector<1x8x8xf32>
    %56 = arith.divf %52, %55 : vector<1x8x8xf32>
    "tpu.trace_start"() <{level = 10 : i32, message = "bqk,bkd->bqd"}> : () -> ()
    %cst_31 = arith.constant dense<0.000000e+00> : vector<1x8x16xf32>
    %57 = tpu.matmul %56, %44, %cst_31 {dimension_numbers = #tpu.dot_dimension_numbers<[2], [1], [1], [2], [0, 0, 0, 1, 1, 2], [0], [0]>} : vector<1x8x8xf32>, vector<1x8x16xf32>, vector<1x8x16xf32> -> vector<1x8x16xf32>
    "tpu.trace_stop"() : () -> ()
    %58 = vector.shape_cast %57 : vector<1x8x16xf32> to vector<8x16xf32>
    %c0_32 = arith.constant 0 : index
    %c0_33 = arith.constant 0 : index
    %c0_34 = arith.constant 0 : index
    %59 = vector.load %arg6[%c0_32, %c0_33, %c0_34] : memref<8x16x64xf32, #tpu.memory_space<vmem>>, vector<1x16x64xf32>
    %60 = vector.shape_cast %59 : vector<1x16x64xf32> to vector<16x64xf32>
    %cst_35 = arith.constant dense<0.000000e+00> : vector<8x64xf32>
    %61 = tpu.matmul %58, %60, %cst_35 {dimension_numbers = #tpu.dot_dimension_numbers<[1], [0], [0], [1], [0, 0, 1, 1], [], []>} : vector<8x16xf32>, vector<16x64xf32>, vector<8x64xf32> -> vector<8x64xf32>
    %62 = arith.addf %20, %61 : vector<8x64xf32>
    %c1 = arith.constant 1 : index
    %c0_36 = arith.constant 0 : index
    %c0_37 = arith.constant 0 : index
    %63 = vector.load %arg4[%c1, %c0_36, %c0_37] : memref<24x64x16xf32, #tpu.memory_space<vmem>>, vector<1x64x16xf32>
    %64 = vector.shape_cast %63 : vector<1x64x16xf32> to vector<64x16xf32>
    %cst_38 = arith.constant dense<0.000000e+00> : vector<8x16xf32>
    %65 = tpu.matmul %19, %64, %cst_38 {dimension_numbers = #tpu.dot_dimension_numbers<[1], [0], [0], [1], [0, 0, 1, 1], [], []>} : vector<8x64xf32>, vector<64x16xf32>, vector<8x16xf32> -> vector<8x16xf32>
    %c1_39 = arith.constant 1 : index
    %c0_40 = arith.constant 0 : index
    %c0_41 = arith.constant 0 : index
    %66 = vector.load %arg5[%c1_39, %c0_40, %c0_41] : memref<24x1x16xf32, #tpu.memory_space<vmem>>, vector<1x1x16xf32>
    %67 = vector.shape_cast %66 : vector<1x1x16xf32> to vector<1x16xf32>
    %68 = vector.broadcast %67 : vector<1x16xf32> to vector<8x16xf32>
    %69 = arith.addf %65, %68 : vector<8x16xf32>
    %c5 = arith.constant 5 : index
    %c0_42 = arith.constant 0 : index
    %c0_43 = arith.constant 0 : index
    %70 = vector.load %arg4[%c5, %c0_42, %c0_43] : memref<24x64x16xf32, #tpu.memory_space<vmem>>, vector<1x64x16xf32>
    %71 = vector.shape_cast %70 : vector<1x64x16xf32> to vector<64x16xf32>
    %cst_44 = arith.constant dense<0.000000e+00> : vector<8x16xf32>
    %72 = tpu.matmul %19, %71, %cst_44 {dimension_numbers = #tpu.dot_dimension_numbers<[1], [0], [0], [1], [0, 0, 1, 1], [], []>} : vector<8x64xf32>, vector<64x16xf32>, vector<8x16xf32> -> vector<8x16xf32>
    %c5_45 = arith.constant 5 : index
    %c0_46 = arith.constant 0 : index
    %c0_47 = arith.constant 0 : index
    %73 = vector.load %arg5[%c5_45, %c0_46, %c0_47] : memref<24x1x16xf32, #tpu.memory_space<vmem>>, vector<1x1x16xf32>
    %74 = vector.shape_cast %73 : vector<1x1x16xf32> to vector<1x16xf32>
    %75 = vector.broadcast %74 : vector<1x16xf32> to vector<8x16xf32>
    %76 = arith.addf %72, %75 : vector<8x16xf32>
    %c9 = arith.constant 9 : index
    %c0_48 = arith.constant 0 : index
    %c0_49 = arith.constant 0 : index
    %77 = vector.load %arg4[%c9, %c0_48, %c0_49] : memref<24x64x16xf32, #tpu.memory_space<vmem>>, vector<1x64x16xf32>
    %78 = vector.shape_cast %77 : vector<1x64x16xf32> to vector<64x16xf32>
    %cst_50 = arith.constant dense<0.000000e+00> : vector<8x16xf32>
    %79 = tpu.matmul %19, %78, %cst_50 {dimension_numbers = #tpu.dot_dimension_numbers<[1], [0], [0], [1], [0, 0, 1, 1], [], []>} : vector<8x64xf32>, vector<64x16xf32>, vector<8x16xf32> -> vector<8x16xf32>
    %c9_51 = arith.constant 9 : index
    %c0_52 = arith.constant 0 : index
    %c0_53 = arith.constant 0 : index
    %80 = vector.load %arg5[%c9_51, %c0_52, %c0_53] : memref<24x1x16xf32, #tpu.memory_space<vmem>>, vector<1x1x16xf32>
    %81 = vector.shape_cast %80 : vector<1x1x16xf32> to vector<1x16xf32>
    %82 = vector.broadcast %81 : vector<1x16xf32> to vector<8x16xf32>
    %83 = arith.addf %79, %82 : vector<8x16xf32>
    %84 = vector.shape_cast %69 : vector<8x16xf32> to vector<1x8x16xf32>
    %85 = vector.shape_cast %76 : vector<8x16xf32> to vector<1x8x16xf32>
    %86 = vector.shape_cast %83 : vector<8x16xf32> to vector<1x8x16xf32>
    "tpu.trace_start"() <{level = 10 : i32, message = "bqd,bkd->bqk"}> : () -> ()
    %cst_54 = arith.constant dense<0.000000e+00> : vector<1x8x8xf32>
    %87 = tpu.matmul %84, %85, %cst_54 {dimension_numbers = #tpu.dot_dimension_numbers<[2], [2], [1], [1], [0, 0, 0, 1, 1, 1], [0], [0]>} : vector<1x8x16xf32>, vector<1x8x16xf32>, vector<1x8x8xf32> -> vector<1x8x8xf32>
    "tpu.trace_stop"() : () -> ()
    %cst_55 = arith.constant 2.500000e-01 : f32
    %88 = vector.broadcast %cst_55 : f32 to vector<1x8x8xf32>
    %89 = arith.mulf %87, %88 : vector<1x8x8xf32>
    %cst_56 = arith.constant dense<0xFF800000> : vector<1x8xf32>
    %90 = vector.multi_reduction <maximumf>, %89, %cst_56 [2] : vector<1x8x8xf32> to vector<1x8xf32>
    %91 = vector.shape_cast %90 : vector<1x8xf32> to vector<1x8x1xf32>
    %92 = vector.broadcast %91 : vector<1x8x1xf32> to vector<1x8x8xf32>
    %93 = arith.subf %89, %92 : vector<1x8x8xf32>
    %94 = math.exp %93 : vector<1x8x8xf32>
    %cst_57 = arith.constant dense<0.000000e+00> : vector<1x8xf32>
    %95 = vector.multi_reduction <add>, %94, %cst_57 [2] : vector<1x8x8xf32> to vector<1x8xf32>
    %96 = vector.shape_cast %95 : vector<1x8xf32> to vector<1x8x1xf32>
    %97 = vector.broadcast %96 : vector<1x8x1xf32> to vector<1x8x8xf32>
    %98 = arith.divf %94, %97 : vector<1x8x8xf32>
    "tpu.trace_start"() <{level = 10 : i32, message = "bqk,bkd->bqd"}> : () -> ()
    %cst_58 = arith.constant dense<0.000000e+00> : vector<1x8x16xf32>
    %99 = tpu.matmul %98, %86, %cst_58 {dimension_numbers = #tpu.dot_dimension_numbers<[2], [1], [1], [2], [0, 0, 0, 1, 1, 2], [0], [0]>} : vector<1x8x8xf32>, vector<1x8x16xf32>, vector<1x8x16xf32> -> vector<1x8x16xf32>
    "tpu.trace_stop"() : () -> ()
    %100 = vector.shape_cast %99 : vector<1x8x16xf32> to vector<8x16xf32>
    %c1_59 = arith.constant 1 : index
    %c0_60 = arith.constant 0 : index
    %c0_61 = arith.constant 0 : index
    %101 = vector.load %arg6[%c1_59, %c0_60, %c0_61] : memref<8x16x64xf32, #tpu.memory_space<vmem>>, vector<1x16x64xf32>
    %102 = vector.shape_cast %101 : vector<1x16x64xf32> to vector<16x64xf32>
    %cst_62 = arith.constant dense<0.000000e+00> : vector<8x64xf32>
    %103 = tpu.matmul %100, %102, %cst_62 {dimension_numbers = #tpu.dot_dimension_numbers<[1], [0], [0], [1], [0, 0, 1, 1], [], []>} : vector<8x16xf32>, vector<16x64xf32>, vector<8x64xf32> -> vector<8x64xf32>
    %104 = arith.addf %62, %103 : vector<8x64xf32>
    %c2 = arith.constant 2 : index
    %c0_63 = arith.constant 0 : index
    %c0_64 = arith.constant 0 : index
    %105 = vector.load %arg4[%c2, %c0_63, %c0_64] : memref<24x64x16xf32, #tpu.memory_space<vmem>>, vector<1x64x16xf32>
    %106 = vector.shape_cast %105 : vector<1x64x16xf32> to vector<64x16xf32>
    %cst_65 = arith.constant dense<0.000000e+00> : vector<8x16xf32>
    %107 = tpu.matmul %19, %106, %cst_65 {dimension_numbers = #tpu.dot_dimension_numbers<[1], [0], [0], [1], [0, 0, 1, 1], [], []>} : vector<8x64xf32>, vector<64x16xf32>, vector<8x16xf32> -> vector<8x16xf32>
    %c2_66 = arith.constant 2 : index
    %c0_67 = arith.constant 0 : index
    %c0_68 = arith.constant 0 : index
    %108 = vector.load %arg5[%c2_66, %c0_67, %c0_68] : memref<24x1x16xf32, #tpu.memory_space<vmem>>, vector<1x1x16xf32>
    %109 = vector.shape_cast %108 : vector<1x1x16xf32> to vector<1x16xf32>
    %110 = vector.broadcast %109 : vector<1x16xf32> to vector<8x16xf32>
    %111 = arith.addf %107, %110 : vector<8x16xf32>
    %c6 = arith.constant 6 : index
    %c0_69 = arith.constant 0 : index
    %c0_70 = arith.constant 0 : index
    %112 = vector.load %arg4[%c6, %c0_69, %c0_70] : memref<24x64x16xf32, #tpu.memory_space<vmem>>, vector<1x64x16xf32>
    %113 = vector.shape_cast %112 : vector<1x64x16xf32> to vector<64x16xf32>
    %cst_71 = arith.constant dense<0.000000e+00> : vector<8x16xf32>
    %114 = tpu.matmul %19, %113, %cst_71 {dimension_numbers = #tpu.dot_dimension_numbers<[1], [0], [0], [1], [0, 0, 1, 1], [], []>} : vector<8x64xf32>, vector<64x16xf32>, vector<8x16xf32> -> vector<8x16xf32>
    %c6_72 = arith.constant 6 : index
    %c0_73 = arith.constant 0 : index
    %c0_74 = arith.constant 0 : index
    %115 = vector.load %arg5[%c6_72, %c0_73, %c0_74] : memref<24x1x16xf32, #tpu.memory_space<vmem>>, vector<1x1x16xf32>
    %116 = vector.shape_cast %115 : vector<1x1x16xf32> to vector<1x16xf32>
    %117 = vector.broadcast %116 : vector<1x16xf32> to vector<8x16xf32>
    %118 = arith.addf %114, %117 : vector<8x16xf32>
    %c10 = arith.constant 10 : index
    %c0_75 = arith.constant 0 : index
    %c0_76 = arith.constant 0 : index
    %119 = vector.load %arg4[%c10, %c0_75, %c0_76] : memref<24x64x16xf32, #tpu.memory_space<vmem>>, vector<1x64x16xf32>
    %120 = vector.shape_cast %119 : vector<1x64x16xf32> to vector<64x16xf32>
    %cst_77 = arith.constant dense<0.000000e+00> : vector<8x16xf32>
    %121 = tpu.matmul %19, %120, %cst_77 {dimension_numbers = #tpu.dot_dimension_numbers<[1], [0], [0], [1], [0, 0, 1, 1], [], []>} : vector<8x64xf32>, vector<64x16xf32>, vector<8x16xf32> -> vector<8x16xf32>
    %c10_78 = arith.constant 10 : index
    %c0_79 = arith.constant 0 : index
    %c0_80 = arith.constant 0 : index
    %122 = vector.load %arg5[%c10_78, %c0_79, %c0_80] : memref<24x1x16xf32, #tpu.memory_space<vmem>>, vector<1x1x16xf32>
    %123 = vector.shape_cast %122 : vector<1x1x16xf32> to vector<1x16xf32>
    %124 = vector.broadcast %123 : vector<1x16xf32> to vector<8x16xf32>
    %125 = arith.addf %121, %124 : vector<8x16xf32>
    %126 = vector.shape_cast %111 : vector<8x16xf32> to vector<1x8x16xf32>
    %127 = vector.shape_cast %118 : vector<8x16xf32> to vector<1x8x16xf32>
    %128 = vector.shape_cast %125 : vector<8x16xf32> to vector<1x8x16xf32>
    "tpu.trace_start"() <{level = 10 : i32, message = "bqd,bkd->bqk"}> : () -> ()
    %cst_81 = arith.constant dense<0.000000e+00> : vector<1x8x8xf32>
    %129 = tpu.matmul %126, %127, %cst_81 {dimension_numbers = #tpu.dot_dimension_numbers<[2], [2], [1], [1], [0, 0, 0, 1, 1, 1], [0], [0]>} : vector<1x8x16xf32>, vector<1x8x16xf32>, vector<1x8x8xf32> -> vector<1x8x8xf32>
    "tpu.trace_stop"() : () -> ()
    %cst_82 = arith.constant 2.500000e-01 : f32
    %130 = vector.broadcast %cst_82 : f32 to vector<1x8x8xf32>
    %131 = arith.mulf %129, %130 : vector<1x8x8xf32>
    %cst_83 = arith.constant dense<0xFF800000> : vector<1x8xf32>
    %132 = vector.multi_reduction <maximumf>, %131, %cst_83 [2] : vector<1x8x8xf32> to vector<1x8xf32>
    %133 = vector.shape_cast %132 : vector<1x8xf32> to vector<1x8x1xf32>
    %134 = vector.broadcast %133 : vector<1x8x1xf32> to vector<1x8x8xf32>
    %135 = arith.subf %131, %134 : vector<1x8x8xf32>
    %136 = math.exp %135 : vector<1x8x8xf32>
    %cst_84 = arith.constant dense<0.000000e+00> : vector<1x8xf32>
    %137 = vector.multi_reduction <add>, %136, %cst_84 [2] : vector<1x8x8xf32> to vector<1x8xf32>
    %138 = vector.shape_cast %137 : vector<1x8xf32> to vector<1x8x1xf32>
    %139 = vector.broadcast %138 : vector<1x8x1xf32> to vector<1x8x8xf32>
    %140 = arith.divf %136, %139 : vector<1x8x8xf32>
    "tpu.trace_start"() <{level = 10 : i32, message = "bqk,bkd->bqd"}> : () -> ()
    %cst_85 = arith.constant dense<0.000000e+00> : vector<1x8x16xf32>
    %141 = tpu.matmul %140, %128, %cst_85 {dimension_numbers = #tpu.dot_dimension_numbers<[2], [1], [1], [2], [0, 0, 0, 1, 1, 2], [0], [0]>} : vector<1x8x8xf32>, vector<1x8x16xf32>, vector<1x8x16xf32> -> vector<1x8x16xf32>
    "tpu.trace_stop"() : () -> ()
    %142 = vector.shape_cast %141 : vector<1x8x16xf32> to vector<8x16xf32>
    %c2_86 = arith.constant 2 : index
    %c0_87 = arith.constant 0 : index
    %c0_88 = arith.constant 0 : index
    %143 = vector.load %arg6[%c2_86, %c0_87, %c0_88] : memref<8x16x64xf32, #tpu.memory_space<vmem>>, vector<1x16x64xf32>
    %144 = vector.shape_cast %143 : vector<1x16x64xf32> to vector<16x64xf32>
    %cst_89 = arith.constant dense<0.000000e+00> : vector<8x64xf32>
    %145 = tpu.matmul %142, %144, %cst_89 {dimension_numbers = #tpu.dot_dimension_numbers<[1], [0], [0], [1], [0, 0, 1, 1], [], []>} : vector<8x16xf32>, vector<16x64xf32>, vector<8x64xf32> -> vector<8x64xf32>
    %146 = arith.addf %104, %145 : vector<8x64xf32>
    %c3 = arith.constant 3 : index
    %c0_90 = arith.constant 0 : index
    %c0_91 = arith.constant 0 : index
    %147 = vector.load %arg4[%c3, %c0_90, %c0_91] : memref<24x64x16xf32, #tpu.memory_space<vmem>>, vector<1x64x16xf32>
    %148 = vector.shape_cast %147 : vector<1x64x16xf32> to vector<64x16xf32>
    %cst_92 = arith.constant dense<0.000000e+00> : vector<8x16xf32>
    %149 = tpu.matmul %19, %148, %cst_92 {dimension_numbers = #tpu.dot_dimension_numbers<[1], [0], [0], [1], [0, 0, 1, 1], [], []>} : vector<8x64xf32>, vector<64x16xf32>, vector<8x16xf32> -> vector<8x16xf32>
    %c3_93 = arith.constant 3 : index
    %c0_94 = arith.constant 0 : index
    %c0_95 = arith.constant 0 : index
    %150 = vector.load %arg5[%c3_93, %c0_94, %c0_95] : memref<24x1x16xf32, #tpu.memory_space<vmem>>, vector<1x1x16xf32>
    %151 = vector.shape_cast %150 : vector<1x1x16xf32> to vector<1x16xf32>
    %152 = vector.broadcast %151 : vector<1x16xf32> to vector<8x16xf32>
    %153 = arith.addf %149, %152 : vector<8x16xf32>
    %c7 = arith.constant 7 : index
    %c0_96 = arith.constant 0 : index
    %c0_97 = arith.constant 0 : index
    %154 = vector.load %arg4[%c7, %c0_96, %c0_97] : memref<24x64x16xf32, #tpu.memory_space<vmem>>, vector<1x64x16xf32>
    %155 = vector.shape_cast %154 : vector<1x64x16xf32> to vector<64x16xf32>
    %cst_98 = arith.constant dense<0.000000e+00> : vector<8x16xf32>
    %156 = tpu.matmul %19, %155, %cst_98 {dimension_numbers = #tpu.dot_dimension_numbers<[1], [0], [0], [1], [0, 0, 1, 1], [], []>} : vector<8x64xf32>, vector<64x16xf32>, vector<8x16xf32> -> vector<8x16xf32>
    %c7_99 = arith.constant 7 : index
    %c0_100 = arith.constant 0 : index
    %c0_101 = arith.constant 0 : index
    %157 = vector.load %arg5[%c7_99, %c0_100, %c0_101] : memref<24x1x16xf32, #tpu.memory_space<vmem>>, vector<1x1x16xf32>
    %158 = vector.shape_cast %157 : vector<1x1x16xf32> to vector<1x16xf32>
    %159 = vector.broadcast %158 : vector<1x16xf32> to vector<8x16xf32>
    %160 = arith.addf %156, %159 : vector<8x16xf32>
    %c11 = arith.constant 11 : index
    %c0_102 = arith.constant 0 : index
    %c0_103 = arith.constant 0 : index
    %161 = vector.load %arg4[%c11, %c0_102, %c0_103] : memref<24x64x16xf32, #tpu.memory_space<vmem>>, vector<1x64x16xf32>
    %162 = vector.shape_cast %161 : vector<1x64x16xf32> to vector<64x16xf32>
    %cst_104 = arith.constant dense<0.000000e+00> : vector<8x16xf32>
    %163 = tpu.matmul %19, %162, %cst_104 {dimension_numbers = #tpu.dot_dimension_numbers<[1], [0], [0], [1], [0, 0, 1, 1], [], []>} : vector<8x64xf32>, vector<64x16xf32>, vector<8x16xf32> -> vector<8x16xf32>
    %c11_105 = arith.constant 11 : index
    %c0_106 = arith.constant 0 : index
    %c0_107 = arith.constant 0 : index
    %164 = vector.load %arg5[%c11_105, %c0_106, %c0_107] : memref<24x1x16xf32, #tpu.memory_space<vmem>>, vector<1x1x16xf32>
    %165 = vector.shape_cast %164 : vector<1x1x16xf32> to vector<1x16xf32>
    %166 = vector.broadcast %165 : vector<1x16xf32> to vector<8x16xf32>
    %167 = arith.addf %163, %166 : vector<8x16xf32>
    %168 = vector.shape_cast %153 : vector<8x16xf32> to vector<1x8x16xf32>
    %169 = vector.shape_cast %160 : vector<8x16xf32> to vector<1x8x16xf32>
    %170 = vector.shape_cast %167 : vector<8x16xf32> to vector<1x8x16xf32>
    "tpu.trace_start"() <{level = 10 : i32, message = "bqd,bkd->bqk"}> : () -> ()
    %cst_108 = arith.constant dense<0.000000e+00> : vector<1x8x8xf32>
    %171 = tpu.matmul %168, %169, %cst_108 {dimension_numbers = #tpu.dot_dimension_numbers<[2], [2], [1], [1], [0, 0, 0, 1, 1, 1], [0], [0]>} : vector<1x8x16xf32>, vector<1x8x16xf32>, vector<1x8x8xf32> -> vector<1x8x8xf32>
    "tpu.trace_stop"() : () -> ()
    %cst_109 = arith.constant 2.500000e-01 : f32
    %172 = vector.broadcast %cst_109 : f32 to vector<1x8x8xf32>
    %173 = arith.mulf %171, %172 : vector<1x8x8xf32>
    %cst_110 = arith.constant dense<0xFF800000> : vector<1x8xf32>
    %174 = vector.multi_reduction <maximumf>, %173, %cst_110 [2] : vector<1x8x8xf32> to vector<1x8xf32>
    %175 = vector.shape_cast %174 : vector<1x8xf32> to vector<1x8x1xf32>
    %176 = vector.broadcast %175 : vector<1x8x1xf32> to vector<1x8x8xf32>
    %177 = arith.subf %173, %176 : vector<1x8x8xf32>
    %178 = math.exp %177 : vector<1x8x8xf32>
    %cst_111 = arith.constant dense<0.000000e+00> : vector<1x8xf32>
    %179 = vector.multi_reduction <add>, %178, %cst_111 [2] : vector<1x8x8xf32> to vector<1x8xf32>
    %180 = vector.shape_cast %179 : vector<1x8xf32> to vector<1x8x1xf32>
    %181 = vector.broadcast %180 : vector<1x8x1xf32> to vector<1x8x8xf32>
    %182 = arith.divf %178, %181 : vector<1x8x8xf32>
    "tpu.trace_start"() <{level = 10 : i32, message = "bqk,bkd->bqd"}> : () -> ()
    %cst_112 = arith.constant dense<0.000000e+00> : vector<1x8x16xf32>
    %183 = tpu.matmul %182, %170, %cst_112 {dimension_numbers = #tpu.dot_dimension_numbers<[2], [1], [1], [2], [0, 0, 0, 1, 1, 2], [0], [0]>} : vector<1x8x8xf32>, vector<1x8x16xf32>, vector<1x8x16xf32> -> vector<1x8x16xf32>
    "tpu.trace_stop"() : () -> ()
    %184 = vector.shape_cast %183 : vector<1x8x16xf32> to vector<8x16xf32>
    %c3_113 = arith.constant 3 : index
    %c0_114 = arith.constant 0 : index
    %c0_115 = arith.constant 0 : index
    %185 = vector.load %arg6[%c3_113, %c0_114, %c0_115] : memref<8x16x64xf32, #tpu.memory_space<vmem>>, vector<1x16x64xf32>
    %186 = vector.shape_cast %185 : vector<1x16x64xf32> to vector<16x64xf32>
    %cst_116 = arith.constant dense<0.000000e+00> : vector<8x64xf32>
    %187 = tpu.matmul %184, %186, %cst_116 {dimension_numbers = #tpu.dot_dimension_numbers<[1], [0], [0], [1], [0, 0, 1, 1], [], []>} : vector<8x16xf32>, vector<16x64xf32>, vector<8x64xf32> -> vector<8x64xf32>
    %188 = arith.addf %146, %187 : vector<8x64xf32>
    %c0_117 = arith.constant 0 : index
    %c0_118 = arith.constant 0 : index
    %c0_119 = arith.constant 0 : index
    %189 = vector.load %arg7[%c0_117, %c0_118, %c0_119] : memref<2x1x64xf32, #tpu.memory_space<vmem>>, vector<1x1x64xf32>
    %190 = vector.shape_cast %189 : vector<1x1x64xf32> to vector<1x64xf32>
    %191 = vector.broadcast %190 : vector<1x64xf32> to vector<8x64xf32>
    %192 = arith.addf %188, %191 : vector<8x64xf32>
    %193 = arith.addf %19, %192 : vector<8x64xf32>
    %c0_120 = arith.constant 0 : index
    %c0_121 = arith.constant 0 : index
    %c0_122 = arith.constant 0 : index
    %194 = vector.load %arg8[%c0_120, %c0_121, %c0_122] : memref<2x1x64xf32, #tpu.memory_space<vmem>>, vector<1x1x64xf32>
    %195 = vector.shape_cast %194 : vector<1x1x64xf32> to vector<1x64xf32>
    %c0_123 = arith.constant 0 : index
    %c0_124 = arith.constant 0 : index
    %c0_125 = arith.constant 0 : index
    %196 = vector.load %arg9[%c0_123, %c0_124, %c0_125] : memref<2x1x64xf32, #tpu.memory_space<vmem>>, vector<1x1x64xf32>
    %197 = vector.shape_cast %196 : vector<1x1x64xf32> to vector<1x64xf32>
    %cst_126 = arith.constant dense<0.000000e+00> : vector<8xf32>
    %198 = vector.multi_reduction <add>, %193, %cst_126 [1] : vector<8x64xf32> to vector<8xf32>
    %199 = vector.shape_cast %198 : vector<8xf32> to vector<8x1xf32>
    %cst_127 = arith.constant 6.400000e+01 : f32
    %200 = vector.broadcast %cst_127 : f32 to vector<8x1xf32>
    %201 = arith.divf %199, %200 : vector<8x1xf32>
    %202 = vector.broadcast %201 : vector<8x1xf32> to vector<8x64xf32>
    %203 = arith.subf %193, %202 : vector<8x64xf32>
    %204 = arith.mulf %203, %203 : vector<8x64xf32>
    %cst_128 = arith.constant dense<0.000000e+00> : vector<8xf32>
    %205 = vector.multi_reduction <add>, %204, %cst_128 [1] : vector<8x64xf32> to vector<8xf32>
    %206 = vector.shape_cast %205 : vector<8xf32> to vector<8x1xf32>
    %cst_129 = arith.constant 6.400000e+01 : f32
    %207 = vector.broadcast %cst_129 : f32 to vector<8x1xf32>
    %208 = arith.divf %206, %207 : vector<8x1xf32>
    %cst_130 = arith.constant 9.99999974E-6 : f32
    %209 = vector.broadcast %cst_130 : f32 to vector<8x1xf32>
    %210 = arith.addf %208, %209 : vector<8x1xf32>
    %211 = math.rsqrt %210 : vector<8x1xf32>
    %212 = vector.broadcast %211 : vector<8x1xf32> to vector<8x64xf32>
    %213 = arith.mulf %203, %212 : vector<8x64xf32>
    %214 = vector.broadcast %195 : vector<1x64xf32> to vector<8x64xf32>
    %215 = arith.mulf %213, %214 : vector<8x64xf32>
    %216 = vector.broadcast %197 : vector<1x64xf32> to vector<8x64xf32>
    %217 = arith.addf %215, %216 : vector<8x64xf32>
    %c0_131 = arith.constant 0 : index
    %c0_132 = arith.constant 0 : index
    %c0_133 = arith.constant 0 : index
    %218 = vector.load %arg10[%c0_131, %c0_132, %c0_133] : memref<2x64x256xf32, #tpu.memory_space<vmem>>, vector<1x64x256xf32>
    %219 = vector.shape_cast %218 : vector<1x64x256xf32> to vector<64x256xf32>
    %cst_134 = arith.constant dense<0.000000e+00> : vector<8x256xf32>
    %220 = tpu.matmul %217, %219, %cst_134 {dimension_numbers = #tpu.dot_dimension_numbers<[1], [0], [0], [1], [0, 0, 1, 1], [], []>} : vector<8x64xf32>, vector<64x256xf32>, vector<8x256xf32> -> vector<8x256xf32>
    %c0_135 = arith.constant 0 : index
    %c0_136 = arith.constant 0 : index
    %c0_137 = arith.constant 0 : index
    %221 = vector.load %arg11[%c0_135, %c0_136, %c0_137] : memref<2x1x256xf32, #tpu.memory_space<vmem>>, vector<1x1x256xf32>
    %222 = vector.shape_cast %221 : vector<1x1x256xf32> to vector<1x256xf32>
    %223 = vector.broadcast %222 : vector<1x256xf32> to vector<8x256xf32>
    %224 = arith.addf %220, %223 : vector<8x256xf32>
    %cst_138 = arith.constant 0.000000e+00 : f32
    %225 = vector.broadcast %cst_138 : f32 to vector<8x256xf32>
    %226 = arith.maximumf %224, %225 : vector<8x256xf32>
    %c0_139 = arith.constant 0 : index
    %c0_140 = arith.constant 0 : index
    %c0_141 = arith.constant 0 : index
    %227 = vector.load %arg12[%c0_139, %c0_140, %c0_141] : memref<2x256x64xf32, #tpu.memory_space<vmem>>, vector<1x256x64xf32>
    %228 = vector.shape_cast %227 : vector<1x256x64xf32> to vector<256x64xf32>
    %cst_142 = arith.constant dense<0.000000e+00> : vector<8x64xf32>
    %229 = tpu.matmul %226, %228, %cst_142 {dimension_numbers = #tpu.dot_dimension_numbers<[1], [0], [0], [1], [0, 0, 1, 1], [], []>} : vector<8x256xf32>, vector<256x64xf32>, vector<8x64xf32> -> vector<8x64xf32>
    %c0_143 = arith.constant 0 : index
    %c0_144 = arith.constant 0 : index
    %c0_145 = arith.constant 0 : index
    %230 = vector.load %arg13[%c0_143, %c0_144, %c0_145] : memref<2x1x64xf32, #tpu.memory_space<vmem>>, vector<1x1x64xf32>
    %231 = vector.shape_cast %230 : vector<1x1x64xf32> to vector<1x64xf32>
    %232 = vector.broadcast %231 : vector<1x64xf32> to vector<8x64xf32>
    %233 = arith.addf %229, %232 : vector<8x64xf32>
    %234 = arith.addf %217, %233 : vector<8x64xf32>
    %c0_146 = arith.constant 0 : index
    %c0_147 = arith.constant 0 : index
    %c0_148 = arith.constant 0 : index
    %235 = vector.load %arg14[%c0_146, %c0_147, %c0_148] : memref<2x1x64xf32, #tpu.memory_space<vmem>>, vector<1x1x64xf32>
    %236 = vector.shape_cast %235 : vector<1x1x64xf32> to vector<1x64xf32>
    %c0_149 = arith.constant 0 : index
    %c0_150 = arith.constant 0 : index
    %c0_151 = arith.constant 0 : index
    %237 = vector.load %arg15[%c0_149, %c0_150, %c0_151] : memref<2x1x64xf32, #tpu.memory_space<vmem>>, vector<1x1x64xf32>
    %238 = vector.shape_cast %237 : vector<1x1x64xf32> to vector<1x64xf32>
    %cst_152 = arith.constant dense<0.000000e+00> : vector<8xf32>
    %239 = vector.multi_reduction <add>, %234, %cst_152 [1] : vector<8x64xf32> to vector<8xf32>
    %240 = vector.shape_cast %239 : vector<8xf32> to vector<8x1xf32>
    %cst_153 = arith.constant 6.400000e+01 : f32
    %241 = vector.broadcast %cst_153 : f32 to vector<8x1xf32>
    %242 = arith.divf %240, %241 : vector<8x1xf32>
    %243 = vector.broadcast %242 : vector<8x1xf32> to vector<8x64xf32>
    %244 = arith.subf %234, %243 : vector<8x64xf32>
    %245 = arith.mulf %244, %244 : vector<8x64xf32>
    %cst_154 = arith.constant dense<0.000000e+00> : vector<8xf32>
    %246 = vector.multi_reduction <add>, %245, %cst_154 [1] : vector<8x64xf32> to vector<8xf32>
    %247 = vector.shape_cast %246 : vector<8xf32> to vector<8x1xf32>
    %cst_155 = arith.constant 6.400000e+01 : f32
    %248 = vector.broadcast %cst_155 : f32 to vector<8x1xf32>
    %249 = arith.divf %247, %248 : vector<8x1xf32>
    %cst_156 = arith.constant 9.99999974E-6 : f32
    %250 = vector.broadcast %cst_156 : f32 to vector<8x1xf32>
    %251 = arith.addf %249, %250 : vector<8x1xf32>
    %252 = math.rsqrt %251 : vector<8x1xf32>
    %253 = vector.broadcast %252 : vector<8x1xf32> to vector<8x64xf32>
    %254 = arith.mulf %244, %253 : vector<8x64xf32>
    %255 = vector.broadcast %236 : vector<1x64xf32> to vector<8x64xf32>
    %256 = arith.mulf %254, %255 : vector<8x64xf32>
    %257 = vector.broadcast %238 : vector<1x64xf32> to vector<8x64xf32>
    %258 = arith.addf %256, %257 : vector<8x64xf32>
    %cst_157 = arith.constant 0.000000e+00 : f32
    %259 = vector.broadcast %cst_157 : f32 to vector<8x64xf32>
    %c12 = arith.constant 12 : index
    %c0_158 = arith.constant 0 : index
    %c0_159 = arith.constant 0 : index
    %260 = vector.load %arg4[%c12, %c0_158, %c0_159] : memref<24x64x16xf32, #tpu.memory_space<vmem>>, vector<1x64x16xf32>
    %261 = vector.shape_cast %260 : vector<1x64x16xf32> to vector<64x16xf32>
    %cst_160 = arith.constant dense<0.000000e+00> : vector<8x16xf32>
    %262 = tpu.matmul %258, %261, %cst_160 {dimension_numbers = #tpu.dot_dimension_numbers<[1], [0], [0], [1], [0, 0, 1, 1], [], []>} : vector<8x64xf32>, vector<64x16xf32>, vector<8x16xf32> -> vector<8x16xf32>
    %c12_161 = arith.constant 12 : index
    %c0_162 = arith.constant 0 : index
    %c0_163 = arith.constant 0 : index
    %263 = vector.load %arg5[%c12_161, %c0_162, %c0_163] : memref<24x1x16xf32, #tpu.memory_space<vmem>>, vector<1x1x16xf32>
    %264 = vector.shape_cast %263 : vector<1x1x16xf32> to vector<1x16xf32>
    %265 = vector.broadcast %264 : vector<1x16xf32> to vector<8x16xf32>
    %266 = arith.addf %262, %265 : vector<8x16xf32>
    %c16 = arith.constant 16 : index
    %c0_164 = arith.constant 0 : index
    %c0_165 = arith.constant 0 : index
    %267 = vector.load %arg4[%c16, %c0_164, %c0_165] : memref<24x64x16xf32, #tpu.memory_space<vmem>>, vector<1x64x16xf32>
    %268 = vector.shape_cast %267 : vector<1x64x16xf32> to vector<64x16xf32>
    %cst_166 = arith.constant dense<0.000000e+00> : vector<8x16xf32>
    %269 = tpu.matmul %258, %268, %cst_166 {dimension_numbers = #tpu.dot_dimension_numbers<[1], [0], [0], [1], [0, 0, 1, 1], [], []>} : vector<8x64xf32>, vector<64x16xf32>, vector<8x16xf32> -> vector<8x16xf32>
    %c16_167 = arith.constant 16 : index
    %c0_168 = arith.constant 0 : index
    %c0_169 = arith.constant 0 : index
    %270 = vector.load %arg5[%c16_167, %c0_168, %c0_169] : memref<24x1x16xf32, #tpu.memory_space<vmem>>, vector<1x1x16xf32>
    %271 = vector.shape_cast %270 : vector<1x1x16xf32> to vector<1x16xf32>
    %272 = vector.broadcast %271 : vector<1x16xf32> to vector<8x16xf32>
    %273 = arith.addf %269, %272 : vector<8x16xf32>
    %c20 = arith.constant 20 : index
    %c0_170 = arith.constant 0 : index
    %c0_171 = arith.constant 0 : index
    %274 = vector.load %arg4[%c20, %c0_170, %c0_171] : memref<24x64x16xf32, #tpu.memory_space<vmem>>, vector<1x64x16xf32>
    %275 = vector.shape_cast %274 : vector<1x64x16xf32> to vector<64x16xf32>
    %cst_172 = arith.constant dense<0.000000e+00> : vector<8x16xf32>
    %276 = tpu.matmul %258, %275, %cst_172 {dimension_numbers = #tpu.dot_dimension_numbers<[1], [0], [0], [1], [0, 0, 1, 1], [], []>} : vector<8x64xf32>, vector<64x16xf32>, vector<8x16xf32> -> vector<8x16xf32>
    %c20_173 = arith.constant 20 : index
    %c0_174 = arith.constant 0 : index
    %c0_175 = arith.constant 0 : index
    %277 = vector.load %arg5[%c20_173, %c0_174, %c0_175] : memref<24x1x16xf32, #tpu.memory_space<vmem>>, vector<1x1x16xf32>
    %278 = vector.shape_cast %277 : vector<1x1x16xf32> to vector<1x16xf32>
    %279 = vector.broadcast %278 : vector<1x16xf32> to vector<8x16xf32>
    %280 = arith.addf %276, %279 : vector<8x16xf32>
    %281 = vector.shape_cast %266 : vector<8x16xf32> to vector<1x8x16xf32>
    %282 = vector.shape_cast %273 : vector<8x16xf32> to vector<1x8x16xf32>
    %283 = vector.shape_cast %280 : vector<8x16xf32> to vector<1x8x16xf32>
    "tpu.trace_start"() <{level = 10 : i32, message = "bqd,bkd->bqk"}> : () -> ()
    %cst_176 = arith.constant dense<0.000000e+00> : vector<1x8x8xf32>
    %284 = tpu.matmul %281, %282, %cst_176 {dimension_numbers = #tpu.dot_dimension_numbers<[2], [2], [1], [1], [0, 0, 0, 1, 1, 1], [0], [0]>} : vector<1x8x16xf32>, vector<1x8x16xf32>, vector<1x8x8xf32> -> vector<1x8x8xf32>
    "tpu.trace_stop"() : () -> ()
    %cst_177 = arith.constant 2.500000e-01 : f32
    %285 = vector.broadcast %cst_177 : f32 to vector<1x8x8xf32>
    %286 = arith.mulf %284, %285 : vector<1x8x8xf32>
    %cst_178 = arith.constant dense<0xFF800000> : vector<1x8xf32>
    %287 = vector.multi_reduction <maximumf>, %286, %cst_178 [2] : vector<1x8x8xf32> to vector<1x8xf32>
    %288 = vector.shape_cast %287 : vector<1x8xf32> to vector<1x8x1xf32>
    %289 = vector.broadcast %288 : vector<1x8x1xf32> to vector<1x8x8xf32>
    %290 = arith.subf %286, %289 : vector<1x8x8xf32>
    %291 = math.exp %290 : vector<1x8x8xf32>
    %cst_179 = arith.constant dense<0.000000e+00> : vector<1x8xf32>
    %292 = vector.multi_reduction <add>, %291, %cst_179 [2] : vector<1x8x8xf32> to vector<1x8xf32>
    %293 = vector.shape_cast %292 : vector<1x8xf32> to vector<1x8x1xf32>
    %294 = vector.broadcast %293 : vector<1x8x1xf32> to vector<1x8x8xf32>
    %295 = arith.divf %291, %294 : vector<1x8x8xf32>
    "tpu.trace_start"() <{level = 10 : i32, message = "bqk,bkd->bqd"}> : () -> ()
    %cst_180 = arith.constant dense<0.000000e+00> : vector<1x8x16xf32>
    %296 = tpu.matmul %295, %283, %cst_180 {dimension_numbers = #tpu.dot_dimension_numbers<[2], [1], [1], [2], [0, 0, 0, 1, 1, 2], [0], [0]>} : vector<1x8x8xf32>, vector<1x8x16xf32>, vector<1x8x16xf32> -> vector<1x8x16xf32>
    "tpu.trace_stop"() : () -> ()
    %297 = vector.shape_cast %296 : vector<1x8x16xf32> to vector<8x16xf32>
    %c4_181 = arith.constant 4 : index
    %c0_182 = arith.constant 0 : index
    %c0_183 = arith.constant 0 : index
    %298 = vector.load %arg6[%c4_181, %c0_182, %c0_183] : memref<8x16x64xf32, #tpu.memory_space<vmem>>, vector<1x16x64xf32>
    %299 = vector.shape_cast %298 : vector<1x16x64xf32> to vector<16x64xf32>
    %cst_184 = arith.constant dense<0.000000e+00> : vector<8x64xf32>
    %300 = tpu.matmul %297, %299, %cst_184 {dimension_numbers = #tpu.dot_dimension_numbers<[1], [0], [0], [1], [0, 0, 1, 1], [], []>} : vector<8x16xf32>, vector<16x64xf32>, vector<8x64xf32> -> vector<8x64xf32>
    %301 = arith.addf %259, %300 : vector<8x64xf32>
    %c13 = arith.constant 13 : index
    %c0_185 = arith.constant 0 : index
    %c0_186 = arith.constant 0 : index
    %302 = vector.load %arg4[%c13, %c0_185, %c0_186] : memref<24x64x16xf32, #tpu.memory_space<vmem>>, vector<1x64x16xf32>
    %303 = vector.shape_cast %302 : vector<1x64x16xf32> to vector<64x16xf32>
    %cst_187 = arith.constant dense<0.000000e+00> : vector<8x16xf32>
    %304 = tpu.matmul %258, %303, %cst_187 {dimension_numbers = #tpu.dot_dimension_numbers<[1], [0], [0], [1], [0, 0, 1, 1], [], []>} : vector<8x64xf32>, vector<64x16xf32>, vector<8x16xf32> -> vector<8x16xf32>
    %c13_188 = arith.constant 13 : index
    %c0_189 = arith.constant 0 : index
    %c0_190 = arith.constant 0 : index
    %305 = vector.load %arg5[%c13_188, %c0_189, %c0_190] : memref<24x1x16xf32, #tpu.memory_space<vmem>>, vector<1x1x16xf32>
    %306 = vector.shape_cast %305 : vector<1x1x16xf32> to vector<1x16xf32>
    %307 = vector.broadcast %306 : vector<1x16xf32> to vector<8x16xf32>
    %308 = arith.addf %304, %307 : vector<8x16xf32>
    %c17 = arith.constant 17 : index
    %c0_191 = arith.constant 0 : index
    %c0_192 = arith.constant 0 : index
    %309 = vector.load %arg4[%c17, %c0_191, %c0_192] : memref<24x64x16xf32, #tpu.memory_space<vmem>>, vector<1x64x16xf32>
    %310 = vector.shape_cast %309 : vector<1x64x16xf32> to vector<64x16xf32>
    %cst_193 = arith.constant dense<0.000000e+00> : vector<8x16xf32>
    %311 = tpu.matmul %258, %310, %cst_193 {dimension_numbers = #tpu.dot_dimension_numbers<[1], [0], [0], [1], [0, 0, 1, 1], [], []>} : vector<8x64xf32>, vector<64x16xf32>, vector<8x16xf32> -> vector<8x16xf32>
    %c17_194 = arith.constant 17 : index
    %c0_195 = arith.constant 0 : index
    %c0_196 = arith.constant 0 : index
    %312 = vector.load %arg5[%c17_194, %c0_195, %c0_196] : memref<24x1x16xf32, #tpu.memory_space<vmem>>, vector<1x1x16xf32>
    %313 = vector.shape_cast %312 : vector<1x1x16xf32> to vector<1x16xf32>
    %314 = vector.broadcast %313 : vector<1x16xf32> to vector<8x16xf32>
    %315 = arith.addf %311, %314 : vector<8x16xf32>
    %c21 = arith.constant 21 : index
    %c0_197 = arith.constant 0 : index
    %c0_198 = arith.constant 0 : index
    %316 = vector.load %arg4[%c21, %c0_197, %c0_198] : memref<24x64x16xf32, #tpu.memory_space<vmem>>, vector<1x64x16xf32>
    %317 = vector.shape_cast %316 : vector<1x64x16xf32> to vector<64x16xf32>
    %cst_199 = arith.constant dense<0.000000e+00> : vector<8x16xf32>
    %318 = tpu.matmul %258, %317, %cst_199 {dimension_numbers = #tpu.dot_dimension_numbers<[1], [0], [0], [1], [0, 0, 1, 1], [], []>} : vector<8x64xf32>, vector<64x16xf32>, vector<8x16xf32> -> vector<8x16xf32>
    %c21_200 = arith.constant 21 : index
    %c0_201 = arith.constant 0 : index
    %c0_202 = arith.constant 0 : index
    %319 = vector.load %arg5[%c21_200, %c0_201, %c0_202] : memref<24x1x16xf32, #tpu.memory_space<vmem>>, vector<1x1x16xf32>
    %320 = vector.shape_cast %319 : vector<1x1x16xf32> to vector<1x16xf32>
    %321 = vector.broadcast %320 : vector<1x16xf32> to vector<8x16xf32>
    %322 = arith.addf %318, %321 : vector<8x16xf32>
    %323 = vector.shape_cast %308 : vector<8x16xf32> to vector<1x8x16xf32>
    %324 = vector.shape_cast %315 : vector<8x16xf32> to vector<1x8x16xf32>
    %325 = vector.shape_cast %322 : vector<8x16xf32> to vector<1x8x16xf32>
    "tpu.trace_start"() <{level = 10 : i32, message = "bqd,bkd->bqk"}> : () -> ()
    %cst_203 = arith.constant dense<0.000000e+00> : vector<1x8x8xf32>
    %326 = tpu.matmul %323, %324, %cst_203 {dimension_numbers = #tpu.dot_dimension_numbers<[2], [2], [1], [1], [0, 0, 0, 1, 1, 1], [0], [0]>} : vector<1x8x16xf32>, vector<1x8x16xf32>, vector<1x8x8xf32> -> vector<1x8x8xf32>
    "tpu.trace_stop"() : () -> ()
    %cst_204 = arith.constant 2.500000e-01 : f32
    %327 = vector.broadcast %cst_204 : f32 to vector<1x8x8xf32>
    %328 = arith.mulf %326, %327 : vector<1x8x8xf32>
    %cst_205 = arith.constant dense<0xFF800000> : vector<1x8xf32>
    %329 = vector.multi_reduction <maximumf>, %328, %cst_205 [2] : vector<1x8x8xf32> to vector<1x8xf32>
    %330 = vector.shape_cast %329 : vector<1x8xf32> to vector<1x8x1xf32>
    %331 = vector.broadcast %330 : vector<1x8x1xf32> to vector<1x8x8xf32>
    %332 = arith.subf %328, %331 : vector<1x8x8xf32>
    %333 = math.exp %332 : vector<1x8x8xf32>
    %cst_206 = arith.constant dense<0.000000e+00> : vector<1x8xf32>
    %334 = vector.multi_reduction <add>, %333, %cst_206 [2] : vector<1x8x8xf32> to vector<1x8xf32>
    %335 = vector.shape_cast %334 : vector<1x8xf32> to vector<1x8x1xf32>
    %336 = vector.broadcast %335 : vector<1x8x1xf32> to vector<1x8x8xf32>
    %337 = arith.divf %333, %336 : vector<1x8x8xf32>
    "tpu.trace_start"() <{level = 10 : i32, message = "bqk,bkd->bqd"}> : () -> ()
    %cst_207 = arith.constant dense<0.000000e+00> : vector<1x8x16xf32>
    %338 = tpu.matmul %337, %325, %cst_207 {dimension_numbers = #tpu.dot_dimension_numbers<[2], [1], [1], [2], [0, 0, 0, 1, 1, 2], [0], [0]>} : vector<1x8x8xf32>, vector<1x8x16xf32>, vector<1x8x16xf32> -> vector<1x8x16xf32>
    "tpu.trace_stop"() : () -> ()
    %339 = vector.shape_cast %338 : vector<1x8x16xf32> to vector<8x16xf32>
    %c5_208 = arith.constant 5 : index
    %c0_209 = arith.constant 0 : index
    %c0_210 = arith.constant 0 : index
    %340 = vector.load %arg6[%c5_208, %c0_209, %c0_210] : memref<8x16x64xf32, #tpu.memory_space<vmem>>, vector<1x16x64xf32>
    %341 = vector.shape_cast %340 : vector<1x16x64xf32> to vector<16x64xf32>
    %cst_211 = arith.constant dense<0.000000e+00> : vector<8x64xf32>
    %342 = tpu.matmul %339, %341, %cst_211 {dimension_numbers = #tpu.dot_dimension_numbers<[1], [0], [0], [1], [0, 0, 1, 1], [], []>} : vector<8x16xf32>, vector<16x64xf32>, vector<8x64xf32> -> vector<8x64xf32>
    %343 = arith.addf %301, %342 : vector<8x64xf32>
    %c14 = arith.constant 14 : index
    %c0_212 = arith.constant 0 : index
    %c0_213 = arith.constant 0 : index
    %344 = vector.load %arg4[%c14, %c0_212, %c0_213] : memref<24x64x16xf32, #tpu.memory_space<vmem>>, vector<1x64x16xf32>
    %345 = vector.shape_cast %344 : vector<1x64x16xf32> to vector<64x16xf32>
    %cst_214 = arith.constant dense<0.000000e+00> : vector<8x16xf32>
    %346 = tpu.matmul %258, %345, %cst_214 {dimension_numbers = #tpu.dot_dimension_numbers<[1], [0], [0], [1], [0, 0, 1, 1], [], []>} : vector<8x64xf32>, vector<64x16xf32>, vector<8x16xf32> -> vector<8x16xf32>
    %c14_215 = arith.constant 14 : index
    %c0_216 = arith.constant 0 : index
    %c0_217 = arith.constant 0 : index
    %347 = vector.load %arg5[%c14_215, %c0_216, %c0_217] : memref<24x1x16xf32, #tpu.memory_space<vmem>>, vector<1x1x16xf32>
    %348 = vector.shape_cast %347 : vector<1x1x16xf32> to vector<1x16xf32>
    %349 = vector.broadcast %348 : vector<1x16xf32> to vector<8x16xf32>
    %350 = arith.addf %346, %349 : vector<8x16xf32>
    %c18 = arith.constant 18 : index
    %c0_218 = arith.constant 0 : index
    %c0_219 = arith.constant 0 : index
    %351 = vector.load %arg4[%c18, %c0_218, %c0_219] : memref<24x64x16xf32, #tpu.memory_space<vmem>>, vector<1x64x16xf32>
    %352 = vector.shape_cast %351 : vector<1x64x16xf32> to vector<64x16xf32>
    %cst_220 = arith.constant dense<0.000000e+00> : vector<8x16xf32>
    %353 = tpu.matmul %258, %352, %cst_220 {dimension_numbers = #tpu.dot_dimension_numbers<[1], [0], [0], [1], [0, 0, 1, 1], [], []>} : vector<8x64xf32>, vector<64x16xf32>, vector<8x16xf32> -> vector<8x16xf32>
    %c18_221 = arith.constant 18 : index
    %c0_222 = arith.constant 0 : index
    %c0_223 = arith.constant 0 : index
    %354 = vector.load %arg5[%c18_221, %c0_222, %c0_223] : memref<24x1x16xf32, #tpu.memory_space<vmem>>, vector<1x1x16xf32>
    %355 = vector.shape_cast %354 : vector<1x1x16xf32> to vector<1x16xf32>
    %356 = vector.broadcast %355 : vector<1x16xf32> to vector<8x16xf32>
    %357 = arith.addf %353, %356 : vector<8x16xf32>
    %c22 = arith.constant 22 : index
    %c0_224 = arith.constant 0 : index
    %c0_225 = arith.constant 0 : index
    %358 = vector.load %arg4[%c22, %c0_224, %c0_225] : memref<24x64x16xf32, #tpu.memory_space<vmem>>, vector<1x64x16xf32>
    %359 = vector.shape_cast %358 : vector<1x64x16xf32> to vector<64x16xf32>
    %cst_226 = arith.constant dense<0.000000e+00> : vector<8x16xf32>
    %360 = tpu.matmul %258, %359, %cst_226 {dimension_numbers = #tpu.dot_dimension_numbers<[1], [0], [0], [1], [0, 0, 1, 1], [], []>} : vector<8x64xf32>, vector<64x16xf32>, vector<8x16xf32> -> vector<8x16xf32>
    %c22_227 = arith.constant 22 : index
    %c0_228 = arith.constant 0 : index
    %c0_229 = arith.constant 0 : index
    %361 = vector.load %arg5[%c22_227, %c0_228, %c0_229] : memref<24x1x16xf32, #tpu.memory_space<vmem>>, vector<1x1x16xf32>
    %362 = vector.shape_cast %361 : vector<1x1x16xf32> to vector<1x16xf32>
    %363 = vector.broadcast %362 : vector<1x16xf32> to vector<8x16xf32>
    %364 = arith.addf %360, %363 : vector<8x16xf32>
    %365 = vector.shape_cast %350 : vector<8x16xf32> to vector<1x8x16xf32>
    %366 = vector.shape_cast %357 : vector<8x16xf32> to vector<1x8x16xf32>
    %367 = vector.shape_cast %364 : vector<8x16xf32> to vector<1x8x16xf32>
    "tpu.trace_start"() <{level = 10 : i32, message = "bqd,bkd->bqk"}> : () -> ()
    %cst_230 = arith.constant dense<0.000000e+00> : vector<1x8x8xf32>
    %368 = tpu.matmul %365, %366, %cst_230 {dimension_numbers = #tpu.dot_dimension_numbers<[2], [2], [1], [1], [0, 0, 0, 1, 1, 1], [0], [0]>} : vector<1x8x16xf32>, vector<1x8x16xf32>, vector<1x8x8xf32> -> vector<1x8x8xf32>
    "tpu.trace_stop"() : () -> ()
    %cst_231 = arith.constant 2.500000e-01 : f32
    %369 = vector.broadcast %cst_231 : f32 to vector<1x8x8xf32>
    %370 = arith.mulf %368, %369 : vector<1x8x8xf32>
    %cst_232 = arith.constant dense<0xFF800000> : vector<1x8xf32>
    %371 = vector.multi_reduction <maximumf>, %370, %cst_232 [2] : vector<1x8x8xf32> to vector<1x8xf32>
    %372 = vector.shape_cast %371 : vector<1x8xf32> to vector<1x8x1xf32>
    %373 = vector.broadcast %372 : vector<1x8x1xf32> to vector<1x8x8xf32>
    %374 = arith.subf %370, %373 : vector<1x8x8xf32>
    %375 = math.exp %374 : vector<1x8x8xf32>
    %cst_233 = arith.constant dense<0.000000e+00> : vector<1x8xf32>
    %376 = vector.multi_reduction <add>, %375, %cst_233 [2] : vector<1x8x8xf32> to vector<1x8xf32>
    %377 = vector.shape_cast %376 : vector<1x8xf32> to vector<1x8x1xf32>
    %378 = vector.broadcast %377 : vector<1x8x1xf32> to vector<1x8x8xf32>
    %379 = arith.divf %375, %378 : vector<1x8x8xf32>
    "tpu.trace_start"() <{level = 10 : i32, message = "bqk,bkd->bqd"}> : () -> ()
    %cst_234 = arith.constant dense<0.000000e+00> : vector<1x8x16xf32>
    %380 = tpu.matmul %379, %367, %cst_234 {dimension_numbers = #tpu.dot_dimension_numbers<[2], [1], [1], [2], [0, 0, 0, 1, 1, 2], [0], [0]>} : vector<1x8x8xf32>, vector<1x8x16xf32>, vector<1x8x16xf32> -> vector<1x8x16xf32>
    "tpu.trace_stop"() : () -> ()
    %381 = vector.shape_cast %380 : vector<1x8x16xf32> to vector<8x16xf32>
    %c6_235 = arith.constant 6 : index
    %c0_236 = arith.constant 0 : index
    %c0_237 = arith.constant 0 : index
    %382 = vector.load %arg6[%c6_235, %c0_236, %c0_237] : memref<8x16x64xf32, #tpu.memory_space<vmem>>, vector<1x16x64xf32>
    %383 = vector.shape_cast %382 : vector<1x16x64xf32> to vector<16x64xf32>
    %cst_238 = arith.constant dense<0.000000e+00> : vector<8x64xf32>
    %384 = tpu.matmul %381, %383, %cst_238 {dimension_numbers = #tpu.dot_dimension_numbers<[1], [0], [0], [1], [0, 0, 1, 1], [], []>} : vector<8x16xf32>, vector<16x64xf32>, vector<8x64xf32> -> vector<8x64xf32>
    %385 = arith.addf %343, %384 : vector<8x64xf32>
    %c15 = arith.constant 15 : index
    %c0_239 = arith.constant 0 : index
    %c0_240 = arith.constant 0 : index
    %386 = vector.load %arg4[%c15, %c0_239, %c0_240] : memref<24x64x16xf32, #tpu.memory_space<vmem>>, vector<1x64x16xf32>
    %387 = vector.shape_cast %386 : vector<1x64x16xf32> to vector<64x16xf32>
    %cst_241 = arith.constant dense<0.000000e+00> : vector<8x16xf32>
    %388 = tpu.matmul %258, %387, %cst_241 {dimension_numbers = #tpu.dot_dimension_numbers<[1], [0], [0], [1], [0, 0, 1, 1], [], []>} : vector<8x64xf32>, vector<64x16xf32>, vector<8x16xf32> -> vector<8x16xf32>
    %c15_242 = arith.constant 15 : index
    %c0_243 = arith.constant 0 : index
    %c0_244 = arith.constant 0 : index
    %389 = vector.load %arg5[%c15_242, %c0_243, %c0_244] : memref<24x1x16xf32, #tpu.memory_space<vmem>>, vector<1x1x16xf32>
    %390 = vector.shape_cast %389 : vector<1x1x16xf32> to vector<1x16xf32>
    %391 = vector.broadcast %390 : vector<1x16xf32> to vector<8x16xf32>
    %392 = arith.addf %388, %391 : vector<8x16xf32>
    %c19 = arith.constant 19 : index
    %c0_245 = arith.constant 0 : index
    %c0_246 = arith.constant 0 : index
    %393 = vector.load %arg4[%c19, %c0_245, %c0_246] : memref<24x64x16xf32, #tpu.memory_space<vmem>>, vector<1x64x16xf32>
    %394 = vector.shape_cast %393 : vector<1x64x16xf32> to vector<64x16xf32>
    %cst_247 = arith.constant dense<0.000000e+00> : vector<8x16xf32>
    %395 = tpu.matmul %258, %394, %cst_247 {dimension_numbers = #tpu.dot_dimension_numbers<[1], [0], [0], [1], [0, 0, 1, 1], [], []>} : vector<8x64xf32>, vector<64x16xf32>, vector<8x16xf32> -> vector<8x16xf32>
    %c19_248 = arith.constant 19 : index
    %c0_249 = arith.constant 0 : index
    %c0_250 = arith.constant 0 : index
    %396 = vector.load %arg5[%c19_248, %c0_249, %c0_250] : memref<24x1x16xf32, #tpu.memory_space<vmem>>, vector<1x1x16xf32>
    %397 = vector.shape_cast %396 : vector<1x1x16xf32> to vector<1x16xf32>
    %398 = vector.broadcast %397 : vector<1x16xf32> to vector<8x16xf32>
    %399 = arith.addf %395, %398 : vector<8x16xf32>
    %c23 = arith.constant 23 : index
    %c0_251 = arith.constant 0 : index
    %c0_252 = arith.constant 0 : index
    %400 = vector.load %arg4[%c23, %c0_251, %c0_252] : memref<24x64x16xf32, #tpu.memory_space<vmem>>, vector<1x64x16xf32>
    %401 = vector.shape_cast %400 : vector<1x64x16xf32> to vector<64x16xf32>
    %cst_253 = arith.constant dense<0.000000e+00> : vector<8x16xf32>
    %402 = tpu.matmul %258, %401, %cst_253 {dimension_numbers = #tpu.dot_dimension_numbers<[1], [0], [0], [1], [0, 0, 1, 1], [], []>} : vector<8x64xf32>, vector<64x16xf32>, vector<8x16xf32> -> vector<8x16xf32>
    %c23_254 = arith.constant 23 : index
    %c0_255 = arith.constant 0 : index
    %c0_256 = arith.constant 0 : index
    %403 = vector.load %arg5[%c23_254, %c0_255, %c0_256] : memref<24x1x16xf32, #tpu.memory_space<vmem>>, vector<1x1x16xf32>
    %404 = vector.shape_cast %403 : vector<1x1x16xf32> to vector<1x16xf32>
    %405 = vector.broadcast %404 : vector<1x16xf32> to vector<8x16xf32>
    %406 = arith.addf %402, %405 : vector<8x16xf32>
    %407 = vector.shape_cast %392 : vector<8x16xf32> to vector<1x8x16xf32>
    %408 = vector.shape_cast %399 : vector<8x16xf32> to vector<1x8x16xf32>
    %409 = vector.shape_cast %406 : vector<8x16xf32> to vector<1x8x16xf32>
    "tpu.trace_start"() <{level = 10 : i32, message = "bqd,bkd->bqk"}> : () -> ()
    %cst_257 = arith.constant dense<0.000000e+00> : vector<1x8x8xf32>
    %410 = tpu.matmul %407, %408, %cst_257 {dimension_numbers = #tpu.dot_dimension_numbers<[2], [2], [1], [1], [0, 0, 0, 1, 1, 1], [0], [0]>} : vector<1x8x16xf32>, vector<1x8x16xf32>, vector<1x8x8xf32> -> vector<1x8x8xf32>
    "tpu.trace_stop"() : () -> ()
    %cst_258 = arith.constant 2.500000e-01 : f32
    %411 = vector.broadcast %cst_258 : f32 to vector<1x8x8xf32>
    %412 = arith.mulf %410, %411 : vector<1x8x8xf32>
    %cst_259 = arith.constant dense<0xFF800000> : vector<1x8xf32>
    %413 = vector.multi_reduction <maximumf>, %412, %cst_259 [2] : vector<1x8x8xf32> to vector<1x8xf32>
    %414 = vector.shape_cast %413 : vector<1x8xf32> to vector<1x8x1xf32>
    %415 = vector.broadcast %414 : vector<1x8x1xf32> to vector<1x8x8xf32>
    %416 = arith.subf %412, %415 : vector<1x8x8xf32>
    %417 = math.exp %416 : vector<1x8x8xf32>
    %cst_260 = arith.constant dense<0.000000e+00> : vector<1x8xf32>
    %418 = vector.multi_reduction <add>, %417, %cst_260 [2] : vector<1x8x8xf32> to vector<1x8xf32>
    %419 = vector.shape_cast %418 : vector<1x8xf32> to vector<1x8x1xf32>
    %420 = vector.broadcast %419 : vector<1x8x1xf32> to vector<1x8x8xf32>
    %421 = arith.divf %417, %420 : vector<1x8x8xf32>
    "tpu.trace_start"() <{level = 10 : i32, message = "bqk,bkd->bqd"}> : () -> ()
    %cst_261 = arith.constant dense<0.000000e+00> : vector<1x8x16xf32>
    %422 = tpu.matmul %421, %409, %cst_261 {dimension_numbers = #tpu.dot_dimension_numbers<[2], [1], [1], [2], [0, 0, 0, 1, 1, 2], [0], [0]>} : vector<1x8x8xf32>, vector<1x8x16xf32>, vector<1x8x16xf32> -> vector<1x8x16xf32>
    "tpu.trace_stop"() : () -> ()
    %423 = vector.shape_cast %422 : vector<1x8x16xf32> to vector<8x16xf32>
    %c7_262 = arith.constant 7 : index
    %c0_263 = arith.constant 0 : index
    %c0_264 = arith.constant 0 : index
    %424 = vector.load %arg6[%c7_262, %c0_263, %c0_264] : memref<8x16x64xf32, #tpu.memory_space<vmem>>, vector<1x16x64xf32>
    %425 = vector.shape_cast %424 : vector<1x16x64xf32> to vector<16x64xf32>
    %cst_265 = arith.constant dense<0.000000e+00> : vector<8x64xf32>
    %426 = tpu.matmul %423, %425, %cst_265 {dimension_numbers = #tpu.dot_dimension_numbers<[1], [0], [0], [1], [0, 0, 1, 1], [], []>} : vector<8x16xf32>, vector<16x64xf32>, vector<8x64xf32> -> vector<8x64xf32>
    %427 = arith.addf %385, %426 : vector<8x64xf32>
    %c1_266 = arith.constant 1 : index
    %c0_267 = arith.constant 0 : index
    %c0_268 = arith.constant 0 : index
    %428 = vector.load %arg7[%c1_266, %c0_267, %c0_268] : memref<2x1x64xf32, #tpu.memory_space<vmem>>, vector<1x1x64xf32>
    %429 = vector.shape_cast %428 : vector<1x1x64xf32> to vector<1x64xf32>
    %430 = vector.broadcast %429 : vector<1x64xf32> to vector<8x64xf32>
    %431 = arith.addf %427, %430 : vector<8x64xf32>
    %432 = arith.addf %258, %431 : vector<8x64xf32>
    %c1_269 = arith.constant 1 : index
    %c0_270 = arith.constant 0 : index
    %c0_271 = arith.constant 0 : index
    %433 = vector.load %arg8[%c1_269, %c0_270, %c0_271] : memref<2x1x64xf32, #tpu.memory_space<vmem>>, vector<1x1x64xf32>
    %434 = vector.shape_cast %433 : vector<1x1x64xf32> to vector<1x64xf32>
    %c1_272 = arith.constant 1 : index
    %c0_273 = arith.constant 0 : index
    %c0_274 = arith.constant 0 : index
    %435 = vector.load %arg9[%c1_272, %c0_273, %c0_274] : memref<2x1x64xf32, #tpu.memory_space<vmem>>, vector<1x1x64xf32>
    %436 = vector.shape_cast %435 : vector<1x1x64xf32> to vector<1x64xf32>
    %cst_275 = arith.constant dense<0.000000e+00> : vector<8xf32>
    %437 = vector.multi_reduction <add>, %432, %cst_275 [1] : vector<8x64xf32> to vector<8xf32>
    %438 = vector.shape_cast %437 : vector<8xf32> to vector<8x1xf32>
    %cst_276 = arith.constant 6.400000e+01 : f32
    %439 = vector.broadcast %cst_276 : f32 to vector<8x1xf32>
    %440 = arith.divf %438, %439 : vector<8x1xf32>
    %441 = vector.broadcast %440 : vector<8x1xf32> to vector<8x64xf32>
    %442 = arith.subf %432, %441 : vector<8x64xf32>
    %443 = arith.mulf %442, %442 : vector<8x64xf32>
    %cst_277 = arith.constant dense<0.000000e+00> : vector<8xf32>
    %444 = vector.multi_reduction <add>, %443, %cst_277 [1] : vector<8x64xf32> to vector<8xf32>
    %445 = vector.shape_cast %444 : vector<8xf32> to vector<8x1xf32>
    %cst_278 = arith.constant 6.400000e+01 : f32
    %446 = vector.broadcast %cst_278 : f32 to vector<8x1xf32>
    %447 = arith.divf %445, %446 : vector<8x1xf32>
    %cst_279 = arith.constant 9.99999974E-6 : f32
    %448 = vector.broadcast %cst_279 : f32 to vector<8x1xf32>
    %449 = arith.addf %447, %448 : vector<8x1xf32>
    %450 = math.rsqrt %449 : vector<8x1xf32>
    %451 = vector.broadcast %450 : vector<8x1xf32> to vector<8x64xf32>
    %452 = arith.mulf %442, %451 : vector<8x64xf32>
    %453 = vector.broadcast %434 : vector<1x64xf32> to vector<8x64xf32>
    %454 = arith.mulf %452, %453 : vector<8x64xf32>
    %455 = vector.broadcast %436 : vector<1x64xf32> to vector<8x64xf32>
    %456 = arith.addf %454, %455 : vector<8x64xf32>
    %c1_280 = arith.constant 1 : index
    %c0_281 = arith.constant 0 : index
    %c0_282 = arith.constant 0 : index
    %457 = vector.load %arg10[%c1_280, %c0_281, %c0_282] : memref<2x64x256xf32, #tpu.memory_space<vmem>>, vector<1x64x256xf32>
    %458 = vector.shape_cast %457 : vector<1x64x256xf32> to vector<64x256xf32>
    %cst_283 = arith.constant dense<0.000000e+00> : vector<8x256xf32>
    %459 = tpu.matmul %456, %458, %cst_283 {dimension_numbers = #tpu.dot_dimension_numbers<[1], [0], [0], [1], [0, 0, 1, 1], [], []>} : vector<8x64xf32>, vector<64x256xf32>, vector<8x256xf32> -> vector<8x256xf32>
    %c1_284 = arith.constant 1 : index
    %c0_285 = arith.constant 0 : index
    %c0_286 = arith.constant 0 : index
    %460 = vector.load %arg11[%c1_284, %c0_285, %c0_286] : memref<2x1x256xf32, #tpu.memory_space<vmem>>, vector<1x1x256xf32>
    %461 = vector.shape_cast %460 : vector<1x1x256xf32> to vector<1x256xf32>
    %462 = vector.broadcast %461 : vector<1x256xf32> to vector<8x256xf32>
    %463 = arith.addf %459, %462 : vector<8x256xf32>
    %cst_287 = arith.constant 0.000000e+00 : f32
    %464 = vector.broadcast %cst_287 : f32 to vector<8x256xf32>
    %465 = arith.maximumf %463, %464 : vector<8x256xf32>
    %c1_288 = arith.constant 1 : index
    %c0_289 = arith.constant 0 : index
    %c0_290 = arith.constant 0 : index
    %466 = vector.load %arg12[%c1_288, %c0_289, %c0_290] : memref<2x256x64xf32, #tpu.memory_space<vmem>>, vector<1x256x64xf32>
    %467 = vector.shape_cast %466 : vector<1x256x64xf32> to vector<256x64xf32>
    %cst_291 = arith.constant dense<0.000000e+00> : vector<8x64xf32>
    %468 = tpu.matmul %465, %467, %cst_291 {dimension_numbers = #tpu.dot_dimension_numbers<[1], [0], [0], [1], [0, 0, 1, 1], [], []>} : vector<8x256xf32>, vector<256x64xf32>, vector<8x64xf32> -> vector<8x64xf32>
    %c1_292 = arith.constant 1 : index
    %c0_293 = arith.constant 0 : index
    %c0_294 = arith.constant 0 : index
    %469 = vector.load %arg13[%c1_292, %c0_293, %c0_294] : memref<2x1x64xf32, #tpu.memory_space<vmem>>, vector<1x1x64xf32>
    %470 = vector.shape_cast %469 : vector<1x1x64xf32> to vector<1x64xf32>
    %471 = vector.broadcast %470 : vector<1x64xf32> to vector<8x64xf32>
    %472 = arith.addf %468, %471 : vector<8x64xf32>
    %473 = arith.addf %456, %472 : vector<8x64xf32>
    %c1_295 = arith.constant 1 : index
    %c0_296 = arith.constant 0 : index
    %c0_297 = arith.constant 0 : index
    %474 = vector.load %arg14[%c1_295, %c0_296, %c0_297] : memref<2x1x64xf32, #tpu.memory_space<vmem>>, vector<1x1x64xf32>
    %475 = vector.shape_cast %474 : vector<1x1x64xf32> to vector<1x64xf32>
    %c1_298 = arith.constant 1 : index
    %c0_299 = arith.constant 0 : index
    %c0_300 = arith.constant 0 : index
    %476 = vector.load %arg15[%c1_298, %c0_299, %c0_300] : memref<2x1x64xf32, #tpu.memory_space<vmem>>, vector<1x1x64xf32>
    %477 = vector.shape_cast %476 : vector<1x1x64xf32> to vector<1x64xf32>
    %cst_301 = arith.constant dense<0.000000e+00> : vector<8xf32>
    %478 = vector.multi_reduction <add>, %473, %cst_301 [1] : vector<8x64xf32> to vector<8xf32>
    %479 = vector.shape_cast %478 : vector<8xf32> to vector<8x1xf32>
    %cst_302 = arith.constant 6.400000e+01 : f32
    %480 = vector.broadcast %cst_302 : f32 to vector<8x1xf32>
    %481 = arith.divf %479, %480 : vector<8x1xf32>
    %482 = vector.broadcast %481 : vector<8x1xf32> to vector<8x64xf32>
    %483 = arith.subf %473, %482 : vector<8x64xf32>
    %484 = arith.mulf %483, %483 : vector<8x64xf32>
    %cst_303 = arith.constant dense<0.000000e+00> : vector<8xf32>
    %485 = vector.multi_reduction <add>, %484, %cst_303 [1] : vector<8x64xf32> to vector<8xf32>
    %486 = vector.shape_cast %485 : vector<8xf32> to vector<8x1xf32>
    %cst_304 = arith.constant 6.400000e+01 : f32
    %487 = vector.broadcast %cst_304 : f32 to vector<8x1xf32>
    %488 = arith.divf %486, %487 : vector<8x1xf32>
    %cst_305 = arith.constant 9.99999974E-6 : f32
    %489 = vector.broadcast %cst_305 : f32 to vector<8x1xf32>
    %490 = arith.addf %488, %489 : vector<8x1xf32>
    %491 = math.rsqrt %490 : vector<8x1xf32>
    %492 = vector.broadcast %491 : vector<8x1xf32> to vector<8x64xf32>
    %493 = arith.mulf %483, %492 : vector<8x64xf32>
    %494 = vector.broadcast %475 : vector<1x64xf32> to vector<8x64xf32>
    %495 = arith.mulf %493, %494 : vector<8x64xf32>
    %496 = vector.broadcast %477 : vector<1x64xf32> to vector<8x64xf32>
    %497 = arith.addf %495, %496 : vector<8x64xf32>
    %498 = vector.shape_cast %497 : vector<8x64xf32> to vector<1x8x64xf32>
    %cst_306 = arith.constant dense<0.000000e+00> : vector<1x64xf32>
    %499 = vector.multi_reduction <add>, %498, %cst_306 [1] : vector<1x8x64xf32> to vector<1x64xf32>
    %cst_307 = arith.constant 8.000000e+00 : f32
    %500 = vector.broadcast %cst_307 : f32 to vector<1x64xf32>
    %501 = arith.divf %499, %500 : vector<1x64xf32>
    %c0_308 = arith.constant 0 : index
    %c0_309 = arith.constant 0 : index
    %502 = vector.load %arg16[%c0_308, %c0_309] : memref<64x32xf32, #tpu.memory_space<vmem>>, vector<64x32xf32>
    %cst_310 = arith.constant dense<0.000000e+00> : vector<1x32xf32>
    %503 = tpu.matmul %501, %502, %cst_310 {dimension_numbers = #tpu.dot_dimension_numbers<[1], [0], [0], [1], [0, 0, 1, 1], [], []>} : vector<1x64xf32>, vector<64x32xf32>, vector<1x32xf32> -> vector<1x32xf32>
    %c0_311 = arith.constant 0 : index
    %c0_312 = arith.constant 0 : index
    %504 = vector.load %arg17[%c0_311, %c0_312] : memref<1x32xf32, #tpu.memory_space<vmem>>, vector<1x32xf32>
    %505 = arith.addf %503, %504 : vector<1x32xf32>
    %cst_313 = arith.constant 0.000000e+00 : f32
    %506 = vector.broadcast %cst_313 : f32 to vector<1x32xf32>
    %507 = arith.maximumf %505, %506 : vector<1x32xf32>
    %c0_314 = arith.constant 0 : index
    %c0_315 = arith.constant 0 : index
    %508 = vector.load %arg18[%c0_314, %c0_315] : memref<32x128xf32, #tpu.memory_space<vmem>>, vector<32x128xf32>
    %cst_316 = arith.constant dense<0.000000e+00> : vector<1x128xf32>
    %509 = tpu.matmul %507, %508, %cst_316 {dimension_numbers = #tpu.dot_dimension_numbers<[1], [0], [0], [1], [0, 0, 1, 1], [], []>} : vector<1x32xf32>, vector<32x128xf32>, vector<1x128xf32> -> vector<1x128xf32>
    %c0_317 = arith.constant 0 : index
    %c0_318 = arith.constant 0 : index
    %510 = vector.load %arg19[%c0_317, %c0_318] : memref<1x128xf32, #tpu.memory_space<vmem>>, vector<1x128xf32>
    %511 = arith.addf %509, %510 : vector<1x128xf32>
    %c0_319 = arith.constant 0 : index
    %c0_320 = arith.constant 0 : index
    %c0_321 = arith.constant 0 : index
    %512 = vector.load %arg20[%c0_319, %c0_320, %c0_321] : memref<1x1x128xf32, #tpu.memory_space<vmem>>, vector<1x1x128xf32>
    %513 = vector.shape_cast %512 : vector<1x1x128xf32> to vector<1x128xf32>
    %514 = vector.shape_cast %511 : vector<1x128xf32> to vector<1x1x128xf32>
    tpu.vector_store %arg20[%c0_319, %c0_320, %c0_321], %514 {strides = array<i32>} : memref<1x1x128xf32, #tpu.memory_space<vmem>>, vector<1x1x128xf32>,
    return
  }
  func.func @transform_0(%arg0: i32) -> (i32, i32, i32, i32) {
    %c0_i32 = arith.constant 0 : i32
    %c0_i32_0 = arith.constant 0 : i32
    %c0_i32_1 = arith.constant 0 : i32
    %c0_i32_2 = arith.constant 0 : i32
    return %arg0, %c0_i32, %c0_i32_0, %c0_i32_1 : i32, i32, i32, i32
  }
  func.func @transform_1(%arg0: i32) -> (i32, i32) {
    %c0_i32 = arith.constant 0 : i32
    %c0_i32_0 = arith.constant 0 : i32
    %c0_i32_1 = arith.constant 0 : i32
    return %c0_i32, %c0_i32_0 : i32, i32
  }
  func.func @transform_2(%arg0: i32) -> (i32, i32) {
    %c0_i32 = arith.constant 0 : i32
    %c0_i32_0 = arith.constant 0 : i32
    %c0_i32_1 = arith.constant 0 : i32
    return %c0_i32, %c0_i32_0 : i32, i32
  }
  func.func @transform_3(%arg0: i32) -> (i32, i32, i32) {
    %c0_i32 = arith.constant 0 : i32
    %c0_i32_0 = arith.constant 0 : i32
    %c0_i32_1 = arith.constant 0 : i32
    %c0_i32_2 = arith.constant 0 : i32
    return %c0_i32, %c0_i32_0, %c0_i32_1 : i32, i32, i32
  }
  func.func @transform_4(%arg0: i32) -> (i32, i32, i32) {
    %c0_i32 = arith.constant 0 : i32
    %c0_i32_0 = arith.constant 0 : i32
    %c0_i32_1 = arith.constant 0 : i32
    %c0_i32_2 = arith.constant 0 : i32
    return %c0_i32, %c0_i32_0, %c0_i32_1 : i32, i32, i32
  }
  func.func @transform_5(%arg0: i32) -> (i32, i32, i32) {
    %c0_i32 = arith.constant 0 : i32
    %c0_i32_0 = arith.constant 0 : i32
    %c0_i32_1 = arith.constant 0 : i32
    %c0_i32_2 = arith.constant 0 : i32
    return %c0_i32, %c0_i32_0, %c0_i32_1 : i32, i32, i32
  }
  func.func @transform_6(%arg0: i32) -> (i32, i32, i32) {
    %c0_i32 = arith.constant 0 : i32
    %c0_i32_0 = arith.constant 0 : i32
    %c0_i32_1 = arith.constant 0 : i32
    %c0_i32_2 = arith.constant 0 : i32
    return %c0_i32, %c0_i32_0, %c0_i32_1 : i32, i32, i32
  }
  func.func @transform_7(%arg0: i32) -> (i32, i32, i32) {
    %c0_i32 = arith.constant 0 : i32
    %c0_i32_0 = arith.constant 0 : i32
    %c0_i32_1 = arith.constant 0 : i32
    %c0_i32_2 = arith.constant 0 : i32
    return %c0_i32, %c0_i32_0, %c0_i32_1 : i32, i32, i32
  }
  func.func @transform_8(%arg0: i32) -> (i32, i32, i32) {
    %c0_i32 = arith.constant 0 : i32
    %c0_i32_0 = arith.constant 0 : i32
    %c0_i32_1 = arith.constant 0 : i32
    %c0_i32_2 = arith.constant 0 : i32
    return %c0_i32, %c0_i32_0, %c0_i32_1 : i32, i32, i32
  }
  func.func @transform_9(%arg0: i32) -> (i32, i32, i32) {
    %c0_i32 = arith.constant 0 : i32
    %c0_i32_0 = arith.constant 0 : i32
    %c0_i32_1 = arith.constant 0 : i32
    %c0_i32_2 = arith.constant 0 : i32
    return %c0_i32, %c0_i32_0, %c0_i32_1 : i32, i32, i32
  }
  func.func @transform_10(%arg0: i32) -> (i32, i32, i32) {
    %c0_i32 = arith.constant 0 : i32
    %c0_i32_0 = arith.constant 0 : i32
    %c0_i32_1 = arith.constant 0 : i32
    %c0_i32_2 = arith.constant 0 : i32
    return %c0_i32, %c0_i32_0, %c0_i32_1 : i32, i32, i32
  }
  func.func @transform_11(%arg0: i32) -> (i32, i32, i32) {
    %c0_i32 = arith.constant 0 : i32
    %c0_i32_0 = arith.constant 0 : i32
    %c0_i32_1 = arith.constant 0 : i32
    %c0_i32_2 = arith.constant 0 : i32
    return %c0_i32, %c0_i32_0, %c0_i32_1 : i32, i32, i32
  }
  func.func @transform_12(%arg0: i32) -> (i32, i32, i32) {
    %c0_i32 = arith.constant 0 : i32
    %c0_i32_0 = arith.constant 0 : i32
    %c0_i32_1 = arith.constant 0 : i32
    %c0_i32_2 = arith.constant 0 : i32
    return %c0_i32, %c0_i32_0, %c0_i32_1 : i32, i32, i32
  }
  func.func @transform_13(%arg0: i32) -> (i32, i32, i32) {
    %c0_i32 = arith.constant 0 : i32
    %c0_i32_0 = arith.constant 0 : i32
    %c0_i32_1 = arith.constant 0 : i32
    %c0_i32_2 = arith.constant 0 : i32
    return %c0_i32, %c0_i32_0, %c0_i32_1 : i32, i32, i32
  }
  func.func @transform_14(%arg0: i32) -> (i32, i32, i32) {
    %c0_i32 = arith.constant 0 : i32
    %c0_i32_0 = arith.constant 0 : i32
    %c0_i32_1 = arith.constant 0 : i32
    %c0_i32_2 = arith.constant 0 : i32
    return %c0_i32, %c0_i32_0, %c0_i32_1 : i32, i32, i32
  }
  func.func @transform_15(%arg0: i32) -> (i32, i32) {
    %c0_i32 = arith.constant 0 : i32
    %c0_i32_0 = arith.constant 0 : i32
    %c0_i32_1 = arith.constant 0 : i32
    return %c0_i32, %c0_i32_0 : i32, i32
  }
  func.func @transform_16(%arg0: i32) -> (i32, i32) {
    %c0_i32 = arith.constant 0 : i32
    %c0_i32_0 = arith.constant 0 : i32
    %c0_i32_1 = arith.constant 0 : i32
    return %c0_i32, %c0_i32_0 : i32, i32
  }
  func.func @transform_17(%arg0: i32) -> (i32, i32) {
    %c0_i32 = arith.constant 0 : i32
    %c0_i32_0 = arith.constant 0 : i32
    %c0_i32_1 = arith.constant 0 : i32
    return %c0_i32, %c0_i32_0 : i32, i32
  }
  func.func @transform_18(%arg0: i32) -> (i32, i32) {
    %c0_i32 = arith.constant 0 : i32
    %c0_i32_0 = arith.constant 0 : i32
    %c0_i32_1 = arith.constant 0 : i32
    return %c0_i32, %c0_i32_0 : i32, i32
  }
  func.func @transform_19(%arg0: i32) -> (i32, i32, i32) {
    %c0_i32 = arith.constant 0 : i32
    %c0_i32_0 = arith.constant 0 : i32
    %c0_i32_1 = arith.constant 0 : i32
    return %arg0, %c0_i32, %c0_i32_0 : i32, i32, i32
  }
}

</mosaic_0001>

<llo_original>
// kernel: tpu_custom_call.1
$region0: #{tpu_custom_call.1}
  #allocation0 [shape = 'u32[]', space=smem, size = 0x4, offset = 0x4, fixed_abs, tag = 'smem constant byte address 0x4 - core index']
  #allocation1 [shape = 'u32[144,128]{1,0:T(1,128)}', space=vmem, size = 0x12000, scoped, tag = 'internal scratch']
  %s0 = inlined_call_operand.vmem [shape: f32[2,1,8,2], index: 0, kind: input, shape index: {}]
  %s1 = inlined_call_operand.vmem [shape: f32[2,64], index: 1, kind: input, shape index: {}]
  %s2 = inlined_call_operand.vmem [shape: f32[1,64], index: 2, kind: input, shape index: {}]
  %s3 = inlined_call_operand.vmem [shape: f32[24,64,16], index: 3, kind: input, shape index: {}]
  %s4 = inlined_call_operand.vmem [shape: f32[24,1,16], index: 4, kind: input, shape index: {}]
  %s5 = inlined_call_operand.vmem [shape: f32[8,16,64], index: 5, kind: input, shape index: {}]
  %s6 = inlined_call_operand.vmem [shape: f32[2,1,64], index: 6, kind: input, shape index: {}]
  %s7 = inlined_call_operand.vmem [shape: f32[2,1,64], index: 7, kind: input, shape index: {}]
  %s8 = inlined_call_operand.vmem [shape: f32[2,1,64], index: 8, kind: input, shape index: {}]
  %s9 = inlined_call_operand.vmem [shape: f32[2,64,256], index: 9, kind: input, shape index: {}]
  %s10 = inlined_call_operand.vmem [shape: f32[2,1,256], index: 10, kind: input, shape index: {}]
  %s11 = inlined_call_operand.vmem [shape: f32[2,256,64], index: 11, kind: input, shape index: {}]
  %s12 = inlined_call_operand.vmem [shape: f32[2,1,64], index: 12, kind: input, shape index: {}]
  %s13 = inlined_call_operand.vmem [shape: f32[2,1,64], index: 13, kind: input, shape index: {}]
  %s14 = inlined_call_operand.vmem [shape: f32[2,1,64], index: 14, kind: input, shape index: {}]
  %s15 = inlined_call_operand.vmem [shape: f32[64,32], index: 15, kind: input, shape index: {}]
  %s16 = inlined_call_operand.vmem [shape: f32[1,32], index: 16, kind: input, shape index: {}]
  %s17 = inlined_call_operand.vmem [shape: f32[32,128], index: 17, kind: input, shape index: {}]
  %s18 = inlined_call_operand.vmem [shape: f32[1,128], index: 18, kind: input, shape index: {}]
  %s19 = inlined_call_operand.hbm [shape: f32[2,1,128], index: 19, kind: output, shape index: {}]
  %s20 = sld [smem:[#allocation0]]
  $region109: #{tpu_custom_call.1} parent=0
    _
  %s22 = ssub.s32 1, %s20
  %s23 = scalar_select 0, %s22, %s20
  $region1: #{tpu_custom_call.1} parent=0
    #allocation2 [shape = 'u8[1024]{0}', space=vmem, size = 0x400, scoped, tag = 'output window, operand 0']
    #allocation3 [shape = 's32[2]{0}', space=sflag, size = 0x8, scoped, tag = 'scoped memory for tpu_custom_call.1']
    %24 = vsyncpa [#allocation3], 0
    %s25 = scalar_lea.sflag [#allocation3], 1
    %26 = vsyncpa %s25, 0
    loop: start=0, step=1, limit=4
    $region2: #{tpu_custom_call.1} parent=1 // loop_pre_header
      _
    $region3: #{tpu_custom_call.1} parent=1 // loop_header
      %s28 = sphi 0, %s32
      %p29 = scmp.ge.s32.totalorder %s28, 4
      %s38 = sphi 0, %s40
      %s41 = sphi 0, %s38
      %s42 = sphi 0, %s41
      %s58 = sphi 0, %s42
      %s62 = sphi 0, %s62
      %s64 = sphi 0, %s62
      %s65 = sphi 0, %s64
      %s79 = sphi 0, %s65
      %s83 = sphi 0, %s83
      %s85 = sphi 0, %s83
      %s86 = sphi 0, %s85
      %s100 = sphi 0, %s86
      %s104 = sphi 0, %s104
      %s106 = sphi 0, %s104
      %s107 = sphi 0, %s106
      %s121 = sphi 0, %s107
      %s125 = sphi 0, %s125
      %s127 = sphi 0, %s125
      %s128 = sphi 0, %s127
      %s142 = sphi 0, %s128
      %s146 = sphi 0, %s146
      %s148 = sphi 0, %s146
      %s149 = sphi 0, %s148
      %s163 = sphi 0, %s149
      %s167 = sphi 0, %s167
      %s169 = sphi 0, %s167
      %s170 = sphi 0, %s169
      %s184 = sphi 0, %s170
      %s188 = sphi 0, %s188
      %s190 = sphi 0, %s188
      %s191 = sphi 0, %s190
      %s205 = sphi 0, %s191
      %s209 = sphi 0, %s209
      %s211 = sphi 0, %s209
      %s212 = sphi 0, %s211
      %s226 = sphi 0, %s212
      %s230 = sphi 0, %s230
      %s232 = sphi 0, %s230
      %s233 = sphi 0, %s232
      %s247 = sphi 0, %s233
      %s251 = sphi 0, %s251
      %s253 = sphi 0, %s251
      %s254 = sphi 0, %s253
      %s268 = sphi 0, %s254
      %s272 = sphi 0, %s272
      %s274 = sphi 0, %s272
      %s275 = sphi 0, %s274
      %s289 = sphi 0, %s275
      %s293 = sphi 0, %s293
      %s295 = sphi 0, %s293
      %s296 = sphi 0, %s295
      %s310 = sphi 0, %s296
      %s314 = sphi 0, %s314
      %s316 = sphi 0, %s314
      %s317 = sphi 0, %s316
      %s331 = sphi 0, %s317
      %s335 = sphi 0, %s335
      %s337 = sphi 0, %s335
      %s338 = sphi 0, %s337
      %s352 = sphi 0, %s338
      %s356 = sphi 0, %s356
      %s358 = sphi 0, %s356
      %s359 = sphi 0, %s358
      %s373 = sphi 0, %s359
      %s377 = sphi 0, %s377
      %s379 = sphi 0, %s377
      %s380 = sphi 0, %s379
      %s394 = sphi 0, %s380
      %s398 = sphi 0, %s398
      %s400 = sphi 0, %s398
      %s401 = sphi 0, %s400
      %s415 = sphi 0, %s401
      %s419 = sphi 0, %s419
      %s421 = sphi 0, %s419
      %s422 = sphi 0, %s421
      %s436 = sphi 0, %s422
      %s442 = sphi 0, %s444
      %s445 = sphi 0, %s442
      %s446 = sphi 0, %s445
      %s462 = sphi 0, %s446
    $region4: #{tpu_custom_call.1} parent=1 // loop_header_branch
      %31 = sbr.rel (%p29) target = $region8
    $region5: #{tpu_custom_call.1} parent=1 // loop_body
      %s33 = ssub.s32 %s28, 1
      %s34 = ssub.s32 %s28, 2
      %s35 = sadd.s32 %s28, 1
      %s36 = ssub.s32 %s28, %s35
      %p37 = scmp.eq.s32.totalorder %s36, 0
      %s39 = sadd.s32 %s38, 1
      %s40 = scalar_select %p37, %s38, %s39
      %p43 = pneg %p37
      %p44 = scmp.eq.s32.totalorder %s28, 1
      %p45 = por %p43, %p44
      %p46 = scmp.ne.s32.totalorder %s38, %s41
      %p47 = scmp.eq.s32.totalorder %s28, 0
      %p48 = por %p46, %p47
      %p49 = scmp.ne.s32.totalorder %s38, %s41
      %p50 = scmp.eq.s32.totalorder %s33, 1
      %p51 = por %p49, %p50
      %p52 = scmp.ne.s32.totalorder %s41, %s42
      %p53 = scmp.eq.s32.totalorder %s33, 0
      %p54 = por %p52, %p53
      %p55 = scmp.ne.s32.totalorder %s41, %s42
      %p56 = scmp.eq.s32.totalorder %s34, 1
      %p57 = por %p55, %p56
      %p59 = scmp.ne.s32.totalorder %s42, %s58
      %p60 = scmp.eq.s32.totalorder %s34, 0
      %p61 = por %p59, %p60
      %s63 = sadd.s32 %s62, 1
      %p66 = scmp.eq.s32.totalorder %s28, 1
      %p67 = scmp.ne.s32.totalorder %s62, %s64
      %p68 = scmp.eq.s32.totalorder %s28, 0
      %p69 = por %p67, %p68
      %p70 = scmp.ne.s32.totalorder %s62, %s64
      %p71 = scmp.eq.s32.totalorder %s33, 1
      %p72 = por %p70, %p71
      %p73 = scmp.ne.s32.totalorder %s64, %s65
      %p74 = scmp.eq.s32.totalorder %s33, 0
      %p75 = por %p73, %p74
      %p76 = scmp.ne.s32.totalorder %s64, %s65
      %p77 = scmp.eq.s32.totalorder %s34, 1
      %p78 = por %p76, %p77
      %p80 = scmp.ne.s32.totalorder %s65, %s79
      %p81 = scmp.eq.s32.totalorder %s34, 0
      %p82 = por %p80, %p81
      %s84 = sadd.s32 %s83, 1
      %p87 = scmp.eq.s32.totalorder %s28, 1
      %p88 = scmp.ne.s32.totalorder %s83, %s85
      %p89 = scmp.eq.s32.totalorder %s28, 0
      %p90 = por %p88, %p89
      %p91 = scmp.ne.s32.totalorder %s83, %s85
      %p92 = scmp.eq.s32.totalorder %s33, 1
      %p93 = por %p91, %p92
      %p94 = scmp.ne.s32.totalorder %s85, %s86
      %p95 = scmp.eq.s32.totalorder %s33, 0
      %p96 = por %p94, %p95
      %p97 = scmp.ne.s32.totalorder %s85, %s86
      %p98 = scmp.eq.s32.totalorder %s34, 1
      %p99 = por %p97, %p98
      %p101 = scmp.ne.s32.totalorder %s86, %s100
      %p102 = scmp.eq.s32.totalorder %s34, 0
      %p103 = por %p101, %p102
      %s105 = sadd.s32 %s104, 1
      %p108 = scmp.eq.s32.totalorder %s28, 1
      %p109 = scmp.ne.s32.totalorder %s104, %s106
      %p110 = scmp.eq.s32.totalorder %s28, 0
      %p111 = por %p109, %p110
      %p112 = scmp.ne.s32.totalorder %s104, %s106
      %p113 = scmp.eq.s32.totalorder %s33, 1
      %p114 = por %p112, %p113
      %p115 = scmp.ne.s32.totalorder %s106, %s107
      %p116 = scmp.eq.s32.totalorder %s33, 0
      %p117 = por %p115, %p116
      %p118 = scmp.ne.s32.totalorder %s106, %s107
      %p119 = scmp.eq.s32.totalorder %s34, 1
      %p120 = por %p118, %p119
      %p122 = scmp.ne.s32.totalorder %s107, %s121
      %p123 = scmp.eq.s32.totalorder %s34, 0
      %p124 = por %p122, %p123
      %s126 = sadd.s32 %s125, 1
      %p129 = scmp.eq.s32.totalorder %s28, 1
      %p130 = scmp.ne.s32.totalorder %s125, %s127
      %p131 = scmp.eq.s32.totalorder %s28, 0
      %p132 = por %p130, %p131
      %p133 = scmp.ne.s32.totalorder %s125, %s127
      %p134 = scmp.eq.s32.totalorder %s33, 1
      %p135 = por %p133, %p134
      %p136 = scmp.ne.s32.totalorder %s127, %s128
      %p137 = scmp.eq.s32.totalorder %s33, 0
      %p138 = por %p136, %p137
      %p139 = scmp.ne.s32.totalorder %s127, %s128
      %p140 = scmp.eq.s32.totalorder %s34, 1
      %p141 = por %p139, %p140
      %p143 = scmp.ne.s32.totalorder %s128, %s142
      %p144 = scmp.eq.s32.totalorder %s34, 0
      %p145 = por %p143, %p144
      %s147 = sadd.s32 %s146, 1
      %p150 = scmp.eq.s32.totalorder %s28, 1
      %p151 = scmp.ne.s32.totalorder %s146, %s148
      %p152 = scmp.eq.s32.totalorder %s28, 0
      %p153 = por %p151, %p152
      %p154 = scmp.ne.s32.totalorder %s146, %s148
      %p155 = scmp.eq.s32.totalorder %s33, 1
      %p156 = por %p154, %p155
      %p157 = scmp.ne.s32.totalorder %s148, %s149
      %p158 = scmp.eq.s32.totalorder %s33, 0
      %p159 = por %p157, %p158
      %p160 = scmp.ne.s32.totalorder %s148, %s149
      %p161 = scmp.eq.s32.totalorder %s34, 1
      %p162 = por %p160, %p161
      %p164 = scmp.ne.s32.totalorder %s149, %s163
      %p165 = scmp.eq.s32.totalorder %s34, 0
      %p166 = por %p164, %p165
      %s168 = sadd.s32 %s167, 1
      %p171 = scmp.eq.s32.totalorder %s28, 1
      %p172 = scmp.ne.s32.totalorder %s167, %s169
      %p173 = scmp.eq.s32.totalorder %s28, 0
      %p174 = por %p172, %p173
      %p175 = scmp.ne.s32.totalorder %s167, %s169
      %p176 = scmp.eq.s32.totalorder %s33, 1
      %p177 = por %p175, %p176
      %p178 = scmp.ne.s32.totalorder %s169, %s170
      %p179 = scmp.eq.s32.totalorder %s33, 0
      %p180 = por %p178, %p179
      %p181 = scmp.ne.s32.totalorder %s169, %s170
      %p182 = scmp.eq.s32.totalorder %s34, 1
      %p183 = por %p181, %p182
      %p185 = scmp.ne.s32.totalorder %s170, %s184
      %p186 = scmp.eq.s32.totalorder %s34, 0
      %p187 = por %p185, %p186
      %s189 = sadd.s32 %s188, 1
      %p192 = scmp.eq.s32.totalorder %s28, 1
      %p193 = scmp.ne.s32.totalorder %s188, %s190
      %p194 = scmp.eq.s32.totalorder %s28, 0
      %p195 = por %p193, %p194
      %p196 = scmp.ne.s32.totalorder %s188, %s190
      %p197 = scmp.eq.s32.totalorder %s33, 1
      %p198 = por %p196, %p197
      %p199 = scmp.ne.s32.totalorder %s190, %s191
      %p200 = scmp.eq.s32.totalorder %s33, 0
      %p201 = por %p199, %p200
      %p202 = scmp.ne.s32.totalorder %s190, %s191
      %p203 = scmp.eq.s32.totalorder %s34, 1
      %p204 = por %p202, %p203
      %p206 = scmp.ne.s32.totalorder %s191, %s205
      %p207 = scmp.eq.s32.totalorder %s34, 0
      %p208 = por %p206, %p207
      %s210 = sadd.s32 %s209, 1
      %p213 = scmp.eq.s32.totalorder %s28, 1
      %p214 = scmp.ne.s32.totalorder %s209, %s211
      %p215 = scmp.eq.s32.totalorder %s28, 0
      %p216 = por %p214, %p215
      %p217 = scmp.ne.s32.totalorder %s209, %s211
      %p218 = scmp.eq.s32.totalorder %s33, 1
      %p219 = por %p217, %p218
      %p220 = scmp.ne.s32.totalorder %s211, %s212
      %p221 = scmp.eq.s32.totalorder %s33, 0
      %p222 = por %p220, %p221
      %p223 = scmp.ne.s32.totalorder %s211, %s212
      %p224 = scmp.eq.s32.totalorder %s34, 1
      %p225 = por %p223, %p224
      %p227 = scmp.ne.s32.totalorder %s212, %s226
      %p228 = scmp.eq.s32.totalorder %s34, 0
      %p229 = por %p227, %p228
      %s231 = sadd.s32 %s230, 1
      %p234 = scmp.eq.s32.totalorder %s28, 1
      %p235 = scmp.ne.s32.totalorder %s230, %s232
      %p236 = scmp.eq.s32.totalorder %s28, 0
      %p237 = por %p235, %p236
      %p238 = scmp.ne.s32.totalorder %s230, %s232
      %p239 = scmp.eq.s32.totalorder %s33, 1
      %p240 = por %p238, %p239
      %p241 = scmp.ne.s32.totalorder %s232, %s233
      %p242 = scmp.eq.s32.totalorder %s33, 0
      %p243 = por %p241, %p242
      %p244 = scmp.ne.s32.totalorder %s232, %s233
      %p245 = scmp.eq.s32.totalorder %s34, 1
      %p246 = por %p244, %p245
      %p248 = scmp.ne.s32.totalorder %s233, %s247
      %p249 = scmp.eq.s32.totalorder %s34, 0
      %p250 = por %p248, %p249
      %s252 = sadd.s32 %s251, 1
      %p255 = scmp.eq.s32.totalorder %s28, 1
      %p256 = scmp.ne.s32.totalorder %s251, %s253
      %p257 = scmp.eq.s32.totalorder %s28, 0
      %p258 = por %p256, %p257
      %p259 = scmp.ne.s32.totalorder %s251, %s253
      %p260 = scmp.eq.s32.totalorder %s33, 1
      %p261 = por %p259, %p260
      %p262 = scmp.ne.s32.totalorder %s253, %s254
      %p263 = scmp.eq.s32.totalorder %s33, 0
      %p264 = por %p262, %p263
      %p265 = scmp.ne.s32.totalorder %s253, %s254
      %p266 = scmp.eq.s32.totalorder %s34, 1
      %p267 = por %p265, %p266
      %p269 = scmp.ne.s32.totalorder %s254, %s268
      %p270 = scmp.eq.s32.totalorder %s34, 0
      %p271 = por %p269, %p270
      %s273 = sadd.s32 %s272, 1
      %p276 = scmp.eq.s32.totalorder %s28, 1
      %p277 = scmp.ne.s32.totalorder %s272, %s274
      %p278 = scmp.eq.s32.totalorder %s28, 0
      %p279 = por %p277, %p278
      %p280 = scmp.ne.s32.totalorder %s272, %s274
      %p281 = scmp.eq.s32.totalorder %s33, 1
      %p282 = por %p280, %p281
      %p283 = scmp.ne.s32.totalorder %s274, %s275
      %p284 = scmp.eq.s32.totalorder %s33, 0
      %p285 = por %p283, %p284
      %p286 = scmp.ne.s32.totalorder %s274, %s275
      %p287 = scmp.eq.s32.totalorder %s34, 1
      %p288 = por %p286, %p287
      %p290 = scmp.ne.s32.totalorder %s275, %s289
      %p291 = scmp.eq.s32.totalorder %s34, 0
      %p292 = por %p290, %p291
      %s294 = sadd.s32 %s293, 1
      %p297 = scmp.eq.s32.totalorder %s28, 1
      %p298 = scmp.ne.s32.totalorder %s293, %s295
      %p299 = scmp.eq.s32.totalorder %s28, 0
      %p300 = por %p298, %p299
      %p301 = scmp.ne.s32.totalorder %s293, %s295
      %p302 = scmp.eq.s32.totalorder %s33, 1
      %p303 = por %p301, %p302
      %p304 = scmp.ne.s32.totalorder %s295, %s296
      %p305 = scmp.eq.s32.totalorder %s33, 0
      %p306 = por %p304, %p305
      %p307 = scmp.ne.s32.totalorder %s295, %s296
      %p308 = scmp.eq.s32.totalorder %s34, 1
      %p309 = por %p307, %p308
      %p311 = scmp.ne.s32.totalorder %s296, %s310
      %p312 = scmp.eq.s32.totalorder %s34, 0
      %p313 = por %p311, %p312
      %s315 = sadd.s32 %s314, 1
      %p318 = scmp.eq.s32.totalorder %s28, 1
      %p319 = scmp.ne.s32.totalorder %s314, %s316
      %p320 = scmp.eq.s32.totalorder %s28, 0
      %p321 = por %p319, %p320
      %p322 = scmp.ne.s32.totalorder %s314, %s316
      %p323 = scmp.eq.s32.totalorder %s33, 1
      %p324 = por %p322, %p323
      %p325 = scmp.ne.s32.totalorder %s316, %s317
      %p326 = scmp.eq.s32.totalorder %s33, 0
      %p327 = por %p325, %p326
      %p328 = scmp.ne.s32.totalorder %s316, %s317
      %p329 = scmp.eq.s32.totalorder %s34, 1
      %p330 = por %p328, %p329
      %p332 = scmp.ne.s32.totalorder %s317, %s331
      %p333 = scmp.eq.s32.totalorder %s34, 0
      %p334 = por %p332, %p333
      %s336 = sadd.s32 %s335, 1
      %p339 = scmp.eq.s32.totalorder %s28, 1
      %p340 = scmp.ne.s32.totalorder %s335, %s337
      %p341 = scmp.eq.s32.totalorder %s28, 0
      %p342 = por %p340, %p341
      %p343 = scmp.ne.s32.totalorder %s335, %s337
      %p344 = scmp.eq.s32.totalorder %s33, 1
      %p345 = por %p343, %p344
      %p346 = scmp.ne.s32.totalorder %s337, %s338
      %p347 = scmp.eq.s32.totalorder %s33, 0
      %p348 = por %p346, %p347
      %p349 = scmp.ne.s32.totalorder %s337, %s338
      %p350 = scmp.eq.s32.totalorder %s34, 1
      %p351 = por %p349, %p350
      %p353 = scmp.ne.s32.totalorder %s338, %s352
      %p354 = scmp.eq.s32.totalorder %s34, 0
      %p355 = por %p353, %p354
      %s357 = sadd.s32 %s356, 1
      %p360 = scmp.eq.s32.totalorder %s28, 1
      %p361 = scmp.ne.s32.totalorder %s356, %s358
      %p362 = scmp.eq.s32.totalorder %s28, 0
      %p363 = por %p361, %p362
      %p364 = scmp.ne.s32.totalorder %s356, %s358
      %p365 = scmp.eq.s32.totalorder %s33, 1
      %p366 = por %p364, %p365
      %p367 = scmp.ne.s32.totalorder %s358, %s359
      %p368 = scmp.eq.s32.totalorder %s33, 0
      %p369 = por %p367, %p368
      %p370 = scmp.ne.s32.totalorder %s358, %s359
      %p371 = scmp.eq.s32.totalorder %s34, 1
      %p372 = por %p370, %p371
      %p374 = scmp.ne.s32.totalorder %s359, %s373
      %p375 = scmp.eq.s32.totalorder %s34, 0
      %p376 = por %p374, %p375
      %s378 = sadd.s32 %s377, 1
      %p381 = scmp.eq.s32.totalorder %s28, 1
      %p382 = scmp.ne.s32.totalorder %s377, %s379
      %p383 = scmp.eq.s32.totalorder %s28, 0
      %p384 = por %p382, %p383
      %p385 = scmp.ne.s32.totalorder %s377, %s379
      %p386 = scmp.eq.s32.totalorder %s33, 1
      %p387 = por %p385, %p386
      %p388 = scmp.ne.s32.totalorder %s379, %s380
      %p389 = scmp.eq.s32.totalorder %s33, 0
      %p390 = por %p388, %p389
      %p391 = scmp.ne.s32.totalorder %s379, %s380
      %p392 = scmp.eq.s32.totalorder %s34, 1
      %p393 = por %p391, %p392
      %p395 = scmp.ne.s32.totalorder %s380, %s394
      %p396 = scmp.eq.s32.totalorder %s34, 0
      %p397 = por %p395, %p396
      %s399 = sadd.s32 %s398, 1
      %p402 = scmp.eq.s32.totalorder %s28, 1
      %p403 = scmp.ne.s32.totalorder %s398, %s400
      %p404 = scmp.eq.s32.totalorder %s28, 0
      %p405 = por %p403, %p404
      %p406 = scmp.ne.s32.totalorder %s398, %s400
      %p407 = scmp.eq.s32.totalorder %s33, 1
      %p408 = por %p406, %p407
      %p409 = scmp.ne.s32.totalorder %s400, %s401
      %p410 = scmp.eq.s32.totalorder %s33, 0
      %p411 = por %p409, %p410
      %p412 = scmp.ne.s32.totalorder %s400, %s401
      %p413 = scmp.eq.s32.totalorder %s34, 1
      %p414 = por %p412, %p413
      %p416 = scmp.ne.s32.totalorder %s401, %s415
      %p417 = scmp.eq.s32.totalorder %s34, 0
      %p418 = por %p416, %p417
      %s420 = sadd.s32 %s419, 1
      %p423 = scmp.eq.s32.totalorder %s28, 1
      %p424 = scmp.ne.s32.totalorder %s419, %s421
      %p425 = scmp.eq.s32.totalorder %s28, 0
      %p426 = por %p424, %p425
      %p427 = scmp.ne.s32.totalorder %s419, %s421
      %p428 = scmp.eq.s32.totalorder %s33, 1
      %p429 = por %p427, %p428
      %p430 = scmp.ne.s32.totalorder %s421, %s422
      %p431 = scmp.eq.s32.totalorder %s33, 0
      %p432 = por %p430, %p431
      %p433 = scmp.ne.s32.totalorder %s421, %s422
      %p434 = scmp.eq.s32.totalorder %s34, 1
      %p435 = por %p433, %p434
      %p437 = scmp.ne.s32.totalorder %s422, %s436
      %p438 = scmp.eq.s32.totalorder %s34, 0
      %p439 = por %p437, %p438
      %s440 = ssub.s32 %s28, %s35
      %p441 = scmp.eq.s32.totalorder %s440, 0
      %s443 = sadd.s32 %s442, 1
      %s444 = scalar_select %p441, %s442, %s443
      %p447 = pneg %p441
      %p448 = scmp.eq.s32.totalorder %s28, 1
      %p449 = por %p447, %p448
      %p450 = scmp.ne.s32.totalorder %s442, %s445
      %p451 = scmp.eq.s32.totalorder %s28, 0
      %p452 = por %p450, %p451
      %p453 = scmp.ne.s32.totalorder %s442, %s445
      %p454 = scmp.eq.s32.totalorder %s33, 1
      %p455 = por %p453, %p454
      %p456 = scmp.ne.s32.totalorder %s445, %s446
      %p457 = scmp.eq.s32.totalorder %s33, 0
      %p458 = por %p456, %p457
      %p459 = scmp.ne.s32.totalorder %s445, %s446
      %p460 = scmp.eq.s32.totalorder %s34, 1
      %p461 = por %p459, %p460
      %p463 = scmp.ne.s32.totalorder %s446, %s462
      %p464 = scmp.eq.s32.totalorder %s34, 0
      %p465 = por %p463, %p464
      %p466 = scmp.le.s32.totalorder 1, %s28
      %p467 = scmp.lt.s32.totalorder %s28, 3
      %p468 = pnand %p466, %p467
      %p469 = pneg %p468
      // Predicated region
      $region9: #{tpu_custom_call.1} parent=5 // pred_check
        _
      $region10: #{tpu_custom_call.1} parent=5 // pred_check_branch
        %471 = sbr.rel (%p468) target = $region12
      $region11: #{tpu_custom_call.1} parent=5 // pred_region
        %s472 = ssub.s32 %s28, 1
        // Predicated region
        $region13: #{tpu_custom_call.1} parent=11 // pred_check
          %p473 = pneg %p75
        $region14: #{tpu_custom_call.1} parent=11 // pred_check_branch
          %475 = sbr.rel (%p473) target = $region16
        $region15: #{tpu_custom_call.1} parent=11 // pred_region
          _
        $region16: #{tpu_custom_call.1} parent=11 // pred_fallthru
          _
        // Predicated region
        $region17: #{tpu_custom_call.1} parent=11 // pred_check
          %p476 = pneg %p96
        $region18: #{tpu_custom_call.1} parent=11 // pred_check_branch
          %478 = sbr.rel (%p476) target = $region20
        $region19: #{tpu_custom_call.1} parent=11 // pred_region
          _
        $region20: #{tpu_custom_call.1} parent=11 // pred_fallthru
          _
        // Predicated region
        $region21: #{tpu_custom_call.1} parent=11 // pred_check
          %p479 = pneg %p117
        $region22: #{tpu_custom_call.1} parent=11 // pred_check_branch
          %481 = sbr.rel (%p479) target = $region24
        $region23: #{tpu_custom_call.1} parent=11 // pred_region
          _
        $region24: #{tpu_custom_call.1} parent=11 // pred_fallthru
          _
        // Predicated region
        $region25: #{tpu_custom_call.1} parent=11 // pred_check
          %p482 = pneg %p138
        $region26: #{tpu_custom_call.1} parent=11 // pred_check_branch
          %484 = sbr.rel (%p482) target = $region28
        $region27: #{tpu_custom_call.1} parent=11 // pred_region
          _
        $region28: #{tpu_custom_call.1} parent=11 // pred_fallthru
          _
        // Predicated region
        $region29: #{tpu_custom_call.1} parent=11 // pred_check
          %p485 = pneg %p159
        $region30: #{tpu_custom_call.1} parent=11 // pred_check_branch
          %487 = sbr.rel (%p485) target = $region32
        $region31: #{tpu_custom_call.1} parent=11 // pred_region
          _
        $region32: #{tpu_custom_call.1} parent=11 // pred_fallthru
          _
        // Predicated region
        $region33: #{tpu_custom_call.1} parent=11 // pred_check
          %p488 = pneg %p180
        $region34: #{tpu_custom_call.1} parent=11 // pred_check_branch
          %490 = sbr.rel (%p488) target = $region36
        $region35: #{tpu_custom_call.1} parent=11 // pred_region
          _
        $region36: #{tpu_custom_call.1} parent=11 // pred_fallthru
          _
        // Predicated region
        $region37: #{tpu_custom_call.1} parent=11 // pred_check
          %p491 = pneg %p201
        $region38: #{tpu_custom_call.1} parent=11 // pred_check_branch
          %493 = sbr.rel (%p491) target = $region40
        $region39: #{tpu_custom_call.1} parent=11 // pred_region
          _
        $region40: #{tpu_custom_call.1} parent=11 // pred_fallthru
          _
        // Predicated region
        $region41: #{tpu_custom_call.1} parent=11 // pred_check
          %p494 = pneg %p222
        $region42: #{tpu_custom_call.1} parent=11 // pred_check_branch
          %496 = sbr.rel (%p494) target = $region44
        $region43: #{tpu_custom_call.1} parent=11 // pred_region
          _
        $region44: #{tpu_custom_call.1} parent=11 // pred_fallthru
          _
        // Predicated region
        $region45: #{tpu_custom_call.1} parent=11 // pred_check
          %p497 = pneg %p243
        $region46: #{tpu_custom_call.1} parent=11 // pred_check_branch
          %499 = sbr.rel (%p497) target = $region48
        $region47: #{tpu_custom_call.1} parent=11 // pred_region
          _
        $region48: #{tpu_custom_call.1} parent=11 // pred_fallthru
          _
        // Predicated region
        $region49: #{tpu_custom_call.1} parent=11 // pred_check
          %p500 = pneg %p264
        $region50: #{tpu_custom_call.1} parent=11 // pred_check_branch
          %502 = sbr.rel (%p500) target = $region52
        $region51: #{tpu_custom_call.1} parent=11 // pred_region
          _
        $region52: #{tpu_custom_call.1} parent=11 // pred_fallthru
          _
        // Predicated region
        $region53: #{tpu_custom_call.1} parent=11 // pred_check
          %p503 = pneg %p285
        $region54: #{tpu_custom_call.1} parent=11 // pred_check_branch
          %505 = sbr.rel (%p503) target = $region56
        $region55: #{tpu_custom_call.1} parent=11 // pred_region
          _
        $region56: #{tpu_custom_call.1} parent=11 // pred_fallthru
          _
        // Predicated region
        $region57: #{tpu_custom_call.1} parent=11 // pred_check
          %p506 = pneg %p306
        $region58: #{tpu_custom_call.1} parent=11 // pred_check_branch
          %508 = sbr.rel (%p506) target = $region60
        $region59: #{tpu_custom_call.1} parent=11 // pred_region
          _
        $region60: #{tpu_custom_call.1} parent=11 // pred_fallthru
          _
        // Predicated region
        $region61: #{tpu_custom_call.1} parent=11 // pred_check
          %p509 = pneg %p327
        $region62: #{tpu_custom_call.1} parent=11 // pred_check_branch
          %511 = sbr.rel (%p509) target = $region64
        $region63: #{tpu_custom_call.1} parent=11 // pred_region
          _
        $region64: #{tpu_custom_call.1} parent=11 // pred_fallthru
          _
        // Predicated region
        $region65: #{tpu_custom_call.1} parent=11 // pred_check
          %p512 = pneg %p348
        $region66: #{tpu_custom_call.1} parent=11 // pred_check_branch
          %514 = sbr.rel (%p512) target = $region68
        $region67: #{tpu_custom_call.1} parent=11 // pred_region
          _
        $region68: #{tpu_custom_call.1} parent=11 // pred_fallthru
          _
        // Predicated region
        $region69: #{tpu_custom_call.1} parent=11 // pred_check
          %p515 = pneg %p369
        $region70: #{tpu_custom_call.1} parent=11 // pred_check_branch
          %517 = sbr.rel (%p515) target = $region72
        $region71: #{tpu_custom_call.1} parent=11 // pred_region
          _
        $region72: #{tpu_custom_call.1} parent=11 // pred_fallthru
          _
        // Predicated region
        $region73: #{tpu_custom_call.1} parent=11 // pred_check
          %p518 = pneg %p390
        $region74: #{tpu_custom_call.1} parent=11 // pred_check_branch
          %520 = sbr.rel (%p518) target = $region76
        $region75: #{tpu_custom_call.1} parent=11 // pred_region
          _
        $region76: #{tpu_custom_call.1} parent=11 // pred_fallthru
          _
        // Predicated region
        $region77: #{tpu_custom_call.1} parent=11 // pred_check
          %p521 = pneg %p411
        $region78: #{tpu_custom_call.1} parent=11 // pred_check_branch
          %523 = sbr.rel (%p521) target = $region80
        $region79: #{tpu_custom_call.1} parent=11 // pred_region
          _
        $region80: #{tpu_custom_call.1} parent=11 // pred_fallthru
          _
        // Predicated region
        $region81: #{tpu_custom_call.1} parent=11 // pred_check
          %p524 = pneg %p432
        $region82: #{tpu_custom_call.1} parent=11 // pred_check_branch
          %526 = sbr.rel (%p524) target = $region84
        $region83: #{tpu_custom_call.1} parent=11 // pred_region
          _
        $region84: #{tpu_custom_call.1} parent=11 // pred_fallthru
          _
      $region12: #{tpu_custom_call.1} parent=5 // pred_fallthru
        _
      %p527 = scmp.lt.s32.totalorder %s28, 2
      // Predicated region
      $region85: #{tpu_custom_call.1} parent=5 // pred_check
        %p528 = pneg %p527
      $region86: #{tpu_custom_call.1} parent=5 // pred_check_branch
        %530 = sbr.rel (%p528) target = $region88
      $region87: #{tpu_custom_call.1} parent=5 // pred_region
        // Predicated region
        $region89: #{tpu_custom_call.1} parent=87 // pred_check
          %p531 = pneg %p48
        $region90: #{tpu_custom_call.1} parent=87 // pred_check_branch
          %533 = sbr.rel (%p531) target = $region92
        $region91: #{tpu_custom_call.1} parent=87 // pred_region
          %p534 = scmp.lt.s32.totalorder %s28, 1
          %s535 = scalar_select %p534, %s28, 1
          %s536 = smul.addr %s535, 8
          %s537 = scalar_lea.vmem %s0, %s536
        $region92: #{tpu_custom_call.1} parent=87 // pred_fallthru
          _
      $region88: #{tpu_custom_call.1} parent=5 // pred_fallthru
        _
      %p538 = scmp.le.s32.totalorder 1, %s28
      %p539 = scmp.lt.s32.totalorder %s28, 3
      %p540 = pnand %p538, %p539
      %p541 = pneg %p540
      // Predicated region
      $region93: #{tpu_custom_call.1} parent=5 // pred_check
        _
      $region94: #{tpu_custom_call.1} parent=5 // pred_check_branch
        %543 = sbr.rel (%p540) target = $region96
      $region95: #{tpu_custom_call.1} parent=5 // pred_region
        %s544 = ssub.s32 %s28, 1
        %p545 = scmp.lt.s32.totalorder %s33, 1
        %s546 = scalar_select %p545, %s33, 1
        %s547 = smul.addr %s546, 8
        %s548 = scalar_lea.vmem %s0, %s547
        %p549 = pneg %p54
        %p550 = pneg %p51
        %p551 = pneg %p75
        %p552 = pneg %p72
        %p553 = pneg %p96
        %p554 = pneg %p93
        %p555 = pneg %p117
        %p556 = pneg %p114
        %p557 = pneg %p138
        %p558 = pneg %p135
        %p559 = pneg %p159
        %p560 = pneg %p156
        %p561 = pneg %p180
        %p562 = pneg %p177
        %p563 = pneg %p201
        %p564 = pneg %p198
        %p565 = pneg %p222
        %p566 = pneg %p219
        %p567 = pneg %p243
        %p568 = pneg %p240
        %p569 = pneg %p264
        %p570 = pneg %p261
        %p571 = pneg %p285
        %p572 = pneg %p282
        %p573 = pneg %p306
        %p574 = pneg %p303
        %p575 = pneg %p327
        %p576 = pneg %p324
        %p577 = pneg %p348
        %p578 = pneg %p345
        %p579 = pneg %p369
        %p580 = pneg %p366
        %p581 = pneg %p390
        %p582 = pneg %p387
        %p583 = pneg %p411
        %p584 = pneg %p408
        %p585 = pneg %p432
        %p586 = pneg %p429
        %p587 = pneg %p458
        %p588 = pneg %p455
        %s589 = sand.u32 %s445, 1
        %s590 = scalar_lea.sflag [#allocation3], %s589
        %s591 = sand.u32 %s445, 1
        %s592 = scalar_lea.vmem [#allocation2], %s591
        %p593 = scmp.lt.s32.totalorder %s33, 1
        %s594 = scalar_select %p593, %s33, 1
        %s595 = smul.addr %s594, 8
        %s596 = scalar_lea.vmem %s0, %s595
        %v597 = vld [vmem:[%s596] sm:$0xff]
        %v598 = vld [vmem:[%s1] sm:$0x3]
        %600 = vset.pattern.permute.xlu0 0
        %601 = vperm.xlu0 %600, %v597
        %v602 = vpop.permute.xlu0 %601
        %v604 = vlaneseq
        %v605 = vshrl.u32 %v604, 7
        %v606 = vsub.s32 0, %v605
        %v607 = vrot.slane %v598, %v606
        %v608 = vmul.f32 %v602, %v607
        %609 = vset.pattern.permute.xlu0 1
        %610 = vperm.xlu0 %609, %v597
        %v611 = vpop.permute.xlu0 %610
        %v613 = vlaneseq
        %v614 = vshrl.u32 %v613, 7
        %v615 = vsub.s32 1, %v614
        %v616 = vrot.slane %v598, %v615
        %v617 = vmul.f32 %v611, %v616
        %v618 = vadd.f32 %v608, %v617
        %v619 = vld [vmem:[%s2] sm:$0x1]
        %v621 = vlaneseq
        %v622 = vshrl.u32 %v621, 7
        %v623 = vsub.s32 0, %v622
        %v624 = vrot.slane %v619, %v623
        %v626 = vadd.f32 %v618, %v624
        %v627 = vmax.f32 %v626, 0.0
        %v628 = vld [vmem:[%s3] sm:$0xff]
        %v629 = vld [vmem:[%s3 + $0x8] sm:$0xff]
        %v630 = vld [vmem:[%s3 + $0x10] sm:$0xff]
        %v631 = vld [vmem:[%s3 + $0x18] sm:$0xff]
        %v632 = vld [vmem:[%s3 + $0x20] sm:$0xff]
        %v633 = vld [vmem:[%s3 + $0x28] sm:$0xff]
        %v634 = vld [vmem:[%s3 + $0x30] sm:$0xff]
        %v635 = vld [vmem:[%s3 + $0x38] sm:$0xff]
        %v636 = vld [vmem:[%s4] sm:$0x1]
        %v638 = vlaneseq
        %v639 = vshrl.u32 %v638, 7
        %v640 = vsub.s32 0, %v639
        %v641 = vrot.slane %v636, %v640
        %vm643 = vcmask 523264
        %v645 = vsel %vm643, %v627, 0
        %647 = vmatprep.subr.mxu0 0.0
        %648 = vmatpush1.msra.mxu0 %v628
        %649 = vmatprep.subr.mxu0 0.0
        %650 = vmatpush1.msra.mxu0 %v629
        %651 = vmatprep.subr.mxu0 0.0
        %652 = vmatpush1.msra.mxu0 %v630
        %653 = vmatprep.subr.mxu0 0.0
        %654 = vmatpush1.msra.mxu0 %v631
        %655 = vmatprep.subr.mxu0 0.0
        %656 = vmatpush1.msra.mxu0 %v632
        %657 = vmatprep.subr.mxu0 0.0
        %658 = vmatpush1.msra.mxu0 %v633
        %659 = vmatprep.subr.mxu0 0.0
        %660 = vmatpush1.msra.mxu0 %v634
        %661 = vmatprep.subr.mxu0 0.0
        %662 = vmatpush1.msra.mxu0 %v635
        %663 = vmatprep.subr.mxu0 0.0
        %664 = vmatpush1.msra.mxu0 0.0
        %665 = vmatprep.subr.mxu0 0.0
        %666 = vmatpush1.msra.mxu0 0.0
        %667 = vmatprep.subr.mxu0 0.0
        %668 = vmatpush1.msra.mxu0 0.0
        %669 = vmatprep.subr.mxu0 0.0
        %670 = vmatpush1.msra.mxu0 0.0
        %671 = vmatprep.subr.mxu0 0.0
        %672 = vmatpush1.msra.mxu0 0.0
        %673 = vmatprep.subr.mxu0 0.0
        %674 = vmatpush1.msra.mxu0 0.0
        %675 = vmatprep.subr.mxu0 0.0
        %676 = vmatpush1.msra.mxu0 0.0
        %677 = vmatprep.subr.mxu0 0.0
        %678 = vmatpush1.msra.mxu0 0.0
        %679 = vmatprep.subr.mxu0 0.0
        %680 = vmatpush1.msra.mxu0 0.0
        %681 = vmatprep.subr.mxu0 0.0
        %682 = vmatpush1.msra.mxu0 0.0
        %683 = vmatprep.subr.mxu0 0.0
        %684 = vmatpush1.msra.mxu0 0.0
        %685 = vmatprep.subr.mxu0 0.0
        %686 = vmatpush1.msra.mxu0 0.0
        %687 = vmatprep.subr.mxu0 0.0
        %688 = vmatpush1.msra.mxu0 0.0
        %689 = vmatprep.subr.mxu0 0.0
        %690 = vmatpush1.msra.mxu0 0.0
        %691 = vmatprep.subr.mxu0 0.0
        %692 = vmatpush1.msra.mxu0 0.0
        %693 = vmatprep.subr.mxu0 0.0
        %694 = vmatpush1.msra.mxu0 0.0
        %695 = vmatprep.subr.mxu0 0.0
        %696 = vmatpush1.msra.mxu0 0.0
        %697 = vmatprep.subr.mxu0 0.0
        %698 = vmatpush1.msra.mxu0 0.0
        %699 = vmatprep.subr.mxu0 0.0
        %700 = vmatpush1.msra.mxu0 0.0
        %701 = vmatprep.subr.mxu0 0.0
        %702 = vmatpush1.msra.mxu0 0.0
        %703 = vmatprep.subr.mxu0 0.0
        %704 = vmatpush1.msra.mxu0 0.0
        %705 = vmatprep.subr.mxu0 0.0
        %706 = vmatpush1.msra.mxu0 0.0
        %707 = vmatprep.subr.mxu0 0.0
        %708 = vmatpush1.msra.mxu0 0.0
        %709 = vmatprep.subr.mxu0 0.0
        %710 = vmatpush1.msra.mxu0 0.0
        %711 = vmatprep.mubr.f32.mxu0 0.0
        %712 = vmatmul.mubr.f32.gmra.mrb[0].mxu0 %v645
        %v713 = vpop.f32.mrb[0].mxu0
        %v714 = vadd.f32 %v641, %v713
        %v715 = vpop.f32.mrb[0].mxu0
        %716 = vdwg.mxu0
        %s717 = scalar_lea.vmem %s3, 256
        %v718 = vld [vmem:[%s717] sm:$0xff]
        %v719 = vld [vmem:[%s717 + $0x8] sm:$0xff]
        %v720 = vld [vmem:[%s717 + $0x10] sm:$0xff]
        %v721 = vld [vmem:[%s717 + $0x18] sm:$0xff]
        %v722 = vld [vmem:[%s717 + $0x20] sm:$0xff]
        %v723 = vld [vmem:[%s717 + $0x28] sm:$0xff]
        %v724 = vld [vmem:[%s717 + $0x30] sm:$0xff]
        %v725 = vld [vmem:[%s717 + $0x38] sm:$0xff]
        %s726 = scalar_lea.vmem %s4, 4
        %v727 = vld [vmem:[%s726] sm:$0x1]
        %v729 = vlaneseq
        %v730 = vshrl.u32 %v729, 7
        %v731 = vsub.s32 0, %v730
        %v732 = vrot.slane %v727, %v731
        %734 = vmatprep.subr.mxu0 0.0
        %735 = vmatpush1.msra.mxu0 %v718
        %736 = vmatprep.subr.mxu0 0.0
        %737 = vmatpush1.msra.mxu0 %v719
        %738 = vmatprep.subr.mxu0 0.0
        %739 = vmatpush1.msra.mxu0 %v720
        %740 = vmatprep.subr.mxu0 0.0
        %741 = vmatpush1.msra.mxu0 %v721
        %742 = vmatprep.subr.mxu0 0.0
        %743 = vmatpush1.msra.mxu0 %v722
        %744 = vmatprep.subr.mxu0 0.0
        %745 = vmatpush1.msra.mxu0 %v723
        %746 = vmatprep.subr.mxu0 0.0
        %747 = vmatpush1.msra.mxu0 %v724
        %748 = vmatprep.subr.mxu0 0.0
        %749 = vmatpush1.msra.mxu0 %v725
        %750 = vmatprep.subr.mxu0 0.0
        %751 = vmatpush1.msra.mxu0 0.0
        %752 = vmatprep.subr.mxu0 0.0
        %753 = vmatpush1.msra.mxu0 0.0
        %754 = vmatprep.subr.mxu0 0.0
        %755 = vmatpush1.msra.mxu0 0.0
        %756 = vmatprep.subr.mxu0 0.0
        %757 = vmatpush1.msra.mxu0 0.0
        %758 = vmatprep.subr.mxu0 0.0
        %759 = vmatpush1.msra.mxu0 0.0
        %760 = vmatprep.subr.mxu0 0.0
        %761 = vmatpush1.msra.mxu0 0.0
        %762 = vmatprep.subr.mxu0 0.0
        %763 = vmatpush1.msra.mxu0 0.0
        %764 = vmatprep.subr.mxu0 0.0
        %765 = vmatpush1.msra.mxu0 0.0
        %766 = vmatprep.subr.mxu0 0.0
        %767 = vmatpush1.msra.mxu0 0.0
        %768 = vmatprep.subr.mxu0 0.0
        %769 = vmatpush1.msra.mxu0 0.0
        %770 = vmatprep.subr.mxu0 0.0
        %771 = vmatpush1.msra.mxu0 0.0
        %772 = vmatprep.subr.mxu0 0.0
        %773 = vmatpush1.msra.mxu0 0.0
        %774 = vmatprep.subr.mxu0 0.0
        %775 = vmatpush1.msra.mxu0 0.0
        %776 = vmatprep.subr.mxu0 0.0
        %777 = vmatpush1.msra.mxu0 0.0
        %778 = vmatprep.subr.mxu0 0.0
        %779 = vmatpush1.msra.mxu0 0.0
        %780 = vmatprep.subr.mxu0 0.0
        %781 = vmatpush1.msra.mxu0 0.0
        %782 = vmatprep.subr.mxu0 0.0
        %783 = vmatpush1.msra.mxu0 0.0
        %784 = vmatprep.subr.mxu0 0.0
        %785 = vmatpush1.msra.mxu0 0.0
        %786 = vmatprep.subr.mxu0 0.0
        %787 = vmatpush1.msra.mxu0 0.0
        %788 = vmatprep.subr.mxu0 0.0
        %789 = vmatpush1.msra.mxu0 0.0
        %790 = vmatprep.subr.mxu0 0.0
        %791 = vmatpush1.msra.mxu0 0.0
        %792 = vmatprep.subr.mxu0 0.0
        %793 = vmatpush1.msra.mxu0 0.0
        %794 = vmatprep.subr.mxu0 0.0
        %795 = vmatpush1.msra.mxu0 0.0
        %796 = vmatprep.subr.mxu0 0.0
        %797 = vmatpush1.msra.mxu0 0.0
        %798 = vmatprep.mubr.f32.mxu0 0.0
        %799 = vmatmul.mubr.f32.gmra.mrb[0].mxu0 %v645
        %v800 = vpop.f32.mrb[0].mxu0
        %v801 = vadd.f32 %v732, %v800
        %v802 = vpop.f32.mrb[0].mxu0
        %803 = vdwg.mxu0
        %s804 = scalar_lea.vmem %s3, 512
        %v805 = vld [vmem:[%s804] sm:$0xff]
        %v806 = vld [vmem:[%s804 + $0x8] sm:$0xff]
        %v807 = vld [vmem:[%s804 + $0x10] sm:$0xff]
        %v808 = vld [vmem:[%s804 + $0x18] sm:$0xff]
        %v809 = vld [vmem:[%s804 + $0x20] sm:$0xff]
        %v810 = vld [vmem:[%s804 + $0x28] sm:$0xff]
        %v811 = vld [vmem:[%s804 + $0x30] sm:$0xff]
        %v812 = vld [vmem:[%s804 + $0x38] sm:$0xff]
        %s813 = scalar_lea.vmem %s4, 8
        %v814 = vld [vmem:[%s813] sm:$0x1]
        %v816 = vlaneseq
        %v817 = vshrl.u32 %v816, 7
        %v818 = vsub.s32 0, %v817
        %v819 = vrot.slane %v814, %v818
        %821 = vmatprep.subr.mxu0 0.0
        %822 = vmatpush1.msra.mxu0 %v805
        %823 = vmatprep.subr.mxu0 0.0
        %824 = vmatpush1.msra.mxu0 %v806
        %825 = vmatprep.subr.mxu0 0.0
        %826 = vmatpush1.msra.mxu0 %v807
        %827 = vmatprep.subr.mxu0 0.0
        %828 = vmatpush1.msra.mxu0 %v808
        %829 = vmatprep.subr.mxu0 0.0
        %830 = vmatpush1.msra.mxu0 %v809
        %831 = vmatprep.subr.mxu0 0.0
        %832 = vmatpush1.msra.mxu0 %v810
        %833 = vmatprep.subr.mxu0 0.0
        %834 = vmatpush1.msra.mxu0 %v811
        %835 = vmatprep.subr.mxu0 0.0
        %836 = vmatpush1.msra.mxu0 %v812
        %837 = vmatprep.subr.mxu0 0.0
        %838 = vmatpush1.msra.mxu0 0.0
        %839 = vmatprep.subr.mxu0 0.0
        %840 = vmatpush1.msra.mxu0 0.0
        %841 = vmatprep.subr.mxu0 0.0
        %842 = vmatpush1.msra.mxu0 0.0
        %843 = vmatprep.subr.mxu0 0.0
        %844 = vmatpush1.msra.mxu0 0.0
        %845 = vmatprep.subr.mxu0 0.0
        %846 = vmatpush1.msra.mxu0 0.0
        %847 = vmatprep.subr.mxu0 0.0
        %848 = vmatpush1.msra.mxu0 0.0
        %849 = vmatprep.subr.mxu0 0.0
        %850 = vmatpush1.msra.mxu0 0.0
        %851 = vmatprep.subr.mxu0 0.0
        %852 = vmatpush1.msra.mxu0 0.0
        %853 = vmatprep.subr.mxu0 0.0
        %854 = vmatpush1.msra.mxu0 0.0
        %855 = vmatprep.subr.mxu0 0.0
        %856 = vmatpush1.msra.mxu0 0.0
        %857 = vmatprep.subr.mxu0 0.0
        %858 = vmatpush1.msra.mxu0 0.0
        %859 = vmatprep.subr.mxu0 0.0
        %860 = vmatpush1.msra.mxu0 0.0
        %861 = vmatprep.subr.mxu0 0.0
        %862 = vmatpush1.msra.mxu0 0.0
        %863 = vmatprep.subr.mxu0 0.0
        %864 = vmatpush1.msra.mxu0 0.0
        %865 = vmatprep.subr.mxu0 0.0
        %866 = vmatpush1.msra.mxu0 0.0
        %867 = vmatprep.subr.mxu0 0.0
        %868 = vmatpush1.msra.mxu0 0.0
        %869 = vmatprep.subr.mxu0 0.0
        %870 = vmatpush1.msra.mxu0 0.0
        %871 = vmatprep.subr.mxu0 0.0
        %872 = vmatpush1.msra.mxu0 0.0
        %873 = vmatprep.subr.mxu0 0.0
        %874 = vmatpush1.msra.mxu0 0.0
        %875 = vmatprep.subr.mxu0 0.0
        %876 = vmatpush1.msra.mxu0 0.0
        %877 = vmatprep.subr.mxu0 0.0
        %878 = vmatpush1.msra.mxu0 0.0
        %879 = vmatprep.subr.mxu0 0.0
        %880 = vmatpush1.msra.mxu0 0.0
        %881 = vmatprep.subr.mxu0 0.0
        %882 = vmatpush1.msra.mxu0 0.0
        %883 = vmatprep.subr.mxu0 0.0
        %884 = vmatpush1.msra.mxu0 0.0
        %885 = vmatprep.mubr.f32.mxu0 0.0
        %886 = vmatmul.mubr.f32.gmra.mrb[0].mxu0 %v645
        %v887 = vpop.f32.mrb[0].mxu0
        %v888 = vadd.f32 %v819, %v887
        %v889 = vpop.f32.mrb[0].mxu0
        %890 = vdwg.mxu0
        %vm891 = vcmask 130048
        %v893 = vsel %vm891, %v714, 0
        %v896 = vsel %vm891, %v801, 0
        %898 = vmatprep.subr.mxu0 0.0
        %899 = vmatpush1.xpose.msra.mxu0 %v896
        %900 = vmatprep.subr.mxu0 0.0
        %901 = vmatpush1.xpose.msra.mxu0 0.0
        %902 = vmatprep.subr.mxu0 0.0
        %903 = vmatpush1.xpose.msra.mxu0 0.0
        %904 = vmatprep.subr.mxu0 0.0
        %905 = vmatpush1.xpose.msra.mxu0 0.0
        %906 = vmatprep.subr.mxu0 0.0
        %907 = vmatpush1.xpose.msra.mxu0 0.0
        %908 = vmatprep.subr.mxu0 0.0
        %909 = vmatpush1.xpose.msra.mxu0 0.0
        %910 = vmatprep.subr.mxu0 0.0
        %911 = vmatpush1.xpose.msra.mxu0 0.0
        %912 = vmatprep.subr.mxu0 0.0
        %913 = vmatpush1.xpose.msra.mxu0 0.0
        %914 = vmatprep.subr.mxu0 0.0
        %915 = vmatpush1.xpose.msra.mxu0 0.0
        %916 = vmatprep.subr.mxu0 0.0
        %917 = vmatpush1.xpose.msra.mxu0 0.0
        %918 = vmatprep.subr.mxu0 0.0
        %919 = vmatpush1.xpose.msra.mxu0 0.0
        %920 = vmatprep.subr.mxu0 0.0
        %921 = vmatpush1.xpose.msra.mxu0 0.0
        %922 = vmatprep.subr.mxu0 0.0
        %923 = vmatpush1.xpose.msra.mxu0 0.0
        %924 = vmatprep.subr.mxu0 0.0
        %925 = vmatpush1.xpose.msra.mxu0 0.0
        %926 = vmatprep.subr.mxu0 0.0
        %927 = vmatpush1.xpose.msra.mxu0 0.0
        %928 = vmatprep.subr.mxu0 0.0
        %929 = vmatpush1.xpose.msra.mxu0 0.0
        %930 = vmatprep.subr.mxu0 0.0
        %931 = vmatpush1.xpose.msra.mxu0 0.0
        %932 = vmatprep.subr.mxu0 0.0
        %933 = vmatpush1.xpose.msra.mxu0 0.0
        %934 = vmatprep.subr.mxu0 0.0
        %935 = vmatpush1.xpose.msra.mxu0 0.0
        %936 = vmatprep.subr.mxu0 0.0
        %937 = vmatpush1.xpose.msra.mxu0 0.0
        %938 = vmatprep.subr.mxu0 0.0
        %939 = vmatpush1.xpose.msra.mxu0 0.0
        %940 = vmatprep.subr.mxu0 0.0
        %941 = vmatpush1.xpose.msra.mxu0 0.0
        %942 = vmatprep.subr.mxu0 0.0
        %943 = vmatpush1.xpose.msra.mxu0 0.0
        %944 = vmatprep.subr.mxu0 0.0
        %945 = vmatpush1.xpose.msra.mxu0 0.0
        %946 = vmatprep.subr.mxu0 0.0
        %947 = vmatpush1.xpose.msra.mxu0 0.0
        %948 = vmatprep.subr.mxu0 0.0
        %949 = vmatpush1.xpose.msra.mxu0 0.0
        %950 = vmatprep.subr.mxu0 0.0
        %951 = vmatpush1.xpose.msra.mxu0 0.0
        %952 = vmatprep.subr.mxu0 0.0
        %953 = vmatpush1.xpose.msra.mxu0 0.0
        %954 = vmatprep.subr.mxu0 0.0
        %955 = vmatpush1.xpose.msra.mxu0 0.0
        %956 = vmatprep.subr.mxu0 0.0
        %957 = vmatpush1.xpose.msra.mxu0 0.0
        %958 = vmatprep.subr.mxu0 0.0
        %959 = vmatpush1.xpose.msra.mxu0 0.0
        %960 = vmatprep.subr.mxu0 0.0
        %961 = vmatpush1.xpose.msra.mxu0 0.0
        %962 = vmatprep.mubr.f32.mxu0 0.0
        %963 = vmatmul.mubr.f32.gmra.mrb[0].mxu0 %v893
        %v964 = vpop.f32.mrb[0].mxu0
        %v965 = vadd.f32 0.0, %v964
        %v966 = vpop.f32.mrb[0].mxu0
        %967 = vdwg.mxu0
        %v968 = vmul.f32 %v965, 0.25
        %vm969 = vcmask 64512
        %v970 = vsel %vm969, %v968, -inf
        %971 = vmax.xlane.f32.xlu0 %v970
        %v972 = vpop.xlane.xlu0 %971
        %v973 = vsub.f32 %v968, %v972
        %v974 = vmul.f32 %v973, 1.442695
        %v975 = vpow.pop %v974
        %v976 = vsel %vm969, %v975, 0.0
        %977 = vadd.xlane.f32.xlu0 %v976
        %v978 = vpop.xlane.xlu0 %977
        %v979 = vrcp.pop %v978
        %v980 = vmul.f32 %v975, %v979
        %v982 = vsel %vm969, %v980, 0
        %984 = vmatprep.subr.mxu0 0.0
        %985 = vmatpush1.msra.mxu0 %v888
        %986 = vmatprep.subr.mxu0 0.0
        %987 = vmatpush1.msra.mxu0 0.0
        %988 = vmatprep.subr.mxu0 0.0
        %989 = vmatpush1.msra.mxu0 0.0
        %990 = vmatprep.subr.mxu0 0.0
        %991 = vmatpush1.msra.mxu0 0.0
        %992 = vmatprep.subr.mxu0 0.0
        %993 = vmatpush1.msra.mxu0 0.0
        %994 = vmatprep.subr.mxu0 0.0
        %995 = vmatpush1.msra.mxu0 0.0
        %996 = vmatprep.subr.mxu0 0.0
        %997 = vmatpush1.msra.mxu0 0.0
        %998 = vmatprep.subr.mxu0 0.0
        %999 = vmatpush1.msra.mxu0 0.0
        %1000 = vmatprep.subr.mxu0 0.0
        %1001 = vmatpush1.msra.mxu0 0.0
        %1002 = vmatprep.subr.mxu0 0.0
        %1003 = vmatpush1.msra.mxu0 0.0
        %1004 = vmatprep.subr.mxu0 0.0
        %1005 = vmatpush1.msra.mxu0 0.0
        %1006 = vmatprep.subr.mxu0 0.0
        %1007 = vmatpush1.msra.mxu0 0.0
        %1008 = vmatprep.subr.mxu0 0.0
        %1009 = vmatpush1.msra.mxu0 0.0
        %1010 = vmatprep.subr.mxu0 0.0
        %1011 = vmatpush1.msra.mxu0 0.0
        %1012 = vmatprep.subr.mxu0 0.0
        %1013 = vmatpush1.msra.mxu0 0.0
        %1014 = vmatprep.subr.mxu0 0.0
        %1015 = vmatpush1.msra.mxu0 0.0
        %1016 = vmatprep.subr.mxu0 0.0
        %1017 = vmatpush1.msra.mxu0 0.0
        %1018 = vmatprep.subr.mxu0 0.0
        %1019 = vmatpush1.msra.mxu0 0.0
        %1020 = vmatprep.subr.mxu0 0.0
        %1021 = vmatpush1.msra.mxu0 0.0
        %1022 = vmatprep.subr.mxu0 0.0
        %1023 = vmatpush1.msra.mxu0 0.0
        %1024 = vmatprep.subr.mxu0 0.0
        %1025 = vmatpush1.msra.mxu0 0.0
        %1026 = vmatprep.subr.mxu0 0.0
        %1027 = vmatpush1.msra.mxu0 0.0
        %1028 = vmatprep.subr.mxu0 0.0
        %1029 = vmatpush1.msra.mxu0 0.0
        %1030 = vmatprep.subr.mxu0 0.0
        %1031 = vmatpush1.msra.mxu0 0.0
        %1032 = vmatprep.subr.mxu0 0.0
        %1033 = vmatpush1.msra.mxu0 0.0
        %1034 = vmatprep.subr.mxu0 0.0
        %1035 = vmatpush1.msra.mxu0 0.0
        %1036 = vmatprep.subr.mxu0 0.0
        %1037 = vmatpush1.msra.mxu0 0.0
        %1038 = vmatprep.subr.mxu0 0.0
        %1039 = vmatpush1.msra.mxu0 0.0
        %1040 = vmatprep.subr.mxu0 0.0
        %1041 = vmatpush1.msra.mxu0 0.0
        %1042 = vmatprep.subr.mxu0 0.0
        %1043 = vmatpush1.msra.mxu0 0.0
        %1044 = vmatprep.subr.mxu0 0.0
        %1045 = vmatpush1.msra.mxu0 0.0
        %1046 = vmatprep.subr.mxu0 0.0
        %1047 = vmatpush1.msra.mxu0 0.0
        %1048 = vmatprep.mubr.f32.mxu0 0.0
        %1049 = vmatmul.mubr.f32.gmra.mrb[0].mxu0 %v982
        %v1050 = vpop.f32.mrb[0].mxu0
        %v1051 = vadd.f32 0.0, %v1050
        %v1052 = vpop.f32.mrb[0].mxu0
        %1053 = vdwg.mxu0
        %v1054 = vld [vmem:[%s5] sm:$0xff]
        %v1055 = vld [vmem:[%s5 + $0x8] sm:$0xff]
        %s1056 = scalar_lea.vmem %s3, 64
        %v1057 = vld [vmem:[%s1056] sm:$0xff]
        %v1058 = vld [vmem:[%s1056 + $0x8] sm:$0xff]
        %v1059 = vld [vmem:[%s1056 + $0x10] sm:$0xff]
        %v1060 = vld [vmem:[%s1056 + $0x18] sm:$0xff]
        %v1061 = vld [vmem:[%s1056 + $0x20] sm:$0xff]
        %v1062 = vld [vmem:[%s1056 + $0x28] sm:$0xff]
        %v1063 = vld [vmem:[%s1056 + $0x30] sm:$0xff]
        %v1064 = vld [vmem:[%s1056 + $0x38] sm:$0xff]
        %s1065 = scalar_lea.vmem %s4, 1
        %v1066 = vld [vmem:[%s1065] sm:$0x1]
        %v1068 = vlaneseq
        %v1069 = vshrl.u32 %v1068, 7
        %v1070 = vsub.s32 0, %v1069
        %v1071 = vrot.slane %v1066, %v1070
        %1073 = vmatprep.subr.mxu0 0.0
        %1074 = vmatpush1.msra.mxu0 %v1057
        %1075 = vmatprep.subr.mxu0 0.0
        %1076 = vmatpush1.msra.mxu0 %v1058
        %1077 = vmatprep.subr.mxu0 0.0
        %1078 = vmatpush1.msra.mxu0 %v1059
        %1079 = vmatprep.subr.mxu0 0.0
        %1080 = vmatpush1.msra.mxu0 %v1060
        %1081 = vmatprep.subr.mxu0 0.0
        %1082 = vmatpush1.msra.mxu0 %v1061
        %1083 = vmatprep.subr.mxu0 0.0
        %1084 = vmatpush1.msra.mxu0 %v1062
        %1085 = vmatprep.subr.mxu0 0.0
        %1086 = vmatpush1.msra.mxu0 %v1063
        %1087 = vmatprep.subr.mxu0 0.0
        %1088 = vmatpush1.msra.mxu0 %v1064
        %1089 = vmatprep.subr.mxu0 0.0
        %1090 = vmatpush1.msra.mxu0 0.0
        %1091 = vmatprep.subr.mxu0 0.0
        %1092 = vmatpush1.msra.mxu0 0.0
        %1093 = vmatprep.subr.mxu0 0.0
        %1094 = vmatpush1.msra.mxu0 0.0
        %1095 = vmatprep.subr.mxu0 0.0
        %1096 = vmatpush1.msra.mxu0 0.0
        %1097 = vmatprep.subr.mxu0 0.0
        %1098 = vmatpush1.msra.mxu0 0.0
        %1099 = vmatprep.subr.mxu0 0.0
        %1100 = vmatpush1.msra.mxu0 0.0
        %1101 = vmatprep.subr.mxu0 0.0
        %1102 = vmatpush1.msra.mxu0 0.0
        %1103 = vmatprep.subr.mxu0 0.0
        %1104 = vmatpush1.msra.mxu0 0.0
        %1105 = vmatprep.subr.mxu0 0.0
        %1106 = vmatpush1.msra.mxu0 0.0
        %1107 = vmatprep.subr.mxu0 0.0
        %1108 = vmatpush1.msra.mxu0 0.0
        %1109 = vmatprep.subr.mxu0 0.0
        %1110 = vmatpush1.msra.mxu0 0.0
        %1111 = vmatprep.subr.mxu0 0.0
        %1112 = vmatpush1.msra.mxu0 0.0
        %1113 = vmatprep.subr.mxu0 0.0
        %1114 = vmatpush1.msra.mxu0 0.0
        %1115 = vmatprep.subr.mxu0 0.0
        %1116 = vmatpush1.msra.mxu0 0.0
        %1117 = vmatprep.subr.mxu0 0.0
        %1118 = vmatpush1.msra.mxu0 0.0
        %1119 = vmatprep.subr.mxu0 0.0
        %1120 = vmatpush1.msra.mxu0 0.0
        %1121 = vmatprep.subr.mxu0 0.0
        %1122 = vmatpush1.msra.mxu0 0.0
        %1123 = vmatprep.subr.mxu0 0.0
        %1124 = vmatpush1.msra.mxu0 0.0
        %1125 = vmatprep.subr.mxu0 0.0
        %1126 = vmatpush1.msra.mxu0 0.0
        %1127 = vmatprep.subr.mxu0 0.0
        %1128 = vmatpush1.msra.mxu0 0.0
        %1129 = vmatprep.subr.mxu0 0.0
        %1130 = vmatpush1.msra.mxu0 0.0
        %1131 = vmatprep.subr.mxu0 0.0
        %1132 = vmatpush1.msra.mxu0 0.0
        %1133 = vmatprep.subr.mxu0 0.0
        %1134 = vmatpush1.msra.mxu0 0.0
        %1135 = vmatprep.subr.mxu0 0.0
        %1136 = vmatpush1.msra.mxu0 0.0
        %1137 = vmatprep.mubr.f32.mxu0 0.0
        %1138 = vmatmul.mubr.f32.gmra.mrb[0].mxu0 %v645
        %v1139 = vpop.f32.mrb[0].mxu0
        %v1140 = vadd.f32 %v1071, %v1139
        %v1141 = vpop.f32.mrb[0].mxu0
        %1142 = vdwg.mxu0
        %s1143 = scalar_lea.vmem %s3, 320
        %v1144 = vld [vmem:[%s1143] sm:$0xff]
        %v1145 = vld [vmem:[%s1143 + $0x8] sm:$0xff]
        %v1146 = vld [vmem:[%s1143 + $0x10] sm:$0xff]
        %v1147 = vld [vmem:[%s1143 + $0x18] sm:$0xff]
        %v1148 = vld [vmem:[%s1143 + $0x20] sm:$0xff]
        %v1149 = vld [vmem:[%s1143 + $0x28] sm:$0xff]
        %v1150 = vld [vmem:[%s1143 + $0x30] sm:$0xff]
        %v1151 = vld [vmem:[%s1143 + $0x38] sm:$0xff]
        %s1152 = scalar_lea.vmem %s4, 5
        %v1153 = vld [vmem:[%s1152] sm:$0x1]
        %v1155 = vlaneseq
        %v1156 = vshrl.u32 %v1155, 7
        %v1157 = vsub.s32 0, %v1156
        %v1158 = vrot.slane %v1153, %v1157
        %1160 = vmatprep.subr.mxu0 0.0
        %1161 = vmatpush1.msra.mxu0 %v1144
        %1162 = vmatprep.subr.mxu0 0.0
        %1163 = vmatpush1.msra.mxu0 %v1145
        %1164 = vmatprep.subr.mxu0 0.0
        %1165 = vmatpush1.msra.mxu0 %v1146
        %1166 = vmatprep.subr.mxu0 0.0
        %1167 = vmatpush1.msra.mxu0 %v1147
        %1168 = vmatprep.subr.mxu0 0.0
        %1169 = vmatpush1.msra.mxu0 %v1148
        %1170 = vmatprep.subr.mxu0 0.0
        %1171 = vmatpush1.msra.mxu0 %v1149
        %1172 = vmatprep.subr.mxu0 0.0
        %1173 = vmatpush1.msra.mxu0 %v1150
        %1174 = vmatprep.subr.mxu0 0.0
        %1175 = vmatpush1.msra.mxu0 %v1151
        %1176 = vmatprep.subr.mxu0 0.0
        %1177 = vmatpush1.msra.mxu0 0.0
        %1178 = vmatprep.subr.mxu0 0.0
        %1179 = vmatpush1.msra.mxu0 0.0
        %1180 = vmatprep.subr.mxu0 0.0
        %1181 = vmatpush1.msra.mxu0 0.0
        %1182 = vmatprep.subr.mxu0 0.0
        %1183 = vmatpush1.msra.mxu0 0.0
        %1184 = vmatprep.subr.mxu0 0.0
        %1185 = vmatpush1.msra.mxu0 0.0
        %1186 = vmatprep.subr.mxu0 0.0
        %1187 = vmatpush1.msra.mxu0 0.0
        %1188 = vmatprep.subr.mxu0 0.0
        %1189 = vmatpush1.msra.mxu0 0.0
        %1190 = vmatprep.subr.mxu0 0.0
        %1191 = vmatpush1.msra.mxu0 0.0
        %1192 = vmatprep.subr.mxu0 0.0
        %1193 = vmatpush1.msra.mxu0 0.0
        %1194 = vmatprep.subr.mxu0 0.0
        %1195 = vmatpush1.msra.mxu0 0.0
        %1196 = vmatprep.subr.mxu0 0.0
        %1197 = vmatpush1.msra.mxu0 0.0
        %1198 = vmatprep.subr.mxu0 0.0
        %1199 = vmatpush1.msra.mxu0 0.0
        %1200 = vmatprep.subr.mxu0 0.0
        %1201 = vmatpush1.msra.mxu0 0.0
        %1202 = vmatprep.subr.mxu0 0.0
        %1203 = vmatpush1.msra.mxu0 0.0
        %1204 = vmatprep.subr.mxu0 0.0
        %1205 = vmatpush1.msra.mxu0 0.0
        %1206 = vmatprep.subr.mxu0 0.0
        %1207 = vmatpush1.msra.mxu0 0.0
        %1208 = vmatprep.subr.mxu0 0.0
        %1209 = vmatpush1.msra.mxu0 0.0
        %1210 = vmatprep.subr.mxu0 0.0
        %1211 = vmatpush1.msra.mxu0 0.0
        %1212 = vmatprep.subr.mxu0 0.0
        %1213 = vmatpush1.msra.mxu0 0.0
        %1214 = vmatprep.subr.mxu0 0.0
        %1215 = vmatpush1.msra.mxu0 0.0
        %1216 = vmatprep.subr.mxu0 0.0
        %1217 = vmatpush1.msra.mxu0 0.0
        %1218 = vmatprep.subr.mxu0 0.0
        %1219 = vmatpush1.msra.mxu0 0.0
        %1220 = vmatprep.subr.mxu0 0.0
        %1221 = vmatpush1.msra.mxu0 0.0
        %1222 = vmatprep.subr.mxu0 0.0
        %1223 = vmatpush1.msra.mxu0 0.0
        %1224 = vmatprep.mubr.f32.mxu0 0.0
        %1225 = vmatmul.mubr.f32.gmra.mrb[0].mxu0 %v645
        %v1226 = vpop.f32.mrb[0].mxu0
        %v1227 = vadd.f32 %v1158, %v1226
        %v1228 = vpop.f32.mrb[0].mxu0
        %1229 = vdwg.mxu0
        %s1230 = scalar_lea.vmem %s3, 576
        %v1231 = vld [vmem:[%s1230] sm:$0xff]
        %v1232 = vld [vmem:[%s1230 + $0x8] sm:$0xff]
        %v1233 = vld [vmem:[%s1230 + $0x10] sm:$0xff]
        %v1234 = vld [vmem:[%s1230 + $0x18] sm:$0xff]
        %v1235 = vld [vmem:[%s1230 + $0x20] sm:$0xff]
        %v1236 = vld [vmem:[%s1230 + $0x28] sm:$0xff]
        %v1237 = vld [vmem:[%s1230 + $0x30] sm:$0xff]
        %v1238 = vld [vmem:[%s1230 + $0x38] sm:$0xff]
        %s1239 = scalar_lea.vmem %s4, 9
        %v1240 = vld [vmem:[%s1239] sm:$0x1]
        %v1242 = vlaneseq
        %v1243 = vshrl.u32 %v1242, 7
        %v1244 = vsub.s32 0, %v1243
        %v1245 = vrot.slane %v1240, %v1244
        %1247 = vmatprep.subr.mxu0 0.0
        %1248 = vmatpush1.msra.mxu0 %v1231
        %1249 = vmatprep.subr.mxu0 0.0
        %1250 = vmatpush1.msra.mxu0 %v1232
        %1251 = vmatprep.subr.mxu0 0.0
        %1252 = vmatpush1.msra.mxu0 %v1233
        %1253 = vmatprep.subr.mxu0 0.0
        %1254 = vmatpush1.msra.mxu0 %v1234
        %1255 = vmatprep.subr.mxu0 0.0
        %1256 = vmatpush1.msra.mxu0 %v1235
        %1257 = vmatprep.subr.mxu0 0.0
        %1258 = vmatpush1.msra.mxu0 %v1236
        %1259 = vmatprep.subr.mxu0 0.0
        %1260 = vmatpush1.msra.mxu0 %v1237
        %1261 = vmatprep.subr.mxu0 0.0
        %1262 = vmatpush1.msra.mxu0 %v1238
        %1263 = vmatprep.subr.mxu0 0.0
        %1264 = vmatpush1.msra.mxu0 0.0
        %1265 = vmatprep.subr.mxu0 0.0
        %1266 = vmatpush1.msra.mxu0 0.0
        %1267 = vmatprep.subr.mxu0 0.0
        %1268 = vmatpush1.msra.mxu0 0.0
        %1269 = vmatprep.subr.mxu0 0.0
        %1270 = vmatpush1.msra.mxu0 0.0
        %1271 = vmatprep.subr.mxu0 0.0
        %1272 = vmatpush1.msra.mxu0 0.0
        %1273 = vmatprep.subr.mxu0 0.0
        %1274 = vmatpush1.msra.mxu0 0.0
        %1275 = vmatprep.subr.mxu0 0.0
        %1276 = vmatpush1.msra.mxu0 0.0
        %1277 = vmatprep.subr.mxu0 0.0
        %1278 = vmatpush1.msra.mxu0 0.0
        %1279 = vmatprep.subr.mxu0 0.0
        %1280 = vmatpush1.msra.mxu0 0.0
        %1281 = vmatprep.subr.mxu0 0.0
        %1282 = vmatpush1.msra.mxu0 0.0
        %1283 = vmatprep.subr.mxu0 0.0
        %1284 = vmatpush1.msra.mxu0 0.0
        %1285 = vmatprep.subr.mxu0 0.0
        %1286 = vmatpush1.msra.mxu0 0.0
        %1287 = vmatprep.subr.mxu0 0.0
        %1288 = vmatpush1.msra.mxu0 0.0
        %1289 = vmatprep.subr.mxu0 0.0
        %1290 = vmatpush1.msra.mxu0 0.0
        %1291 = vmatprep.subr.mxu0 0.0
        %1292 = vmatpush1.msra.mxu0 0.0
        %1293 = vmatprep.subr.mxu0 0.0
        %1294 = vmatpush1.msra.mxu0 0.0
        %1295 = vmatprep.subr.mxu0 0.0
        %1296 = vmatpush1.msra.mxu0 0.0
        %1297 = vmatprep.subr.mxu0 0.0
        %1298 = vmatpush1.msra.mxu0 0.0
        %1299 = vmatprep.subr.mxu0 0.0
        %1300 = vmatpush1.msra.mxu0 0.0
        %1301 = vmatprep.subr.mxu0 0.0
        %1302 = vmatpush1.msra.mxu0 0.0
        %1303 = vmatprep.subr.mxu0 0.0
        %1304 = vmatpush1.msra.mxu0 0.0
        %1305 = vmatprep.subr.mxu0 0.0
        %1306 = vmatpush1.msra.mxu0 0.0
        %1307 = vmatprep.subr.mxu0 0.0
        %1308 = vmatpush1.msra.mxu0 0.0
        %1309 = vmatprep.subr.mxu0 0.0
        %1310 = vmatpush1.msra.mxu0 0.0
        %1311 = vmatprep.mubr.f32.mxu0 0.0
        %1312 = vmatmul.mubr.f32.gmra.mrb[0].mxu0 %v645
        %v1313 = vpop.f32.mrb[0].mxu0
        %v1314 = vadd.f32 %v1245, %v1313
        %v1315 = vpop.f32.mrb[0].mxu0
        %1316 = vdwg.mxu0
        %v1318 = vsel %vm891, %v1140, 0
        %v1321 = vsel %vm891, %v1227, 0
        %1323 = vmatprep.subr.mxu0 0.0
        %1324 = vmatpush1.xpose.msra.mxu0 %v1321
        %1325 = vmatprep.subr.mxu0 0.0
        %1326 = vmatpush1.xpose.msra.mxu0 0.0
        %1327 = vmatprep.subr.mxu0 0.0
        %1328 = vmatpush1.xpose.msra.mxu0 0.0
        %1329 = vmatprep.subr.mxu0 0.0
        %1330 = vmatpush1.xpose.msra.mxu0 0.0
        %1331 = vmatprep.subr.mxu0 0.0
        %1332 = vmatpush1.xpose.msra.mxu0 0.0
        %1333 = vmatprep.subr.mxu0 0.0
        %1334 = vmatpush1.xpose.msra.mxu0 0.0
        %1335 = vmatprep.subr.mxu0 0.0
        %1336 = vmatpush1.xpose.msra.mxu0 0.0
        %1337 = vmatprep.subr.mxu0 0.0
        %1338 = vmatpush1.xpose.msra.mxu0 0.0
        %1339 = vmatprep.subr.mxu0 0.0
        %1340 = vmatpush1.xpose.msra.mxu0 0.0
        %1341 = vmatprep.subr.mxu0 0.0
        %1342 = vmatpush1.xpose.msra.mxu0 0.0
        %1343 = vmatprep.subr.mxu0 0.0
        %1344 = vmatpush1.xpose.msra.mxu0 0.0
        %1345 = vmatprep.subr.mxu0 0.0
        %1346 = vmatpush1.xpose.msra.mxu0 0.0
        %1347 = vmatprep.subr.mxu0 0.0
        %1348 = vmatpush1.xpose.msra.mxu0 0.0
        %1349 = vmatprep.subr.mxu0 0.0
        %1350 = vmatpush1.xpose.msra.mxu0 0.0
        %1351 = vmatprep.subr.mxu0 0.0
        %1352 = vmatpush1.xpose.msra.mxu0 0.0
        %1353 = vmatprep.subr.mxu0 0.0
        %1354 = vmatpush1.xpose.msra.mxu0 0.0
        %1355 = vmatprep.subr.mxu0 0.0
        %1356 = vmatpush1.xpose.msra.mxu0 0.0
        %1357 = vmatprep.subr.mxu0 0.0
        %1358 = vmatpush1.xpose.msra.mxu0 0.0
        %1359 = vmatprep.subr.mxu0 0.0
        %1360 = vmatpush1.xpose.msra.mxu0 0.0
        %1361 = vmatprep.subr.mxu0 0.0
        %1362 = vmatpush1.xpose.msra.mxu0 0.0
        %1363 = vmatprep.subr.mxu0 0.0
        %1364 = vmatpush1.xpose.msra.mxu0 0.0
        %1365 = vmatprep.subr.mxu0 0.0
        %1366 = vmatpush1.xpose.msra.mxu0 0.0
        %1367 = vmatprep.subr.mxu0 0.0
        %1368 = vmatpush1.xpose.msra.mxu0 0.0
        %1369 = vmatprep.subr.mxu0 0.0
        %1370 = vmatpush1.xpose.msra.mxu0 0.0
        %1371 = vmatprep.subr.mxu0 0.0
        %1372 = vmatpush1.xpose.msra.mxu0 0.0
        %1373 = vmatprep.subr.mxu0 0.0
        %1374 = vmatpush1.xpose.msra.mxu0 0.0
        %1375 = vmatprep.subr.mxu0 0.0
        %1376 = vmatpush1.xpose.msra.mxu0 0.0
        %1377 = vmatprep.subr.mxu0 0.0
        %1378 = vmatpush1.xpose.msra.mxu0 0.0
        %1379 = vmatprep.subr.mxu0 0.0
        %1380 = vmatpush1.xpose.msra.mxu0 0.0
        %1381 = vmatprep.subr.mxu0 0.0
        %1382 = vmatpush1.xpose.msra.mxu0 0.0
        %1383 = vmatprep.subr.mxu0 0.0
        %1384 = vmatpush1.xpose.msra.mxu0 0.0
        %1385 = vmatprep.subr.mxu0 0.0
        %1386 = vmatpush1.xpose.msra.mxu0 0.0
        %1387 = vmatprep.mubr.f32.mxu0 0.0
        %1388 = vmatmul.mubr.f32.gmra.mrb[0].mxu0 %v1318
        %v1389 = vpop.f32.mrb[0].mxu0
        %v1390 = vadd.f32 0.0, %v1389
        %v1391 = vpop.f32.mrb[0].mxu0
        %1392 = vdwg.mxu0
        %v1393 = vmul.f32 %v1390, 0.25
        %v1394 = vsel %vm969, %v1393, -inf
        %1395 = vmax.xlane.f32.xlu0 %v1394
        %v1396 = vpop.xlane.xlu0 %1395
        %v1397 = vsub.f32 %v1393, %v1396
        %v1398 = vmul.f32 %v1397, 1.442695
        %v1399 = vpow.pop %v1398
        %v1400 = vsel %vm969, %v1399, 0.0
        %1401 = vadd.xlane.f32.xlu0 %v1400
        %v1402 = vpop.xlane.xlu0 %1401
        %v1403 = vrcp.pop %v1402
        %v1404 = vmul.f32 %v1399, %v1403
        %v1406 = vsel %vm969, %v1404, 0
        %1408 = vmatprep.subr.mxu0 0.0
        %1409 = vmatpush1.msra.mxu0 %v1314
        %1410 = vmatprep.subr.mxu0 0.0
        %1411 = vmatpush1.msra.mxu0 0.0
        %1412 = vmatprep.subr.mxu0 0.0
        %1413 = vmatpush1.msra.mxu0 0.0
        %1414 = vmatprep.subr.mxu0 0.0
        %1415 = vmatpush1.msra.mxu0 0.0
        %1416 = vmatprep.subr.mxu0 0.0
        %1417 = vmatpush1.msra.mxu0 0.0
        %1418 = vmatprep.subr.mxu0 0.0
        %1419 = vmatpush1.msra.mxu0 0.0
        %1420 = vmatprep.subr.mxu0 0.0
        %1421 = vmatpush1.msra.mxu0 0.0
        %1422 = vmatprep.subr.mxu0 0.0
        %1423 = vmatpush1.msra.mxu0 0.0
        %1424 = vmatprep.subr.mxu0 0.0
        %1425 = vmatpush1.msra.mxu0 0.0
        %1426 = vmatprep.subr.mxu0 0.0
        %1427 = vmatpush1.msra.mxu0 0.0
        %1428 = vmatprep.subr.mxu0 0.0
        %1429 = vmatpush1.msra.mxu0 0.0
        %1430 = vmatprep.subr.mxu0 0.0
        %1431 = vmatpush1.msra.mxu0 0.0
        %1432 = vmatprep.subr.mxu0 0.0
        %1433 = vmatpush1.msra.mxu0 0.0
        %1434 = vmatprep.subr.mxu0 0.0
        %1435 = vmatpush1.msra.mxu0 0.0
        %1436 = vmatprep.subr.mxu0 0.0
        %1437 = vmatpush1.msra.mxu0 0.0
        %1438 = vmatprep.subr.mxu0 0.0
        %1439 = vmatpush1.msra.mxu0 0.0
        %1440 = vmatprep.subr.mxu0 0.0
        %1441 = vmatpush1.msra.mxu0 0.0
        %1442 = vmatprep.subr.mxu0 0.0
        %1443 = vmatpush1.msra.mxu0 0.0
        %1444 = vmatprep.subr.mxu0 0.0
        %1445 = vmatpush1.msra.mxu0 0.0
        %1446 = vmatprep.subr.mxu0 0.0
        %1447 = vmatpush1.msra.mxu0 0.0
        %1448 = vmatprep.subr.mxu0 0.0
        %1449 = vmatpush1.msra.mxu0 0.0
        %1450 = vmatprep.subr.mxu0 0.0
        %1451 = vmatpush1.msra.mxu0 0.0
        %1452 = vmatprep.subr.mxu0 0.0
        %1453 = vmatpush1.msra.mxu0 0.0
        %1454 = vmatprep.subr.mxu0 0.0
        %1455 = vmatpush1.msra.mxu0 0.0
        %1456 = vmatprep.subr.mxu0 0.0
        %1457 = vmatpush1.msra.mxu0 0.0
        %1458 = vmatprep.subr.mxu0 0.0
        %1459 = vmatpush1.msra.mxu0 0.0
        %1460 = vmatprep.subr.mxu0 0.0
        %1461 = vmatpush1.msra.mxu0 0.0
        %1462 = vmatprep.subr.mxu0 0.0
        %1463 = vmatpush1.msra.mxu0 0.0
        %1464 = vmatprep.subr.mxu0 0.0
        %1465 = vmatpush1.msra.mxu0 0.0
        %1466 = vmatprep.subr.mxu0 0.0
        %1467 = vmatpush1.msra.mxu0 0.0
        %1468 = vmatprep.subr.mxu0 0.0
        %1469 = vmatpush1.msra.mxu0 0.0
        %1470 = vmatprep.subr.mxu0 0.0
        %1471 = vmatpush1.msra.mxu0 0.0
        %1472 = vmatprep.mubr.f32.mxu0 0.0
        %1473 = vmatmul.mubr.f32.gmra.mrb[0].mxu0 %v1406
        %v1474 = vpop.f32.mrb[0].mxu0
        %v1475 = vadd.f32 0.0, %v1474
        %v1476 = vpop.f32.mrb[0].mxu0
        %1477 = vdwg.mxu0
        %s1478 = scalar_lea.vmem %s5, 16
        %v1479 = vld [vmem:[%s1478] sm:$0xff]
        %v1480 = vld [vmem:[%s1478 + $0x8] sm:$0xff]
        %v1482 = vsel %vm891, %v1475, 0
        %1484 = vmatprep.subr.mxu0 0.0
        %1485 = vmatpush1.msra.mxu0 %v1479
        %1486 = vmatprep.subr.mxu0 0.0
        %1487 = vmatpush1.msra.mxu0 %v1480
        %1488 = vmatprep.subr.mxu0 0.0
        %1489 = vmatpush1.msra.mxu0 0.0
        %1490 = vmatprep.subr.mxu0 0.0
        %1491 = vmatpush1.msra.mxu0 0.0
        %1492 = vmatprep.subr.mxu0 0.0
        %1493 = vmatpush1.msra.mxu0 0.0
        %1494 = vmatprep.subr.mxu0 0.0
        %1495 = vmatpush1.msra.mxu0 0.0
        %1496 = vmatprep.subr.mxu0 0.0
        %1497 = vmatpush1.msra.mxu0 0.0
        %1498 = vmatprep.subr.mxu0 0.0
        %1499 = vmatpush1.msra.mxu0 0.0
        %1500 = vmatprep.subr.mxu0 0.0
        %1501 = vmatpush1.msra.mxu0 0.0
        %1502 = vmatprep.subr.mxu0 0.0
        %1503 = vmatpush1.msra.mxu0 0.0
        %1504 = vmatprep.subr.mxu0 0.0
        %1505 = vmatpush1.msra.mxu0 0.0
        %1506 = vmatprep.subr.mxu0 0.0
        %1507 = vmatpush1.msra.mxu0 0.0
        %1508 = vmatprep.subr.mxu0 0.0
        %1509 = vmatpush1.msra.mxu0 0.0
        %1510 = vmatprep.subr.mxu0 0.0
        %1511 = vmatpush1.msra.mxu0 0.0
        %1512 = vmatprep.subr.mxu0 0.0
        %1513 = vmatpush1.msra.mxu0 0.0
        %1514 = vmatprep.subr.mxu0 0.0
        %1515 = vmatpush1.msra.mxu0 0.0
        %1516 = vmatprep.subr.mxu0 0.0
        %1517 = vmatpush1.msra.mxu0 0.0
        %1518 = vmatprep.subr.mxu0 0.0
        %1519 = vmatpush1.msra.mxu0 0.0
        %1520 = vmatprep.subr.mxu0 0.0
        %1521 = vmatpush1.msra.mxu0 0.0
        %1522 = vmatprep.subr.mxu0 0.0
        %1523 = vmatpush1.msra.mxu0 0.0
        %1524 = vmatprep.subr.mxu0 0.0
        %1525 = vmatpush1.msra.mxu0 0.0
        %1526 = vmatprep.subr.mxu0 0.0
        %1527 = vmatpush1.msra.mxu0 0.0
        %1528 = vmatprep.subr.mxu0 0.0
        %1529 = vmatpush1.msra.mxu0 0.0
        %1530 = vmatprep.subr.mxu0 0.0
        %1531 = vmatpush1.msra.mxu0 0.0
        %1532 = vmatprep.subr.mxu0 0.0
        %1533 = vmatpush1.msra.mxu0 0.0
        %1534 = vmatprep.subr.mxu0 0.0
        %1535 = vmatpush1.msra.mxu0 0.0
        %1536 = vmatprep.subr.mxu0 0.0
        %1537 = vmatpush1.msra.mxu0 0.0
        %1538 = vmatprep.subr.mxu0 0.0
        %1539 = vmatpush1.msra.mxu0 0.0
        %1540 = vmatprep.subr.mxu0 0.0
        %1541 = vmatpush1.msra.mxu0 0.0
        %1542 = vmatprep.subr.mxu0 0.0
        %1543 = vmatpush1.msra.mxu0 0.0
        %1544 = vmatprep.subr.mxu0 0.0
        %1545 = vmatpush1.msra.mxu0 0.0
        %1546 = vmatprep.subr.mxu0 0.0
        %1547 = vmatpush1.msra.mxu0 0.0
        %1548 = vmatprep.mubr.f32.mxu0 0.0
        %1549 = vmatmul.mubr.f32.gmra.mrb[0].mxu0 %v1482
        %v1550 = vpop.f32.mrb[0].mxu0
        %v1551 = vadd.f32 0.0, %v1550
        %v1552 = vpop.f32.mrb[0].mxu0
        %1553 = vdwg.mxu0
        %v1555 = vsel %vm891, %v1051, 0
        %1557 = vmatprep.subr.mxu0 0.0
        %1558 = vmatpush1.msra.mxu0 %v1054
        %1559 = vmatprep.subr.mxu0 0.0
        %1560 = vmatpush1.msra.mxu0 %v1055
        %1561 = vmatprep.subr.mxu0 0.0
        %1562 = vmatpush1.msra.mxu0 0.0
        %1563 = vmatprep.subr.mxu0 0.0
        %1564 = vmatpush1.msra.mxu0 0.0
        %1565 = vmatprep.subr.mxu0 0.0
        %1566 = vmatpush1.msra.mxu0 0.0
        %1567 = vmatprep.subr.mxu0 0.0
        %1568 = vmatpush1.msra.mxu0 0.0
        %1569 = vmatprep.subr.mxu0 0.0
        %1570 = vmatpush1.msra.mxu0 0.0
        %1571 = vmatprep.subr.mxu0 0.0
        %1572 = vmatpush1.msra.mxu0 0.0
        %1573 = vmatprep.subr.mxu0 0.0
        %1574 = vmatpush1.msra.mxu0 0.0
        %1575 = vmatprep.subr.mxu0 0.0
        %1576 = vmatpush1.msra.mxu0 0.0
        %1577 = vmatprep.subr.mxu0 0.0
        %1578 = vmatpush1.msra.mxu0 0.0
        %1579 = vmatprep.subr.mxu0 0.0
        %1580 = vmatpush1.msra.mxu0 0.0
        %1581 = vmatprep.subr.mxu0 0.0
        %1582 = vmatpush1.msra.mxu0 0.0
        %1583 = vmatprep.subr.mxu0 0.0
        %1584 = vmatpush1.msra.mxu0 0.0
        %1585 = vmatprep.subr.mxu0 0.0
        %1586 = vmatpush1.msra.mxu0 0.0
        %1587 = vmatprep.subr.mxu0 0.0
        %1588 = vmatpush1.msra.mxu0 0.0
        %1589 = vmatprep.subr.mxu0 0.0
        %1590 = vmatpush1.msra.mxu0 0.0
        %1591 = vmatprep.subr.mxu0 0.0
        %1592 = vmatpush1.msra.mxu0 0.0
        %1593 = vmatprep.subr.mxu0 0.0
        %1594 = vmatpush1.msra.mxu0 0.0
        %1595 = vmatprep.subr.mxu0 0.0
        %1596 = vmatpush1.msra.mxu0 0.0
        %1597 = vmatprep.subr.mxu0 0.0
        %1598 = vmatpush1.msra.mxu0 0.0
        %1599 = vmatprep.subr.mxu0 0.0
        %1600 = vmatpush1.msra.mxu0 0.0
        %1601 = vmatprep.subr.mxu0 0.0
        %1602 = vmatpush1.msra.mxu0 0.0
        %1603 = vmatprep.subr.mxu0 0.0
        %1604 = vmatpush1.msra.mxu0 0.0
        %1605 = vmatprep.subr.mxu0 0.0
        %1606 = vmatpush1.msra.mxu0 0.0
        %1607 = vmatprep.subr.mxu0 0.0
        %1608 = vmatpush1.msra.mxu0 0.0
        %1609 = vmatprep.subr.mxu0 0.0
        %1610 = vmatpush1.msra.mxu0 0.0
        %1611 = vmatprep.subr.mxu0 0.0
        %1612 = vmatpush1.msra.mxu0 0.0
        %1613 = vmatprep.subr.mxu0 0.0
        %1614 = vmatpush1.msra.mxu0 0.0
        %1615 = vmatprep.subr.mxu0 0.0
        %1616 = vmatpush1.msra.mxu0 0.0
        %1617 = vmatprep.subr.mxu0 0.0
        %1618 = vmatpush1.msra.mxu0 0.0
        %1619 = vmatprep.subr.mxu0 0.0
        %1620 = vmatpush1.msra.mxu0 0.0
        %1621 = vmatprep.mubr.f32.mxu0 0.0
        %1622 = vmatmul.mubr.f32.gmra.mrb[0].mxu0 %v1555
        %v1623 = vpop.f32.mrb[0].mxu0
        %v1624 = vadd.f32 %v1551, %v1623
        %v1625 = vpop.f32.mrb[0].mxu0
        %1626 = vdwg.mxu0
        %s1627 = scalar_lea.vmem %s3, 128
        %v1628 = vld [vmem:[%s1627] sm:$0xff]
        %v1629 = vld [vmem:[%s1627 + $0x8] sm:$0xff]
        %v1630 = vld [vmem:[%s1627 + $0x10] sm:$0xff]
        %v1631 = vld [vmem:[%s1627 + $0x18] sm:$0xff]
        %v1632 = vld [vmem:[%s1627 + $0x20] sm:$0xff]
        %v1633 = vld [vmem:[%s1627 + $0x28] sm:$0xff]
        %v1634 = vld [vmem:[%s1627 + $0x30] sm:$0xff]
        %v1635 = vld [vmem:[%s1627 + $0x38] sm:$0xff]
        %s1636 = scalar_lea.vmem %s4, 2
        %v1637 = vld [vmem:[%s1636] sm:$0x1]
        %v1639 = vlaneseq
        %v1640 = vshrl.u32 %v1639, 7
        %v1641 = vsub.s32 0, %v1640
        %v1642 = vrot.slane %v1637, %v1641
        %1644 = vmatprep.subr.mxu0 0.0
        %1645 = vmatpush1.msra.mxu0 %v1628
        %1646 = vmatprep.subr.mxu0 0.0
        %1647 = vmatpush1.msra.mxu0 %v1629
        %1648 = vmatprep.subr.mxu0 0.0
        %1649 = vmatpush1.msra.mxu0 %v1630
        %1650 = vmatprep.subr.mxu0 0.0
        %1651 = vmatpush1.msra.mxu0 %v1631
        %1652 = vmatprep.subr.mxu0 0.0
        %1653 = vmatpush1.msra.mxu0 %v1632
        %1654 = vmatprep.subr.mxu0 0.0
        %1655 = vmatpush1.msra.mxu0 %v1633
        %1656 = vmatprep.subr.mxu0 0.0
        %1657 = vmatpush1.msra.mxu0 %v1634
        %1658 = vmatprep.subr.mxu0 0.0
        %1659 = vmatpush1.msra.mxu0 %v1635
        %1660 = vmatprep.subr.mxu0 0.0
        %1661 = vmatpush1.msra.mxu0 0.0
        %1662 = vmatprep.subr.mxu0 0.0
        %1663 = vmatpush1.msra.mxu0 0.0
        %1664 = vmatprep.subr.mxu0 0.0
        %1665 = vmatpush1.msra.mxu0 0.0
        %1666 = vmatprep.subr.mxu0 0.0
        %1667 = vmatpush1.msra.mxu0 0.0
        %1668 = vmatprep.subr.mxu0 0.0
        %1669 = vmatpush1.msra.mxu0 0.0
        %1670 = vmatprep.subr.mxu0 0.0
        %1671 = vmatpush1.msra.mxu0 0.0
        %1672 = vmatprep.subr.mxu0 0.0
        %1673 = vmatpush1.msra.mxu0 0.0
        %1674 = vmatprep.subr.mxu0 0.0
        %1675 = vmatpush1.msra.mxu0 0.0
        %1676 = vmatprep.subr.mxu0 0.0
        %1677 = vmatpush1.msra.mxu0 0.0
        %1678 = vmatprep.subr.mxu0 0.0
        %1679 = vmatpush1.msra.mxu0 0.0
        %1680 = vmatprep.subr.mxu0 0.0
        %1681 = vmatpush1.msra.mxu0 0.0
        %1682 = vmatprep.subr.mxu0 0.0
        %1683 = vmatpush1.msra.mxu0 0.0
        %1684 = vmatprep.subr.mxu0 0.0
        %1685 = vmatpush1.msra.mxu0 0.0
        %1686 = vmatprep.subr.mxu0 0.0
        %1687 = vmatpush1.msra.mxu0 0.0
        %1688 = vmatprep.subr.mxu0 0.0
        %1689 = vmatpush1.msra.mxu0 0.0
        %1690 = vmatprep.subr.mxu0 0.0
        %1691 = vmatpush1.msra.mxu0 0.0
        %1692 = vmatprep.subr.mxu0 0.0
        %1693 = vmatpush1.msra.mxu0 0.0
        %1694 = vmatprep.subr.mxu0 0.0
        %1695 = vmatpush1.msra.mxu0 0.0
        %1696 = vmatprep.subr.mxu0 0.0
        %1697 = vmatpush1.msra.mxu0 0.0
        %1698 = vmatprep.subr.mxu0 0.0
        %1699 = vmatpush1.msra.mxu0 0.0
        %1700 = vmatprep.subr.mxu0 0.0
        %1701 = vmatpush1.msra.mxu0 0.0
        %1702 = vmatprep.subr.mxu0 0.0
        %1703 = vmatpush1.msra.mxu0 0.0
        %1704 = vmatprep.subr.mxu0 0.0
        %1705 = vmatpush1.msra.mxu0 0.0
        %1706 = vmatprep.subr.mxu0 0.0
        %1707 = vmatpush1.msra.mxu0 0.0
        %1708 = vmatprep.mubr.f32.mxu0 0.0
        %1709 = vmatmul.mubr.f32.gmra.mrb[0].mxu0 %v645
        %v1710 = vpop.f32.mrb[0].mxu0
        %v1711 = vadd.f32 %v1642, %v1710
        %v1712 = vpop.f32.mrb[0].mxu0
        %1713 = vdwg.mxu0
        %s1714 = scalar_lea.vmem %s3, 384
        %v1715 = vld [vmem:[%s1714] sm:$0xff]
        %v1716 = vld [vmem:[%s1714 + $0x8] sm:$0xff]
        %v1717 = vld [vmem:[%s1714 + $0x10] sm:$0xff]
        %v1718 = vld [vmem:[%s1714 + $0x18] sm:$0xff]
        %v1719 = vld [vmem:[%s1714 + $0x20] sm:$0xff]
        %v1720 = vld [vmem:[%s1714 + $0x28] sm:$0xff]
        %v1721 = vld [vmem:[%s1714 + $0x30] sm:$0xff]
        %v1722 = vld [vmem:[%s1714 + $0x38] sm:$0xff]
        %s1723 = scalar_lea.vmem %s4, 6
        %v1724 = vld [vmem:[%s1723] sm:$0x1]
        %v1726 = vlaneseq
        %v1727 = vshrl.u32 %v1726, 7
        %v1728 = vsub.s32 0, %v1727
        %v1729 = vrot.slane %v1724, %v1728
        %1731 = vmatprep.subr.mxu0 0.0
        %1732 = vmatpush1.msra.mxu0 %v1715
        %1733 = vmatprep.subr.mxu0 0.0
        %1734 = vmatpush1.msra.mxu0 %v1716
        %1735 = vmatprep.subr.mxu0 0.0
        %1736 = vmatpush1.msra.mxu0 %v1717
        %1737 = vmatprep.subr.mxu0 0.0
        %1738 = vmatpush1.msra.mxu0 %v1718
        %1739 = vmatprep.subr.mxu0 0.0
        %1740 = vmatpush1.msra.mxu0 %v1719
        %1741 = vmatprep.subr.mxu0 0.0
        %1742 = vmatpush1.msra.mxu0 %v1720
        %1743 = vmatprep.subr.mxu0 0.0
        %1744 = vmatpush1.msra.mxu0 %v1721
        %1745 = vmatprep.subr.mxu0 0.0
        %1746 = vmatpush1.msra.mxu0 %v1722
        %1747 = vmatprep.subr.mxu0 0.0
        %1748 = vmatpush1.msra.mxu0 0.0
        %1749 = vmatprep.subr.mxu0 0.0
        %1750 = vmatpush1.msra.mxu0 0.0
        %1751 = vmatprep.subr.mxu0 0.0
        %1752 = vmatpush1.msra.mxu0 0.0
        %1753 = vmatprep.subr.mxu0 0.0
        %1754 = vmatpush1.msra.mxu0 0.0
        %1755 = vmatprep.subr.mxu0 0.0
        %1756 = vmatpush1.msra.mxu0 0.0
        %1757 = vmatprep.subr.mxu0 0.0
        %1758 = vmatpush1.msra.mxu0 0.0
        %1759 = vmatprep.subr.mxu0 0.0
        %1760 = vmatpush1.msra.mxu0 0.0
        %1761 = vmatprep.subr.mxu0 0.0
        %1762 = vmatpush1.msra.mxu0 0.0
        %1763 = vmatprep.subr.mxu0 0.0
        %1764 = vmatpush1.msra.mxu0 0.0
        %1765 = vmatprep.subr.mxu0 0.0
        %1766 = vmatpush1.msra.mxu0 0.0
        %1767 = vmatprep.subr.mxu0 0.0
        %1768 = vmatpush1.msra.mxu0 0.0
        %1769 = vmatprep.subr.mxu0 0.0
        %1770 = vmatpush1.msra.mxu0 0.0
        %1771 = vmatprep.subr.mxu0 0.0
        %1772 = vmatpush1.msra.mxu0 0.0
        %1773 = vmatprep.subr.mxu0 0.0
        %1774 = vmatpush1.msra.mxu0 0.0
        %1775 = vmatprep.subr.mxu0 0.0
        %1776 = vmatpush1.msra.mxu0 0.0
        %1777 = vmatprep.subr.mxu0 0.0
        %1778 = vmatpush1.msra.mxu0 0.0
        %1779 = vmatprep.subr.mxu0 0.0
        %1780 = vmatpush1.msra.mxu0 0.0
        %1781 = vmatprep.subr.mxu0 0.0
        %1782 = vmatpush1.msra.mxu0 0.0
        %1783 = vmatprep.subr.mxu0 0.0
        %1784 = vmatpush1.msra.mxu0 0.0
        %1785 = vmatprep.subr.mxu0 0.0
        %1786 = vmatpush1.msra.mxu0 0.0
        %1787 = vmatprep.subr.mxu0 0.0
        %1788 = vmatpush1.msra.mxu0 0.0
        %1789 = vmatprep.subr.mxu0 0.0
        %1790 = vmatpush1.msra.mxu0 0.0
        %1791 = vmatprep.subr.mxu0 0.0
        %1792 = vmatpush1.msra.mxu0 0.0
        %1793 = vmatprep.subr.mxu0 0.0
        %1794 = vmatpush1.msra.mxu0 0.0
        %1795 = vmatprep.mubr.f32.mxu0 0.0
        %1796 = vmatmul.mubr.f32.gmra.mrb[0].mxu0 %v645
        %v1797 = vpop.f32.mrb[0].mxu0
        %v1798 = vadd.f32 %v1729, %v1797
        %v1799 = vpop.f32.mrb[0].mxu0
        %1800 = vdwg.mxu0
        %s1801 = scalar_lea.vmem %s3, 640
        %v1802 = vld [vmem:[%s1801] sm:$0xff]
        %v1803 = vld [vmem:[%s1801 + $0x8] sm:$0xff]
        %v1804 = vld [vmem:[%s1801 + $0x10] sm:$0xff]
        %v1805 = vld [vmem:[%s1801 + $0x18] sm:$0xff]
        %v1806 = vld [vmem:[%s1801 + $0x20] sm:$0xff]
        %v1807 = vld [vmem:[%s1801 + $0x28] sm:$0xff]
        %v1808 = vld [vmem:[%s1801 + $0x30] sm:$0xff]
        %v1809 = vld [vmem:[%s1801 + $0x38] sm:$0xff]
        %s1810 = scalar_lea.vmem %s4, 10
        %v1811 = vld [vmem:[%s1810] sm:$0x1]
        %v1813 = vlaneseq
        %v1814 = vshrl.u32 %v1813, 7
        %v1815 = vsub.s32 0, %v1814
        %v1816 = vrot.slane %v1811, %v1815
        %1818 = vmatprep.subr.mxu0 0.0
        %1819 = vmatpush1.msra.mxu0 %v1802
        %1820 = vmatprep.subr.mxu0 0.0
        %1821 = vmatpush1.msra.mxu0 %v1803
        %1822 = vmatprep.subr.mxu0 0.0
        %1823 = vmatpush1.msra.mxu0 %v1804
        %1824 = vmatprep.subr.mxu0 0.0
        %1825 = vmatpush1.msra.mxu0 %v1805
        %1826 = vmatprep.subr.mxu0 0.0
        %1827 = vmatpush1.msra.mxu0 %v1806
        %1828 = vmatprep.subr.mxu0 0.0
        %1829 = vmatpush1.msra.mxu0 %v1807
        %1830 = vmatprep.subr.mxu0 0.0
        %1831 = vmatpush1.msra.mxu0 %v1808
        %1832 = vmatprep.subr.mxu0 0.0
        %1833 = vmatpush1.msra.mxu0 %v1809
        %1834 = vmatprep.subr.mxu0 0.0
        %1835 = vmatpush1.msra.mxu0 0.0
        %1836 = vmatprep.subr.mxu0 0.0
        %1837 = vmatpush1.msra.mxu0 0.0
        %1838 = vmatprep.subr.mxu0 0.0
        %1839 = vmatpush1.msra.mxu0 0.0
        %1840 = vmatprep.subr.mxu0 0.0
        %1841 = vmatpush1.msra.mxu0 0.0
        %1842 = vmatprep.subr.mxu0 0.0
        %1843 = vmatpush1.msra.mxu0 0.0
        %1844 = vmatprep.subr.mxu0 0.0
        %1845 = vmatpush1.msra.mxu0 0.0
        %1846 = vmatprep.subr.mxu0 0.0
        %1847 = vmatpush1.msra.mxu0 0.0
        %1848 = vmatprep.subr.mxu0 0.0
        %1849 = vmatpush1.msra.mxu0 0.0
        %1850 = vmatprep.subr.mxu0 0.0
        %1851 = vmatpush1.msra.mxu0 0.0
        %1852 = vmatprep.subr.mxu0 0.0
        %1853 = vmatpush1.msra.mxu0 0.0
        %1854 = vmatprep.subr.mxu0 0.0
        %1855 = vmatpush1.msra.mxu0 0.0
        %1856 = vmatprep.subr.mxu0 0.0
        %1857 = vmatpush1.msra.mxu0 0.0
        %1858 = vmatprep.subr.mxu0 0.0
        %1859 = vmatpush1.msra.mxu0 0.0
        %1860 = vmatprep.subr.mxu0 0.0
        %1861 = vmatpush1.msra.mxu0 0.0
        %1862 = vmatprep.subr.mxu0 0.0
        %1863 = vmatpush1.msra.mxu0 0.0
        %1864 = vmatprep.subr.mxu0 0.0
        %1865 = vmatpush1.msra.mxu0 0.0
        %1866 = vmatprep.subr.mxu0 0.0
        %1867 = vmatpush1.msra.mxu0 0.0
        %1868 = vmatprep.subr.mxu0 0.0
        %1869 = vmatpush1.msra.mxu0 0.0
        %1870 = vmatprep.subr.mxu0 0.0
        %1871 = vmatpush1.msra.mxu0 0.0
        %1872 = vmatprep.subr.mxu0 0.0
        %1873 = vmatpush1.msra.mxu0 0.0
        %1874 = vmatprep.subr.mxu0 0.0
        %1875 = vmatpush1.msra.mxu0 0.0
        %1876 = vmatprep.subr.mxu0 0.0
        %1877 = vmatpush1.msra.mxu0 0.0
        %1878 = vmatprep.subr.mxu0 0.0
        %1879 = vmatpush1.msra.mxu0 0.0
        %1880 = vmatprep.subr.mxu0 0.0
        %1881 = vmatpush1.msra.mxu0 0.0
        %1882 = vmatprep.mubr.f32.mxu0 0.0
        %1883 = vmatmul.mubr.f32.gmra.mrb[0].mxu0 %v645
        %v1884 = vpop.f32.mrb[0].mxu0
        %v1885 = vadd.f32 %v1816, %v1884
        %v1886 = vpop.f32.mrb[0].mxu0
        %1887 = vdwg.mxu0
        %v1889 = vsel %vm891, %v1711, 0
        %v1892 = vsel %vm891, %v1798, 0
        %1894 = vmatprep.subr.mxu0 0.0
        %1895 = vmatpush1.xpose.msra.mxu0 %v1892
        %1896 = vmatprep.subr.mxu0 0.0
        %1897 = vmatpush1.xpose.msra.mxu0 0.0
        %1898 = vmatprep.subr.mxu0 0.0
        %1899 = vmatpush1.xpose.msra.mxu0 0.0
        %1900 = vmatprep.subr.mxu0 0.0
        %1901 = vmatpush1.xpose.msra.mxu0 0.0
        %1902 = vmatprep.subr.mxu0 0.0
        %1903 = vmatpush1.xpose.msra.mxu0 0.0
        %1904 = vmatprep.subr.mxu0 0.0
        %1905 = vmatpush1.xpose.msra.mxu0 0.0
        %1906 = vmatprep.subr.mxu0 0.0
        %1907 = vmatpush1.xpose.msra.mxu0 0.0
        %1908 = vmatprep.subr.mxu0 0.0
        %1909 = vmatpush1.xpose.msra.mxu0 0.0
        %1910 = vmatprep.subr.mxu0 0.0
        %1911 = vmatpush1.xpose.msra.mxu0 0.0
        %1912 = vmatprep.subr.mxu0 0.0
        %1913 = vmatpush1.xpose.msra.mxu0 0.0
        %1914 = vmatprep.subr.mxu0 0.0
        %1915 = vmatpush1.xpose.msra.mxu0 0.0
        %1916 = vmatprep.subr.mxu0 0.0
        %1917 = vmatpush1.xpose.msra.mxu0 0.0
        %1918 = vmatprep.subr.mxu0 0.0
        %1919 = vmatpush1.xpose.msra.mxu0 0.0
        %1920 = vmatprep.subr.mxu0 0.0
        %1921 = vmatpush1.xpose.msra.mxu0 0.0
        %1922 = vmatprep.subr.mxu0 0.0
        %1923 = vmatpush1.xpose.msra.mxu0 0.0
        %1924 = vmatprep.subr.mxu0 0.0
        %1925 = vmatpush1.xpose.msra.mxu0 0.0
        %1926 = vmatprep.subr.mxu0 0.0
        %1927 = vmatpush1.xpose.msra.mxu0 0.0
        %1928 = vmatprep.subr.mxu0 0.0
        %1929 = vmatpush1.xpose.msra.mxu0 0.0
        %1930 = vmatprep.subr.mxu0 0.0
        %1931 = vmatpush1.xpose.msra.mxu0 0.0
        %1932 = vmatprep.subr.mxu0 0.0
        %1933 = vmatpush1.xpose.msra.mxu0 0.0
        %1934 = vmatprep.subr.mxu0 0.0
        %1935 = vmatpush1.xpose.msra.mxu0 0.0
        %1936 = vmatprep.subr.mxu0 0.0
        %1937 = vmatpush1.xpose.msra.mxu0 0.0
        %1938 = vmatprep.subr.mxu0 0.0
        %1939 = vmatpush1.xpose.msra.mxu0 0.0
        %1940 = vmatprep.subr.mxu0 0.0
        %1941 = vmatpush1.xpose.msra.mxu0 0.0
        %1942 = vmatprep.subr.mxu0 0.0
        %1943 = vmatpush1.xpose.msra.mxu0 0.0
        %1944 = vmatprep.subr.mxu0 0.0
        %1945 = vmatpush1.xpose.msra.mxu0 0.0
        %1946 = vmatprep.subr.mxu0 0.0
        %1947 = vmatpush1.xpose.msra.mxu0 0.0
        %1948 = vmatprep.subr.mxu0 0.0
        %1949 = vmatpush1.xpose.msra.mxu0 0.0
        %1950 = vmatprep.subr.mxu0 0.0
        %1951 = vmatpush1.xpose.msra.mxu0 0.0
        %1952 = vmatprep.subr.mxu0 0.0
        %1953 = vmatpush1.xpose.msra.mxu0 0.0
        %1954 = vmatprep.subr.mxu0 0.0
        %1955 = vmatpush1.xpose.msra.mxu0 0.0
        %1956 = vmatprep.subr.mxu0 0.0
        %1957 = vmatpush1.xpose.msra.mxu0 0.0
        %1958 = vmatprep.mubr.f32.mxu0 0.0
        %1959 = vmatmul.mubr.f32.gmra.mrb[0].mxu0 %v1889
        %v1960 = vpop.f32.mrb[0].mxu0
        %v1961 = vadd.f32 0.0, %v1960
        %v1962 = vpop.f32.mrb[0].mxu0
        %1963 = vdwg.mxu0
        %v1964 = vmul.f32 %v1961, 0.25
        %v1965 = vsel %vm969, %v1964, -inf
        %1966 = vmax.xlane.f32.xlu0 %v1965
        %v1967 = vpop.xlane.xlu0 %1966
        %v1968 = vsub.f32 %v1964, %v1967
        %v1969 = vmul.f32 %v1968, 1.442695
        %v1970 = vpow.pop %v1969
        %v1971 = vsel %vm969, %v1970, 0.0
        %1972 = vadd.xlane.f32.xlu0 %v1971
        %v1973 = vpop.xlane.xlu0 %1972
        %v1974 = vrcp.pop %v1973
        %v1975 = vmul.f32 %v1970, %v1974
        %v1977 = vsel %vm969, %v1975, 0
        %1979 = vmatprep.subr.mxu0 0.0
        %1980 = vmatpush1.msra.mxu0 %v1885
        %1981 = vmatprep.subr.mxu0 0.0
        %1982 = vmatpush1.msra.mxu0 0.0
        %1983 = vmatprep.subr.mxu0 0.0
        %1984 = vmatpush1.msra.mxu0 0.0
        %1985 = vmatprep.subr.mxu0 0.0
        %1986 = vmatpush1.msra.mxu0 0.0
        %1987 = vmatprep.subr.mxu0 0.0
        %1988 = vmatpush1.msra.mxu0 0.0
        %1989 = vmatprep.subr.mxu0 0.0
        %1990 = vmatpush1.msra.mxu0 0.0
        %1991 = vmatprep.subr.mxu0 0.0
        %1992 = vmatpush1.msra.mxu0 0.0
        %1993 = vmatprep.subr.mxu0 0.0
        %1994 = vmatpush1.msra.mxu0 0.0
        %1995 = vmatprep.subr.mxu0 0.0
        %1996 = vmatpush1.msra.mxu0 0.0
        %1997 = vmatprep.subr.mxu0 0.0
        %1998 = vmatpush1.msra.mxu0 0.0
        %1999 = vmatprep.subr.mxu0 0.0
        %2000 = vmatpush1.msra.mxu0 0.0
        %2001 = vmatprep.subr.mxu0 0.0
        %2002 = vmatpush1.msra.mxu0 0.0
        %2003 = vmatprep.subr.mxu0 0.0
        %2004 = vmatpush1.msra.mxu0 0.0
        %2005 = vmatprep.subr.mxu0 0.0
        %2006 = vmatpush1.msra.mxu0 0.0
        %2007 = vmatprep.subr.mxu0 0.0
        %2008 = vmatpush1.msra.mxu0 0.0
        %2009 = vmatprep.subr.mxu0 0.0
        %2010 = vmatpush1.msra.mxu0 0.0
        %2011 = vmatprep.subr.mxu0 0.0
        %2012 = vmatpush1.msra.mxu0 0.0
        %2013 = vmatprep.subr.mxu0 0.0
        %2014 = vmatpush1.msra.mxu0 0.0
        %2015 = vmatprep.subr.mxu0 0.0
        %2016 = vmatpush1.msra.mxu0 0.0
        %2017 = vmatprep.subr.mxu0 0.0
        %2018 = vmatpush1.msra.mxu0 0.0
        %2019 = vmatprep.subr.mxu0 0.0
        %2020 = vmatpush1.msra.mxu0 0.0
        %2021 = vmatprep.subr.mxu0 0.0
        %2022 = vmatpush1.msra.mxu0 0.0
        %2023 = vmatprep.subr.mxu0 0.0
        %2024 = vmatpush1.msra.mxu0 0.0
        %2025 = vmatprep.subr.mxu0 0.0
        %2026 = vmatpush1.msra.mxu0 0.0
        %2027 = vmatprep.subr.mxu0 0.0
        %2028 = vmatpush1.msra.mxu0 0.0
        %2029 = vmatprep.subr.mxu0 0.0
        %2030 = vmatpush1.msra.mxu0 0.0
        %2031 = vmatprep.subr.mxu0 0.0
        %2032 = vmatpush1.msra.mxu0 0.0
        %2033 = vmatprep.subr.mxu0 0.0
        %2034 = vmatpush1.msra.mxu0 0.0
        %2035 = vmatprep.subr.mxu0 0.0
        %2036 = vmatpush1.msra.mxu0 0.0
        %2037 = vmatprep.subr.mxu0 0.0
        %2038 = vmatpush1.msra.mxu0 0.0
        %2039 = vmatprep.subr.mxu0 0.0
        %2040 = vmatpush1.msra.mxu0 0.0
        %2041 = vmatprep.subr.mxu0 0.0
        %2042 = vmatpush1.msra.mxu0 0.0
        %2043 = vmatprep.mubr.f32.mxu0 0.0
        %2044 = vmatmul.mubr.f32.gmra.mrb[0].mxu0 %v1977
        %v2045 = vpop.f32.mrb[0].mxu0
        %v2046 = vadd.f32 0.0, %v2045
        %v2047 = vpop.f32.mrb[0].mxu0
        %2048 = vdwg.mxu0
        %s2049 = scalar_lea.vmem %s5, 32
        %v2050 = vld [vmem:[%s2049] sm:$0xff]
        %v2051 = vld [vmem:[%s2049 + $0x8] sm:$0xff]
        %v2053 = vsel %vm891, %v2046, 0
        %2055 = vmatprep.subr.mxu0 0.0
        %2056 = vmatpush1.msra.mxu0 %v2050
        %2057 = vmatprep.subr.mxu0 0.0
        %2058 = vmatpush1.msra.mxu0 %v2051
        %2059 = vmatprep.subr.mxu0 0.0
        %2060 = vmatpush1.msra.mxu0 0.0
        %2061 = vmatprep.subr.mxu0 0.0
        %2062 = vmatpush1.msra.mxu0 0.0
        %2063 = vmatprep.subr.mxu0 0.0
        %2064 = vmatpush1.msra.mxu0 0.0
        %2065 = vmatprep.subr.mxu0 0.0
        %2066 = vmatpush1.msra.mxu0 0.0
        %2067 = vmatprep.subr.mxu0 0.0
        %2068 = vmatpush1.msra.mxu0 0.0
        %2069 = vmatprep.subr.mxu0 0.0
        %2070 = vmatpush1.msra.mxu0 0.0
        %2071 = vmatprep.subr.mxu0 0.0
        %2072 = vmatpush1.msra.mxu0 0.0
        %2073 = vmatprep.subr.mxu0 0.0
        %2074 = vmatpush1.msra.mxu0 0.0
        %2075 = vmatprep.subr.mxu0 0.0
        %2076 = vmatpush1.msra.mxu0 0.0
        %2077 = vmatprep.subr.mxu0 0.0
        %2078 = vmatpush1.msra.mxu0 0.0
        %2079 = vmatprep.subr.mxu0 0.0
        %2080 = vmatpush1.msra.mxu0 0.0
        %2081 = vmatprep.subr.mxu0 0.0
        %2082 = vmatpush1.msra.mxu0 0.0
        %2083 = vmatprep.subr.mxu0 0.0
        %2084 = vmatpush1.msra.mxu0 0.0
        %2085 = vmatprep.subr.mxu0 0.0
        %2086 = vmatpush1.msra.mxu0 0.0
        %2087 = vmatprep.subr.mxu0 0.0
        %2088 = vmatpush1.msra.mxu0 0.0
        %2089 = vmatprep.subr.mxu0 0.0
        %2090 = vmatpush1.msra.mxu0 0.0
        %2091 = vmatprep.subr.mxu0 0.0
        %2092 = vmatpush1.msra.mxu0 0.0
        %2093 = vmatprep.subr.mxu0 0.0
        %2094 = vmatpush1.msra.mxu0 0.0
        %2095 = vmatprep.subr.mxu0 0.0
        %2096 = vmatpush1.msra.mxu0 0.0
        %2097 = vmatprep.subr.mxu0 0.0
        %2098 = vmatpush1.msra.mxu0 0.0
        %2099 = vmatprep.subr.mxu0 0.0
        %2100 = vmatpush1.msra.mxu0 0.0
        %2101 = vmatprep.subr.mxu0 0.0
        %2102 = vmatpush1.msra.mxu0 0.0
        %2103 = vmatprep.subr.mxu0 0.0
        %2104 = vmatpush1.msra.mxu0 0.0
        %2105 = vmatprep.subr.mxu0 0.0
        %2106 = vmatpush1.msra.mxu0 0.0
        %2107 = vmatprep.subr.mxu0 0.0
        %2108 = vmatpush1.msra.mxu0 0.0
        %2109 = vmatprep.subr.mxu0 0.0
        %2110 = vmatpush1.msra.mxu0 0.0
        %2111 = vmatprep.subr.mxu0 0.0
        %2112 = vmatpush1.msra.mxu0 0.0
        %2113 = vmatprep.subr.mxu0 0.0
        %2114 = vmatpush1.msra.mxu0 0.0
        %2115 = vmatprep.subr.mxu0 0.0
        %2116 = vmatpush1.msra.mxu0 0.0
        %2117 = vmatprep.subr.mxu0 0.0
        %2118 = vmatpush1.msra.mxu0 0.0
        %2119 = vmatprep.mubr.f32.mxu0 0.0
        %2120 = vmatmul.mubr.f32.gmra.mrb[0].mxu0 %v2053
        %v2121 = vpop.f32.mrb[0].mxu0
        %v2122 = vadd.f32 0.0, %v2121
        %v2123 = vpop.f32.mrb[0].mxu0
        %2124 = vdwg.mxu0
        %v2125 = vadd.f32 %v1624, %v2122
        %s2126 = scalar_lea.vmem %s3, 192
        %v2127 = vld [vmem:[%s2126] sm:$0xff]
        %v2128 = vld [vmem:[%s2126 + $0x8] sm:$0xff]
        %v2129 = vld [vmem:[%s2126 + $0x10] sm:$0xff]
        %v2130 = vld [vmem:[%s2126 + $0x18] sm:$0xff]
        %v2131 = vld [vmem:[%s2126 + $0x20] sm:$0xff]
        %v2132 = vld [vmem:[%s2126 + $0x28] sm:$0xff]
        %v2133 = vld [vmem:[%s2126 + $0x30] sm:$0xff]
        %v2134 = vld [vmem:[%s2126 + $0x38] sm:$0xff]
        %s2135 = scalar_lea.vmem %s4, 3
        %v2136 = vld [vmem:[%s2135] sm:$0x1]
        %v2138 = vlaneseq
        %v2139 = vshrl.u32 %v2138, 7
        %v2140 = vsub.s32 0, %v2139
        %v2141 = vrot.slane %v2136, %v2140
        %2143 = vmatprep.subr.mxu0 0.0
        %2144 = vmatpush1.msra.mxu0 %v2127
        %2145 = vmatprep.subr.mxu0 0.0
        %2146 = vmatpush1.msra.mxu0 %v2128
        %2147 = vmatprep.subr.mxu0 0.0
        %2148 = vmatpush1.msra.mxu0 %v2129
        %2149 = vmatprep.subr.mxu0 0.0
        %2150 = vmatpush1.msra.mxu0 %v2130
        %2151 = vmatprep.subr.mxu0 0.0
        %2152 = vmatpush1.msra.mxu0 %v2131
        %2153 = vmatprep.subr.mxu0 0.0
        %2154 = vmatpush1.msra.mxu0 %v2132
        %2155 = vmatprep.subr.mxu0 0.0
        %2156 = vmatpush1.msra.mxu0 %v2133
        %2157 = vmatprep.subr.mxu0 0.0
        %2158 = vmatpush1.msra.mxu0 %v2134
        %2159 = vmatprep.subr.mxu0 0.0
        %2160 = vmatpush1.msra.mxu0 0.0
        %2161 = vmatprep.subr.mxu0 0.0
        %2162 = vmatpush1.msra.mxu0 0.0
        %2163 = vmatprep.subr.mxu0 0.0
        %2164 = vmatpush1.msra.mxu0 0.0
        %2165 = vmatprep.subr.mxu0 0.0
        %2166 = vmatpush1.msra.mxu0 0.0
        %2167 = vmatprep.subr.mxu0 0.0
        %2168 = vmatpush1.msra.mxu0 0.0
        %2169 = vmatprep.subr.mxu0 0.0
        %2170 = vmatpush1.msra.mxu0 0.0
        %2171 = vmatprep.subr.mxu0 0.0
        %2172 = vmatpush1.msra.mxu0 0.0
        %2173 = vmatprep.subr.mxu0 0.0
        %2174 = vmatpush1.msra.mxu0 0.0
        %2175 = vmatprep.subr.mxu0 0.0
        %2176 = vmatpush1.msra.mxu0 0.0
        %2177 = vmatprep.subr.mxu0 0.0
        %2178 = vmatpush1.msra.mxu0 0.0
        %2179 = vmatprep.subr.mxu0 0.0
        %2180 = vmatpush1.msra.mxu0 0.0
        %2181 = vmatprep.subr.mxu0 0.0
        %2182 = vmatpush1.msra.mxu0 0.0
        %2183 = vmatprep.subr.mxu0 0.0
        %2184 = vmatpush1.msra.mxu0 0.0
        %2185 = vmatprep.subr.mxu0 0.0
        %2186 = vmatpush1.msra.mxu0 0.0
        %2187 = vmatprep.subr.mxu0 0.0
        %2188 = vmatpush1.msra.mxu0 0.0
        %2189 = vmatprep.subr.mxu0 0.0
        %2190 = vmatpush1.msra.mxu0 0.0
        %2191 = vmatprep.subr.mxu0 0.0
        %2192 = vmatpush1.msra.mxu0 0.0
        %2193 = vmatprep.subr.mxu0 0.0
        %2194 = vmatpush1.msra.mxu0 0.0
        %2195 = vmatprep.subr.mxu0 0.0
        %2196 = vmatpush1.msra.mxu0 0.0
        %2197 = vmatprep.subr.mxu0 0.0
        %2198 = vmatpush1.msra.mxu0 0.0
        %2199 = vmatprep.subr.mxu0 0.0
        %2200 = vmatpush1.msra.mxu0 0.0
        %2201 = vmatprep.subr.mxu0 0.0
        %2202 = vmatpush1.msra.mxu0 0.0
        %2203 = vmatprep.subr.mxu0 0.0
        %2204 = vmatpush1.msra.mxu0 0.0
        %2205 = vmatprep.subr.mxu0 0.0
        %2206 = vmatpush1.msra.mxu0 0.0
        %2207 = vmatprep.mubr.f32.mxu0 0.0
        %2208 = vmatmul.mubr.f32.gmra.mrb[0].mxu0 %v645
        %v2209 = vpop.f32.mrb[0].mxu0
        %v2210 = vadd.f32 %v2141, %v2209
        %v2211 = vpop.f32.mrb[0].mxu0
        %2212 = vdwg.mxu0
        %s2213 = scalar_lea.vmem %s3, 448
        %v2214 = vld [vmem:[%s2213] sm:$0xff]
        %v2215 = vld [vmem:[%s2213 + $0x8] sm:$0xff]
        %v2216 = vld [vmem:[%s2213 + $0x10] sm:$0xff]
        %v2217 = vld [vmem:[%s2213 + $0x18] sm:$0xff]
        %v2218 = vld [vmem:[%s2213 + $0x20] sm:$0xff]
        %v2219 = vld [vmem:[%s2213 + $0x28] sm:$0xff]
        %v2220 = vld [vmem:[%s2213 + $0x30] sm:$0xff]
        %v2221 = vld [vmem:[%s2213 + $0x38] sm:$0xff]
        %s2222 = scalar_lea.vmem %s4, 7
        %v2223 = vld [vmem:[%s2222] sm:$0x1]
        %v2225 = vlaneseq
        %v2226 = vshrl.u32 %v2225, 7
        %v2227 = vsub.s32 0, %v2226
        %v2228 = vrot.slane %v2223, %v2227
        %2230 = vmatprep.subr.mxu0 0.0
        %2231 = vmatpush1.msra.mxu0 %v2214
        %2232 = vmatprep.subr.mxu0 0.0
        %2233 = vmatpush1.msra.mxu0 %v2215
        %2234 = vmatprep.subr.mxu0 0.0
        %2235 = vmatpush1.msra.mxu0 %v2216
        %2236 = vmatprep.subr.mxu0 0.0
        %2237 = vmatpush1.msra.mxu0 %v2217
        %2238 = vmatprep.subr.mxu0 0.0
        %2239 = vmatpush1.msra.mxu0 %v2218
        %2240 = vmatprep.subr.mxu0 0.0
        %2241 = vmatpush1.msra.mxu0 %v2219
        %2242 = vmatprep.subr.mxu0 0.0
        %2243 = vmatpush1.msra.mxu0 %v2220
        %2244 = vmatprep.subr.mxu0 0.0
        %2245 = vmatpush1.msra.mxu0 %v2221
        %2246 = vmatprep.subr.mxu0 0.0
        %2247 = vmatpush1.msra.mxu0 0.0
        %2248 = vmatprep.subr.mxu0 0.0
        %2249 = vmatpush1.msra.mxu0 0.0
        %2250 = vmatprep.subr.mxu0 0.0
        %2251 = vmatpush1.msra.mxu0 0.0
        %2252 = vmatprep.subr.mxu0 0.0
        %2253 = vmatpush1.msra.mxu0 0.0
        %2254 = vmatprep.subr.mxu0 0.0
        %2255 = vmatpush1.msra.mxu0 0.0
        %2256 = vmatprep.subr.mxu0 0.0
        %2257 = vmatpush1.msra.mxu0 0.0
        %2258 = vmatprep.subr.mxu0 0.0
        %2259 = vmatpush1.msra.mxu0 0.0
        %2260 = vmatprep.subr.mxu0 0.0
        %2261 = vmatpush1.msra.mxu0 0.0
        %2262 = vmatprep.subr.mxu0 0.0
        %2263 = vmatpush1.msra.mxu0 0.0
        %2264 = vmatprep.subr.mxu0 0.0
        %2265 = vmatpush1.msra.mxu0 0.0
        %2266 = vmatprep.subr.mxu0 0.0
        %2267 = vmatpush1.msra.mxu0 0.0
        %2268 = vmatprep.subr.mxu0 0.0
        %2269 = vmatpush1.msra.mxu0 0.0
        %2270 = vmatprep.subr.mxu0 0.0
        %2271 = vmatpush1.msra.mxu0 0.0
        %2272 = vmatprep.subr.mxu0 0.0
        %2273 = vmatpush1.msra.mxu0 0.0
        %2274 = vmatprep.subr.mxu0 0.0
        %2275 = vmatpush1.msra.mxu0 0.0
        %2276 = vmatprep.subr.mxu0 0.0
        %2277 = vmatpush1.msra.mxu0 0.0
        %2278 = vmatprep.subr.mxu0 0.0
        %2279 = vmatpush1.msra.mxu0 0.0
        %2280 = vmatprep.subr.mxu0 0.0
        %2281 = vmatpush1.msra.mxu0 0.0
        %2282 = vmatprep.subr.mxu0 0.0
        %2283 = vmatpush1.msra.mxu0 0.0
        %2284 = vmatprep.subr.mxu0 0.0
        %2285 = vmatpush1.msra.mxu0 0.0
        %2286 = vmatprep.subr.mxu0 0.0
        %2287 = vmatpush1.msra.mxu0 0.0
        %2288 = vmatprep.subr.mxu0 0.0
        %2289 = vmatpush1.msra.mxu0 0.0
        %2290 = vmatprep.subr.mxu0 0.0
        %2291 = vmatpush1.msra.mxu0 0.0
        %2292 = vmatprep.subr.mxu0 0.0
        %2293 = vmatpush1.msra.mxu0 0.0
        %2294 = vmatprep.mubr.f32.mxu0 0.0
        %2295 = vmatmul.mubr.f32.gmra.mrb[0].mxu0 %v645
        %v2296 = vpop.f32.mrb[0].mxu0
        %v2297 = vadd.f32 %v2228, %v2296
        %v2298 = vpop.f32.mrb[0].mxu0
        %2299 = vdwg.mxu0
        %s2300 = scalar_lea.vmem %s3, 704
        %v2301 = vld [vmem:[%s2300] sm:$0xff]
        %v2302 = vld [vmem:[%s2300 + $0x8] sm:$0xff]
        %v2303 = vld [vmem:[%s2300 + $0x10] sm:$0xff]
        %v2304 = vld [vmem:[%s2300 + $0x18] sm:$0xff]
        %v2305 = vld [vmem:[%s2300 + $0x20] sm:$0xff]
        %v2306 = vld [vmem:[%s2300 + $0x28] sm:$0xff]
        %v2307 = vld [vmem:[%s2300 + $0x30] sm:$0xff]
        %v2308 = vld [vmem:[%s2300 + $0x38] sm:$0xff]
        %s2309 = scalar_lea.vmem %s4, 11
        %v2310 = vld [vmem:[%s2309] sm:$0x1]
        %v2312 = vlaneseq
        %v2313 = vshrl.u32 %v2312, 7
        %v2314 = vsub.s32 0, %v2313
        %v2315 = vrot.slane %v2310, %v2314
        %2317 = vmatprep.subr.mxu0 0.0
        %2318 = vmatpush1.msra.mxu0 %v2301
        %2319 = vmatprep.subr.mxu0 0.0
        %2320 = vmatpush1.msra.mxu0 %v2302
        %2321 = vmatprep.subr.mxu0 0.0
        %2322 = vmatpush1.msra.mxu0 %v2303
        %2323 = vmatprep.subr.mxu0 0.0
        %2324 = vmatpush1.msra.mxu0 %v2304
        %2325 = vmatprep.subr.mxu0 0.0
        %2326 = vmatpush1.msra.mxu0 %v2305
        %2327 = vmatprep.subr.mxu0 0.0
        %2328 = vmatpush1.msra.mxu0 %v2306
        %2329 = vmatprep.subr.mxu0 0.0
        %2330 = vmatpush1.msra.mxu0 %v2307
        %2331 = vmatprep.subr.mxu0 0.0
        %2332 = vmatpush1.msra.mxu0 %v2308
        %2333 = vmatprep.subr.mxu0 0.0
        %2334 = vmatpush1.msra.mxu0 0.0
        %2335 = vmatprep.subr.mxu0 0.0
        %2336 = vmatpush1.msra.mxu0 0.0
        %2337 = vmatprep.subr.mxu0 0.0
        %2338 = vmatpush1.msra.mxu0 0.0
        %2339 = vmatprep.subr.mxu0 0.0
        %2340 = vmatpush1.msra.mxu0 0.0
        %2341 = vmatprep.subr.mxu0 0.0
        %2342 = vmatpush1.msra.mxu0 0.0
        %2343 = vmatprep.subr.mxu0 0.0
        %2344 = vmatpush1.msra.mxu0 0.0
        %2345 = vmatprep.subr.mxu0 0.0
        %2346 = vmatpush1.msra.mxu0 0.0
        %2347 = vmatprep.subr.mxu0 0.0
        %2348 = vmatpush1.msra.mxu0 0.0
        %2349 = vmatprep.subr.mxu0 0.0
        %2350 = vmatpush1.msra.mxu0 0.0
        %2351 = vmatprep.subr.mxu0 0.0
        %2352 = vmatpush1.msra.mxu0 0.0
        %2353 = vmatprep.subr.mxu0 0.0
        %2354 = vmatpush1.msra.mxu0 0.0
        %2355 = vmatprep.subr.mxu0 0.0
        %2356 = vmatpush1.msra.mxu0 0.0
        %2357 = vmatprep.subr.mxu0 0.0
        %2358 = vmatpush1.msra.mxu0 0.0
        %2359 = vmatprep.subr.mxu0 0.0
        %2360 = vmatpush1.msra.mxu0 0.0
        %2361 = vmatprep.subr.mxu0 0.0
        %2362 = vmatpush1.msra.mxu0 0.0
        %2363 = vmatprep.subr.mxu0 0.0
        %2364 = vmatpush1.msra.mxu0 0.0
        %2365 = vmatprep.subr.mxu0 0.0
        %2366 = vmatpush1.msra.mxu0 0.0
        %2367 = vmatprep.subr.mxu0 0.0
        %2368 = vmatpush1.msra.mxu0 0.0
        %2369 = vmatprep.subr.mxu0 0.0
        %2370 = vmatpush1.msra.mxu0 0.0
        %2371 = vmatprep.subr.mxu0 0.0
        %2372 = vmatpush1.msra.mxu0 0.0
        %2373 = vmatprep.subr.mxu0 0.0
        %2374 = vmatpush1.msra.mxu0 0.0
        %2375 = vmatprep.subr.mxu0 0.0
        %2376 = vmatpush1.msra.mxu0 0.0
        %2377 = vmatprep.subr.mxu0 0.0
        %2378 = vmatpush1.msra.mxu0 0.0
        %2379 = vmatprep.subr.mxu0 0.0
        %2380 = vmatpush1.msra.mxu0 0.0
        %2381 = vmatprep.mubr.f32.mxu0 0.0
        %2382 = vmatmul.mubr.f32.gmra.mrb[0].mxu0 %v645
        %v2383 = vpop.f32.mrb[0].mxu0
        %v2384 = vadd.f32 %v2315, %v2383
        %v2385 = vpop.f32.mrb[0].mxu0
        %2386 = vdwg.mxu0
        %v2388 = vsel %vm891, %v2210, 0
        %v2391 = vsel %vm891, %v2297, 0
        %2393 = vmatprep.subr.mxu0 0.0
        %2394 = vmatpush1.xpose.msra.mxu0 %v2391
        %2395 = vmatprep.subr.mxu0 0.0
        %2396 = vmatpush1.xpose.msra.mxu0 0.0
        %2397 = vmatprep.subr.mxu0 0.0
        %2398 = vmatpush1.xpose.msra.mxu0 0.0
        %2399 = vmatprep.subr.mxu0 0.0
        %2400 = vmatpush1.xpose.msra.mxu0 0.0
        %2401 = vmatprep.subr.mxu0 0.0
        %2402 = vmatpush1.xpose.msra.mxu0 0.0
        %2403 = vmatprep.subr.mxu0 0.0
        %2404 = vmatpush1.xpose.msra.mxu0 0.0
        %2405 = vmatprep.subr.mxu0 0.0
        %2406 = vmatpush1.xpose.msra.mxu0 0.0
        %2407 = vmatprep.subr.mxu0 0.0
        %2408 = vmatpush1.xpose.msra.mxu0 0.0
        %2409 = vmatprep.subr.mxu0 0.0
        %2410 = vmatpush1.xpose.msra.mxu0 0.0
        %2411 = vmatprep.subr.mxu0 0.0
        %2412 = vmatpush1.xpose.msra.mxu0 0.0
        %2413 = vmatprep.subr.mxu0 0.0
        %2414 = vmatpush1.xpose.msra.mxu0 0.0
        %2415 = vmatprep.subr.mxu0 0.0
        %2416 = vmatpush1.xpose.msra.mxu0 0.0
        %2417 = vmatprep.subr.mxu0 0.0
        %2418 = vmatpush1.xpose.msra.mxu0 0.0
        %2419 = vmatprep.subr.mxu0 0.0
        %2420 = vmatpush1.xpose.msra.mxu0 0.0
        %2421 = vmatprep.subr.mxu0 0.0
        %2422 = vmatpush1.xpose.msra.mxu0 0.0
        %2423 = vmatprep.subr.mxu0 0.0
        %2424 = vmatpush1.xpose.msra.mxu0 0.0
        %2425 = vmatprep.subr.mxu0 0.0
        %2426 = vmatpush1.xpose.msra.mxu0 0.0
        %2427 = vmatprep.subr.mxu0 0.0
        %2428 = vmatpush1.xpose.msra.mxu0 0.0
        %2429 = vmatprep.subr.mxu0 0.0
        %2430 = vmatpush1.xpose.msra.mxu0 0.0
        %2431 = vmatprep.subr.mxu0 0.0
        %2432 = vmatpush1.xpose.msra.mxu0 0.0
        %2433 = vmatprep.subr.mxu0 0.0
        %2434 = vmatpush1.xpose.msra.mxu0 0.0
        %2435 = vmatprep.subr.mxu0 0.0
        %2436 = vmatpush1.xpose.msra.mxu0 0.0
        %2437 = vmatprep.subr.mxu0 0.0
        %2438 = vmatpush1.xpose.msra.mxu0 0.0
        %2439 = vmatprep.subr.mxu0 0.0
        %2440 = vmatpush1.xpose.msra.mxu0 0.0
        %2441 = vmatprep.subr.mxu0 0.0
        %2442 = vmatpush1.xpose.msra.mxu0 0.0
        %2443 = vmatprep.subr.mxu0 0.0
        %2444 = vmatpush1.xpose.msra.mxu0 0.0
        %2445 = vmatprep.subr.mxu0 0.0
        %2446 = vmatpush1.xpose.msra.mxu0 0.0
        %2447 = vmatprep.subr.mxu0 0.0
        %2448 = vmatpush1.xpose.msra.mxu0 0.0
        %2449 = vmatprep.subr.mxu0 0.0
        %2450 = vmatpush1.xpose.msra.mxu0 0.0
        %2451 = vmatprep.subr.mxu0 0.0
        %2452 = vmatpush1.xpose.msra.mxu0 0.0
        %2453 = vmatprep.subr.mxu0 0.0
        %2454 = vmatpush1.xpose.msra.mxu0 0.0
        %2455 = vmatprep.subr.mxu0 0.0
        %2456 = vmatpush1.xpose.msra.mxu0 0.0
        %2457 = vmatprep.mubr.f32.mxu0 0.0
        %2458 = vmatmul.mubr.f32.gmra.mrb[0].mxu0 %v2388
        %v2459 = vpop.f32.mrb[0].mxu0
        %v2460 = vadd.f32 0.0, %v2459
        %v2461 = vpop.f32.mrb[0].mxu0
        %2462 = vdwg.mxu0
        %v2463 = vmul.f32 %v2460, 0.25
        %v2464 = vsel %vm969, %v2463, -inf
        %2465 = vmax.xlane.f32.xlu0 %v2464
        %v2466 = vpop.xlane.xlu0 %2465
        %v2467 = vsub.f32 %v2463, %v2466
        %v2468 = vmul.f32 %v2467, 1.442695
        %v2469 = vpow.pop %v2468
        %v2470 = vsel %vm969, %v2469, 0.0
        %2471 = vadd.xlane.f32.xlu0 %v2470
        %v2472 = vpop.xlane.xlu0 %2471
        %v2473 = vrcp.pop %v2472
        %v2474 = vmul.f32 %v2469, %v2473
        %v2476 = vsel %vm969, %v2474, 0
        %2478 = vmatprep.subr.mxu0 0.0
        %2479 = vmatpush1.msra.mxu0 %v2384
        %2480 = vmatprep.subr.mxu0 0.0
        %2481 = vmatpush1.msra.mxu0 0.0
        %2482 = vmatprep.subr.mxu0 0.0
        %2483 = vmatpush1.msra.mxu0 0.0
        %2484 = vmatprep.subr.mxu0 0.0
        %2485 = vmatpush1.msra.mxu0 0.0
        %2486 = vmatprep.subr.mxu0 0.0
        %2487 = vmatpush1.msra.mxu0 0.0
        %2488 = vmatprep.subr.mxu0 0.0
        %2489 = vmatpush1.msra.mxu0 0.0
        %2490 = vmatprep.subr.mxu0 0.0
        %2491 = vmatpush1.msra.mxu0 0.0
        %2492 = vmatprep.subr.mxu0 0.0
        %2493 = vmatpush1.msra.mxu0 0.0
        %2494 = vmatprep.subr.mxu0 0.0
        %2495 = vmatpush1.msra.mxu0 0.0
        %2496 = vmatprep.subr.mxu0 0.0
        %2497 = vmatpush1.msra.mxu0 0.0
        %2498 = vmatprep.subr.mxu0 0.0
        %2499 = vmatpush1.msra.mxu0 0.0
        %2500 = vmatprep.subr.mxu0 0.0
        %2501 = vmatpush1.msra.mxu0 0.0
        %2502 = vmatprep.subr.mxu0 0.0
        %2503 = vmatpush1.msra.mxu0 0.0
        %2504 = vmatprep.subr.mxu0 0.0
        %2505 = vmatpush1.msra.mxu0 0.0
        %2506 = vmatprep.subr.mxu0 0.0
        %2507 = vmatpush1.msra.mxu0 0.0
        %2508 = vmatprep.subr.mxu0 0.0
        %2509 = vmatpush1.msra.mxu0 0.0
        %2510 = vmatprep.subr.mxu0 0.0
        %2511 = vmatpush1.msra.mxu0 0.0
        %2512 = vmatprep.subr.mxu0 0.0
        %2513 = vmatpush1.msra.mxu0 0.0
        %2514 = vmatprep.subr.mxu0 0.0
        %2515 = vmatpush1.msra.mxu0 0.0
        %2516 = vmatprep.subr.mxu0 0.0
        %2517 = vmatpush1.msra.mxu0 0.0
        %2518 = vmatprep.subr.mxu0 0.0
        %2519 = vmatpush1.msra.mxu0 0.0
        %2520 = vmatprep.subr.mxu0 0.0
        %2521 = vmatpush1.msra.mxu0 0.0
        %2522 = vmatprep.subr.mxu0 0.0
        %2523 = vmatpush1.msra.mxu0 0.0
        %2524 = vmatprep.subr.mxu0 0.0
        %2525 = vmatpush1.msra.mxu0 0.0
        %2526 = vmatprep.subr.mxu0 0.0
        %2527 = vmatpush1.msra.mxu0 0.0
        %2528 = vmatprep.subr.mxu0 0.0
        %2529 = vmatpush1.msra.mxu0 0.0
        %2530 = vmatprep.subr.mxu0 0.0
        %2531 = vmatpush1.msra.mxu0 0.0
        %2532 = vmatprep.subr.mxu0 0.0
        %2533 = vmatpush1.msra.mxu0 0.0
        %2534 = vmatprep.subr.mxu0 0.0
        %2535 = vmatpush1.msra.mxu0 0.0
        %2536 = vmatprep.subr.mxu0 0.0
        %2537 = vmatpush1.msra.mxu0 0.0
        %2538 = vmatprep.subr.mxu0 0.0
        %2539 = vmatpush1.msra.mxu0 0.0
        %2540 = vmatprep.subr.mxu0 0.0
        %2541 = vmatpush1.msra.mxu0 0.0
        %2542 = vmatprep.mubr.f32.mxu0 0.0
        %2543 = vmatmul.mubr.f32.gmra.mrb[0].mxu0 %v2476
        %v2544 = vpop.f32.mrb[0].mxu0
        %v2545 = vadd.f32 0.0, %v2544
        %v2546 = vpop.f32.mrb[0].mxu0
        %2547 = vdwg.mxu0
        %s2548 = scalar_lea.vmem %s5, 48
        %v2549 = vld [vmem:[%s2548] sm:$0xff]
        %v2550 = vld [vmem:[%s2548 + $0x8] sm:$0xff]
        %v2552 = vsel %vm891, %v2545, 0
        %2554 = vmatprep.subr.mxu0 0.0
        %2555 = vmatpush1.msra.mxu0 %v2549
        %2556 = vmatprep.subr.mxu0 0.0
        %2557 = vmatpush1.msra.mxu0 %v2550
        %2558 = vmatprep.subr.mxu0 0.0
        %2559 = vmatpush1.msra.mxu0 0.0
        %2560 = vmatprep.subr.mxu0 0.0
        %2561 = vmatpush1.msra.mxu0 0.0
        %2562 = vmatprep.subr.mxu0 0.0
        %2563 = vmatpush1.msra.mxu0 0.0
        %2564 = vmatprep.subr.mxu0 0.0
        %2565 = vmatpush1.msra.mxu0 0.0
        %2566 = vmatprep.subr.mxu0 0.0
        %2567 = vmatpush1.msra.mxu0 0.0
        %2568 = vmatprep.subr.mxu0 0.0
        %2569 = vmatpush1.msra.mxu0 0.0
        %2570 = vmatprep.subr.mxu0 0.0
        %2571 = vmatpush1.msra.mxu0 0.0
        %2572 = vmatprep.subr.mxu0 0.0
        %2573 = vmatpush1.msra.mxu0 0.0
        %2574 = vmatprep.subr.mxu0 0.0
        %2575 = vmatpush1.msra.mxu0 0.0
        %2576 = vmatprep.subr.mxu0 0.0
        %2577 = vmatpush1.msra.mxu0 0.0
        %2578 = vmatprep.subr.mxu0 0.0
        %2579 = vmatpush1.msra.mxu0 0.0
        %2580 = vmatprep.subr.mxu0 0.0
        %2581 = vmatpush1.msra.mxu0 0.0
        %2582 = vmatprep.subr.mxu0 0.0
        %2583 = vmatpush1.msra.mxu0 0.0
        %2584 = vmatprep.subr.mxu0 0.0
        %2585 = vmatpush1.msra.mxu0 0.0
        %2586 = vmatprep.subr.mxu0 0.0
        %2587 = vmatpush1.msra.mxu0 0.0
        %2588 = vmatprep.subr.mxu0 0.0
        %2589 = vmatpush1.msra.mxu0 0.0
        %2590 = vmatprep.subr.mxu0 0.0
        %2591 = vmatpush1.msra.mxu0 0.0
        %2592 = vmatprep.subr.mxu0 0.0
        %2593 = vmatpush1.msra.mxu0 0.0
        %2594 = vmatprep.subr.mxu0 0.0
        %2595 = vmatpush1.msra.mxu0 0.0
        %2596 = vmatprep.subr.mxu0 0.0
        %2597 = vmatpush1.msra.mxu0 0.0
        %2598 = vmatprep.subr.mxu0 0.0
        %2599 = vmatpush1.msra.mxu0 0.0
        %2600 = vmatprep.subr.mxu0 0.0
        %2601 = vmatpush1.msra.mxu0 0.0
        %2602 = vmatprep.subr.mxu0 0.0
        %2603 = vmatpush1.msra.mxu0 0.0
        %2604 = vmatprep.subr.mxu0 0.0
        %2605 = vmatpush1.msra.mxu0 0.0
        %2606 = vmatprep.subr.mxu0 0.0
        %2607 = vmatpush1.msra.mxu0 0.0
        %2608 = vmatprep.subr.mxu0 0.0
        %2609 = vmatpush1.msra.mxu0 0.0
        %2610 = vmatprep.subr.mxu0 0.0
        %2611 = vmatpush1.msra.mxu0 0.0
        %2612 = vmatprep.subr.mxu0 0.0
        %2613 = vmatpush1.msra.mxu0 0.0
        %2614 = vmatprep.subr.mxu0 0.0
        %2615 = vmatpush1.msra.mxu0 0.0
        %2616 = vmatprep.subr.mxu0 0.0
        %2617 = vmatpush1.msra.mxu0 0.0
        %2618 = vmatprep.mubr.f32.mxu0 0.0
        %2619 = vmatmul.mubr.f32.gmra.mrb[0].mxu0 %v2552
        %v2620 = vpop.f32.mrb[0].mxu0
        %v2621 = vadd.f32 0.0, %v2620
        %v2622 = vpop.f32.mrb[0].mxu0
        %2623 = vdwg.mxu0
        %v2624 = vadd.f32 %v2125, %v2621
        %v2625 = vld [vmem:[%s6] sm:$0x1]
        %v2627 = vlaneseq
        %v2628 = vshrl.u32 %v2627, 7
        %v2629 = vsub.s32 0, %v2628
        %v2630 = vrot.slane %v2625, %v2629
        %v2632 = vadd.f32 %v2624, %v2630
        %v2633 = vadd.f32 %v627, %v2632
        %v2634 = vld [vmem:[%s7] sm:$0x1]
        %v2635 = vld [vmem:[%s8] sm:$0x1]
        %v2636 = vsel %vm643, %v2633, 0.0
        %2637 = vadd.xlane.f32.xlu0 %v2636
        %v2638 = vpop.xlane.xlu0 %2637
        %v2639 = vrcp.pop 64.0
        %v2640 = vmul.f32 %v2638, %v2639
        %v2641 = vsub.f32 %v2633, %v2640
        %v2642 = vmul.f32 %v2641, %v2641
        %v2643 = vsel %vm643, %v2642, 0.0
        %2644 = vadd.xlane.f32.xlu0 %v2643
        %v2645 = vpop.xlane.xlu0 %2644
        %v2646 = vmul.f32 %v2645, %v2639
        %v2647 = vadd.f32 %v2646, 1e-05
        %v2648 = vrsqrt.pop %v2647
        %v2649 = vmul.f32 %v2641, %v2648
        %v2651 = vlaneseq
        %v2652 = vshrl.u32 %v2651, 7
        %v2653 = vsub.s32 0, %v2652
        %v2654 = vrot.slane %v2634, %v2653
        %v2656 = vmul.f32 %v2649, %v2654
        %v2658 = vlaneseq
        %v2659 = vshrl.u32 %v2658, 7
        %v2660 = vsub.s32 0, %v2659
        %v2661 = vrot.slane %v2635, %v2660
        %v2663 = vadd.f32 %v2656, %v2661
        %v2664 = vld [vmem:[%s9] sm:$0xff]
        %v2665 = vld [vmem:[%s9 + $0x8] sm:$0xff]
        %v2666 = vld [vmem:[%s9 + $0x10] sm:$0xff]
        %v2667 = vld [vmem:[%s9 + $0x18] sm:$0xff]
        %v2668 = vld [vmem:[%s9 + $0x20] sm:$0xff]
        %v2669 = vld [vmem:[%s9 + $0x28] sm:$0xff]
        %v2670 = vld [vmem:[%s9 + $0x30] sm:$0xff]
        %v2671 = vld [vmem:[%s9 + $0x38] sm:$0xff]
        %v2672 = vld [vmem:[%s9 + $0x40] sm:$0xff]
        %v2673 = vld [vmem:[%s9 + $0x48] sm:$0xff]
        %v2674 = vld [vmem:[%s9 + $0x50] sm:$0xff]
        %v2675 = vld [vmem:[%s9 + $0x58] sm:$0xff]
        %v2676 = vld [vmem:[%s9 + $0x60] sm:$0xff]
        %v2677 = vld [vmem:[%s9 + $0x68] sm:$0xff]
        %v2678 = vld [vmem:[%s9 + $0x70] sm:$0xff]
        %v2679 = vld [vmem:[%s9 + $0x78] sm:$0xff]
        %v2680 = vld [vmem:[%s10] sm:$0x3]
        %v2682 = vlaneseq
        %v2683 = vshrl.u32 %v2682, 7
        %v2684 = vsub.s32 0, %v2683
        %v2685 = vrot.slane %v2680, %v2684
        %v2686 = vlaneseq
        %v2687 = vshrl.u32 %v2686, 7
        %v2688 = vsub.s32 1, %v2687
        %v2689 = vrot.slane %v2680, %v2688
        %v2693 = vsel %vm643, %v2663, 0
        %2695 = vmatprep.subr.mxu0 %v2665
        %2696 = vmatpush1.msra.mxu0 %v2664
        %2697 = vmatprep.subr.mxu0 %v2667
        %2698 = vmatpush1.msra.mxu0 %v2666
        %2699 = vmatprep.subr.mxu0 %v2669
        %2700 = vmatpush1.msra.mxu0 %v2668
        %2701 = vmatprep.subr.mxu0 %v2671
        %2702 = vmatpush1.msra.mxu0 %v2670
        %2703 = vmatprep.subr.mxu0 %v2673
        %2704 = vmatpush1.msra.mxu0 %v2672
        %2705 = vmatprep.subr.mxu0 %v2675
        %2706 = vmatpush1.msra.mxu0 %v2674
        %2707 = vmatprep.subr.mxu0 %v2677
        %2708 = vmatpush1.msra.mxu0 %v2676
        %2709 = vmatprep.subr.mxu0 %v2679
        %2710 = vmatpush1.msra.mxu0 %v2678
        %2711 = vmatprep.subr.mxu0 0.0
        %2712 = vmatpush1.msra.mxu0 0.0
        %2713 = vmatprep.subr.mxu0 0.0
        %2714 = vmatpush1.msra.mxu0 0.0
        %2715 = vmatprep.subr.mxu0 0.0
        %2716 = vmatpush1.msra.mxu0 0.0
        %2717 = vmatprep.subr.mxu0 0.0
        %2718 = vmatpush1.msra.mxu0 0.0
        %2719 = vmatprep.subr.mxu0 0.0
        %2720 = vmatpush1.msra.mxu0 0.0
        %2721 = vmatprep.subr.mxu0 0.0
        %2722 = vmatpush1.msra.mxu0 0.0
        %2723 = vmatprep.subr.mxu0 0.0
        %2724 = vmatpush1.msra.mxu0 0.0
        %2725 = vmatprep.subr.mxu0 0.0
        %2726 = vmatpush1.msra.mxu0 0.0
        %2727 = vmatprep.subr.mxu0 0.0
        %2728 = vmatpush1.msra.mxu0 0.0
        %2729 = vmatprep.subr.mxu0 0.0
        %2730 = vmatpush1.msra.mxu0 0.0
        %2731 = vmatprep.subr.mxu0 0.0
        %2732 = vmatpush1.msra.mxu0 0.0
        %2733 = vmatprep.subr.mxu0 0.0
        %2734 = vmatpush1.msra.mxu0 0.0
        %2735 = vmatprep.subr.mxu0 0.0
        %2736 = vmatpush1.msra.mxu0 0.0
        %2737 = vmatprep.subr.mxu0 0.0
        %2738 = vmatpush1.msra.mxu0 0.0
        %2739 = vmatprep.subr.mxu0 0.0
        %2740 = vmatpush1.msra.mxu0 0.0
        %2741 = vmatprep.subr.mxu0 0.0
        %2742 = vmatpush1.msra.mxu0 0.0
        %2743 = vmatprep.subr.mxu0 0.0
        %2744 = vmatpush1.msra.mxu0 0.0
        %2745 = vmatprep.subr.mxu0 0.0
        %2746 = vmatpush1.msra.mxu0 0.0
        %2747 = vmatprep.subr.mxu0 0.0
        %2748 = vmatpush1.msra.mxu0 0.0
        %2749 = vmatprep.subr.mxu0 0.0
        %2750 = vmatpush1.msra.mxu0 0.0
        %2751 = vmatprep.subr.mxu0 0.0
        %2752 = vmatpush1.msra.mxu0 0.0
        %2753 = vmatprep.subr.mxu0 0.0
        %2754 = vmatpush1.msra.mxu0 0.0
        %2755 = vmatprep.subr.mxu0 0.0
        %2756 = vmatpush1.msra.mxu0 0.0
        %2757 = vmatprep.subr.mxu0 0.0
        %2758 = vmatpush1.msra.mxu0 0.0
        %2759 = vmatprep.mubr.f32.mxu0 0.0
        %2760 = vmatmul.mubr.f32.gmra.mrb[0].mxu0 %v2693
        %v2761 = vpop.f32.mrb[0].mxu0
        %v2762 = vadd.f32 %v2685, %v2761
        %v2763 = vpop.f32.mrb[0].mxu0
        %v2764 = vadd.f32 %v2689, %v2763
        %2765 = vdwg.mxu0
        %v2766 = vmax.f32 %v2762, 0.0
        %v2767 = vmax.f32 %v2764, 0.0
        %v2768 = vld [vmem:[%s11] sm:$0xff]
        %v2769 = vld [vmem:[%s11 + $0x8] sm:$0xff]
        %v2770 = vld [vmem:[%s11 + $0x10] sm:$0xff]
        %v2771 = vld [vmem:[%s11 + $0x18] sm:$0xff]
        %v2772 = vld [vmem:[%s11 + $0x20] sm:$0xff]
        %v2773 = vld [vmem:[%s11 + $0x28] sm:$0xff]
        %v2774 = vld [vmem:[%s11 + $0x30] sm:$0xff]
        %v2775 = vld [vmem:[%s11 + $0x38] sm:$0xff]
        %v2776 = vld [vmem:[%s11 + $0x40] sm:$0xff]
        %v2777 = vld [vmem:[%s11 + $0x48] sm:$0xff]
        %v2778 = vld [vmem:[%s11 + $0x50] sm:$0xff]
        %v2779 = vld [vmem:[%s11 + $0x58] sm:$0xff]
        %v2780 = vld [vmem:[%s11 + $0x60] sm:$0xff]
        %v2781 = vld [vmem:[%s11 + $0x68] sm:$0xff]
        %v2782 = vld [vmem:[%s11 + $0x70] sm:$0xff]
        %v2783 = vld [vmem:[%s11 + $0x78] sm:$0xff]
        %v2784 = vld [vmem:[%s11 + $0x80] sm:$0xff]
        %v2785 = vld [vmem:[%s11 + $0x88] sm:$0xff]
        %v2786 = vld [vmem:[%s11 + $0x90] sm:$0xff]
        %v2787 = vld [vmem:[%s11 + $0x98] sm:$0xff]
        %v2788 = vld [vmem:[%s11 + $0xa0] sm:$0xff]
        %v2789 = vld [vmem:[%s11 + $0xa8] sm:$0xff]
        %v2790 = vld [vmem:[%s11 + $0xb0] sm:$0xff]
        %v2791 = vld [vmem:[%s11 + $0xb8] sm:$0xff]
        %v2792 = vld [vmem:[%s11 + $0xc0] sm:$0xff]
        %v2793 = vld [vmem:[%s11 + $0xc8] sm:$0xff]
        %v2794 = vld [vmem:[%s11 + $0xd0] sm:$0xff]
        %v2795 = vld [vmem:[%s11 + $0xd8] sm:$0xff]
        %v2796 = vld [vmem:[%s11 + $0xe0] sm:$0xff]
        %v2797 = vld [vmem:[%s11 + $0xe8] sm:$0xff]
        %v2798 = vld [vmem:[%s11 + $0xf0] sm:$0xff]
        %v2799 = vld [vmem:[%s11 + $0xf8] sm:$0xff]
        %v2800 = vld [vmem:[%s12] sm:$0x1]
        %v2802 = vlaneseq
        %v2803 = vshrl.u32 %v2802, 7
        %v2804 = vsub.s32 0, %v2803
        %v2805 = vrot.slane %v2800, %v2804
        %2807 = vmatprep.subr.mxu0 0.0
        %2808 = vmatpush1.msra.mxu0 %v2768
        %2809 = vmatprep.subr.mxu0 0.0
        %2810 = vmatpush1.msra.mxu0 %v2769
        %2811 = vmatprep.subr.mxu0 0.0
        %2812 = vmatpush1.msra.mxu0 %v2770
        %2813 = vmatprep.subr.mxu0 0.0
        %2814 = vmatpush1.msra.mxu0 %v2771
        %2815 = vmatprep.subr.mxu0 0.0
        %2816 = vmatpush1.msra.mxu0 %v2772
        %2817 = vmatprep.subr.mxu0 0.0
        %2818 = vmatpush1.msra.mxu0 %v2773
        %2819 = vmatprep.subr.mxu0 0.0
        %2820 = vmatpush1.msra.mxu0 %v2774
        %2821 = vmatprep.subr.mxu0 0.0
        %2822 = vmatpush1.msra.mxu0 %v2775
        %2823 = vmatprep.subr.mxu0 0.0
        %2824 = vmatpush1.msra.mxu0 %v2776
        %2825 = vmatprep.subr.mxu0 0.0
        %2826 = vmatpush1.msra.mxu0 %v2777
        %2827 = vmatprep.subr.mxu0 0.0
        %2828 = vmatpush1.msra.mxu0 %v2778
        %2829 = vmatprep.subr.mxu0 0.0
        %2830 = vmatpush1.msra.mxu0 %v2779
        %2831 = vmatprep.subr.mxu0 0.0
        %2832 = vmatpush1.msra.mxu0 %v2780
        %2833 = vmatprep.subr.mxu0 0.0
        %2834 = vmatpush1.msra.mxu0 %v2781
        %2835 = vmatprep.subr.mxu0 0.0
        %2836 = vmatpush1.msra.mxu0 %v2782
        %2837 = vmatprep.subr.mxu0 0.0
        %2838 = vmatpush1.msra.mxu0 %v2783
        %2839 = vmatprep.subr.mxu0 0.0
        %2840 = vmatpush1.msra.mxu0 %v2784
        %2841 = vmatprep.subr.mxu0 0.0
        %2842 = vmatpush1.msra.mxu0 %v2785
        %2843 = vmatprep.subr.mxu0 0.0
        %2844 = vmatpush1.msra.mxu0 %v2786
        %2845 = vmatprep.subr.mxu0 0.0
        %2846 = vmatpush1.msra.mxu0 %v2787
        %2847 = vmatprep.subr.mxu0 0.0
        %2848 = vmatpush1.msra.mxu0 %v2788
        %2849 = vmatprep.subr.mxu0 0.0
        %2850 = vmatpush1.msra.mxu0 %v2789
        %2851 = vmatprep.subr.mxu0 0.0
        %2852 = vmatpush1.msra.mxu0 %v2790
        %2853 = vmatprep.subr.mxu0 0.0
        %2854 = vmatpush1.msra.mxu0 %v2791
        %2855 = vmatprep.subr.mxu0 0.0
        %2856 = vmatpush1.msra.mxu0 %v2792
        %2857 = vmatprep.subr.mxu0 0.0
        %2858 = vmatpush1.msra.mxu0 %v2793
        %2859 = vmatprep.subr.mxu0 0.0
        %2860 = vmatpush1.msra.mxu0 %v2794
        %2861 = vmatprep.subr.mxu0 0.0
        %2862 = vmatpush1.msra.mxu0 %v2795
        %2863 = vmatprep.subr.mxu0 0.0
        %2864 = vmatpush1.msra.mxu0 %v2796
        %2865 = vmatprep.subr.mxu0 0.0
        %2866 = vmatpush1.msra.mxu0 %v2797
        %2867 = vmatprep.subr.mxu0 0.0
        %2868 = vmatpush1.msra.mxu0 %v2798
        %2869 = vmatprep.subr.mxu0 0.0
        %2870 = vmatpush1.msra.mxu0 %v2799
        %2871 = vmatprep.mubr.f32.mxu0 %v2767
        %2872 = vmatmul.mubr.f32.gmra.mrb[0].mxu0 %v2766
        %v2873 = vpop.f32.mrb[0].mxu0
        %v2874 = vadd.f32 %v2805, %v2873
        %v2875 = vpop.f32.mrb[0].mxu0
        %2876 = vdwg.mxu0
        %v2877 = vadd.f32 %v2663, %v2874
        %v2878 = vld [vmem:[%s13] sm:$0x1]
        %v2879 = vld [vmem:[%s14] sm:$0x1]
        %v2880 = vsel %vm643, %v2877, 0.0
        %2881 = vadd.xlane.f32.xlu0 %v2880
        %v2882 = vpop.xlane.xlu0 %2881
        %v2883 = vmul.f32 %v2882, %v2639
        %v2884 = vsub.f32 %v2877, %v2883
        %v2885 = vmul.f32 %v2884, %v2884
        %v2886 = vsel %vm643, %v2885, 0.0
        %2887 = vadd.xlane.f32.xlu0 %v2886
        %v2888 = vpop.xlane.xlu0 %2887
        %v2889 = vmul.f32 %v2888, %v2639
        %v2890 = vadd.f32 %v2889, 1e-05
        %v2891 = vrsqrt.pop %v2890
        %v2892 = vmul.f32 %v2884, %v2891
        %v2894 = vlaneseq
        %v2895 = vshrl.u32 %v2894, 7
        %v2896 = vsub.s32 0, %v2895
        %v2897 = vrot.slane %v2878, %v2896
        %v2899 = vmul.f32 %v2892, %v2897
        %v2901 = vlaneseq
        %v2902 = vshrl.u32 %v2901, 7
        %v2903 = vsub.s32 0, %v2902
        %v2904 = vrot.slane %v2879, %v2903
        %v2906 = vadd.f32 %v2899, %v2904
        %s2907 = scalar_lea.vmem %s3, 768
        %v2908 = vld [vmem:[%s2907] sm:$0xff]
        %v2909 = vld [vmem:[%s2907 + $0x8] sm:$0xff]
        %v2910 = vld [vmem:[%s2907 + $0x10] sm:$0xff]
        %v2911 = vld [vmem:[%s2907 + $0x18] sm:$0xff]
        %v2912 = vld [vmem:[%s2907 + $0x20] sm:$0xff]
        %v2913 = vld [vmem:[%s2907 + $0x28] sm:$0xff]
        %v2914 = vld [vmem:[%s2907 + $0x30] sm:$0xff]
        %v2915 = vld [vmem:[%s2907 + $0x38] sm:$0xff]
        %s2916 = scalar_lea.vmem %s4, 12
        %v2917 = vld [vmem:[%s2916] sm:$0x1]
        %v2919 = vlaneseq
        %v2920 = vshrl.u32 %v2919, 7
        %v2921 = vsub.s32 0, %v2920
        %v2922 = vrot.slane %v2917, %v2921
        %v2925 = vsel %vm643, %v2906, 0
        %2927 = vmatprep.subr.mxu0 0.0
        %2928 = vmatpush1.msra.mxu0 %v2908
        %2929 = vmatprep.subr.mxu0 0.0
        %2930 = vmatpush1.msra.mxu0 %v2909
        %2931 = vmatprep.subr.mxu0 0.0
        %2932 = vmatpush1.msra.mxu0 %v2910
        %2933 = vmatprep.subr.mxu0 0.0
        %2934 = vmatpush1.msra.mxu0 %v2911
        %2935 = vmatprep.subr.mxu0 0.0
        %2936 = vmatpush1.msra.mxu0 %v2912
        %2937 = vmatprep.subr.mxu0 0.0
        %2938 = vmatpush1.msra.mxu0 %v2913
        %2939 = vmatprep.subr.mxu0 0.0
        %2940 = vmatpush1.msra.mxu0 %v2914
        %2941 = vmatprep.subr.mxu0 0.0
        %2942 = vmatpush1.msra.mxu0 %v2915
        %2943 = vmatprep.subr.mxu0 0.0
        %2944 = vmatpush1.msra.mxu0 0.0
        %2945 = vmatprep.subr.mxu0 0.0
        %2946 = vmatpush1.msra.mxu0 0.0
        %2947 = vmatprep.subr.mxu0 0.0
        %2948 = vmatpush1.msra.mxu0 0.0
        %2949 = vmatprep.subr.mxu0 0.0
        %2950 = vmatpush1.msra.mxu0 0.0
        %2951 = vmatprep.subr.mxu0 0.0
        %2952 = vmatpush1.msra.mxu0 0.0
        %2953 = vmatprep.subr.mxu0 0.0
        %2954 = vmatpush1.msra.mxu0 0.0
        %2955 = vmatprep.subr.mxu0 0.0
        %2956 = vmatpush1.msra.mxu0 0.0
        %2957 = vmatprep.subr.mxu0 0.0
        %2958 = vmatpush1.msra.mxu0 0.0
        %2959 = vmatprep.subr.mxu0 0.0
        %2960 = vmatpush1.msra.mxu0 0.0
        %2961 = vmatprep.subr.mxu0 0.0
        %2962 = vmatpush1.msra.mxu0 0.0
        %2963 = vmatprep.subr.mxu0 0.0
        %2964 = vmatpush1.msra.mxu0 0.0
        %2965 = vmatprep.subr.mxu0 0.0
        %2966 = vmatpush1.msra.mxu0 0.0
        %2967 = vmatprep.subr.mxu0 0.0
        %2968 = vmatpush1.msra.mxu0 0.0
        %2969 = vmatprep.subr.mxu0 0.0
        %2970 = vmatpush1.msra.mxu0 0.0
        %2971 = vmatprep.subr.mxu0 0.0
        %2972 = vmatpush1.msra.mxu0 0.0
        %2973 = vmatprep.subr.mxu0 0.0
        %2974 = vmatpush1.msra.mxu0 0.0
        %2975 = vmatprep.subr.mxu0 0.0
        %2976 = vmatpush1.msra.mxu0 0.0
        %2977 = vmatprep.subr.mxu0 0.0
        %2978 = vmatpush1.msra.mxu0 0.0
        %2979 = vmatprep.subr.mxu0 0.0
        %2980 = vmatpush1.msra.mxu0 0.0
        %2981 = vmatprep.subr.mxu0 0.0
        %2982 = vmatpush1.msra.mxu0 0.0
        %2983 = vmatprep.subr.mxu0 0.0
        %2984 = vmatpush1.msra.mxu0 0.0
        %2985 = vmatprep.subr.mxu0 0.0
        %2986 = vmatpush1.msra.mxu0 0.0
        %2987 = vmatprep.subr.mxu0 0.0
        %2988 = vmatpush1.msra.mxu0 0.0
        %2989 = vmatprep.subr.mxu0 0.0
        %2990 = vmatpush1.msra.mxu0 0.0
        %2991 = vmatprep.mubr.f32.mxu0 0.0
        %2992 = vmatmul.mubr.f32.gmra.mrb[0].mxu0 %v2925
        %v2993 = vpop.f32.mrb[0].mxu0
        %v2994 = vadd.f32 %v2922, %v2993
        %v2995 = vpop.f32.mrb[0].mxu0
        %2996 = vdwg.mxu0
        %s2997 = scalar_lea.vmem %s3, 1024
        %v2998 = vld [vmem:[%s2997] sm:$0xff]
        %v2999 = vld [vmem:[%s2997 + $0x8] sm:$0xff]
        %v3000 = vld [vmem:[%s2997 + $0x10] sm:$0xff]
        %v3001 = vld [vmem:[%s2997 + $0x18] sm:$0xff]
        %v3002 = vld [vmem:[%s2997 + $0x20] sm:$0xff]
        %v3003 = vld [vmem:[%s2997 + $0x28] sm:$0xff]
        %v3004 = vld [vmem:[%s2997 + $0x30] sm:$0xff]
        %v3005 = vld [vmem:[%s2997 + $0x38] sm:$0xff]
        %s3006 = scalar_lea.vmem %s4, 16
        %v3007 = vld [vmem:[%s3006] sm:$0x1]
        %v3009 = vlaneseq
        %v3010 = vshrl.u32 %v3009, 7
        %v3011 = vsub.s32 0, %v3010
        %v3012 = vrot.slane %v3007, %v3011
        %3014 = vmatprep.subr.mxu0 0.0
        %3015 = vmatpush1.msra.mxu0 %v2998
        %3016 = vmatprep.subr.mxu0 0.0
        %3017 = vmatpush1.msra.mxu0 %v2999
        %3018 = vmatprep.subr.mxu0 0.0
        %3019 = vmatpush1.msra.mxu0 %v3000
        %3020 = vmatprep.subr.mxu0 0.0
        %3021 = vmatpush1.msra.mxu0 %v3001
        %3022 = vmatprep.subr.mxu0 0.0
        %3023 = vmatpush1.msra.mxu0 %v3002
        %3024 = vmatprep.subr.mxu0 0.0
        %3025 = vmatpush1.msra.mxu0 %v3003
        %3026 = vmatprep.subr.mxu0 0.0
        %3027 = vmatpush1.msra.mxu0 %v3004
        %3028 = vmatprep.subr.mxu0 0.0
        %3029 = vmatpush1.msra.mxu0 %v3005
        %3030 = vmatprep.subr.mxu0 0.0
        %3031 = vmatpush1.msra.mxu0 0.0
        %3032 = vmatprep.subr.mxu0 0.0
        %3033 = vmatpush1.msra.mxu0 0.0
        %3034 = vmatprep.subr.mxu0 0.0
        %3035 = vmatpush1.msra.mxu0 0.0
        %3036 = vmatprep.subr.mxu0 0.0
        %3037 = vmatpush1.msra.mxu0 0.0
        %3038 = vmatprep.subr.mxu0 0.0
        %3039 = vmatpush1.msra.mxu0 0.0
        %3040 = vmatprep.subr.mxu0 0.0
        %3041 = vmatpush1.msra.mxu0 0.0
        %3042 = vmatprep.subr.mxu0 0.0
        %3043 = vmatpush1.msra.mxu0 0.0
        %3044 = vmatprep.subr.mxu0 0.0
        %3045 = vmatpush1.msra.mxu0 0.0
        %3046 = vmatprep.subr.mxu0 0.0
        %3047 = vmatpush1.msra.mxu0 0.0
        %3048 = vmatprep.subr.mxu0 0.0
        %3049 = vmatpush1.msra.mxu0 0.0
        %3050 = vmatprep.subr.mxu0 0.0
        %3051 = vmatpush1.msra.mxu0 0.0
        %3052 = vmatprep.subr.mxu0 0.0
        %3053 = vmatpush1.msra.mxu0 0.0
        %3054 = vmatprep.subr.mxu0 0.0
        %3055 = vmatpush1.msra.mxu0 0.0
        %3056 = vmatprep.subr.mxu0 0.0
        %3057 = vmatpush1.msra.mxu0 0.0
        %3058 = vmatprep.subr.mxu0 0.0
        %3059 = vmatpush1.msra.mxu0 0.0
        %3060 = vmatprep.subr.mxu0 0.0
        %3061 = vmatpush1.msra.mxu0 0.0
        %3062 = vmatprep.subr.mxu0 0.0
        %3063 = vmatpush1.msra.mxu0 0.0
        %3064 = vmatprep.subr.mxu0 0.0
        %3065 = vmatpush1.msra.mxu0 0.0
        %3066 = vmatprep.subr.mxu0 0.0
        %3067 = vmatpush1.msra.mxu0 0.0
        %3068 = vmatprep.subr.mxu0 0.0
        %3069 = vmatpush1.msra.mxu0 0.0
        %3070 = vmatprep.subr.mxu0 0.0
        %3071 = vmatpush1.msra.mxu0 0.0
        %3072 = vmatprep.subr.mxu0 0.0
        %3073 = vmatpush1.msra.mxu0 0.0
        %3074 = vmatprep.subr.mxu0 0.0
        %3075 = vmatpush1.msra.mxu0 0.0
        %3076 = vmatprep.subr.mxu0 0.0
        %3077 = vmatpush1.msra.mxu0 0.0
        %3078 = vmatprep.mubr.f32.mxu0 0.0
        %3079 = vmatmul.mubr.f32.gmra.mrb[0].mxu0 %v2925
        %v3080 = vpop.f32.mrb[0].mxu0
        %v3081 = vadd.f32 %v3012, %v3080
        %v3082 = vpop.f32.mrb[0].mxu0
        %3083 = vdwg.mxu0
        %s3084 = scalar_lea.vmem %s3, 1280
        %v3085 = vld [vmem:[%s3084] sm:$0xff]
        %v3086 = vld [vmem:[%s3084 + $0x8] sm:$0xff]
        %v3087 = vld [vmem:[%s3084 + $0x10] sm:$0xff]
        %v3088 = vld [vmem:[%s3084 + $0x18] sm:$0xff]
        %v3089 = vld [vmem:[%s3084 + $0x20] sm:$0xff]
        %v3090 = vld [vmem:[%s3084 + $0x28] sm:$0xff]
        %v3091 = vld [vmem:[%s3084 + $0x30] sm:$0xff]
        %v3092 = vld [vmem:[%s3084 + $0x38] sm:$0xff]
        %s3093 = scalar_lea.vmem %s4, 20
        %v3094 = vld [vmem:[%s3093] sm:$0x1]
        %v3096 = vlaneseq
        %v3097 = vshrl.u32 %v3096, 7
        %v3098 = vsub.s32 0, %v3097
        %v3099 = vrot.slane %v3094, %v3098
        %3101 = vmatprep.subr.mxu0 0.0
        %3102 = vmatpush1.msra.mxu0 %v3085
        %3103 = vmatprep.subr.mxu0 0.0
        %3104 = vmatpush1.msra.mxu0 %v3086
        %3105 = vmatprep.subr.mxu0 0.0
        %3106 = vmatpush1.msra.mxu0 %v3087
        %3107 = vmatprep.subr.mxu0 0.0
        %3108 = vmatpush1.msra.mxu0 %v3088
        %3109 = vmatprep.subr.mxu0 0.0
        %3110 = vmatpush1.msra.mxu0 %v3089
        %3111 = vmatprep.subr.mxu0 0.0
        %3112 = vmatpush1.msra.mxu0 %v3090
        %3113 = vmatprep.subr.mxu0 0.0
        %3114 = vmatpush1.msra.mxu0 %v3091
        %3115 = vmatprep.subr.mxu0 0.0
        %3116 = vmatpush1.msra.mxu0 %v3092
        %3117 = vmatprep.subr.mxu0 0.0
        %3118 = vmatpush1.msra.mxu0 0.0
        %3119 = vmatprep.subr.mxu0 0.0
        %3120 = vmatpush1.msra.mxu0 0.0
        %3121 = vmatprep.subr.mxu0 0.0
        %3122 = vmatpush1.msra.mxu0 0.0
        %3123 = vmatprep.subr.mxu0 0.0
        %3124 = vmatpush1.msra.mxu0 0.0
        %3125 = vmatprep.subr.mxu0 0.0
        %3126 = vmatpush1.msra.mxu0 0.0
        %3127 = vmatprep.subr.mxu0 0.0
        %3128 = vmatpush1.msra.mxu0 0.0
        %3129 = vmatprep.subr.mxu0 0.0
        %3130 = vmatpush1.msra.mxu0 0.0
        %3131 = vmatprep.subr.mxu0 0.0
        %3132 = vmatpush1.msra.mxu0 0.0
        %3133 = vmatprep.subr.mxu0 0.0
        %3134 = vmatpush1.msra.mxu0 0.0
        %3135 = vmatprep.subr.mxu0 0.0
        %3136 = vmatpush1.msra.mxu0 0.0
        %3137 = vmatprep.subr.mxu0 0.0
        %3138 = vmatpush1.msra.mxu0 0.0
        %3139 = vmatprep.subr.mxu0 0.0
        %3140 = vmatpush1.msra.mxu0 0.0
        %3141 = vmatprep.subr.mxu0 0.0
        %3142 = vmatpush1.msra.mxu0 0.0
        %3143 = vmatprep.subr.mxu0 0.0
        %3144 = vmatpush1.msra.mxu0 0.0
        %3145 = vmatprep.subr.mxu0 0.0
        %3146 = vmatpush1.msra.mxu0 0.0
        %3147 = vmatprep.subr.mxu0 0.0
        %3148 = vmatpush1.msra.mxu0 0.0
        %3149 = vmatprep.subr.mxu0 0.0
        %3150 = vmatpush1.msra.mxu0 0.0
        %3151 = vmatprep.subr.mxu0 0.0
        %3152 = vmatpush1.msra.mxu0 0.0
        %3153 = vmatprep.subr.mxu0 0.0
        %3154 = vmatpush1.msra.mxu0 0.0
        %3155 = vmatprep.subr.mxu0 0.0
        %3156 = vmatpush1.msra.mxu0 0.0
        %3157 = vmatprep.subr.mxu0 0.0
        %3158 = vmatpush1.msra.mxu0 0.0
        %3159 = vmatprep.subr.mxu0 0.0
        %3160 = vmatpush1.msra.mxu0 0.0
        %3161 = vmatprep.subr.mxu0 0.0
        %3162 = vmatpush1.msra.mxu0 0.0
        %3163 = vmatprep.subr.mxu0 0.0
        %3164 = vmatpush1.msra.mxu0 0.0
        %3165 = vmatprep.mubr.f32.mxu0 0.0
        %3166 = vmatmul.mubr.f32.gmra.mrb[0].mxu0 %v2925
        %v3167 = vpop.f32.mrb[0].mxu0
        %v3168 = vadd.f32 %v3099, %v3167
        %v3169 = vpop.f32.mrb[0].mxu0
        %3170 = vdwg.mxu0
        %v3172 = vsel %vm891, %v2994, 0
        %v3175 = vsel %vm891, %v3081, 0
        %3177 = vmatprep.subr.mxu0 0.0
        %3178 = vmatpush1.xpose.msra.mxu0 %v3175
        %3179 = vmatprep.subr.mxu0 0.0
        %3180 = vmatpush1.xpose.msra.mxu0 0.0
        %3181 = vmatprep.subr.mxu0 0.0
        %3182 = vmatpush1.xpose.msra.mxu0 0.0
        %3183 = vmatprep.subr.mxu0 0.0
        %3184 = vmatpush1.xpose.msra.mxu0 0.0
        %3185 = vmatprep.subr.mxu0 0.0
        %3186 = vmatpush1.xpose.msra.mxu0 0.0
        %3187 = vmatprep.subr.mxu0 0.0
        %3188 = vmatpush1.xpose.msra.mxu0 0.0
        %3189 = vmatprep.subr.mxu0 0.0
        %3190 = vmatpush1.xpose.msra.mxu0 0.0
        %3191 = vmatprep.subr.mxu0 0.0
        %3192 = vmatpush1.xpose.msra.mxu0 0.0
        %3193 = vmatprep.subr.mxu0 0.0
        %3194 = vmatpush1.xpose.msra.mxu0 0.0
        %3195 = vmatprep.subr.mxu0 0.0
        %3196 = vmatpush1.xpose.msra.mxu0 0.0
        %3197 = vmatprep.subr.mxu0 0.0
        %3198 = vmatpush1.xpose.msra.mxu0 0.0
        %3199 = vmatprep.subr.mxu0 0.0
        %3200 = vmatpush1.xpose.msra.mxu0 0.0
        %3201 = vmatprep.subr.mxu0 0.0
        %3202 = vmatpush1.xpose.msra.mxu0 0.0
        %3203 = vmatprep.subr.mxu0 0.0
        %3204 = vmatpush1.xpose.msra.mxu0 0.0
        %3205 = vmatprep.subr.mxu0 0.0
        %3206 = vmatpush1.xpose.msra.mxu0 0.0
        %3207 = vmatprep.subr.mxu0 0.0
        %3208 = vmatpush1.xpose.msra.mxu0 0.0
        %3209 = vmatprep.subr.mxu0 0.0
        %3210 = vmatpush1.xpose.msra.mxu0 0.0
        %3211 = vmatprep.subr.mxu0 0.0
        %3212 = vmatpush1.xpose.msra.mxu0 0.0
        %3213 = vmatprep.subr.mxu0 0.0
        %3214 = vmatpush1.xpose.msra.mxu0 0.0
        %3215 = vmatprep.subr.mxu0 0.0
        %3216 = vmatpush1.xpose.msra.mxu0 0.0
        %3217 = vmatprep.subr.mxu0 0.0
        %3218 = vmatpush1.xpose.msra.mxu0 0.0
        %3219 = vmatprep.subr.mxu0 0.0
        %3220 = vmatpush1.xpose.msra.mxu0 0.0
        %3221 = vmatprep.subr.mxu0 0.0
        %3222 = vmatpush1.xpose.msra.mxu0 0.0
        %3223 = vmatprep.subr.mxu0 0.0
        %3224 = vmatpush1.xpose.msra.mxu0 0.0
        %3225 = vmatprep.subr.mxu0 0.0
        %3226 = vmatpush1.xpose.msra.mxu0 0.0
        %3227 = vmatprep.subr.mxu0 0.0
        %3228 = vmatpush1.xpose.msra.mxu0 0.0
        %3229 = vmatprep.subr.mxu0 0.0
        %3230 = vmatpush1.xpose.msra.mxu0 0.0
        %3231 = vmatprep.subr.mxu0 0.0
        %3232 = vmatpush1.xpose.msra.mxu0 0.0
        %3233 = vmatprep.subr.mxu0 0.0
        %3234 = vmatpush1.xpose.msra.mxu0 0.0
        %3235 = vmatprep.subr.mxu0 0.0
        %3236 = vmatpush1.xpose.msra.mxu0 0.0
        %3237 = vmatprep.subr.mxu0 0.0
        %3238 = vmatpush1.xpose.msra.mxu0 0.0
        %3239 = vmatprep.subr.mxu0 0.0
        %3240 = vmatpush1.xpose.msra.mxu0 0.0
        %3241 = vmatprep.mubr.f32.mxu0 0.0
        %3242 = vmatmul.mubr.f32.gmra.mrb[0].mxu0 %v3172
        %v3243 = vpop.f32.mrb[0].mxu0
        %v3244 = vadd.f32 0.0, %v3243
        %v3245 = vpop.f32.mrb[0].mxu0
        %3246 = vdwg.mxu0
        %v3247 = vmul.f32 %v3244, 0.25
        %v3248 = vsel %vm969, %v3247, -inf
        %3249 = vmax.xlane.f32.xlu0 %v3248
        %v3250 = vpop.xlane.xlu0 %3249
        %v3251 = vsub.f32 %v3247, %v3250
        %v3252 = vmul.f32 %v3251, 1.442695
        %v3253 = vpow.pop %v3252
        %v3254 = vsel %vm969, %v3253, 0.0
        %3255 = vadd.xlane.f32.xlu0 %v3254
        %v3256 = vpop.xlane.xlu0 %3255
        %v3257 = vrcp.pop %v3256
        %v3258 = vmul.f32 %v3253, %v3257
        %v3260 = vsel %vm969, %v3258, 0
        %3262 = vmatprep.subr.mxu0 0.0
        %3263 = vmatpush1.msra.mxu0 %v3168
        %3264 = vmatprep.subr.mxu0 0.0
        %3265 = vmatpush1.msra.mxu0 0.0
        %3266 = vmatprep.subr.mxu0 0.0
        %3267 = vmatpush1.msra.mxu0 0.0
        %3268 = vmatprep.subr.mxu0 0.0
        %3269 = vmatpush1.msra.mxu0 0.0
        %3270 = vmatprep.subr.mxu0 0.0
        %3271 = vmatpush1.msra.mxu0 0.0
        %3272 = vmatprep.subr.mxu0 0.0
        %3273 = vmatpush1.msra.mxu0 0.0
        %3274 = vmatprep.subr.mxu0 0.0
        %3275 = vmatpush1.msra.mxu0 0.0
        %3276 = vmatprep.subr.mxu0 0.0
        %3277 = vmatpush1.msra.mxu0 0.0
        %3278 = vmatprep.subr.mxu0 0.0
        %3279 = vmatpush1.msra.mxu0 0.0
        %3280 = vmatprep.subr.mxu0 0.0
        %3281 = vmatpush1.msra.mxu0 0.0
        %3282 = vmatprep.subr.mxu0 0.0
        %3283 = vmatpush1.msra.mxu0 0.0
        %3284 = vmatprep.subr.mxu0 0.0
        %3285 = vmatpush1.msra.mxu0 0.0
        %3286 = vmatprep.subr.mxu0 0.0
        %3287 = vmatpush1.msra.mxu0 0.0
        %3288 = vmatprep.subr.mxu0 0.0
        %3289 = vmatpush1.msra.mxu0 0.0
        %3290 = vmatprep.subr.mxu0 0.0
        %3291 = vmatpush1.msra.mxu0 0.0
        %3292 = vmatprep.subr.mxu0 0.0
        %3293 = vmatpush1.msra.mxu0 0.0
        %3294 = vmatprep.subr.mxu0 0.0
        %3295 = vmatpush1.msra.mxu0 0.0
        %3296 = vmatprep.subr.mxu0 0.0
        %3297 = vmatpush1.msra.mxu0 0.0
        %3298 = vmatprep.subr.mxu0 0.0
        %3299 = vmatpush1.msra.mxu0 0.0
        %3300 = vmatprep.subr.mxu0 0.0
        %3301 = vmatpush1.msra.mxu0 0.0
        %3302 = vmatprep.subr.mxu0 0.0
        %3303 = vmatpush1.msra.mxu0 0.0
        %3304 = vmatprep.subr.mxu0 0.0
        %3305 = vmatpush1.msra.mxu0 0.0
        %3306 = vmatprep.subr.mxu0 0.0
        %3307 = vmatpush1.msra.mxu0 0.0
        %3308 = vmatprep.subr.mxu0 0.0
        %3309 = vmatpush1.msra.mxu0 0.0
        %3310 = vmatprep.subr.mxu0 0.0
        %3311 = vmatpush1.msra.mxu0 0.0
        %3312 = vmatprep.subr.mxu0 0.0
        %3313 = vmatpush1.msra.mxu0 0.0
        %3314 = vmatprep.subr.mxu0 0.0
        %3315 = vmatpush1.msra.mxu0 0.0
        %3316 = vmatprep.subr.mxu0 0.0
        %3317 = vmatpush1.msra.mxu0 0.0
        %3318 = vmatprep.subr.mxu0 0.0
        %3319 = vmatpush1.msra.mxu0 0.0
        %3320 = vmatprep.subr.mxu0 0.0
        %3321 = vmatpush1.msra.mxu0 0.0
        %3322 = vmatprep.subr.mxu0 0.0
        %3323 = vmatpush1.msra.mxu0 0.0
        %3324 = vmatprep.subr.mxu0 0.0
        %3325 = vmatpush1.msra.mxu0 0.0
        %3326 = vmatprep.mubr.f32.mxu0 0.0
        %3327 = vmatmul.mubr.f32.gmra.mrb[0].mxu0 %v3260
        %v3328 = vpop.f32.mrb[0].mxu0
        %v3329 = vadd.f32 0.0, %v3328
        %v3330 = vpop.f32.mrb[0].mxu0
        %3331 = vdwg.mxu0
        %s3332 = scalar_lea.vmem %s5, 64
        %v3333 = vld [vmem:[%s3332] sm:$0xff]
        %v3334 = vld [vmem:[%s3332 + $0x8] sm:$0xff]
        %s3335 = scalar_lea.vmem %s3, 832
        %v3336 = vld [vmem:[%s3335] sm:$0xff]
        %v3337 = vld [vmem:[%s3335 + $0x8] sm:$0xff]
        %v3338 = vld [vmem:[%s3335 + $0x10] sm:$0xff]
        %v3339 = vld [vmem:[%s3335 + $0x18] sm:$0xff]
        %v3340 = vld [vmem:[%s3335 + $0x20] sm:$0xff]
        %v3341 = vld [vmem:[%s3335 + $0x28] sm:$0xff]
        %v3342 = vld [vmem:[%s3335 + $0x30] sm:$0xff]
        %v3343 = vld [vmem:[%s3335 + $0x38] sm:$0xff]
        %s3344 = scalar_lea.vmem %s4, 13
        %v3345 = vld [vmem:[%s3344] sm:$0x1]
        %v3347 = vlaneseq
        %v3348 = vshrl.u32 %v3347, 7
        %v3349 = vsub.s32 0, %v3348
        %v3350 = vrot.slane %v3345, %v3349
        %3352 = vmatprep.subr.mxu0 0.0
        %3353 = vmatpush1.msra.mxu0 %v3336
        %3354 = vmatprep.subr.mxu0 0.0
        %3355 = vmatpush1.msra.mxu0 %v3337
        %3356 = vmatprep.subr.mxu0 0.0
        %3357 = vmatpush1.msra.mxu0 %v3338
        %3358 = vmatprep.subr.mxu0 0.0
        %3359 = vmatpush1.msra.mxu0 %v3339
        %3360 = vmatprep.subr.mxu0 0.0
        %3361 = vmatpush1.msra.mxu0 %v3340
        %3362 = vmatprep.subr.mxu0 0.0
        %3363 = vmatpush1.msra.mxu0 %v3341
        %3364 = vmatprep.subr.mxu0 0.0
        %3365 = vmatpush1.msra.mxu0 %v3342
        %3366 = vmatprep.subr.mxu0 0.0
        %3367 = vmatpush1.msra.mxu0 %v3343
        %3368 = vmatprep.subr.mxu0 0.0
        %3369 = vmatpush1.msra.mxu0 0.0
        %3370 = vmatprep.subr.mxu0 0.0
        %3371 = vmatpush1.msra.mxu0 0.0
        %3372 = vmatprep.subr.mxu0 0.0
        %3373 = vmatpush1.msra.mxu0 0.0
        %3374 = vmatprep.subr.mxu0 0.0
        %3375 = vmatpush1.msra.mxu0 0.0
        %3376 = vmatprep.subr.mxu0 0.0
        %3377 = vmatpush1.msra.mxu0 0.0
        %3378 = vmatprep.subr.mxu0 0.0
        %3379 = vmatpush1.msra.mxu0 0.0
        %3380 = vmatprep.subr.mxu0 0.0
        %3381 = vmatpush1.msra.mxu0 0.0
        %3382 = vmatprep.subr.mxu0 0.0
        %3383 = vmatpush1.msra.mxu0 0.0
        %3384 = vmatprep.subr.mxu0 0.0
        %3385 = vmatpush1.msra.mxu0 0.0
        %3386 = vmatprep.subr.mxu0 0.0
        %3387 = vmatpush1.msra.mxu0 0.0
        %3388 = vmatprep.subr.mxu0 0.0
        %3389 = vmatpush1.msra.mxu0 0.0
        %3390 = vmatprep.subr.mxu0 0.0
        %3391 = vmatpush1.msra.mxu0 0.0
        %3392 = vmatprep.subr.mxu0 0.0
        %3393 = vmatpush1.msra.mxu0 0.0
        %3394 = vmatprep.subr.mxu0 0.0
        %3395 = vmatpush1.msra.mxu0 0.0
        %3396 = vmatprep.subr.mxu0 0.0
        %3397 = vmatpush1.msra.mxu0 0.0
        %3398 = vmatprep.subr.mxu0 0.0
        %3399 = vmatpush1.msra.mxu0 0.0
        %3400 = vmatprep.subr.mxu0 0.0
        %3401 = vmatpush1.msra.mxu0 0.0
        %3402 = vmatprep.subr.mxu0 0.0
        %3403 = vmatpush1.msra.mxu0 0.0
        %3404 = vmatprep.subr.mxu0 0.0
        %3405 = vmatpush1.msra.mxu0 0.0
        %3406 = vmatprep.subr.mxu0 0.0
        %3407 = vmatpush1.msra.mxu0 0.0
        %3408 = vmatprep.subr.mxu0 0.0
        %3409 = vmatpush1.msra.mxu0 0.0
        %3410 = vmatprep.subr.mxu0 0.0
        %3411 = vmatpush1.msra.mxu0 0.0
        %3412 = vmatprep.subr.mxu0 0.0
        %3413 = vmatpush1.msra.mxu0 0.0
        %3414 = vmatprep.subr.mxu0 0.0
        %3415 = vmatpush1.msra.mxu0 0.0
        %3416 = vmatprep.mubr.f32.mxu0 0.0
        %3417 = vmatmul.mubr.f32.gmra.mrb[0].mxu0 %v2925
        %v3418 = vpop.f32.mrb[0].mxu0
        %v3419 = vadd.f32 %v3350, %v3418
        %v3420 = vpop.f32.mrb[0].mxu0
        %3421 = vdwg.mxu0
        %s3422 = scalar_lea.vmem %s3, 1088
        %v3423 = vld [vmem:[%s3422] sm:$0xff]
        %v3424 = vld [vmem:[%s3422 + $0x8] sm:$0xff]
        %v3425 = vld [vmem:[%s3422 + $0x10] sm:$0xff]
        %v3426 = vld [vmem:[%s3422 + $0x18] sm:$0xff]
        %v3427 = vld [vmem:[%s3422 + $0x20] sm:$0xff]
        %v3428 = vld [vmem:[%s3422 + $0x28] sm:$0xff]
        %v3429 = vld [vmem:[%s3422 + $0x30] sm:$0xff]
        %v3430 = vld [vmem:[%s3422 + $0x38] sm:$0xff]
        %s3431 = scalar_lea.vmem %s4, 17
        %v3432 = vld [vmem:[%s3431] sm:$0x1]
        %v3434 = vlaneseq
        %v3435 = vshrl.u32 %v3434, 7
        %v3436 = vsub.s32 0, %v3435
        %v3437 = vrot.slane %v3432, %v3436
        %3439 = vmatprep.subr.mxu0 0.0
        %3440 = vmatpush1.msra.mxu0 %v3423
        %3441 = vmatprep.subr.mxu0 0.0
        %3442 = vmatpush1.msra.mxu0 %v3424
        %3443 = vmatprep.subr.mxu0 0.0
        %3444 = vmatpush1.msra.mxu0 %v3425
        %3445 = vmatprep.subr.mxu0 0.0
        %3446 = vmatpush1.msra.mxu0 %v3426
        %3447 = vmatprep.subr.mxu0 0.0
        %3448 = vmatpush1.msra.mxu0 %v3427
        %3449 = vmatprep.subr.mxu0 0.0
        %3450 = vmatpush1.msra.mxu0 %v3428
        %3451 = vmatprep.subr.mxu0 0.0
        %3452 = vmatpush1.msra.mxu0 %v3429
        %3453 = vmatprep.subr.mxu0 0.0
        %3454 = vmatpush1.msra.mxu0 %v3430
        %3455 = vmatprep.subr.mxu0 0.0
        %3456 = vmatpush1.msra.mxu0 0.0
        %3457 = vmatprep.subr.mxu0 0.0
        %3458 = vmatpush1.msra.mxu0 0.0
        %3459 = vmatprep.subr.mxu0 0.0
        %3460 = vmatpush1.msra.mxu0 0.0
        %3461 = vmatprep.subr.mxu0 0.0
        %3462 = vmatpush1.msra.mxu0 0.0
        %3463 = vmatprep.subr.mxu0 0.0
        %3464 = vmatpush1.msra.mxu0 0.0
        %3465 = vmatprep.subr.mxu0 0.0
        %3466 = vmatpush1.msra.mxu0 0.0
        %3467 = vmatprep.subr.mxu0 0.0
        %3468 = vmatpush1.msra.mxu0 0.0
        %3469 = vmatprep.subr.mxu0 0.0
        %3470 = vmatpush1.msra.mxu0 0.0
        %3471 = vmatprep.subr.mxu0 0.0
        %3472 = vmatpush1.msra.mxu0 0.0
        %3473 = vmatprep.subr.mxu0 0.0
        %3474 = vmatpush1.msra.mxu0 0.0
        %3475 = vmatprep.subr.mxu0 0.0
        %3476 = vmatpush1.msra.mxu0 0.0
        %3477 = vmatprep.subr.mxu0 0.0
        %3478 = vmatpush1.msra.mxu0 0.0
        %3479 = vmatprep.subr.mxu0 0.0
        %3480 = vmatpush1.msra.mxu0 0.0
        %3481 = vmatprep.subr.mxu0 0.0
        %3482 = vmatpush1.msra.mxu0 0.0
        %3483 = vmatprep.subr.mxu0 0.0
        %3484 = vmatpush1.msra.mxu0 0.0
        %3485 = vmatprep.subr.mxu0 0.0
        %3486 = vmatpush1.msra.mxu0 0.0
        %3487 = vmatprep.subr.mxu0 0.0
        %3488 = vmatpush1.msra.mxu0 0.0
        %3489 = vmatprep.subr.mxu0 0.0
        %3490 = vmatpush1.msra.mxu0 0.0
        %3491 = vmatprep.subr.mxu0 0.0
        %3492 = vmatpush1.msra.mxu0 0.0
        %3493 = vmatprep.subr.mxu0 0.0
        %3494 = vmatpush1.msra.mxu0 0.0
        %3495 = vmatprep.subr.mxu0 0.0
        %3496 = vmatpush1.msra.mxu0 0.0
        %3497 = vmatprep.subr.mxu0 0.0
        %3498 = vmatpush1.msra.mxu0 0.0
        %3499 = vmatprep.subr.mxu0 0.0
        %3500 = vmatpush1.msra.mxu0 0.0
        %3501 = vmatprep.subr.mxu0 0.0
        %3502 = vmatpush1.msra.mxu0 0.0
        %3503 = vmatprep.mubr.f32.mxu0 0.0
        %3504 = vmatmul.mubr.f32.gmra.mrb[0].mxu0 %v2925
        %v3505 = vpop.f32.mrb[0].mxu0
        %v3506 = vadd.f32 %v3437, %v3505
        %v3507 = vpop.f32.mrb[0].mxu0
        %3508 = vdwg.mxu0
        %s3509 = scalar_lea.vmem %s3, 1344
        %v3510 = vld [vmem:[%s3509] sm:$0xff]
        %v3511 = vld [vmem:[%s3509 + $0x8] sm:$0xff]
        %v3512 = vld [vmem:[%s3509 + $0x10] sm:$0xff]
        %v3513 = vld [vmem:[%s3509 + $0x18] sm:$0xff]
        %v3514 = vld [vmem:[%s3509 + $0x20] sm:$0xff]
        %v3515 = vld [vmem:[%s3509 + $0x28] sm:$0xff]
        %v3516 = vld [vmem:[%s3509 + $0x30] sm:$0xff]
        %v3517 = vld [vmem:[%s3509 + $0x38] sm:$0xff]
        %s3518 = scalar_lea.vmem %s4, 21
        %v3519 = vld [vmem:[%s3518] sm:$0x1]
        %v3521 = vlaneseq
        %v3522 = vshrl.u32 %v3521, 7
        %v3523 = vsub.s32 0, %v3522
        %v3524 = vrot.slane %v3519, %v3523
        %3526 = vmatprep.subr.mxu0 0.0
        %3527 = vmatpush1.msra.mxu0 %v3510
        %3528 = vmatprep.subr.mxu0 0.0
        %3529 = vmatpush1.msra.mxu0 %v3511
        %3530 = vmatprep.subr.mxu0 0.0
        %3531 = vmatpush1.msra.mxu0 %v3512
        %3532 = vmatprep.subr.mxu0 0.0
        %3533 = vmatpush1.msra.mxu0 %v3513
        %3534 = vmatprep.subr.mxu0 0.0
        %3535 = vmatpush1.msra.mxu0 %v3514
        %3536 = vmatprep.subr.mxu0 0.0
        %3537 = vmatpush1.msra.mxu0 %v3515
        %3538 = vmatprep.subr.mxu0 0.0
        %3539 = vmatpush1.msra.mxu0 %v3516
        %3540 = vmatprep.subr.mxu0 0.0
        %3541 = vmatpush1.msra.mxu0 %v3517
        %3542 = vmatprep.subr.mxu0 0.0
        %3543 = vmatpush1.msra.mxu0 0.0
        %3544 = vmatprep.subr.mxu0 0.0
        %3545 = vmatpush1.msra.mxu0 0.0
        %3546 = vmatprep.subr.mxu0 0.0
        %3547 = vmatpush1.msra.mxu0 0.0
        %3548 = vmatprep.subr.mxu0 0.0
        %3549 = vmatpush1.msra.mxu0 0.0
        %3550 = vmatprep.subr.mxu0 0.0
        %3551 = vmatpush1.msra.mxu0 0.0
        %3552 = vmatprep.subr.mxu0 0.0
        %3553 = vmatpush1.msra.mxu0 0.0
        %3554 = vmatprep.subr.mxu0 0.0
        %3555 = vmatpush1.msra.mxu0 0.0
        %3556 = vmatprep.subr.mxu0 0.0
        %3557 = vmatpush1.msra.mxu0 0.0
        %3558 = vmatprep.subr.mxu0 0.0
        %3559 = vmatpush1.msra.mxu0 0.0
        %3560 = vmatprep.subr.mxu0 0.0
        %3561 = vmatpush1.msra.mxu0 0.0
        %3562 = vmatprep.subr.mxu0 0.0
        %3563 = vmatpush1.msra.mxu0 0.0
        %3564 = vmatprep.subr.mxu0 0.0
        %3565 = vmatpush1.msra.mxu0 0.0
        %3566 = vmatprep.subr.mxu0 0.0
        %3567 = vmatpush1.msra.mxu0 0.0
        %3568 = vmatprep.subr.mxu0 0.0
        %3569 = vmatpush1.msra.mxu0 0.0
        %3570 = vmatprep.subr.mxu0 0.0
        %3571 = vmatpush1.msra.mxu0 0.0
        %3572 = vmatprep.subr.mxu0 0.0
        %3573 = vmatpush1.msra.mxu0 0.0
        %3574 = vmatprep.subr.mxu0 0.0
        %3575 = vmatpush1.msra.mxu0 0.0
        %3576 = vmatprep.subr.mxu0 0.0
        %3577 = vmatpush1.msra.mxu0 0.0
        %3578 = vmatprep.subr.mxu0 0.0
        %3579 = vmatpush1.msra.mxu0 0.0
        %3580 = vmatprep.subr.mxu0 0.0
        %3581 = vmatpush1.msra.mxu0 0.0
        %3582 = vmatprep.subr.mxu0 0.0
        %3583 = vmatpush1.msra.mxu0 0.0
        %3584 = vmatprep.subr.mxu0 0.0
        %3585 = vmatpush1.msra.mxu0 0.0
        %3586 = vmatprep.subr.mxu0 0.0
        %3587 = vmatpush1.msra.mxu0 0.0
        %3588 = vmatprep.subr.mxu0 0.0
        %3589 = vmatpush1.msra.mxu0 0.0
        %3590 = vmatprep.mubr.f32.mxu0 0.0
        %3591 = vmatmul.mubr.f32.gmra.mrb[0].mxu0 %v2925
        %v3592 = vpop.f32.mrb[0].mxu0
        %v3593 = vadd.f32 %v3524, %v3592
        %v3594 = vpop.f32.mrb[0].mxu0
        %3595 = vdwg.mxu0
        %v3597 = vsel %vm891, %v3419, 0
        %v3600 = vsel %vm891, %v3506, 0
        %3602 = vmatprep.subr.mxu0 0.0
        %3603 = vmatpush1.xpose.msra.mxu0 %v3600
        %3604 = vmatprep.subr.mxu0 0.0
        %3605 = vmatpush1.xpose.msra.mxu0 0.0
        %3606 = vmatprep.subr.mxu0 0.0
        %3607 = vmatpush1.xpose.msra.mxu0 0.0
        %3608 = vmatprep.subr.mxu0 0.0
        %3609 = vmatpush1.xpose.msra.mxu0 0.0
        %3610 = vmatprep.subr.mxu0 0.0
        %3611 = vmatpush1.xpose.msra.mxu0 0.0
        %3612 = vmatprep.subr.mxu0 0.0
        %3613 = vmatpush1.xpose.msra.mxu0 0.0
        %3614 = vmatprep.subr.mxu0 0.0
        %3615 = vmatpush1.xpose.msra.mxu0 0.0
        %3616 = vmatprep.subr.mxu0 0.0
        %3617 = vmatpush1.xpose.msra.mxu0 0.0
        %3618 = vmatprep.subr.mxu0 0.0
        %3619 = vmatpush1.xpose.msra.mxu0 0.0
        %3620 = vmatprep.subr.mxu0 0.0
        %3621 = vmatpush1.xpose.msra.mxu0 0.0
        %3622 = vmatprep.subr.mxu0 0.0
        %3623 = vmatpush1.xpose.msra.mxu0 0.0
        %3624 = vmatprep.subr.mxu0 0.0
        %3625 = vmatpush1.xpose.msra.mxu0 0.0
        %3626 = vmatprep.subr.mxu0 0.0
        %3627 = vmatpush1.xpose.msra.mxu0 0.0
        %3628 = vmatprep.subr.mxu0 0.0
        %3629 = vmatpush1.xpose.msra.mxu0 0.0
        %3630 = vmatprep.subr.mxu0 0.0
        %3631 = vmatpush1.xpose.msra.mxu0 0.0
        %3632 = vmatprep.subr.mxu0 0.0
        %3633 = vmatpush1.xpose.msra.mxu0 0.0
        %3634 = vmatprep.subr.mxu0 0.0
        %3635 = vmatpush1.xpose.msra.mxu0 0.0
        %3636 = vmatprep.subr.mxu0 0.0
        %3637 = vmatpush1.xpose.msra.mxu0 0.0
        %3638 = vmatprep.subr.mxu0 0.0
        %3639 = vmatpush1.xpose.msra.mxu0 0.0
        %3640 = vmatprep.subr.mxu0 0.0
        %3641 = vmatpush1.xpose.msra.mxu0 0.0
        %3642 = vmatprep.subr.mxu0 0.0
        %3643 = vmatpush1.xpose.msra.mxu0 0.0
        %3644 = vmatprep.subr.mxu0 0.0
        %3645 = vmatpush1.xpose.msra.mxu0 0.0
        %3646 = vmatprep.subr.mxu0 0.0
        %3647 = vmatpush1.xpose.msra.mxu0 0.0
        %3648 = vmatprep.subr.mxu0 0.0
        %3649 = vmatpush1.xpose.msra.mxu0 0.0
        %3650 = vmatprep.subr.mxu0 0.0
        %3651 = vmatpush1.xpose.msra.mxu0 0.0
        %3652 = vmatprep.subr.mxu0 0.0
        %3653 = vmatpush1.xpose.msra.mxu0 0.0
        %3654 = vmatprep.subr.mxu0 0.0
        %3655 = vmatpush1.xpose.msra.mxu0 0.0
        %3656 = vmatprep.subr.mxu0 0.0
        %3657 = vmatpush1.xpose.msra.mxu0 0.0
        %3658 = vmatprep.subr.mxu0 0.0
        %3659 = vmatpush1.xpose.msra.mxu0 0.0
        %3660 = vmatprep.subr.mxu0 0.0
        %3661 = vmatpush1.xpose.msra.mxu0 0.0
        %3662 = vmatprep.subr.mxu0 0.0
        %3663 = vmatpush1.xpose.msra.mxu0 0.0
        %3664 = vmatprep.subr.mxu0 0.0
        %3665 = vmatpush1.xpose.msra.mxu0 0.0
        %3666 = vmatprep.mubr.f32.mxu0 0.0
        %3667 = vmatmul.mubr.f32.gmra.mrb[0].mxu0 %v3597
        %v3668 = vpop.f32.mrb[0].mxu0
        %v3669 = vadd.f32 0.0, %v3668
        %v3670 = vpop.f32.mrb[0].mxu0
        %3671 = vdwg.mxu0
        %v3672 = vmul.f32 %v3669, 0.25
        %v3673 = vsel %vm969, %v3672, -inf
        %3674 = vmax.xlane.f32.xlu0 %v3673
        %v3675 = vpop.xlane.xlu0 %3674
        %v3676 = vsub.f32 %v3672, %v3675
        %v3677 = vmul.f32 %v3676, 1.442695
        %v3678 = vpow.pop %v3677
        %v3679 = vsel %vm969, %v3678, 0.0
        %3680 = vadd.xlane.f32.xlu0 %v3679
        %v3681 = vpop.xlane.xlu0 %3680
        %v3682 = vrcp.pop %v3681
        %v3683 = vmul.f32 %v3678, %v3682
        %v3685 = vsel %vm969, %v3683, 0
        %3687 = vmatprep.subr.mxu0 0.0
        %3688 = vmatpush1.msra.mxu0 %v3593
        %3689 = vmatprep.subr.mxu0 0.0
        %3690 = vmatpush1.msra.mxu0 0.0
        %3691 = vmatprep.subr.mxu0 0.0
        %3692 = vmatpush1.msra.mxu0 0.0
        %3693 = vmatprep.subr.mxu0 0.0
        %3694 = vmatpush1.msra.mxu0 0.0
        %3695 = vmatprep.subr.mxu0 0.0
        %3696 = vmatpush1.msra.mxu0 0.0
        %3697 = vmatprep.subr.mxu0 0.0
        %3698 = vmatpush1.msra.mxu0 0.0
        %3699 = vmatprep.subr.mxu0 0.0
        %3700 = vmatpush1.msra.mxu0 0.0
        %3701 = vmatprep.subr.mxu0 0.0
        %3702 = vmatpush1.msra.mxu0 0.0
        %3703 = vmatprep.subr.mxu0 0.0
        %3704 = vmatpush1.msra.mxu0 0.0
        %3705 = vmatprep.subr.mxu0 0.0
        %3706 = vmatpush1.msra.mxu0 0.0
        %3707 = vmatprep.subr.mxu0 0.0
        %3708 = vmatpush1.msra.mxu0 0.0
        %3709 = vmatprep.subr.mxu0 0.0
        %3710 = vmatpush1.msra.mxu0 0.0
        %3711 = vmatprep.subr.mxu0 0.0
        %3712 = vmatpush1.msra.mxu0 0.0
        %3713 = vmatprep.subr.mxu0 0.0
        %3714 = vmatpush1.msra.mxu0 0.0
        %3715 = vmatprep.subr.mxu0 0.0
        %3716 = vmatpush1.msra.mxu0 0.0
        %3717 = vmatprep.subr.mxu0 0.0
        %3718 = vmatpush1.msra.mxu0 0.0
        %3719 = vmatprep.subr.mxu0 0.0
        %3720 = vmatpush1.msra.mxu0 0.0
        %3721 = vmatprep.subr.mxu0 0.0
        %3722 = vmatpush1.msra.mxu0 0.0
        %3723 = vmatprep.subr.mxu0 0.0
        %3724 = vmatpush1.msra.mxu0 0.0
        %3725 = vmatprep.subr.mxu0 0.0
        %3726 = vmatpush1.msra.mxu0 0.0
        %3727 = vmatprep.subr.mxu0 0.0
        %3728 = vmatpush1.msra.mxu0 0.0
        %3729 = vmatprep.subr.mxu0 0.0
        %3730 = vmatpush1.msra.mxu0 0.0
        %3731 = vmatprep.subr.mxu0 0.0
        %3732 = vmatpush1.msra.mxu0 0.0
        %3733 = vmatprep.subr.mxu0 0.0
        %3734 = vmatpush1.msra.mxu0 0.0
        %3735 = vmatprep.subr.mxu0 0.0
        %3736 = vmatpush1.msra.mxu0 0.0
        %3737 = vmatprep.subr.mxu0 0.0
        %3738 = vmatpush1.msra.mxu0 0.0
        %3739 = vmatprep.subr.mxu0 0.0
        %3740 = vmatpush1.msra.mxu0 0.0
        %3741 = vmatprep.subr.mxu0 0.0
        %3742 = vmatpush1.msra.mxu0 0.0
        %3743 = vmatprep.subr.mxu0 0.0
        %3744 = vmatpush1.msra.mxu0 0.0
        %3745 = vmatprep.subr.mxu0 0.0
        %3746 = vmatpush1.msra.mxu0 0.0
        %3747 = vmatprep.subr.mxu0 0.0
        %3748 = vmatpush1.msra.mxu0 0.0
        %3749 = vmatprep.subr.mxu0 0.0
        %3750 = vmatpush1.msra.mxu0 0.0
        %3751 = vmatprep.mubr.f32.mxu0 0.0
        %3752 = vmatmul.mubr.f32.gmra.mrb[0].mxu0 %v3685
        %v3753 = vpop.f32.mrb[0].mxu0
        %v3754 = vadd.f32 0.0, %v3753
        %v3755 = vpop.f32.mrb[0].mxu0
        %3756 = vdwg.mxu0
        %s3757 = scalar_lea.vmem %s5, 80
        %v3758 = vld [vmem:[%s3757] sm:$0xff]
        %v3759 = vld [vmem:[%s3757 + $0x8] sm:$0xff]
        %v3761 = vsel %vm891, %v3754, 0
        %3763 = vmatprep.subr.mxu0 0.0
        %3764 = vmatpush1.msra.mxu0 %v3758
        %3765 = vmatprep.subr.mxu0 0.0
        %3766 = vmatpush1.msra.mxu0 %v3759
        %3767 = vmatprep.subr.mxu0 0.0
        %3768 = vmatpush1.msra.mxu0 0.0
        %3769 = vmatprep.subr.mxu0 0.0
        %3770 = vmatpush1.msra.mxu0 0.0
        %3771 = vmatprep.subr.mxu0 0.0
        %3772 = vmatpush1.msra.mxu0 0.0
        %3773 = vmatprep.subr.mxu0 0.0
        %3774 = vmatpush1.msra.mxu0 0.0
        %3775 = vmatprep.subr.mxu0 0.0
        %3776 = vmatpush1.msra.mxu0 0.0
        %3777 = vmatprep.subr.mxu0 0.0
        %3778 = vmatpush1.msra.mxu0 0.0
        %3779 = vmatprep.subr.mxu0 0.0
        %3780 = vmatpush1.msra.mxu0 0.0
        %3781 = vmatprep.subr.mxu0 0.0
        %3782 = vmatpush1.msra.mxu0 0.0
        %3783 = vmatprep.subr.mxu0 0.0
        %3784 = vmatpush1.msra.mxu0 0.0
        %3785 = vmatprep.subr.mxu0 0.0
        %3786 = vmatpush1.msra.mxu0 0.0
        %3787 = vmatprep.subr.mxu0 0.0
        %3788 = vmatpush1.msra.mxu0 0.0
        %3789 = vmatprep.subr.mxu0 0.0
        %3790 = vmatpush1.msra.mxu0 0.0
        %3791 = vmatprep.subr.mxu0 0.0
        %3792 = vmatpush1.msra.mxu0 0.0
        %3793 = vmatprep.subr.mxu0 0.0
        %3794 = vmatpush1.msra.mxu0 0.0
        %3795 = vmatprep.subr.mxu0 0.0
        %3796 = vmatpush1.msra.mxu0 0.0
        %3797 = vmatprep.subr.mxu0 0.0
        %3798 = vmatpush1.msra.mxu0 0.0
        %3799 = vmatprep.subr.mxu0 0.0
        %3800 = vmatpush1.msra.mxu0 0.0
        %3801 = vmatprep.subr.mxu0 0.0
        %3802 = vmatpush1.msra.mxu0 0.0
        %3803 = vmatprep.subr.mxu0 0.0
        %3804 = vmatpush1.msra.mxu0 0.0
        %3805 = vmatprep.subr.mxu0 0.0
        %3806 = vmatpush1.msra.mxu0 0.0
        %3807 = vmatprep.subr.mxu0 0.0
        %3808 = vmatpush1.msra.mxu0 0.0
        %3809 = vmatprep.subr.mxu0 0.0
        %3810 = vmatpush1.msra.mxu0 0.0
        %3811 = vmatprep.subr.mxu0 0.0
        %3812 = vmatpush1.msra.mxu0 0.0
        %3813 = vmatprep.subr.mxu0 0.0
        %3814 = vmatpush1.msra.mxu0 0.0
        %3815 = vmatprep.subr.mxu0 0.0
        %3816 = vmatpush1.msra.mxu0 0.0
        %3817 = vmatprep.subr.mxu0 0.0
        %3818 = vmatpush1.msra.mxu0 0.0
        %3819 = vmatprep.subr.mxu0 0.0
        %3820 = vmatpush1.msra.mxu0 0.0
        %3821 = vmatprep.subr.mxu0 0.0
        %3822 = vmatpush1.msra.mxu0 0.0
        %3823 = vmatprep.subr.mxu0 0.0
        %3824 = vmatpush1.msra.mxu0 0.0
        %3825 = vmatprep.subr.mxu0 0.0
        %3826 = vmatpush1.msra.mxu0 0.0
        %3827 = vmatprep.mubr.f32.mxu0 0.0
        %3828 = vmatmul.mubr.f32.gmra.mrb[0].mxu0 %v3761
        %v3829 = vpop.f32.mrb[0].mxu0
        %v3830 = vadd.f32 0.0, %v3829
        %v3831 = vpop.f32.mrb[0].mxu0
        %3832 = vdwg.mxu0
        %v3834 = vsel %vm891, %v3329, 0
        %3836 = vmatprep.subr.mxu0 0.0
        %3837 = vmatpush1.msra.mxu0 %v3333
        %3838 = vmatprep.subr.mxu0 0.0
        %3839 = vmatpush1.msra.mxu0 %v3334
        %3840 = vmatprep.subr.mxu0 0.0
        %3841 = vmatpush1.msra.mxu0 0.0
        %3842 = vmatprep.subr.mxu0 0.0
        %3843 = vmatpush1.msra.mxu0 0.0
        %3844 = vmatprep.subr.mxu0 0.0
        %3845 = vmatpush1.msra.mxu0 0.0
        %3846 = vmatprep.subr.mxu0 0.0
        %3847 = vmatpush1.msra.mxu0 0.0
        %3848 = vmatprep.subr.mxu0 0.0
        %3849 = vmatpush1.msra.mxu0 0.0
        %3850 = vmatprep.subr.mxu0 0.0
        %3851 = vmatpush1.msra.mxu0 0.0
        %3852 = vmatprep.subr.mxu0 0.0
        %3853 = vmatpush1.msra.mxu0 0.0
        %3854 = vmatprep.subr.mxu0 0.0
        %3855 = vmatpush1.msra.mxu0 0.0
        %3856 = vmatprep.subr.mxu0 0.0
        %3857 = vmatpush1.msra.mxu0 0.0
        %3858 = vmatprep.subr.mxu0 0.0
        %3859 = vmatpush1.msra.mxu0 0.0
        %3860 = vmatprep.subr.mxu0 0.0
        %3861 = vmatpush1.msra.mxu0 0.0
        %3862 = vmatprep.subr.mxu0 0.0
        %3863 = vmatpush1.msra.mxu0 0.0
        %3864 = vmatprep.subr.mxu0 0.0
        %3865 = vmatpush1.msra.mxu0 0.0
        %3866 = vmatprep.subr.mxu0 0.0
        %3867 = vmatpush1.msra.mxu0 0.0
        %3868 = vmatprep.subr.mxu0 0.0
        %3869 = vmatpush1.msra.mxu0 0.0
        %3870 = vmatprep.subr.mxu0 0.0
        %3871 = vmatpush1.msra.mxu0 0.0
        %3872 = vmatprep.subr.mxu0 0.0
        %3873 = vmatpush1.msra.mxu0 0.0
        %3874 = vmatprep.subr.mxu0 0.0
        %3875 = vmatpush1.msra.mxu0 0.0
        %3876 = vmatprep.subr.mxu0 0.0
        %3877 = vmatpush1.msra.mxu0 0.0
        %3878 = vmatprep.subr.mxu0 0.0
        %3879 = vmatpush1.msra.mxu0 0.0
        %3880 = vmatprep.subr.mxu0 0.0
        %3881 = vmatpush1.msra.mxu0 0.0
        %3882 = vmatprep.subr.mxu0 0.0
        %3883 = vmatpush1.msra.mxu0 0.0
        %3884 = vmatprep.subr.mxu0 0.0
        %3885 = vmatpush1.msra.mxu0 0.0
        %3886 = vmatprep.subr.mxu0 0.0
        %3887 = vmatpush1.msra.mxu0 0.0
        %3888 = vmatprep.subr.mxu0 0.0
        %3889 = vmatpush1.msra.mxu0 0.0
        %3890 = vmatprep.subr.mxu0 0.0
        %3891 = vmatpush1.msra.mxu0 0.0
        %3892 = vmatprep.subr.mxu0 0.0
        %3893 = vmatpush1.msra.mxu0 0.0
        %3894 = vmatprep.subr.mxu0 0.0
        %3895 = vmatpush1.msra.mxu0 0.0
        %3896 = vmatprep.subr.mxu0 0.0
        %3897 = vmatpush1.msra.mxu0 0.0
        %3898 = vmatprep.subr.mxu0 0.0
        %3899 = vmatpush1.msra.mxu0 0.0
        %3900 = vmatprep.mubr.f32.mxu0 0.0
        %3901 = vmatmul.mubr.f32.gmra.mrb[0].mxu0 %v3834
        %v3902 = vpop.f32.mrb[0].mxu0
        %v3903 = vadd.f32 %v3830, %v3902
        %v3904 = vpop.f32.mrb[0].mxu0
        %3905 = vdwg.mxu0
        %s3906 = scalar_lea.vmem %s3, 896
        %v3907 = vld [vmem:[%s3906] sm:$0xff]
        %v3908 = vld [vmem:[%s3906 + $0x8] sm:$0xff]
        %v3909 = vld [vmem:[%s3906 + $0x10] sm:$0xff]
        %v3910 = vld [vmem:[%s3906 + $0x18] sm:$0xff]
        %v3911 = vld [vmem:[%s3906 + $0x20] sm:$0xff]
        %v3912 = vld [vmem:[%s3906 + $0x28] sm:$0xff]
        %v3913 = vld [vmem:[%s3906 + $0x30] sm:$0xff]
        %v3914 = vld [vmem:[%s3906 + $0x38] sm:$0xff]
        %s3915 = scalar_lea.vmem %s4, 14
        %v3916 = vld [vmem:[%s3915] sm:$0x1]
        %v3918 = vlaneseq
        %v3919 = vshrl.u32 %v3918, 7
        %v3920 = vsub.s32 0, %v3919
        %v3921 = vrot.slane %v3916, %v3920
        %3923 = vmatprep.subr.mxu0 0.0
        %3924 = vmatpush1.msra.mxu0 %v3907
        %3925 = vmatprep.subr.mxu0 0.0
        %3926 = vmatpush1.msra.mxu0 %v3908
        %3927 = vmatprep.subr.mxu0 0.0
        %3928 = vmatpush1.msra.mxu0 %v3909
        %3929 = vmatprep.subr.mxu0 0.0
        %3930 = vmatpush1.msra.mxu0 %v3910
        %3931 = vmatprep.subr.mxu0 0.0
        %3932 = vmatpush1.msra.mxu0 %v3911
        %3933 = vmatprep.subr.mxu0 0.0
        %3934 = vmatpush1.msra.mxu0 %v3912
        %3935 = vmatprep.subr.mxu0 0.0
        %3936 = vmatpush1.msra.mxu0 %v3913
        %3937 = vmatprep.subr.mxu0 0.0
        %3938 = vmatpush1.msra.mxu0 %v3914
        %3939 = vmatprep.subr.mxu0 0.0
        %3940 = vmatpush1.msra.mxu0 0.0
        %3941 = vmatprep.subr.mxu0 0.0
        %3942 = vmatpush1.msra.mxu0 0.0
        %3943 = vmatprep.subr.mxu0 0.0
        %3944 = vmatpush1.msra.mxu0 0.0
        %3945 = vmatprep.subr.mxu0 0.0
        %3946 = vmatpush1.msra.mxu0 0.0
        %3947 = vmatprep.subr.mxu0 0.0
        %3948 = vmatpush1.msra.mxu0 0.0
        %3949 = vmatprep.subr.mxu0 0.0
        %3950 = vmatpush1.msra.mxu0 0.0
        %3951 = vmatprep.subr.mxu0 0.0
        %3952 = vmatpush1.msra.mxu0 0.0
        %3953 = vmatprep.subr.mxu0 0.0
        %3954 = vmatpush1.msra.mxu0 0.0
        %3955 = vmatprep.subr.mxu0 0.0
        %3956 = vmatpush1.msra.mxu0 0.0
        %3957 = vmatprep.subr.mxu0 0.0
        %3958 = vmatpush1.msra.mxu0 0.0
        %3959 = vmatprep.subr.mxu0 0.0
        %3960 = vmatpush1.msra.mxu0 0.0
        %3961 = vmatprep.subr.mxu0 0.0
        %3962 = vmatpush1.msra.mxu0 0.0
        %3963 = vmatprep.subr.mxu0 0.0
        %3964 = vmatpush1.msra.mxu0 0.0
        %3965 = vmatprep.subr.mxu0 0.0
        %3966 = vmatpush1.msra.mxu0 0.0
        %3967 = vmatprep.subr.mxu0 0.0
        %3968 = vmatpush1.msra.mxu0 0.0
        %3969 = vmatprep.subr.mxu0 0.0
        %3970 = vmatpush1.msra.mxu0 0.0
        %3971 = vmatprep.subr.mxu0 0.0
        %3972 = vmatpush1.msra.mxu0 0.0
        %3973 = vmatprep.subr.mxu0 0.0
        %3974 = vmatpush1.msra.mxu0 0.0
        %3975 = vmatprep.subr.mxu0 0.0
        %3976 = vmatpush1.msra.mxu0 0.0
        %3977 = vmatprep.subr.mxu0 0.0
        %3978 = vmatpush1.msra.mxu0 0.0
        %3979 = vmatprep.subr.mxu0 0.0
        %3980 = vmatpush1.msra.mxu0 0.0
        %3981 = vmatprep.subr.mxu0 0.0
        %3982 = vmatpush1.msra.mxu0 0.0
        %3983 = vmatprep.subr.mxu0 0.0
        %3984 = vmatpush1.msra.mxu0 0.0
        %3985 = vmatprep.subr.mxu0 0.0
        %3986 = vmatpush1.msra.mxu0 0.0
        %3987 = vmatprep.mubr.f32.mxu0 0.0
        %3988 = vmatmul.mubr.f32.gmra.mrb[0].mxu0 %v2925
        %v3989 = vpop.f32.mrb[0].mxu0
        %v3990 = vadd.f32 %v3921, %v3989
        %v3991 = vpop.f32.mrb[0].mxu0
        %3992 = vdwg.mxu0
        %s3993 = scalar_lea.vmem %s3, 1152
        %v3994 = vld [vmem:[%s3993] sm:$0xff]
        %v3995 = vld [vmem:[%s3993 + $0x8] sm:$0xff]
        %v3996 = vld [vmem:[%s3993 + $0x10] sm:$0xff]
        %v3997 = vld [vmem:[%s3993 + $0x18] sm:$0xff]
        %v3998 = vld [vmem:[%s3993 + $0x20] sm:$0xff]
        %v3999 = vld [vmem:[%s3993 + $0x28] sm:$0xff]
        %v4000 = vld [vmem:[%s3993 + $0x30] sm:$0xff]
        %v4001 = vld [vmem:[%s3993 + $0x38] sm:$0xff]
        %s4002 = scalar_lea.vmem %s4, 18
        %v4003 = vld [vmem:[%s4002] sm:$0x1]
        %v4005 = vlaneseq
        %v4006 = vshrl.u32 %v4005, 7
        %v4007 = vsub.s32 0, %v4006
        %v4008 = vrot.slane %v4003, %v4007
        %4010 = vmatprep.subr.mxu0 0.0
        %4011 = vmatpush1.msra.mxu0 %v3994
        %4012 = vmatprep.subr.mxu0 0.0
        %4013 = vmatpush1.msra.mxu0 %v3995
        %4014 = vmatprep.subr.mxu0 0.0
        %4015 = vmatpush1.msra.mxu0 %v3996
        %4016 = vmatprep.subr.mxu0 0.0
        %4017 = vmatpush1.msra.mxu0 %v3997
        %4018 = vmatprep.subr.mxu0 0.0
        %4019 = vmatpush1.msra.mxu0 %v3998
        %4020 = vmatprep.subr.mxu0 0.0
        %4021 = vmatpush1.msra.mxu0 %v3999
        %4022 = vmatprep.subr.mxu0 0.0
        %4023 = vmatpush1.msra.mxu0 %v4000
        %4024 = vmatprep.subr.mxu0 0.0
        %4025 = vmatpush1.msra.mxu0 %v4001
        %4026 = vmatprep.subr.mxu0 0.0
        %4027 = vmatpush1.msra.mxu0 0.0
        %4028 = vmatprep.subr.mxu0 0.0
        %4029 = vmatpush1.msra.mxu0 0.0
        %4030 = vmatprep.subr.mxu0 0.0
        %4031 = vmatpush1.msra.mxu0 0.0
        %4032 = vmatprep.subr.mxu0 0.0
        %4033 = vmatpush1.msra.mxu0 0.0
        %4034 = vmatprep.subr.mxu0 0.0
        %4035 = vmatpush1.msra.mxu0 0.0
        %4036 = vmatprep.subr.mxu0 0.0
        %4037 = vmatpush1.msra.mxu0 0.0
        %4038 = vmatprep.subr.mxu0 0.0
        %4039 = vmatpush1.msra.mxu0 0.0
        %4040 = vmatprep.subr.mxu0 0.0
        %4041 = vmatpush1.msra.mxu0 0.0
        %4042 = vmatprep.subr.mxu0 0.0
        %4043 = vmatpush1.msra.mxu0 0.0
        %4044 = vmatprep.subr.mxu0 0.0
        %4045 = vmatpush1.msra.mxu0 0.0
        %4046 = vmatprep.subr.mxu0 0.0
        %4047 = vmatpush1.msra.mxu0 0.0
        %4048 = vmatprep.subr.mxu0 0.0
        %4049 = vmatpush1.msra.mxu0 0.0
        %4050 = vmatprep.subr.mxu0 0.0
        %4051 = vmatpush1.msra.mxu0 0.0
        %4052 = vmatprep.subr.mxu0 0.0
        %4053 = vmatpush1.msra.mxu0 0.0
        %4054 = vmatprep.subr.mxu0 0.0
        %4055 = vmatpush1.msra.mxu0 0.0
        %4056 = vmatprep.subr.mxu0 0.0
        %4057 = vmatpush1.msra.mxu0 0.0
        %4058 = vmatprep.subr.mxu0 0.0
        %4059 = vmatpush1.msra.mxu0 0.0
        %4060 = vmatprep.subr.mxu0 0.0
        %4061 = vmatpush1.msra.mxu0 0.0
        %4062 = vmatprep.subr.mxu0 0.0
        %4063 = vmatpush1.msra.mxu0 0.0
        %4064 = vmatprep.subr.mxu0 0.0
        %4065 = vmatpush1.msra.mxu0 0.0
        %4066 = vmatprep.subr.mxu0 0.0
        %4067 = vmatpush1.msra.mxu0 0.0
        %4068 = vmatprep.subr.mxu0 0.0
        %4069 = vmatpush1.msra.mxu0 0.0
        %4070 = vmatprep.subr.mxu0 0.0
        %4071 = vmatpush1.msra.mxu0 0.0
        %4072 = vmatprep.subr.mxu0 0.0
        %4073 = vmatpush1.msra.mxu0 0.0
        %4074 = vmatprep.mubr.f32.mxu0 0.0
        %4075 = vmatmul.mubr.f32.gmra.mrb[0].mxu0 %v2925
        %v4076 = vpop.f32.mrb[0].mxu0
        %v4077 = vadd.f32 %v4008, %v4076
        %v4078 = vpop.f32.mrb[0].mxu0
        %4079 = vdwg.mxu0
        %s4080 = scalar_lea.vmem %s3, 1408
        %v4081 = vld [vmem:[%s4080] sm:$0xff]
        %v4082 = vld [vmem:[%s4080 + $0x8] sm:$0xff]
        %v4083 = vld [vmem:[%s4080 + $0x10] sm:$0xff]
        %v4084 = vld [vmem:[%s4080 + $0x18] sm:$0xff]
        %v4085 = vld [vmem:[%s4080 + $0x20] sm:$0xff]
        %v4086 = vld [vmem:[%s4080 + $0x28] sm:$0xff]
        %v4087 = vld [vmem:[%s4080 + $0x30] sm:$0xff]
        %v4088 = vld [vmem:[%s4080 + $0x38] sm:$0xff]
        %s4089 = scalar_lea.vmem %s4, 22
        %v4090 = vld [vmem:[%s4089] sm:$0x1]
        %v4092 = vlaneseq
        %v4093 = vshrl.u32 %v4092, 7
        %v4094 = vsub.s32 0, %v4093
        %v4095 = vrot.slane %v4090, %v4094
        %4097 = vmatprep.subr.mxu0 0.0
        %4098 = vmatpush1.msra.mxu0 %v4081
        %4099 = vmatprep.subr.mxu0 0.0
        %4100 = vmatpush1.msra.mxu0 %v4082
        %4101 = vmatprep.subr.mxu0 0.0
        %4102 = vmatpush1.msra.mxu0 %v4083
        %4103 = vmatprep.subr.mxu0 0.0
        %4104 = vmatpush1.msra.mxu0 %v4084
        %4105 = vmatprep.subr.mxu0 0.0
        %4106 = vmatpush1.msra.mxu0 %v4085
        %4107 = vmatprep.subr.mxu0 0.0
        %4108 = vmatpush1.msra.mxu0 %v4086
        %4109 = vmatprep.subr.mxu0 0.0
        %4110 = vmatpush1.msra.mxu0 %v4087
        %4111 = vmatprep.subr.mxu0 0.0
        %4112 = vmatpush1.msra.mxu0 %v4088
        %4113 = vmatprep.subr.mxu0 0.0
        %4114 = vmatpush1.msra.mxu0 0.0
        %4115 = vmatprep.subr.mxu0 0.0
        %4116 = vmatpush1.msra.mxu0 0.0
        %4117 = vmatprep.subr.mxu0 0.0
        %4118 = vmatpush1.msra.mxu0 0.0
        %4119 = vmatprep.subr.mxu0 0.0
        %4120 = vmatpush1.msra.mxu0 0.0
        %4121 = vmatprep.subr.mxu0 0.0
        %4122 = vmatpush1.msra.mxu0 0.0
        %4123 = vmatprep.subr.mxu0 0.0
        %4124 = vmatpush1.msra.mxu0 0.0
        %4125 = vmatprep.subr.mxu0 0.0
        %4126 = vmatpush1.msra.mxu0 0.0
        %4127 = vmatprep.subr.mxu0 0.0
        %4128 = vmatpush1.msra.mxu0 0.0
        %4129 = vmatprep.subr.mxu0 0.0
        %4130 = vmatpush1.msra.mxu0 0.0
        %4131 = vmatprep.subr.mxu0 0.0
        %4132 = vmatpush1.msra.mxu0 0.0
        %4133 = vmatprep.subr.mxu0 0.0
        %4134 = vmatpush1.msra.mxu0 0.0
        %4135 = vmatprep.subr.mxu0 0.0
        %4136 = vmatpush1.msra.mxu0 0.0
        %4137 = vmatprep.subr.mxu0 0.0
        %4138 = vmatpush1.msra.mxu0 0.0
        %4139 = vmatprep.subr.mxu0 0.0
        %4140 = vmatpush1.msra.mxu0 0.0
        %4141 = vmatprep.subr.mxu0 0.0
        %4142 = vmatpush1.msra.mxu0 0.0
        %4143 = vmatprep.subr.mxu0 0.0
        %4144 = vmatpush1.msra.mxu0 0.0
        %4145 = vmatprep.subr.mxu0 0.0
        %4146 = vmatpush1.msra.mxu0 0.0
        %4147 = vmatprep.subr.mxu0 0.0
        %4148 = vmatpush1.msra.mxu0 0.0
        %4149 = vmatprep.subr.mxu0 0.0
        %4150 = vmatpush1.msra.mxu0 0.0
        %4151 = vmatprep.subr.mxu0 0.0
        %4152 = vmatpush1.msra.mxu0 0.0
        %4153 = vmatprep.subr.mxu0 0.0
        %4154 = vmatpush1.msra.mxu0 0.0
        %4155 = vmatprep.subr.mxu0 0.0
        %4156 = vmatpush1.msra.mxu0 0.0
        %4157 = vmatprep.subr.mxu0 0.0
        %4158 = vmatpush1.msra.mxu0 0.0
        %4159 = vmatprep.subr.mxu0 0.0
        %4160 = vmatpush1.msra.mxu0 0.0
        %4161 = vmatprep.mubr.f32.mxu0 0.0
        %4162 = vmatmul.mubr.f32.gmra.mrb[0].mxu0 %v2925
        %v4163 = vpop.f32.mrb[0].mxu0
        %v4164 = vadd.f32 %v4095, %v4163
        %v4165 = vpop.f32.mrb[0].mxu0
        %4166 = vdwg.mxu0
        %v4168 = vsel %vm891, %v3990, 0
        %v4171 = vsel %vm891, %v4077, 0
        %4173 = vmatprep.subr.mxu0 0.0
        %4174 = vmatpush1.xpose.msra.mxu0 %v4171
        %4175 = vmatprep.subr.mxu0 0.0
        %4176 = vmatpush1.xpose.msra.mxu0 0.0
        %4177 = vmatprep.subr.mxu0 0.0
        %4178 = vmatpush1.xpose.msra.mxu0 0.0
        %4179 = vmatprep.subr.mxu0 0.0
        %4180 = vmatpush1.xpose.msra.mxu0 0.0
        %4181 = vmatprep.subr.mxu0 0.0
        %4182 = vmatpush1.xpose.msra.mxu0 0.0
        %4183 = vmatprep.subr.mxu0 0.0
        %4184 = vmatpush1.xpose.msra.mxu0 0.0
        %4185 = vmatprep.subr.mxu0 0.0
        %4186 = vmatpush1.xpose.msra.mxu0 0.0
        %4187 = vmatprep.subr.mxu0 0.0
        %4188 = vmatpush1.xpose.msra.mxu0 0.0
        %4189 = vmatprep.subr.mxu0 0.0
        %4190 = vmatpush1.xpose.msra.mxu0 0.0
        %4191 = vmatprep.subr.mxu0 0.0
        %4192 = vmatpush1.xpose.msra.mxu0 0.0
        %4193 = vmatprep.subr.mxu0 0.0
        %4194 = vmatpush1.xpose.msra.mxu0 0.0
        %4195 = vmatprep.subr.mxu0 0.0
        %4196 = vmatpush1.xpose.msra.mxu0 0.0
        %4197 = vmatprep.subr.mxu0 0.0
        %4198 = vmatpush1.xpose.msra.mxu0 0.0
        %4199 = vmatprep.subr.mxu0 0.0
        %4200 = vmatpush1.xpose.msra.mxu0 0.0
        %4201 = vmatprep.subr.mxu0 0.0
        %4202 = vmatpush1.xpose.msra.mxu0 0.0
        %4203 = vmatprep.subr.mxu0 0.0
        %4204 = vmatpush1.xpose.msra.mxu0 0.0
        %4205 = vmatprep.subr.mxu0 0.0
        %4206 = vmatpush1.xpose.msra.mxu0 0.0
        %4207 = vmatprep.subr.mxu0 0.0
        %4208 = vmatpush1.xpose.msra.mxu0 0.0
        %4209 = vmatprep.subr.mxu0 0.0
        %4210 = vmatpush1.xpose.msra.mxu0 0.0
        %4211 = vmatprep.subr.mxu0 0.0
        %4212 = vmatpush1.xpose.msra.mxu0 0.0
        %4213 = vmatprep.subr.mxu0 0.0
        %4214 = vmatpush1.xpose.msra.mxu0 0.0
        %4215 = vmatprep.subr.mxu0 0.0
        %4216 = vmatpush1.xpose.msra.mxu0 0.0
        %4217 = vmatprep.subr.mxu0 0.0
        %4218 = vmatpush1.xpose.msra.mxu0 0.0
        %4219 = vmatprep.subr.mxu0 0.0
        %4220 = vmatpush1.xpose.msra.mxu0 0.0
        %4221 = vmatprep.subr.mxu0 0.0
        %4222 = vmatpush1.xpose.msra.mxu0 0.0
        %4223 = vmatprep.subr.mxu0 0.0
        %4224 = vmatpush1.xpose.msra.mxu0 0.0
        %4225 = vmatprep.subr.mxu0 0.0
        %4226 = vmatpush1.xpose.msra.mxu0 0.0
        %4227 = vmatprep.subr.mxu0 0.0
        %4228 = vmatpush1.xpose.msra.mxu0 0.0
        %4229 = vmatprep.subr.mxu0 0.0
        %4230 = vmatpush1.xpose.msra.mxu0 0.0
        %4231 = vmatprep.subr.mxu0 0.0
        %4232 = vmatpush1.xpose.msra.mxu0 0.0
        %4233 = vmatprep.subr.mxu0 0.0
        %4234 = vmatpush1.xpose.msra.mxu0 0.0
        %4235 = vmatprep.subr.mxu0 0.0
        %4236 = vmatpush1.xpose.msra.mxu0 0.0
        %4237 = vmatprep.mubr.f32.mxu0 0.0
        %4238 = vmatmul.mubr.f32.gmra.mrb[0].mxu0 %v4168
        %v4239 = vpop.f32.mrb[0].mxu0
        %v4240 = vadd.f32 0.0, %v4239
        %v4241 = vpop.f32.mrb[0].mxu0
        %4242 = vdwg.mxu0
        %v4243 = vmul.f32 %v4240, 0.25
        %v4244 = vsel %vm969, %v4243, -inf
        %4245 = vmax.xlane.f32.xlu0 %v4244
        %v4246 = vpop.xlane.xlu0 %4245
        %v4247 = vsub.f32 %v4243, %v4246
        %v4248 = vmul.f32 %v4247, 1.442695
        %v4249 = vpow.pop %v4248
        %v4250 = vsel %vm969, %v4249, 0.0
        %4251 = vadd.xlane.f32.xlu0 %v4250
        %v4252 = vpop.xlane.xlu0 %4251
        %v4253 = vrcp.pop %v4252
        %v4254 = vmul.f32 %v4249, %v4253
        %v4256 = vsel %vm969, %v4254, 0
        %4258 = vmatprep.subr.mxu0 0.0
        %4259 = vmatpush1.msra.mxu0 %v4164
        %4260 = vmatprep.subr.mxu0 0.0
        %4261 = vmatpush1.msra.mxu0 0.0
        %4262 = vmatprep.subr.mxu0 0.0
        %4263 = vmatpush1.msra.mxu0 0.0
        %4264 = vmatprep.subr.mxu0 0.0
        %4265 = vmatpush1.msra.mxu0 0.0
        %4266 = vmatprep.subr.mxu0 0.0
        %4267 = vmatpush1.msra.mxu0 0.0
        %4268 = vmatprep.subr.mxu0 0.0
        %4269 = vmatpush1.msra.mxu0 0.0
        %4270 = vmatprep.subr.mxu0 0.0
        %4271 = vmatpush1.msra.mxu0 0.0
        %4272 = vmatprep.subr.mxu0 0.0
        %4273 = vmatpush1.msra.mxu0 0.0
        %4274 = vmatprep.subr.mxu0 0.0
        %4275 = vmatpush1.msra.mxu0 0.0
        %4276 = vmatprep.subr.mxu0 0.0
        %4277 = vmatpush1.msra.mxu0 0.0
        %4278 = vmatprep.subr.mxu0 0.0
        %4279 = vmatpush1.msra.mxu0 0.0
        %4280 = vmatprep.subr.mxu0 0.0
        %4281 = vmatpush1.msra.mxu0 0.0
        %4282 = vmatprep.subr.mxu0 0.0
        %4283 = vmatpush1.msra.mxu0 0.0
        %4284 = vmatprep.subr.mxu0 0.0
        %4285 = vmatpush1.msra.mxu0 0.0
        %4286 = vmatprep.subr.mxu0 0.0
        %4287 = vmatpush1.msra.mxu0 0.0
        %4288 = vmatprep.subr.mxu0 0.0
        %4289 = vmatpush1.msra.mxu0 0.0
        %4290 = vmatprep.subr.mxu0 0.0
        %4291 = vmatpush1.msra.mxu0 0.0
        %4292 = vmatprep.subr.mxu0 0.0
        %4293 = vmatpush1.msra.mxu0 0.0
        %4294 = vmatprep.subr.mxu0 0.0
        %4295 = vmatpush1.msra.mxu0 0.0
        %4296 = vmatprep.subr.mxu0 0.0
        %4297 = vmatpush1.msra.mxu0 0.0
        %4298 = vmatprep.subr.mxu0 0.0
        %4299 = vmatpush1.msra.mxu0 0.0
        %4300 = vmatprep.subr.mxu0 0.0
        %4301 = vmatpush1.msra.mxu0 0.0
        %4302 = vmatprep.subr.mxu0 0.0
        %4303 = vmatpush1.msra.mxu0 0.0
        %4304 = vmatprep.subr.mxu0 0.0
        %4305 = vmatpush1.msra.mxu0 0.0
        %4306 = vmatprep.subr.mxu0 0.0
        %4307 = vmatpush1.msra.mxu0 0.0
        %4308 = vmatprep.subr.mxu0 0.0
        %4309 = vmatpush1.msra.mxu0 0.0
        %4310 = vmatprep.subr.mxu0 0.0
        %4311 = vmatpush1.msra.mxu0 0.0
        %4312 = vmatprep.subr.mxu0 0.0
        %4313 = vmatpush1.msra.mxu0 0.0
        %4314 = vmatprep.subr.mxu0 0.0
        %4315 = vmatpush1.msra.mxu0 0.0
        %4316 = vmatprep.subr.mxu0 0.0
        %4317 = vmatpush1.msra.mxu0 0.0
        %4318 = vmatprep.subr.mxu0 0.0
        %4319 = vmatpush1.msra.mxu0 0.0
        %4320 = vmatprep.subr.mxu0 0.0
        %4321 = vmatpush1.msra.mxu0 0.0
        %4322 = vmatprep.mubr.f32.mxu0 0.0
        %4323 = vmatmul.mubr.f32.gmra.mrb[0].mxu0 %v4256
        %v4324 = vpop.f32.mrb[0].mxu0
        %v4325 = vadd.f32 0.0, %v4324
        %v4326 = vpop.f32.mrb[0].mxu0
        %4327 = vdwg.mxu0
        %s4328 = scalar_lea.vmem %s5, 96
        %v4329 = vld [vmem:[%s4328] sm:$0xff]
        %v4330 = vld [vmem:[%s4328 + $0x8] sm:$0xff]
        %v4332 = vsel %vm891, %v4325, 0
        %4334 = vmatprep.subr.mxu0 0.0
        %4335 = vmatpush1.msra.mxu0 %v4329
        %4336 = vmatprep.subr.mxu0 0.0
        %4337 = vmatpush1.msra.mxu0 %v4330
        %4338 = vmatprep.subr.mxu0 0.0
        %4339 = vmatpush1.msra.mxu0 0.0
        %4340 = vmatprep.subr.mxu0 0.0
        %4341 = vmatpush1.msra.mxu0 0.0
        %4342 = vmatprep.subr.mxu0 0.0
        %4343 = vmatpush1.msra.mxu0 0.0
        %4344 = vmatprep.subr.mxu0 0.0
        %4345 = vmatpush1.msra.mxu0 0.0
        %4346 = vmatprep.subr.mxu0 0.0
        %4347 = vmatpush1.msra.mxu0 0.0
        %4348 = vmatprep.subr.mxu0 0.0
        %4349 = vmatpush1.msra.mxu0 0.0
        %4350 = vmatprep.subr.mxu0 0.0
        %4351 = vmatpush1.msra.mxu0 0.0
        %4352 = vmatprep.subr.mxu0 0.0
        %4353 = vmatpush1.msra.mxu0 0.0
        %4354 = vmatprep.subr.mxu0 0.0
        %4355 = vmatpush1.msra.mxu0 0.0
        %4356 = vmatprep.subr.mxu0 0.0
        %4357 = vmatpush1.msra.mxu0 0.0
        %4358 = vmatprep.subr.mxu0 0.0
        %4359 = vmatpush1.msra.mxu0 0.0
        %4360 = vmatprep.subr.mxu0 0.0
        %4361 = vmatpush1.msra.mxu0 0.0
        %4362 = vmatprep.subr.mxu0 0.0
        %4363 = vmatpush1.msra.mxu0 0.0
        %4364 = vmatprep.subr.mxu0 0.0
        %4365 = vmatpush1.msra.mxu0 0.0
        %4366 = vmatprep.subr.mxu0 0.0
        %4367 = vmatpush1.msra.mxu0 0.0
        %4368 = vmatprep.subr.mxu0 0.0
        %4369 = vmatpush1.msra.mxu0 0.0
        %4370 = vmatprep.subr.mxu0 0.0
        %4371 = vmatpush1.msra.mxu0 0.0
        %4372 = vmatprep.subr.mxu0 0.0
        %4373 = vmatpush1.msra.mxu0 0.0
        %4374 = vmatprep.subr.mxu0 0.0
        %4375 = vmatpush1.msra.mxu0 0.0
        %4376 = vmatprep.subr.mxu0 0.0
        %4377 = vmatpush1.msra.mxu0 0.0
        %4378 = vmatprep.subr.mxu0 0.0
        %4379 = vmatpush1.msra.mxu0 0.0
        %4380 = vmatprep.subr.mxu0 0.0
        %4381 = vmatpush1.msra.mxu0 0.0
        %4382 = vmatprep.subr.mxu0 0.0
        %4383 = vmatpush1.msra.mxu0 0.0
        %4384 = vmatprep.subr.mxu0 0.0
        %4385 = vmatpush1.msra.mxu0 0.0
        %4386 = vmatprep.subr.mxu0 0.0
        %4387 = vmatpush1.msra.mxu0 0.0
        %4388 = vmatprep.subr.mxu0 0.0
        %4389 = vmatpush1.msra.mxu0 0.0
        %4390 = vmatprep.subr.mxu0 0.0
        %4391 = vmatpush1.msra.mxu0 0.0
        %4392 = vmatprep.subr.mxu0 0.0
        %4393 = vmatpush1.msra.mxu0 0.0
        %4394 = vmatprep.subr.mxu0 0.0
        %4395 = vmatpush1.msra.mxu0 0.0
        %4396 = vmatprep.subr.mxu0 0.0
        %4397 = vmatpush1.msra.mxu0 0.0
        %4398 = vmatprep.mubr.f32.mxu0 0.0
        %4399 = vmatmul.mubr.f32.gmra.mrb[0].mxu0 %v4332
        %v4400 = vpop.f32.mrb[0].mxu0
        %v4401 = vadd.f32 0.0, %v4400
        %v4402 = vpop.f32.mrb[0].mxu0
        %4403 = vdwg.mxu0
        %v4404 = vadd.f32 %v3903, %v4401
        %s4405 = scalar_lea.vmem %s3, 960
        %v4406 = vld [vmem:[%s4405] sm:$0xff]
        %v4407 = vld [vmem:[%s4405 + $0x8] sm:$0xff]
        %v4408 = vld [vmem:[%s4405 + $0x10] sm:$0xff]
        %v4409 = vld [vmem:[%s4405 + $0x18] sm:$0xff]
        %v4410 = vld [vmem:[%s4405 + $0x20] sm:$0xff]
        %v4411 = vld [vmem:[%s4405 + $0x28] sm:$0xff]
        %v4412 = vld [vmem:[%s4405 + $0x30] sm:$0xff]
        %v4413 = vld [vmem:[%s4405 + $0x38] sm:$0xff]
        %s4414 = scalar_lea.vmem %s4, 15
        %v4415 = vld [vmem:[%s4414] sm:$0x1]
        %v4417 = vlaneseq
        %v4418 = vshrl.u32 %v4417, 7
        %v4419 = vsub.s32 0, %v4418
        %v4420 = vrot.slane %v4415, %v4419
        %4422 = vmatprep.subr.mxu0 0.0
        %4423 = vmatpush1.msra.mxu0 %v4406
        %4424 = vmatprep.subr.mxu0 0.0
        %4425 = vmatpush1.msra.mxu0 %v4407
        %4426 = vmatprep.subr.mxu0 0.0
        %4427 = vmatpush1.msra.mxu0 %v4408
        %4428 = vmatprep.subr.mxu0 0.0
        %4429 = vmatpush1.msra.mxu0 %v4409
        %4430 = vmatprep.subr.mxu0 0.0
        %4431 = vmatpush1.msra.mxu0 %v4410
        %4432 = vmatprep.subr.mxu0 0.0
        %4433 = vmatpush1.msra.mxu0 %v4411
        %4434 = vmatprep.subr.mxu0 0.0
        %4435 = vmatpush1.msra.mxu0 %v4412
        %4436 = vmatprep.subr.mxu0 0.0
        %4437 = vmatpush1.msra.mxu0 %v4413
        %4438 = vmatprep.subr.mxu0 0.0
        %4439 = vmatpush1.msra.mxu0 0.0
        %4440 = vmatprep.subr.mxu0 0.0
        %4441 = vmatpush1.msra.mxu0 0.0
        %4442 = vmatprep.subr.mxu0 0.0
        %4443 = vmatpush1.msra.mxu0 0.0
        %4444 = vmatprep.subr.mxu0 0.0
        %4445 = vmatpush1.msra.mxu0 0.0
        %4446 = vmatprep.subr.mxu0 0.0
        %4447 = vmatpush1.msra.mxu0 0.0
        %4448 = vmatprep.subr.mxu0 0.0
        %4449 = vmatpush1.msra.mxu0 0.0
        %4450 = vmatprep.subr.mxu0 0.0
        %4451 = vmatpush1.msra.mxu0 0.0
        %4452 = vmatprep.subr.mxu0 0.0
        %4453 = vmatpush1.msra.mxu0 0.0
        %4454 = vmatprep.subr.mxu0 0.0
        %4455 = vmatpush1.msra.mxu0 0.0
        %4456 = vmatprep.subr.mxu0 0.0
        %4457 = vmatpush1.msra.mxu0 0.0
        %4458 = vmatprep.subr.mxu0 0.0
        %4459 = vmatpush1.msra.mxu0 0.0
        %4460 = vmatprep.subr.mxu0 0.0
        %4461 = vmatpush1.msra.mxu0 0.0
        %4462 = vmatprep.subr.mxu0 0.0
        %4463 = vmatpush1.msra.mxu0 0.0
        %4464 = vmatprep.subr.mxu0 0.0
        %4465 = vmatpush1.msra.mxu0 0.0
        %4466 = vmatprep.subr.mxu0 0.0
        %4467 = vmatpush1.msra.mxu0 0.0
        %4468 = vmatprep.subr.mxu0 0.0
        %4469 = vmatpush1.msra.mxu0 0.0
        %4470 = vmatprep.subr.mxu0 0.0
        %4471 = vmatpush1.msra.mxu0 0.0
        %4472 = vmatprep.subr.mxu0 0.0
        %4473 = vmatpush1.msra.mxu0 0.0
        %4474 = vmatprep.subr.mxu0 0.0
        %4475 = vmatpush1.msra.mxu0 0.0
        %4476 = vmatprep.subr.mxu0 0.0
        %4477 = vmatpush1.msra.mxu0 0.0
        %4478 = vmatprep.subr.mxu0 0.0
        %4479 = vmatpush1.msra.mxu0 0.0
        %4480 = vmatprep.subr.mxu0 0.0
        %4481 = vmatpush1.msra.mxu0 0.0
        %4482 = vmatprep.subr.mxu0 0.0
        %4483 = vmatpush1.msra.mxu0 0.0
        %4484 = vmatprep.subr.mxu0 0.0
        %4485 = vmatpush1.msra.mxu0 0.0
        %4486 = vmatprep.mubr.f32.mxu0 0.0
        %4487 = vmatmul.mubr.f32.gmra.mrb[0].mxu0 %v2925
        %v4488 = vpop.f32.mrb[0].mxu0
        %v4489 = vadd.f32 %v4420, %v4488
        %v4490 = vpop.f32.mrb[0].mxu0
        %4491 = vdwg.mxu0
        %s4492 = scalar_lea.vmem %s3, 1216
        %v4493 = vld [vmem:[%s4492] sm:$0xff]
        %v4494 = vld [vmem:[%s4492 + $0x8] sm:$0xff]
        %v4495 = vld [vmem:[%s4492 + $0x10] sm:$0xff]
        %v4496 = vld [vmem:[%s4492 + $0x18] sm:$0xff]
        %v4497 = vld [vmem:[%s4492 + $0x20] sm:$0xff]
        %v4498 = vld [vmem:[%s4492 + $0x28] sm:$0xff]
        %v4499 = vld [vmem:[%s4492 + $0x30] sm:$0xff]
        %v4500 = vld [vmem:[%s4492 + $0x38] sm:$0xff]
        %s4501 = scalar_lea.vmem %s4, 19
        %v4502 = vld [vmem:[%s4501] sm:$0x1]
        %v4504 = vlaneseq
        %v4505 = vshrl.u32 %v4504, 7
        %v4506 = vsub.s32 0, %v4505
        %v4507 = vrot.slane %v4502, %v4506
        %4509 = vmatprep.subr.mxu0 0.0
        %4510 = vmatpush1.msra.mxu0 %v4493
        %4511 = vmatprep.subr.mxu0 0.0
        %4512 = vmatpush1.msra.mxu0 %v4494
        %4513 = vmatprep.subr.mxu0 0.0
        %4514 = vmatpush1.msra.mxu0 %v4495
        %4515 = vmatprep.subr.mxu0 0.0
        %4516 = vmatpush1.msra.mxu0 %v4496
        %4517 = vmatprep.subr.mxu0 0.0
        %4518 = vmatpush1.msra.mxu0 %v4497
        %4519 = vmatprep.subr.mxu0 0.0
        %4520 = vmatpush1.msra.mxu0 %v4498
        %4521 = vmatprep.subr.mxu0 0.0
        %4522 = vmatpush1.msra.mxu0 %v4499
        %4523 = vmatprep.subr.mxu0 0.0
        %4524 = vmatpush1.msra.mxu0 %v4500
        %4525 = vmatprep.subr.mxu0 0.0
        %4526 = vmatpush1.msra.mxu0 0.0
        %4527 = vmatprep.subr.mxu0 0.0
        %4528 = vmatpush1.msra.mxu0 0.0
        %4529 = vmatprep.subr.mxu0 0.0
        %4530 = vmatpush1.msra.mxu0 0.0
        %4531 = vmatprep.subr.mxu0 0.0
        %4532 = vmatpush1.msra.mxu0 0.0
        %4533 = vmatprep.subr.mxu0 0.0
        %4534 = vmatpush1.msra.mxu0 0.0
        %4535 = vmatprep.subr.mxu0 0.0
        %4536 = vmatpush1.msra.mxu0 0.0
        %4537 = vmatprep.subr.mxu0 0.0
        %4538 = vmatpush1.msra.mxu0 0.0
        %4539 = vmatprep.subr.mxu0 0.0
        %4540 = vmatpush1.msra.mxu0 0.0
        %4541 = vmatprep.subr.mxu0 0.0
        %4542 = vmatpush1.msra.mxu0 0.0
        %4543 = vmatprep.subr.mxu0 0.0
        %4544 = vmatpush1.msra.mxu0 0.0
        %4545 = vmatprep.subr.mxu0 0.0
        %4546 = vmatpush1.msra.mxu0 0.0
        %4547 = vmatprep.subr.mxu0 0.0
        %4548 = vmatpush1.msra.mxu0 0.0
        %4549 = vmatprep.subr.mxu0 0.0
        %4550 = vmatpush1.msra.mxu0 0.0
        %4551 = vmatprep.subr.mxu0 0.0
        %4552 = vmatpush1.msra.mxu0 0.0
        %4553 = vmatprep.subr.mxu0 0.0
        %4554 = vmatpush1.msra.mxu0 0.0
        %4555 = vmatprep.subr.mxu0 0.0
        %4556 = vmatpush1.msra.mxu0 0.0
        %4557 = vmatprep.subr.mxu0 0.0
        %4558 = vmatpush1.msra.mxu0 0.0
        %4559 = vmatprep.subr.mxu0 0.0
        %4560 = vmatpush1.msra.mxu0 0.0
        %4561 = vmatprep.subr.mxu0 0.0
        %4562 = vmatpush1.msra.mxu0 0.0
        %4563 = vmatprep.subr.mxu0 0.0
        %4564 = vmatpush1.msra.mxu0 0.0
        %4565 = vmatprep.subr.mxu0 0.0
        %4566 = vmatpush1.msra.mxu0 0.0
        %4567 = vmatprep.subr.mxu0 0.0
        %4568 = vmatpush1.msra.mxu0 0.0
        %4569 = vmatprep.subr.mxu0 0.0
        %4570 = vmatpush1.msra.mxu0 0.0
        %4571 = vmatprep.subr.mxu0 0.0
        %4572 = vmatpush1.msra.mxu0 0.0
        %4573 = vmatprep.mubr.f32.mxu0 0.0
        %4574 = vmatmul.mubr.f32.gmra.mrb[0].mxu0 %v2925
        %v4575 = vpop.f32.mrb[0].mxu0
        %v4576 = vadd.f32 %v4507, %v4575
        %v4577 = vpop.f32.mrb[0].mxu0
        %4578 = vdwg.mxu0
        %s4579 = scalar_lea.vmem %s3, 1472
        %v4580 = vld [vmem:[%s4579] sm:$0xff]
        %v4581 = vld [vmem:[%s4579 + $0x8] sm:$0xff]
        %v4582 = vld [vmem:[%s4579 + $0x10] sm:$0xff]
        %v4583 = vld [vmem:[%s4579 + $0x18] sm:$0xff]
        %v4584 = vld [vmem:[%s4579 + $0x20] sm:$0xff]
        %v4585 = vld [vmem:[%s4579 + $0x28] sm:$0xff]
        %v4586 = vld [vmem:[%s4579 + $0x30] sm:$0xff]
        %v4587 = vld [vmem:[%s4579 + $0x38] sm:$0xff]
        %s4588 = scalar_lea.vmem %s4, 23
        %v4589 = vld [vmem:[%s4588] sm:$0x1]
        %v4591 = vlaneseq
        %v4592 = vshrl.u32 %v4591, 7
        %v4593 = vsub.s32 0, %v4592
        %v4594 = vrot.slane %v4589, %v4593
        %4596 = vmatprep.subr.mxu0 0.0
        %4597 = vmatpush1.msra.mxu0 %v4580
        %4598 = vmatprep.subr.mxu0 0.0
        %4599 = vmatpush1.msra.mxu0 %v4581
        %4600 = vmatprep.subr.mxu0 0.0
        %4601 = vmatpush1.msra.mxu0 %v4582
        %4602 = vmatprep.subr.mxu0 0.0
        %4603 = vmatpush1.msra.mxu0 %v4583
        %4604 = vmatprep.subr.mxu0 0.0
        %4605 = vmatpush1.msra.mxu0 %v4584
        %4606 = vmatprep.subr.mxu0 0.0
        %4607 = vmatpush1.msra.mxu0 %v4585
        %4608 = vmatprep.subr.mxu0 0.0
        %4609 = vmatpush1.msra.mxu0 %v4586
        %4610 = vmatprep.subr.mxu0 0.0
        %4611 = vmatpush1.msra.mxu0 %v4587
        %4612 = vmatprep.subr.mxu0 0.0
        %4613 = vmatpush1.msra.mxu0 0.0
        %4614 = vmatprep.subr.mxu0 0.0
        %4615 = vmatpush1.msra.mxu0 0.0
        %4616 = vmatprep.subr.mxu0 0.0
        %4617 = vmatpush1.msra.mxu0 0.0
        %4618 = vmatprep.subr.mxu0 0.0
        %4619 = vmatpush1.msra.mxu0 0.0
        %4620 = vmatprep.subr.mxu0 0.0
        %4621 = vmatpush1.msra.mxu0 0.0
        %4622 = vmatprep.subr.mxu0 0.0
        %4623 = vmatpush1.msra.mxu0 0.0
        %4624 = vmatprep.subr.mxu0 0.0
        %4625 = vmatpush1.msra.mxu0 0.0
        %4626 = vmatprep.subr.mxu0 0.0
        %4627 = vmatpush1.msra.mxu0 0.0
        %4628 = vmatprep.subr.mxu0 0.0
        %4629 = vmatpush1.msra.mxu0 0.0
        %4630 = vmatprep.subr.mxu0 0.0
        %4631 = vmatpush1.msra.mxu0 0.0
        %4632 = vmatprep.subr.mxu0 0.0
        %4633 = vmatpush1.msra.mxu0 0.0
        %4634 = vmatprep.subr.mxu0 0.0
        %4635 = vmatpush1.msra.mxu0 0.0
        %4636 = vmatprep.subr.mxu0 0.0
        %4637 = vmatpush1.msra.mxu0 0.0
        %4638 = vmatprep.subr.mxu0 0.0
        %4639 = vmatpush1.msra.mxu0 0.0
        %4640 = vmatprep.subr.mxu0 0.0
        %4641 = vmatpush1.msra.mxu0 0.0
        %4642 = vmatprep.subr.mxu0 0.0
        %4643 = vmatpush1.msra.mxu0 0.0
        %4644 = vmatprep.subr.mxu0 0.0
        %4645 = vmatpush1.msra.mxu0 0.0
        %4646 = vmatprep.subr.mxu0 0.0
        %4647 = vmatpush1.msra.mxu0 0.0
        %4648 = vmatprep.subr.mxu0 0.0
        %4649 = vmatpush1.msra.mxu0 0.0
        %4650 = vmatprep.subr.mxu0 0.0
        %4651 = vmatpush1.msra.mxu0 0.0
        %4652 = vmatprep.subr.mxu0 0.0
        %4653 = vmatpush1.msra.mxu0 0.0
        %4654 = vmatprep.subr.mxu0 0.0
        %4655 = vmatpush1.msra.mxu0 0.0
        %4656 = vmatprep.subr.mxu0 0.0
        %4657 = vmatpush1.msra.mxu0 0.0
        %4658 = vmatprep.subr.mxu0 0.0
        %4659 = vmatpush1.msra.mxu0 0.0
        %4660 = vmatprep.mubr.f32.mxu0 0.0
        %4661 = vmatmul.mubr.f32.gmra.mrb[0].mxu0 %v2925
        %v4662 = vpop.f32.mrb[0].mxu0
        %v4663 = vadd.f32 %v4594, %v4662
        %v4664 = vpop.f32.mrb[0].mxu0
        %4665 = vdwg.mxu0
        %v4667 = vsel %vm891, %v4489, 0
        %v4670 = vsel %vm891, %v4576, 0
        %4672 = vmatprep.subr.mxu0 0.0
        %4673 = vmatpush1.xpose.msra.mxu0 %v4670
        %4674 = vmatprep.subr.mxu0 0.0
        %4675 = vmatpush1.xpose.msra.mxu0 0.0
        %4676 = vmatprep.subr.mxu0 0.0
        %4677 = vmatpush1.xpose.msra.mxu0 0.0
        %4678 = vmatprep.subr.mxu0 0.0
        %4679 = vmatpush1.xpose.msra.mxu0 0.0
        %4680 = vmatprep.subr.mxu0 0.0
        %4681 = vmatpush1.xpose.msra.mxu0 0.0
        %4682 = vmatprep.subr.mxu0 0.0
        %4683 = vmatpush1.xpose.msra.mxu0 0.0
        %4684 = vmatprep.subr.mxu0 0.0
        %4685 = vmatpush1.xpose.msra.mxu0 0.0
        %4686 = vmatprep.subr.mxu0 0.0
        %4687 = vmatpush1.xpose.msra.mxu0 0.0
        %4688 = vmatprep.subr.mxu0 0.0
        %4689 = vmatpush1.xpose.msra.mxu0 0.0
        %4690 = vmatprep.subr.mxu0 0.0
        %4691 = vmatpush1.xpose.msra.mxu0 0.0
        %4692 = vmatprep.subr.mxu0 0.0
        %4693 = vmatpush1.xpose.msra.mxu0 0.0
        %4694 = vmatprep.subr.mxu0 0.0
        %4695 = vmatpush1.xpose.msra.mxu0 0.0
        %4696 = vmatprep.subr.mxu0 0.0
        %4697 = vmatpush1.xpose.msra.mxu0 0.0
        %4698 = vmatprep.subr.mxu0 0.0
        %4699 = vmatpush1.xpose.msra.mxu0 0.0
        %4700 = vmatprep.subr.mxu0 0.0
        %4701 = vmatpush1.xpose.msra.mxu0 0.0
        %4702 = vmatprep.subr.mxu0 0.0
        %4703 = vmatpush1.xpose.msra.mxu0 0.0
        %4704 = vmatprep.subr.mxu0 0.0
        %4705 = vmatpush1.xpose.msra.mxu0 0.0
        %4706 = vmatprep.subr.mxu0 0.0
        %4707 = vmatpush1.xpose.msra.mxu0 0.0
        %4708 = vmatprep.subr.mxu0 0.0
        %4709 = vmatpush1.xpose.msra.mxu0 0.0
        %4710 = vmatprep.subr.mxu0 0.0
        %4711 = vmatpush1.xpose.msra.mxu0 0.0
        %4712 = vmatprep.subr.mxu0 0.0
        %4713 = vmatpush1.xpose.msra.mxu0 0.0
        %4714 = vmatprep.subr.mxu0 0.0
        %4715 = vmatpush1.xpose.msra.mxu0 0.0
        %4716 = vmatprep.subr.mxu0 0.0
        %4717 = vmatpush1.xpose.msra.mxu0 0.0
        %4718 = vmatprep.subr.mxu0 0.0
        %4719 = vmatpush1.xpose.msra.mxu0 0.0
        %4720 = vmatprep.subr.mxu0 0.0
        %4721 = vmatpush1.xpose.msra.mxu0 0.0
        %4722 = vmatprep.subr.mxu0 0.0
        %4723 = vmatpush1.xpose.msra.mxu0 0.0
        %4724 = vmatprep.subr.mxu0 0.0
        %4725 = vmatpush1.xpose.msra.mxu0 0.0
        %4726 = vmatprep.subr.mxu0 0.0
        %4727 = vmatpush1.xpose.msra.mxu0 0.0
        %4728 = vmatprep.subr.mxu0 0.0
        %4729 = vmatpush1.xpose.msra.mxu0 0.0
        %4730 = vmatprep.subr.mxu0 0.0
        %4731 = vmatpush1.xpose.msra.mxu0 0.0
        %4732 = vmatprep.subr.mxu0 0.0
        %4733 = vmatpush1.xpose.msra.mxu0 0.0
        %4734 = vmatprep.subr.mxu0 0.0
        %4735 = vmatpush1.xpose.msra.mxu0 0.0
        %4736 = vmatprep.mubr.f32.mxu0 0.0
        %4737 = vmatmul.mubr.f32.gmra.mrb[0].mxu0 %v4667
        %v4738 = vpop.f32.mrb[0].mxu0
        %v4739 = vadd.f32 0.0, %v4738
        %v4740 = vpop.f32.mrb[0].mxu0
        %4741 = vdwg.mxu0
        %v4742 = vmul.f32 %v4739, 0.25
        %v4743 = vsel %vm969, %v4742, -inf
        %4744 = vmax.xlane.f32.xlu0 %v4743
        %v4745 = vpop.xlane.xlu0 %4744
        %v4746 = vsub.f32 %v4742, %v4745
        %v4747 = vmul.f32 %v4746, 1.442695
        %v4748 = vpow.pop %v4747
        %v4749 = vsel %vm969, %v4748, 0.0
        %4750 = vadd.xlane.f32.xlu0 %v4749
        %v4751 = vpop.xlane.xlu0 %4750
        %v4752 = vrcp.pop %v4751
        %v4753 = vmul.f32 %v4748, %v4752
        %v4755 = vsel %vm969, %v4753, 0
        %4757 = vmatprep.subr.mxu0 0.0
        %4758 = vmatpush1.msra.mxu0 %v4663
        %4759 = vmatprep.subr.mxu0 0.0
        %4760 = vmatpush1.msra.mxu0 0.0
        %4761 = vmatprep.subr.mxu0 0.0
        %4762 = vmatpush1.msra.mxu0 0.0
        %4763 = vmatprep.subr.mxu0 0.0
        %4764 = vmatpush1.msra.mxu0 0.0
        %4765 = vmatprep.subr.mxu0 0.0
        %4766 = vmatpush1.msra.mxu0 0.0
        %4767 = vmatprep.subr.mxu0 0.0
        %4768 = vmatpush1.msra.mxu0 0.0
        %4769 = vmatprep.subr.mxu0 0.0
        %4770 = vmatpush1.msra.mxu0 0.0
        %4771 = vmatprep.subr.mxu0 0.0
        %4772 = vmatpush1.msra.mxu0 0.0
        %4773 = vmatprep.subr.mxu0 0.0
        %4774 = vmatpush1.msra.mxu0 0.0
        %4775 = vmatprep.subr.mxu0 0.0
        %4776 = vmatpush1.msra.mxu0 0.0
        %4777 = vmatprep.subr.mxu0 0.0
        %4778 = vmatpush1.msra.mxu0 0.0
        %4779 = vmatprep.subr.mxu0 0.0
        %4780 = vmatpush1.msra.mxu0 0.0
        %4781 = vmatprep.subr.mxu0 0.0
        %4782 = vmatpush1.msra.mxu0 0.0
        %4783 = vmatprep.subr.mxu0 0.0
        %4784 = vmatpush1.msra.mxu0 0.0
        %4785 = vmatprep.subr.mxu0 0.0
        %4786 = vmatpush1.msra.mxu0 0.0
        %4787 = vmatprep.subr.mxu0 0.0
        %4788 = vmatpush1.msra.mxu0 0.0
        %4789 = vmatprep.subr.mxu0 0.0
        %4790 = vmatpush1.msra.mxu0 0.0
        %4791 = vmatprep.subr.mxu0 0.0
        %4792 = vmatpush1.msra.mxu0 0.0
        %4793 = vmatprep.subr.mxu0 0.0
        %4794 = vmatpush1.msra.mxu0 0.0
        %4795 = vmatprep.subr.mxu0 0.0
        %4796 = vmatpush1.msra.mxu0 0.0
        %4797 = vmatprep.subr.mxu0 0.0
        %4798 = vmatpush1.msra.mxu0 0.0
        %4799 = vmatprep.subr.mxu0 0.0
        %4800 = vmatpush1.msra.mxu0 0.0
        %4801 = vmatprep.subr.mxu0 0.0
        %4802 = vmatpush1.msra.mxu0 0.0
        %4803 = vmatprep.subr.mxu0 0.0
        %4804 = vmatpush1.msra.mxu0 0.0
        %4805 = vmatprep.subr.mxu0 0.0
        %4806 = vmatpush1.msra.mxu0 0.0
        %4807 = vmatprep.subr.mxu0 0.0
        %4808 = vmatpush1.msra.mxu0 0.0
        %4809 = vmatprep.subr.mxu0 0.0
        %4810 = vmatpush1.msra.mxu0 0.0
        %4811 = vmatprep.subr.mxu0 0.0
        %4812 = vmatpush1.msra.mxu0 0.0
        %4813 = vmatprep.subr.mxu0 0.0
        %4814 = vmatpush1.msra.mxu0 0.0
        %4815 = vmatprep.subr.mxu0 0.0
        %4816 = vmatpush1.msra.mxu0 0.0
        %4817 = vmatprep.subr.mxu0 0.0
        %4818 = vmatpush1.msra.mxu0 0.0
        %4819 = vmatprep.subr.mxu0 0.0
        %4820 = vmatpush1.msra.mxu0 0.0
        %4821 = vmatprep.mubr.f32.mxu0 0.0
        %4822 = vmatmul.mubr.f32.gmra.mrb[0].mxu0 %v4755
        %v4823 = vpop.f32.mrb[0].mxu0
        %v4824 = vadd.f32 0.0, %v4823
        %v4825 = vpop.f32.mrb[0].mxu0
        %4826 = vdwg.mxu0
        %s4827 = scalar_lea.vmem %s5, 112
        %v4828 = vld [vmem:[%s4827] sm:$0xff]
        %v4829 = vld [vmem:[%s4827 + $0x8] sm:$0xff]
        %v4831 = vsel %vm891, %v4824, 0
        %4833 = vmatprep.subr.mxu0 0.0
        %4834 = vmatpush1.msra.mxu0 %v4828
        %4835 = vmatprep.subr.mxu0 0.0
        %4836 = vmatpush1.msra.mxu0 %v4829
        %4837 = vmatprep.subr.mxu0 0.0
        %4838 = vmatpush1.msra.mxu0 0.0
        %4839 = vmatprep.subr.mxu0 0.0
        %4840 = vmatpush1.msra.mxu0 0.0
        %4841 = vmatprep.subr.mxu0 0.0
        %4842 = vmatpush1.msra.mxu0 0.0
        %4843 = vmatprep.subr.mxu0 0.0
        %4844 = vmatpush1.msra.mxu0 0.0
        %4845 = vmatprep.subr.mxu0 0.0
        %4846 = vmatpush1.msra.mxu0 0.0
        %4847 = vmatprep.subr.mxu0 0.0
        %4848 = vmatpush1.msra.mxu0 0.0
        %4849 = vmatprep.subr.mxu0 0.0
        %4850 = vmatpush1.msra.mxu0 0.0
        %4851 = vmatprep.subr.mxu0 0.0
        %4852 = vmatpush1.msra.mxu0 0.0
        %4853 = vmatprep.subr.mxu0 0.0
        %4854 = vmatpush1.msra.mxu0 0.0
        %4855 = vmatprep.subr.mxu0 0.0
        %4856 = vmatpush1.msra.mxu0 0.0
        %4857 = vmatprep.subr.mxu0 0.0
        %4858 = vmatpush1.msra.mxu0 0.0
        %4859 = vmatprep.subr.mxu0 0.0
        %4860 = vmatpush1.msra.mxu0 0.0
        %4861 = vmatprep.subr.mxu0 0.0
        %4862 = vmatpush1.msra.mxu0 0.0
        %4863 = vmatprep.subr.mxu0 0.0
        %4864 = vmatpush1.msra.mxu0 0.0
        %4865 = vmatprep.subr.mxu0 0.0
        %4866 = vmatpush1.msra.mxu0 0.0
        %4867 = vmatprep.subr.mxu0 0.0
        %4868 = vmatpush1.msra.mxu0 0.0
        %4869 = vmatprep.subr.mxu0 0.0
        %4870 = vmatpush1.msra.mxu0 0.0
        %4871 = vmatprep.subr.mxu0 0.0
        %4872 = vmatpush1.msra.mxu0 0.0
        %4873 = vmatprep.subr.mxu0 0.0
        %4874 = vmatpush1.msra.mxu0 0.0
        %4875 = vmatprep.subr.mxu0 0.0
        %4876 = vmatpush1.msra.mxu0 0.0
        %4877 = vmatprep.subr.mxu0 0.0
        %4878 = vmatpush1.msra.mxu0 0.0
        %4879 = vmatprep.subr.mxu0 0.0
        %4880 = vmatpush1.msra.mxu0 0.0
        %4881 = vmatprep.subr.mxu0 0.0
        %4882 = vmatpush1.msra.mxu0 0.0
        %4883 = vmatprep.subr.mxu0 0.0
        %4884 = vmatpush1.msra.mxu0 0.0
        %4885 = vmatprep.subr.mxu0 0.0
        %4886 = vmatpush1.msra.mxu0 0.0
        %4887 = vmatprep.subr.mxu0 0.0
        %4888 = vmatpush1.msra.mxu0 0.0
        %4889 = vmatprep.subr.mxu0 0.0
        %4890 = vmatpush1.msra.mxu0 0.0
        %4891 = vmatprep.subr.mxu0 0.0
        %4892 = vmatpush1.msra.mxu0 0.0
        %4893 = vmatprep.subr.mxu0 0.0
        %4894 = vmatpush1.msra.mxu0 0.0
        %4895 = vmatprep.subr.mxu0 0.0
        %4896 = vmatpush1.msra.mxu0 0.0
        %4897 = vmatprep.mubr.f32.mxu0 0.0
        %4898 = vmatmul.mubr.f32.gmra.mrb[0].mxu0 %v4831
        %v4899 = vpop.f32.mrb[0].mxu0
        %v4900 = vadd.f32 0.0, %v4899
        %v4901 = vpop.f32.mrb[0].mxu0
        %4902 = vdwg.mxu0
        %v4903 = vadd.f32 %v4404, %v4900
        %s4904 = scalar_lea.vmem %s6, 1
        %v4905 = vld [vmem:[%s4904] sm:$0x1]
        %v4907 = vlaneseq
        %v4908 = vshrl.u32 %v4907, 7
        %v4909 = vsub.s32 0, %v4908
        %v4910 = vrot.slane %v4905, %v4909
        %v4912 = vadd.f32 %v4903, %v4910
        %v4913 = vadd.f32 %v2906, %v4912
        %s4914 = scalar_lea.vmem %s7, 1
        %v4915 = vld [vmem:[%s4914] sm:$0x1]
        %s4916 = scalar_lea.vmem %s8, 1
        %v4917 = vld [vmem:[%s4916] sm:$0x1]
        %v4918 = vsel %vm643, %v4913, 0.0
        %4919 = vadd.xlane.f32.xlu0 %v4918
        %v4920 = vpop.xlane.xlu0 %4919
        %v4921 = vmul.f32 %v4920, %v2639
        %v4922 = vsub.f32 %v4913, %v4921
        %v4923 = vmul.f32 %v4922, %v4922
        %v4924 = vsel %vm643, %v4923, 0.0
        %4925 = vadd.xlane.f32.xlu0 %v4924
        %v4926 = vpop.xlane.xlu0 %4925
        %v4927 = vmul.f32 %v4926, %v2639
        %v4928 = vadd.f32 %v4927, 1e-05
        %v4929 = vrsqrt.pop %v4928
        %v4930 = vmul.f32 %v4922, %v4929
        %v4932 = vlaneseq
        %v4933 = vshrl.u32 %v4932, 7
        %v4934 = vsub.s32 0, %v4933
        %v4935 = vrot.slane %v4915, %v4934
        %v4937 = vmul.f32 %v4930, %v4935
        %v4939 = vlaneseq
        %v4940 = vshrl.u32 %v4939, 7
        %v4941 = vsub.s32 0, %v4940
        %v4942 = vrot.slane %v4917, %v4941
        %v4944 = vadd.f32 %v4937, %v4942
        %s4945 = scalar_lea.vmem %s9, 128
        %v4946 = vld [vmem:[%s4945] sm:$0xff]
        %v4947 = vld [vmem:[%s4945 + $0x8] sm:$0xff]
        %v4948 = vld [vmem:[%s4945 + $0x10] sm:$0xff]
        %v4949 = vld [vmem:[%s4945 + $0x18] sm:$0xff]
        %v4950 = vld [vmem:[%s4945 + $0x20] sm:$0xff]
        %v4951 = vld [vmem:[%s4945 + $0x28] sm:$0xff]
        %v4952 = vld [vmem:[%s4945 + $0x30] sm:$0xff]
        %v4953 = vld [vmem:[%s4945 + $0x38] sm:$0xff]
        %v4954 = vld [vmem:[%s4945 + $0x40] sm:$0xff]
        %v4955 = vld [vmem:[%s4945 + $0x48] sm:$0xff]
        %v4956 = vld [vmem:[%s4945 + $0x50] sm:$0xff]
        %v4957 = vld [vmem:[%s4945 + $0x58] sm:$0xff]
        %v4958 = vld [vmem:[%s4945 + $0x60] sm:$0xff]
        %v4959 = vld [vmem:[%s4945 + $0x68] sm:$0xff]
        %v4960 = vld [vmem:[%s4945 + $0x70] sm:$0xff]
        %v4961 = vld [vmem:[%s4945 + $0x78] sm:$0xff]
        %s4962 = scalar_lea.vmem %s10, 2
        %v4963 = vld [vmem:[%s4962] sm:$0x3]
        %v4965 = vlaneseq
        %v4966 = vshrl.u32 %v4965, 7
        %v4967 = vsub.s32 0, %v4966
        %v4968 = vrot.slane %v4963, %v4967
        %v4969 = vlaneseq
        %v4970 = vshrl.u32 %v4969, 7
        %v4971 = vsub.s32 1, %v4970
        %v4972 = vrot.slane %v4963, %v4971
        %v4976 = vsel %vm643, %v4944, 0
        %4978 = vmatprep.subr.mxu0 %v4947
        %4979 = vmatpush1.msra.mxu0 %v4946
        %4980 = vmatprep.subr.mxu0 %v4949
        %4981 = vmatpush1.msra.mxu0 %v4948
        %4982 = vmatprep.subr.mxu0 %v4951
        %4983 = vmatpush1.msra.mxu0 %v4950
        %4984 = vmatprep.subr.mxu0 %v4953
        %4985 = vmatpush1.msra.mxu0 %v4952
        %4986 = vmatprep.subr.mxu0 %v4955
        %4987 = vmatpush1.msra.mxu0 %v4954
        %4988 = vmatprep.subr.mxu0 %v4957
        %4989 = vmatpush1.msra.mxu0 %v4956
        %4990 = vmatprep.subr.mxu0 %v4959
        %4991 = vmatpush1.msra.mxu0 %v4958
        %4992 = vmatprep.subr.mxu0 %v4961
        %4993 = vmatpush1.msra.mxu0 %v4960
        %4994 = vmatprep.subr.mxu0 0.0
        %4995 = vmatpush1.msra.mxu0 0.0
        %4996 = vmatprep.subr.mxu0 0.0
        %4997 = vmatpush1.msra.mxu0 0.0
        %4998 = vmatprep.subr.mxu0 0.0
        %4999 = vmatpush1.msra.mxu0 0.0
        %5000 = vmatprep.subr.mxu0 0.0
        %5001 = vmatpush1.msra.mxu0 0.0
        %5002 = vmatprep.subr.mxu0 0.0
        %5003 = vmatpush1.msra.mxu0 0.0
        %5004 = vmatprep.subr.mxu0 0.0
        %5005 = vmatpush1.msra.mxu0 0.0
        %5006 = vmatprep.subr.mxu0 0.0
        %5007 = vmatpush1.msra.mxu0 0.0
        %5008 = vmatprep.subr.mxu0 0.0
        %5009 = vmatpush1.msra.mxu0 0.0
        %5010 = vmatprep.subr.mxu0 0.0
        %5011 = vmatpush1.msra.mxu0 0.0
        %5012 = vmatprep.subr.mxu0 0.0
        %5013 = vmatpush1.msra.mxu0 0.0
        %5014 = vmatprep.subr.mxu0 0.0
        %5015 = vmatpush1.msra.mxu0 0.0
        %5016 = vmatprep.subr.mxu0 0.0
        %5017 = vmatpush1.msra.mxu0 0.0
        %5018 = vmatprep.subr.mxu0 0.0
        %5019 = vmatpush1.msra.mxu0 0.0
        %5020 = vmatprep.subr.mxu0 0.0
        %5021 = vmatpush1.msra.mxu0 0.0
        %5022 = vmatprep.subr.mxu0 0.0
        %5023 = vmatpush1.msra.mxu0 0.0
        %5024 = vmatprep.subr.mxu0 0.0
        %5025 = vmatpush1.msra.mxu0 0.0
        %5026 = vmatprep.subr.mxu0 0.0
        %5027 = vmatpush1.msra.mxu0 0.0
        %5028 = vmatprep.subr.mxu0 0.0
        %5029 = vmatpush1.msra.mxu0 0.0
        %5030 = vmatprep.subr.mxu0 0.0
        %5031 = vmatpush1.msra.mxu0 0.0
        %5032 = vmatprep.subr.mxu0 0.0
        %5033 = vmatpush1.msra.mxu0 0.0
        %5034 = vmatprep.subr.mxu0 0.0
        %5035 = vmatpush1.msra.mxu0 0.0
        %5036 = vmatprep.subr.mxu0 0.0
        %5037 = vmatpush1.msra.mxu0 0.0
        %5038 = vmatprep.subr.mxu0 0.0
        %5039 = vmatpush1.msra.mxu0 0.0
        %5040 = vmatprep.subr.mxu0 0.0
        %5041 = vmatpush1.msra.mxu0 0.0
        %5042 = vmatprep.mubr.f32.mxu0 0.0
        %5043 = vmatmul.mubr.f32.gmra.mrb[0].mxu0 %v4976
        %v5044 = vpop.f32.mrb[0].mxu0
        %v5045 = vadd.f32 %v4968, %v5044
        %v5046 = vpop.f32.mrb[0].mxu0
        %v5047 = vadd.f32 %v4972, %v5046
        %5048 = vdwg.mxu0
        %v5049 = vmax.f32 %v5045, 0.0
        %v5050 = vmax.f32 %v5047, 0.0
        %s5051 = scalar_lea.vmem %s11, 256
        %v5052 = vld [vmem:[%s5051] sm:$0xff]
        %v5053 = vld [vmem:[%s5051 + $0x8] sm:$0xff]
        %v5054 = vld [vmem:[%s5051 + $0x10] sm:$0xff]
        %v5055 = vld [vmem:[%s5051 + $0x18] sm:$0xff]
        %v5056 = vld [vmem:[%s5051 + $0x20] sm:$0xff]
        %v5057 = vld [vmem:[%s5051 + $0x28] sm:$0xff]
        %v5058 = vld [vmem:[%s5051 + $0x30] sm:$0xff]
        %v5059 = vld [vmem:[%s5051 + $0x38] sm:$0xff]
        %v5060 = vld [vmem:[%s5051 + $0x40] sm:$0xff]
        %v5061 = vld [vmem:[%s5051 + $0x48] sm:$0xff]
        %v5062 = vld [vmem:[%s5051 + $0x50] sm:$0xff]
        %v5063 = vld [vmem:[%s5051 + $0x58] sm:$0xff]
        %v5064 = vld [vmem:[%s5051 + $0x60] sm:$0xff]
        %v5065 = vld [vmem:[%s5051 + $0x68] sm:$0xff]
        %v5066 = vld [vmem:[%s5051 + $0x70] sm:$0xff]
        %v5067 = vld [vmem:[%s5051 + $0x78] sm:$0xff]
        %v5068 = vld [vmem:[%s5051 + $0x80] sm:$0xff]
        %v5069 = vld [vmem:[%s5051 + $0x88] sm:$0xff]
        %v5070 = vld [vmem:[%s5051 + $0x90] sm:$0xff]
        %v5071 = vld [vmem:[%s5051 + $0x98] sm:$0xff]
        %v5072 = vld [vmem:[%s5051 + $0xa0] sm:$0xff]
        %v5073 = vld [vmem:[%s5051 + $0xa8] sm:$0xff]
        %v5074 = vld [vmem:[%s5051 + $0xb0] sm:$0xff]
        %v5075 = vld [vmem:[%s5051 + $0xb8] sm:$0xff]
        %v5076 = vld [vmem:[%s5051 + $0xc0] sm:$0xff]
        %v5077 = vld [vmem:[%s5051 + $0xc8] sm:$0xff]
        %v5078 = vld [vmem:[%s5051 + $0xd0] sm:$0xff]
        %v5079 = vld [vmem:[%s5051 + $0xd8] sm:$0xff]
        %v5080 = vld [vmem:[%s5051 + $0xe0] sm:$0xff]
        %v5081 = vld [vmem:[%s5051 + $0xe8] sm:$0xff]
        %v5082 = vld [vmem:[%s5051 + $0xf0] sm:$0xff]
        %v5083 = vld [vmem:[%s5051 + $0xf8] sm:$0xff]
        %s5084 = scalar_lea.vmem %s12, 1
        %v5085 = vld [vmem:[%s5084] sm:$0x1]
        %v5087 = vlaneseq
        %v5088 = vshrl.u32 %v5087, 7
        %v5089 = vsub.s32 0, %v5088
        %v5090 = vrot.slane %v5085, %v5089
        %5092 = vmatprep.subr.mxu0 0.0
        %5093 = vmatpush1.msra.mxu0 %v5052
        %5094 = vmatprep.subr.mxu0 0.0
        %5095 = vmatpush1.msra.mxu0 %v5053
        %5096 = vmatprep.subr.mxu0 0.0
        %5097 = vmatpush1.msra.mxu0 %v5054
        %5098 = vmatprep.subr.mxu0 0.0
        %5099 = vmatpush1.msra.mxu0 %v5055
        %5100 = vmatprep.subr.mxu0 0.0
        %5101 = vmatpush1.msra.mxu0 %v5056
        %5102 = vmatprep.subr.mxu0 0.0
        %5103 = vmatpush1.msra.mxu0 %v5057
        %5104 = vmatprep.subr.mxu0 0.0
        %5105 = vmatpush1.msra.mxu0 %v5058
        %5106 = vmatprep.subr.mxu0 0.0
        %5107 = vmatpush1.msra.mxu0 %v5059
        %5108 = vmatprep.subr.mxu0 0.0
        %5109 = vmatpush1.msra.mxu0 %v5060
        %5110 = vmatprep.subr.mxu0 0.0
        %5111 = vmatpush1.msra.mxu0 %v5061
        %5112 = vmatprep.subr.mxu0 0.0
        %5113 = vmatpush1.msra.mxu0 %v5062
        %5114 = vmatprep.subr.mxu0 0.0
        %5115 = vmatpush1.msra.mxu0 %v5063
        %5116 = vmatprep.subr.mxu0 0.0
        %5117 = vmatpush1.msra.mxu0 %v5064
        %5118 = vmatprep.subr.mxu0 0.0
        %5119 = vmatpush1.msra.mxu0 %v5065
        %5120 = vmatprep.subr.mxu0 0.0
        %5121 = vmatpush1.msra.mxu0 %v5066
        %5122 = vmatprep.subr.mxu0 0.0
        %5123 = vmatpush1.msra.mxu0 %v5067
        %5124 = vmatprep.subr.mxu0 0.0
        %5125 = vmatpush1.msra.mxu0 %v5068
        %5126 = vmatprep.subr.mxu0 0.0
        %5127 = vmatpush1.msra.mxu0 %v5069
        %5128 = vmatprep.subr.mxu0 0.0
        %5129 = vmatpush1.msra.mxu0 %v5070
        %5130 = vmatprep.subr.mxu0 0.0
        %5131 = vmatpush1.msra.mxu0 %v5071
        %5132 = vmatprep.subr.mxu0 0.0
        %5133 = vmatpush1.msra.mxu0 %v5072
        %5134 = vmatprep.subr.mxu0 0.0
        %5135 = vmatpush1.msra.mxu0 %v5073
        %5136 = vmatprep.subr.mxu0 0.0
        %5137 = vmatpush1.msra.mxu0 %v5074
        %5138 = vmatprep.subr.mxu0 0.0
        %5139 = vmatpush1.msra.mxu0 %v5075
        %5140 = vmatprep.subr.mxu0 0.0
        %5141 = vmatpush1.msra.mxu0 %v5076
        %5142 = vmatprep.subr.mxu0 0.0
        %5143 = vmatpush1.msra.mxu0 %v5077
        %5144 = vmatprep.subr.mxu0 0.0
        %5145 = vmatpush1.msra.mxu0 %v5078
        %5146 = vmatprep.subr.mxu0 0.0
        %5147 = vmatpush1.msra.mxu0 %v5079
        %5148 = vmatprep.subr.mxu0 0.0
        %5149 = vmatpush1.msra.mxu0 %v5080
        %5150 = vmatprep.subr.mxu0 0.0
        %5151 = vmatpush1.msra.mxu0 %v5081
        %5152 = vmatprep.subr.mxu0 0.0
        %5153 = vmatpush1.msra.mxu0 %v5082
        %5154 = vmatprep.subr.mxu0 0.0
        %5155 = vmatpush1.msra.mxu0 %v5083
        %5156 = vmatprep.mubr.f32.mxu0 %v5050
        %5157 = vmatmul.mubr.f32.gmra.mrb[0].mxu0 %v5049
        %v5158 = vpop.f32.mrb[0].mxu0
        %v5159 = vadd.f32 %v5090, %v5158
        %v5160 = vpop.f32.mrb[0].mxu0
        %5161 = vdwg.mxu0
        %v5162 = vadd.f32 %v4944, %v5159
        %s5163 = scalar_lea.vmem %s13, 1
        %v5164 = vld [vmem:[%s5163] sm:$0x1]
        %s5165 = scalar_lea.vmem %s14, 1
        %v5166 = vld [vmem:[%s5165] sm:$0x1]
        %v5167 = vsel %vm643, %v5162, 0.0
        %5168 = vadd.xlane.f32.xlu0 %v5167
        %v5169 = vpop.xlane.xlu0 %5168
        %v5170 = vmul.f32 %v5169, %v2639
        %v5171 = vsub.f32 %v5162, %v5170
        %v5172 = vmul.f32 %v5171, %v5171
        %v5173 = vsel %vm643, %v5172, 0.0
        %5174 = vadd.xlane.f32.xlu0 %v5173
        %v5175 = vpop.xlane.xlu0 %5174
        %v5176 = vmul.f32 %v5175, %v2639
        %v5177 = vadd.f32 %v5176, 1e-05
        %v5178 = vrsqrt.pop %v5177
        %v5179 = vmul.f32 %v5171, %v5178
        %v5181 = vlaneseq
        %v5182 = vshrl.u32 %v5181, 7
        %v5183 = vsub.s32 0, %v5182
        %v5184 = vrot.slane %v5164, %v5183
        %v5186 = vmul.f32 %v5179, %v5184
        %v5188 = vlaneseq
        %v5189 = vshrl.u32 %v5188, 7
        %v5190 = vsub.s32 0, %v5189
        %v5191 = vrot.slane %v5166, %v5190
        %v5193 = vadd.f32 %v5186, %v5191
        %v5194 = vsel %vm643, %v5193, 0.0
        %v5195 = vrot.slane %v5194, 4
        %v5196 = vadd.f32 %v5194, %v5195
        %v5197 = vrot.slane %v5196, 2
        %v5198 = vadd.f32 %v5196, %v5197
        %v5199 = vrot.slane %v5198, 1
        %v5200 = vadd.f32 %v5198, %v5199
        %v5201 = vrcp.pop 8.0
        %v5202 = vmul.f32 %v5200, %v5201
        %v5203 = vld [vmem:[%s15] sm:$0xff]
        %v5204 = vld [vmem:[%s15 + $0x8] sm:$0xff]
        %v5205 = vld [vmem:[%s15 + $0x10] sm:$0xff]
        %v5206 = vld [vmem:[%s15 + $0x18] sm:$0xff]
        %v5207 = vld [vmem:[%s15 + $0x20] sm:$0xff]
        %v5208 = vld [vmem:[%s15 + $0x28] sm:$0xff]
        %v5209 = vld [vmem:[%s15 + $0x30] sm:$0xff]
        %v5210 = vld [vmem:[%s15 + $0x38] sm:$0xff]
        %v5211 = vld [vmem:[%s16] sm:$0x1]
        %v5213 = vsel %vm643, %v5202, 0
        %5215 = vmatprep.subr.mxu0 0.0
        %5216 = vmatpush1.msra.mxu0 %v5203
        %5217 = vmatprep.subr.mxu0 0.0
        %5218 = vmatpush1.msra.mxu0 %v5204
        %5219 = vmatprep.subr.mxu0 0.0
        %5220 = vmatpush1.msra.mxu0 %v5205
        %5221 = vmatprep.subr.mxu0 0.0
        %5222 = vmatpush1.msra.mxu0 %v5206
        %5223 = vmatprep.subr.mxu0 0.0
        %5224 = vmatpush1.msra.mxu0 %v5207
        %5225 = vmatprep.subr.mxu0 0.0
        %5226 = vmatpush1.msra.mxu0 %v5208
        %5227 = vmatprep.subr.mxu0 0.0
        %5228 = vmatpush1.msra.mxu0 %v5209
        %5229 = vmatprep.subr.mxu0 0.0
        %5230 = vmatpush1.msra.mxu0 %v5210
        %5231 = vmatprep.subr.mxu0 0.0
        %5232 = vmatpush1.msra.mxu0 0.0
        %5233 = vmatprep.subr.mxu0 0.0
        %5234 = vmatpush1.msra.mxu0 0.0
        %5235 = vmatprep.subr.mxu0 0.0
        %5236 = vmatpush1.msra.mxu0 0.0
        %5237 = vmatprep.subr.mxu0 0.0
        %5238 = vmatpush1.msra.mxu0 0.0
        %5239 = vmatprep.subr.mxu0 0.0
        %5240 = vmatpush1.msra.mxu0 0.0
        %5241 = vmatprep.subr.mxu0 0.0
        %5242 = vmatpush1.msra.mxu0 0.0
        %5243 = vmatprep.subr.mxu0 0.0
        %5244 = vmatpush1.msra.mxu0 0.0
        %5245 = vmatprep.subr.mxu0 0.0
        %5246 = vmatpush1.msra.mxu0 0.0
        %5247 = vmatprep.subr.mxu0 0.0
        %5248 = vmatpush1.msra.mxu0 0.0
        %5249 = vmatprep.subr.mxu0 0.0
        %5250 = vmatpush1.msra.mxu0 0.0
        %5251 = vmatprep.subr.mxu0 0.0
        %5252 = vmatpush1.msra.mxu0 0.0
        %5253 = vmatprep.subr.mxu0 0.0
        %5254 = vmatpush1.msra.mxu0 0.0
        %5255 = vmatprep.subr.mxu0 0.0
        %5256 = vmatpush1.msra.mxu0 0.0
        %5257 = vmatprep.subr.mxu0 0.0
        %5258 = vmatpush1.msra.mxu0 0.0
        %5259 = vmatprep.subr.mxu0 0.0
        %5260 = vmatpush1.msra.mxu0 0.0
        %5261 = vmatprep.subr.mxu0 0.0
        %5262 = vmatpush1.msra.mxu0 0.0
        %5263 = vmatprep.subr.mxu0 0.0
        %5264 = vmatpush1.msra.mxu0 0.0
        %5265 = vmatprep.subr.mxu0 0.0
        %5266 = vmatpush1.msra.mxu0 0.0
        %5267 = vmatprep.subr.mxu0 0.0
        %5268 = vmatpush1.msra.mxu0 0.0
        %5269 = vmatprep.subr.mxu0 0.0
        %5270 = vmatpush1.msra.mxu0 0.0
        %5271 = vmatprep.subr.mxu0 0.0
        %5272 = vmatpush1.msra.mxu0 0.0
        %5273 = vmatprep.subr.mxu0 0.0
        %5274 = vmatpush1.msra.mxu0 0.0
        %5275 = vmatprep.subr.mxu0 0.0
        %5276 = vmatpush1.msra.mxu0 0.0
        %5277 = vmatprep.subr.mxu0 0.0
        %5278 = vmatpush1.msra.mxu0 0.0
        %5279 = vmatprep.mubr.f32.mxu0 0.0
        %5280 = vmatmul.mubr.f32.gmra.mrb[0].mxu0 %v5213
        %v5281 = vpop.f32.mrb[0].mxu0
        %v5282 = vadd.f32 %v5211, %v5281
        %v5283 = vpop.f32.mrb[0].mxu0
        %5284 = vdwg.mxu0
        %v5285 = vmax.f32 %v5282, 0.0
        %v5286 = vld [vmem:[%s17] sm:$0xff]
        %v5287 = vld [vmem:[%s17 + $0x8] sm:$0xff]
        %v5288 = vld [vmem:[%s17 + $0x10] sm:$0xff]
        %v5289 = vld [vmem:[%s17 + $0x18] sm:$0xff]
        %v5290 = vld [vmem:[%s18] sm:$0x1]
        %vm5291 = vcmask 261120
        %v5293 = vsel %vm5291, %v5285, 0
        %5295 = vmatprep.subr.mxu0 0.0
        %5296 = vmatpush1.msra.mxu0 %v5286
        %5297 = vmatprep.subr.mxu0 0.0
        %5298 = vmatpush1.msra.mxu0 %v5287
        %5299 = vmatprep.subr.mxu0 0.0
        %5300 = vmatpush1.msra.mxu0 %v5288
        %5301 = vmatprep.subr.mxu0 0.0
        %5302 = vmatpush1.msra.mxu0 %v5289
        %5303 = vmatprep.subr.mxu0 0.0
        %5304 = vmatpush1.msra.mxu0 0.0
        %5305 = vmatprep.subr.mxu0 0.0
        %5306 = vmatpush1.msra.mxu0 0.0
        %5307 = vmatprep.subr.mxu0 0.0
        %5308 = vmatpush1.msra.mxu0 0.0
        %5309 = vmatprep.subr.mxu0 0.0
        %5310 = vmatpush1.msra.mxu0 0.0
        %5311 = vmatprep.subr.mxu0 0.0
        %5312 = vmatpush1.msra.mxu0 0.0
        %5313 = vmatprep.subr.mxu0 0.0
        %5314 = vmatpush1.msra.mxu0 0.0
        %5315 = vmatprep.subr.mxu0 0.0
        %5316 = vmatpush1.msra.mxu0 0.0
        %5317 = vmatprep.subr.mxu0 0.0
        %5318 = vmatpush1.msra.mxu0 0.0
        %5319 = vmatprep.subr.mxu0 0.0
        %5320 = vmatpush1.msra.mxu0 0.0
        %5321 = vmatprep.subr.mxu0 0.0
        %5322 = vmatpush1.msra.mxu0 0.0
        %5323 = vmatprep.subr.mxu0 0.0
        %5324 = vmatpush1.msra.mxu0 0.0
        %5325 = vmatprep.subr.mxu0 0.0
        %5326 = vmatpush1.msra.mxu0 0.0
        %5327 = vmatprep.subr.mxu0 0.0
        %5328 = vmatpush1.msra.mxu0 0.0
        %5329 = vmatprep.subr.mxu0 0.0
        %5330 = vmatpush1.msra.mxu0 0.0
        %5331 = vmatprep.subr.mxu0 0.0
        %5332 = vmatpush1.msra.mxu0 0.0
        %5333 = vmatprep.subr.mxu0 0.0
        %5334 = vmatpush1.msra.mxu0 0.0
        %5335 = vmatprep.subr.mxu0 0.0
        %5336 = vmatpush1.msra.mxu0 0.0
        %5337 = vmatprep.subr.mxu0 0.0
        %5338 = vmatpush1.msra.mxu0 0.0
        %5339 = vmatprep.subr.mxu0 0.0
        %5340 = vmatpush1.msra.mxu0 0.0
        %5341 = vmatprep.subr.mxu0 0.0
        %5342 = vmatpush1.msra.mxu0 0.0
        %5343 = vmatprep.subr.mxu0 0.0
        %5344 = vmatpush1.msra.mxu0 0.0
        %5345 = vmatprep.subr.mxu0 0.0
        %5346 = vmatpush1.msra.mxu0 0.0
        %5347 = vmatprep.subr.mxu0 0.0
        %5348 = vmatpush1.msra.mxu0 0.0
        %5349 = vmatprep.subr.mxu0 0.0
        %5350 = vmatpush1.msra.mxu0 0.0
        %5351 = vmatprep.subr.mxu0 0.0
        %5352 = vmatpush1.msra.mxu0 0.0
        %5353 = vmatprep.subr.mxu0 0.0
        %5354 = vmatpush1.msra.mxu0 0.0
        %5355 = vmatprep.subr.mxu0 0.0
        %5356 = vmatpush1.msra.mxu0 0.0
        %5357 = vmatprep.subr.mxu0 0.0
        %5358 = vmatpush1.msra.mxu0 0.0
        %5359 = vmatprep.mubr.f32.mxu0 0.0
        %5360 = vmatmul.mubr.f32.gmra.mrb[0].mxu0 %v5293
        %v5361 = vpop.f32.mrb[0].mxu0
        %v5362 = vadd.f32 %v5290, %v5361
        %v5363 = vpop.f32.mrb[0].mxu0
        %5364 = vdwg.mxu0
        %5365 = vst [vmem:[%s592] sm:$0x1] %v5362
        %s5366 = sand.u32 %s445, 1
        %s5367 = scalar_lea.sflag [#allocation3], %s5366
        %s5368 = sand.u32 %s445, 1
        %s5369 = scalar_lea.vmem [#allocation2], %s5368
        // Predicated region
        $region97: #{tpu_custom_call.1} parent=95 // pred_check
          %p5370 = pneg %p455
        $region98: #{tpu_custom_call.1} parent=95 // pred_check_branch
          %5372 = sbr.rel (%p5370) target = $region100
        $region99: #{tpu_custom_call.1} parent=95 // pred_region
          %s5374 = ssub.s32 16, 16
          %5375 = vsyncadd %s5367, %s5374
          %s5376 = smul.addr %s33, 16
          %s5377 = scalar_lea.hbm %s19, %s5376
          %s5379 = sshll.u32 %s5369, 4
          %s5380 = int_to_ptr.vmem [resolvable:$true] %s5379
          %5382 = dma.vmem_to_hbm [thread:$0]  %s5380, 16, %s5377, %s5367
        $region100: #{tpu_custom_call.1} parent=95 // pred_fallthru
          _
      $region96: #{tpu_custom_call.1} parent=5 // pred_fallthru
        _
      %p5383 = scmp.le.s32.totalorder 2, %s28
      // Predicated region
      $region101: #{tpu_custom_call.1} parent=5 // pred_check
        %p5384 = pneg %p5383
      $region102: #{tpu_custom_call.1} parent=5 // pred_check_branch
        %5386 = sbr.rel (%p5384) target = $region104
      $region103: #{tpu_custom_call.1} parent=5 // pred_region
        %s5387 = ssub.s32 %s28, 2
        // Predicated region
        $region105: #{tpu_custom_call.1} parent=103 // pred_check
          %p5388 = pneg %p461
        $region106: #{tpu_custom_call.1} parent=103 // pred_check_branch
          %5390 = sbr.rel (%p5388) target = $region108
        $region107: #{tpu_custom_call.1} parent=103 // pred_region
          %s5391 = sand.u32 %s446, 1
          %s5392 = scalar_lea.sflag [#allocation3], %s5391
          %s5393 = sand.u32 %s446, 1
          %s5394 = scalar_lea.vmem [#allocation2], %s5393
          %5395 = dma.done %s5392, 16
        $region108: #{tpu_custom_call.1} parent=103 // pred_fallthru
          _
      $region104: #{tpu_custom_call.1} parent=5 // pred_fallthru
        _
    $region6: #{tpu_custom_call.1} parent=1 // loop_footer
      %s32 = sadd.s32 1, %s28
    $region7: #{tpu_custom_call.1} parent=1 // loop_footer_branch
      %27 = sbr.rel target = $region3
    $region8: #{tpu_custom_call.1} parent=1 // loop_exit
      _
    %5396 = vsyncpa [#allocation3], 1
    %s5397 = scalar_lea.sflag [#allocation3], 1
    %5398 = vsyncpa %s5397, 1

</llo_original>
